<compile_context>
chip_gen: v7x
topology: tpu7x:2x2x1
jax: 0.10.0
libtpu: 0.0.40
codegen_flags: <defaults>
</compile_context>

<pallas_src>
import functools

import jax
import jax.numpy as jnp
from jax.experimental import pallas as pl
from jax.experimental.pallas import tpu as pltpu


def _aspp_kernel(x_ref, wb_ref, sb_ref, bb_ref,
                 wp_ref, sp_ref, bp_ref,
                 wproj_ref, sproj_ref, bproj_ref,
                 out_ref, *, H, W, pad, rates, tile_h):
    """Grid = (batch, row_tile).  x_ref holds the full zero-padded NHWC image
    (resident across row tiles of the same image); out_ref is one row band."""
    Cin = x_ref.shape[-1]
    Cout = wb_ref.shape[-1]
    Cproj = out_ref.shape[-1]
    n_rates = len(rates)
    band_h = tile_h + 2 * pad

    row0 = pl.multiple_of(pl.program_id(1) * tile_h, tile_h)

    # ---------------- global-average-pool branch (rank-1 shortcut) ----------
    # Padding rows/cols are zero, so summing the padded tile == summing the
    # original H*W window.  The bilinear upsample of a 1x1 map is a broadcast,
    # so its contribution to the 1x1 projection is one (1, Cproj) vector that
    # enters as a per-image bias before the final ReLU.
    # (Recomputed per row tile on purpose: it is tiny and keeps both grid axes
    #  fully parallel — no cross-iteration scratch dependency.)
    x_full = x_ref[...]                                          # (Hp,Wp,Cin) bf16
    xsum = jnp.sum(jnp.sum(x_full.astype(jnp.float32), axis=0),
                   axis=0, keepdims=True)                        # (1, Cin) f32
    xmean = xsum * (1.0 / float(H * W))                          # reciprocal mul
    pooled = jnp.dot(xmean.astype(jnp.bfloat16), wp_ref[...],
                     preferred_element_type=jnp.float32)         # (1, Cout)
    pooled = jnp.maximum(pooled * sp_ref[...] + bp_ref[...], 0.0)
    pool_proj = jnp.dot(pooled.astype(jnp.bfloat16), wproj_ref[n_rates],
                        preferred_element_type=jnp.float32)      # (1, Cproj)

    # ---------------- dilated 3x3 branches fused into the projection --------
    # Row band with dilation halo; slicing along the leading (row) axis is free.
    x_band = x_ref[pl.ds(row0, band_h), :, :]                    # (band_h,Wp,Cin)

    # Build each distinct width-shifted slab once and reuse it for all ky taps
    # and all branches that share the offset (width slices cost a sublane
    # relayout, so do them <= 2*len(rates)+1 times instead of 9*len(rates)).
    dx_offsets = sorted({pad + (kx - 1) * r for r in rates for kx in (0, 1, 2)})
    slabs = {dx: x_band[:, dx:dx + W, :] for dx in dx_offsets}

    proj = jnp.zeros((tile_h * W, Cproj), jnp.float32)
    for bi, rate in enumerate(rates):
        acc = jnp.zeros((tile_h * W, Cout), jnp.float32)
        for ky in range(3):
            dy = pad + (ky - 1) * rate                            # leading-axis
            for kx in range(3):
                dx = pad + (kx - 1) * rate
                patch = slabs[dx][dy:dy + tile_h].reshape(tile_h * W, Cin)
                acc += jnp.dot(patch, wb_ref[bi, ky, kx],
                               preferred_element_type=jnp.float32)
        # Folded BN + ReLU for this branch, then immediately fold the branch
        # into the 1x1 projection (concat + 1x1 conv == sum of matmuls) so the
        # branch activation dies right away (no 4x (H*W,Cout) buffers).
        y = jnp.maximum(acc * sb_ref[bi] + bb_ref[bi], 0.0)
        proj += jnp.dot(y.astype(jnp.bfloat16), wproj_ref[bi],
                        preferred_element_type=jnp.float32)

    # ---------------- projection BN + ReLU (pooled branch as a bias) --------
    bias = pool_proj * sproj_ref[...] + bproj_ref[...]            # (1, Cproj)
    out = jnp.maximum(proj * sproj_ref[...] + bias, 0.0)
    out_ref[...] = out.reshape(tile_h, W, Cproj).astype(out_ref.dtype)


def _vmem_limit_bytes():
    """Raise the scoped-VMEM limit with headroom for the detected chip."""
    try:
        cap = pltpu.get_tpu_info().vmem_capacity_bytes
        return min(100 * 1024 * 1024, int(cap) * 7 // 8)
    except Exception:
        return None  # fall back to the compiler default


def aspp_forward(x_nchw, params, rates, *, tile_h=8):
    """NCHW in, NCHW out (matching the PyTorch module)."""
    N, Cin, H, W = x_nchw.shape
    wb, sb, bb, wp, sp, bp, wproj, sproj, bproj = params
    n_rates = len(rates)
    n_branches = n_rates + 1
    Cout = wb.shape[-1]
    Cproj = wproj.shape[-1]

    if H % tile_h != 0:
        tile_h = H                       # TODO(synk): pad rows instead of falling back
    n_row_tiles = H // tile_h

    # NHWC, bf16 activations for the MXU.
    x = jnp.transpose(x_nchw, (0, 2, 3, 1)).astype(jnp.bfloat16)
    pad = max(rates)
    x_pad = jnp.pad(x, ((0, 0), (pad, pad), (pad, pad), (0, 0)))
    Hp, Wp = H + 2 * pad, W + 2 * pad

    # bf16 conv weights for the MXU; folded BN scale/bias stay f32.
    # wproj is reshaped to (n_branches, Cout, Cproj) so per-branch slices are
    # free leading-axis indexing (no sublane-offset slicing).
    wb_b = wb.astype(jnp.bfloat16)                                  # (nr,3,3,Cin,Cout)
    wp_b = wp.astype(jnp.bfloat16)                                  # (Cin, Cout)
    wproj_b = wproj.reshape(n_branches, Cout, Cproj).astype(jnp.bfloat16)
    sb_r = sb.reshape(n_rates, 1, Cout).astype(jnp.float32)
    bb_r = bb.reshape(n_rates, 1, Cout).astype(jnp.float32)
    sp_r = sp.reshape(1, Cout).astype(jnp.float32)
    bp_r = bp.reshape(1, Cout).astype(jnp.float32)
    sproj_r = sproj.reshape(1, Cproj).astype(jnp.float32)
    bproj_r = bproj.reshape(1, Cproj).astype(jnp.float32)

    def const_spec(arr):
        nd = arr.ndim
        return pl.BlockSpec(arr.shape, lambda n, r, _nd=nd: (0,) * _nd)

    kernel = functools.partial(_aspp_kernel, H=H, W=W, pad=pad,
                               rates=tuple(int(r) for r in rates),
                               tile_h=tile_h)

    # TODO(synk): for production DOLG sizes (Cin=1024, Cout=512, rates 6/12/18)
    # additionally tile Cout / the wproj K dimension into the grid (or stream
    # weight chunks from pl.ANY) so weights are not fully resident on v7x.
    out = pl.pallas_call(
        kernel,
        out_shape=jax.ShapeDtypeStruct((N, H, W, Cproj), jnp.float32),
        grid_spec=pltpu.PrefetchScalarGridSpec(
            num_scalar_prefetch=0,
            grid=(N, n_row_tiles),
            in_specs=[
                # Full padded image per batch element; block index is constant
                # across the row-tile axis so it stays resident (no re-DMA).
                pl.BlockSpec((None, Hp, Wp, Cin), lambda n, r: (n, 0, 0, 0)),
                const_spec(wb_b), const_spec(sb_r), const_spec(bb_r),
                const_spec(wp_b), const_spec(sp_r), const_spec(bp_r),
                const_spec(wproj_b), const_spec(sproj_r), const_spec(bproj_r),
            ],
            out_specs=pl.BlockSpec((None, tile_h, W, Cproj),
                                   lambda n, r: (n, r, 0, 0)),
        ),
        compiler_params=pltpu.CompilerParams(
            dimension_semantics=("parallel", "parallel"),
            vmem_limit_bytes=_vmem_limit_bytes()),
    )(x_pad, wb_b, sb_r, bb_r, wp_b, sp_r, bp_r, wproj_b, sproj_r, bproj_r)

    return jnp.transpose(out, (0, 3, 1, 2)).astype(x_nchw.dtype)


# ----------------------------- pure-JAX reference -----------------------------
def aspp_reference(x_nchw, raw, rates, eps=1e-5):
    x = jnp.transpose(x_nchw, (0, 2, 3, 1)).astype(jnp.float32)   # NHWC

    def bn_relu(y, g, b, m, v):
        return jnp.maximum((y - m) / jnp.sqrt(v + eps) * g + b, 0.0)

    res = []
    for (w, g, b, m, v), r in zip(raw['branches'], rates):
        y = jax.lax.conv_general_dilated(
            x, w, window_strides=(1, 1), padding=[(r, r), (r, r)],
            rhs_dilation=(r, r),
            dimension_numbers=('NHWC', 'HWIO', 'NHWC'))
        res.append(bn_relu(y, g, b, m, v))

    wp, g, b, m, v = raw['pool']
    pooled = jnp.mean(x, axis=(1, 2), keepdims=True)               # (N,1,1,Cin)
    y = bn_relu(jnp.einsum('nhwc,co->nhwo', pooled, wp), g, b, m, v)
    res.append(jnp.broadcast_to(y, x.shape[:3] + (wp.shape[1],)))

    cat = jnp.concatenate(res, axis=-1)
    wproj, g, b, m, v = raw['proj']
    y = bn_relu(jnp.einsum('nhwc,co->nhwo', cat, wproj), g, b, m, v)
    return jnp.transpose(y, (0, 3, 1, 2))


if __name__ == "__main__":
    # Small shapes consistent with the module (scaled-down channels/rates).
    N, Cin, H, W = 2, 8, 16, 16      # module default in_channels=1024
    Cout = 4                          # module default out_channels=512
    rates = (1, 2, 3)                 # module default atrous_rates=[6,12,18]
    eps = 1e-5                        # PyTorch BatchNorm2d default

    keys = iter(jax.random.split(jax.random.PRNGKey(0), 32))

    def bn_params(c):
        g = 1.0 + 0.1 * jax.random.normal(next(keys), (c,), jnp.float32)
        b = 0.1 * jax.random.normal(next(keys), (c,), jnp.float32)
        m = 0.1 * jax.random.normal(next(keys), (c,), jnp.float32)
        v = jax.random.uniform(next(keys), (c,), jnp.float32, 0.5, 1.5)
        return g, b, m, v

    raw = {'branches': [], 'pool': None, 'proj': None}
    for _ in rates:
        w = 0.1 * jax.random.normal(next(keys), (3, 3, Cin, Cout), jnp.float32)
        raw['branches'].append((w,) + bn_params(Cout))
    wp = 0.1 * jax.random.normal(next(keys), (Cin, Cout), jnp.float32)
    raw['pool'] = (wp,) + bn_params(Cout)
    n_branches = len(rates) + 1
    wproj = 0.1 * jax.random.normal(next(keys), (n_branches * Cout, Cin),
                                    jnp.float32)
    raw['proj'] = (wproj,) + bn_params(Cin)

    x = jax.random.normal(next(keys), (N, Cin, H, W), jnp.float32)

    # Fold inference-mode BatchNorm into per-channel scale/bias.
    def fold(g, b, m, v):
        s = g / jnp.sqrt(v + eps)
        return s, b - m * s

    wb = jnp.stack([p[0] for p in raw['branches']])          # (3,3,3,Cin,Cout)
    folded = [fold(*p[1:]) for p in raw['branches']]
    sb = jnp.stack([s for s, _ in folded])                   # (3, Cout)
    bb = jnp.stack([b for _, b in folded])                   # (3, Cout)
    sp, bp = fold(*raw['pool'][1:])                          # (Cout,)
    sproj, bproj = fold(*raw['proj'][1:])                    # (Cin,)

    params = (wb, sb, bb, wp, sp, bp, wproj, sproj, bproj)

    out = aspp_forward(x, params, rates)
    out = jax.block_until_ready(out)
    assert out.shape == (N, Cin, H, W), out.shape

    ref = aspp_reference(x, raw, rates, eps)
    max_err = float(jnp.max(jnp.abs(out - ref)))
    # bf16 MXU path vs f32 reference -> slightly looser tolerance.
    assert jnp.allclose(out, ref, atol=5e-2, rtol=5e-2), max_err

    print("KERNEL_OK")
</pallas_src>

<mosaic_0001>
module attributes {stable_mosaic.version = 11 : i64} {
  func.func @_aspp_kernel(%arg0: i32, %arg1: i32, %arg2: memref<1x22x22x8xbf16, #tpu.memory_space<vmem>>, %arg3: memref<3x3x3x8x4xbf16, #tpu.memory_space<vmem>>, %arg4: memref<3x1x4xf32, #tpu.memory_space<vmem>>, %arg5: memref<3x1x4xf32, #tpu.memory_space<vmem>>, %arg6: memref<8x4xbf16, #tpu.memory_space<vmem>>, %arg7: memref<1x4xf32, #tpu.memory_space<vmem>>, %arg8: memref<1x4xf32, #tpu.memory_space<vmem>>, %arg9: memref<4x4x8xbf16, #tpu.memory_space<vmem>>, %arg10: memref<1x8xf32, #tpu.memory_space<vmem>>, %arg11: memref<1x8xf32, #tpu.memory_space<vmem>>, %arg12: memref<1x8x16x8xf32, #tpu.memory_space<vmem>>) attributes {dimension_semantics = [#tpu.dimension_semantics<parallel>, #tpu.dimension_semantics<parallel>], iteration_bounds = array<i64: 2, 2>, scalar_prefetch = 0 : i64, scratch_operands = 0 : i64, tpu.core_type = #tpu.core_type<tc>, window_params = [{transform_indices = @transform_0, window_bounds = array<i64: 1, 22, 22, 8>}, {pipeline_mode = #tpu.pipeline_mode<synchronous>, transform_indices = @transform_1, window_bounds = array<i64: 3, 3, 3, 8, 4>}, {pipeline_mode = #tpu.pipeline_mode<synchronous>, transform_indices = @transform_2, window_bounds = array<i64: 3, 1, 4>}, {pipeline_mode = #tpu.pipeline_mode<synchronous>, transform_indices = @transform_3, window_bounds = array<i64: 3, 1, 4>}, {pipeline_mode = #tpu.pipeline_mode<synchronous>, transform_indices = @transform_4, window_bounds = array<i64: 8, 4>}, {pipeline_mode = #tpu.pipeline_mode<synchronous>, transform_indices = @transform_5, window_bounds = array<i64: 1, 4>}, {pipeline_mode = #tpu.pipeline_mode<synchronous>, transform_indices = @transform_6, window_bounds = array<i64: 1, 4>}, {pipeline_mode = #tpu.pipeline_mode<synchronous>, transform_indices = @transform_7, window_bounds = array<i64: 4, 4, 8>}, {pipeline_mode = #tpu.pipeline_mode<synchronous>, transform_indices = @transform_8, window_bounds = array<i64: 1, 8>}, {pipeline_mode = #tpu.pipeline_mode<synchronous>, transform_indices = @transform_9, window_bounds = array<i64: 1, 8>}, {transform_indices = @transform_10, window_bounds = array<i64: 1, 8, 16, 8>}]} {
    %c8_i32 = arith.constant 8 : i32
    %0 = arith.muli %arg1, %c8_i32 : i32
    %1 = tpu.assume_multiple %0, 8 : i32
    %c0 = arith.constant 0 : index
    %c0_0 = arith.constant 0 : index
    %c0_1 = arith.constant 0 : index
    %c0_2 = arith.constant 0 : index
    %2 = vector.load %arg2[%c0, %c0_0, %c0_1, %c0_2] : memref<1x22x22x8xbf16, #tpu.memory_space<vmem>>, vector<1x22x22x8xbf16>
    %3 = vector.shape_cast %2 : vector<1x22x22x8xbf16> to vector<22x22x8xbf16>
    %4 = arith.extf %3 : vector<22x22x8xbf16> to vector<22x22x8xf32>
    %cst = arith.constant dense<0.000000e+00> : vector<22x8xf32>
    %5 = vector.multi_reduction <add>, %4, %cst [0] : vector<22x22x8xf32> to vector<22x8xf32>
    %cst_3 = arith.constant dense<0.000000e+00> : vector<8xf32>
    %6 = vector.multi_reduction <add>, %5, %cst_3 [0] : vector<22x8xf32> to vector<8xf32>
    %7 = vector.shape_cast %6 : vector<8xf32> to vector<1x8xf32>
    %cst_4 = arith.constant 3.906250e-03 : f32
    %8 = vector.broadcast %cst_4 : f32 to vector<1x8xf32>
    %9 = arith.mulf %7, %8 : vector<1x8xf32>
    %10 = arith.truncf %9 : vector<1x8xf32> to vector<1x8xbf16>
    %c0_5 = arith.constant 0 : index
    %c0_6 = arith.constant 0 : index
    %11 = vector.load %arg6[%c0_5, %c0_6] : memref<8x4xbf16, #tpu.memory_space<vmem>>, vector<8x4xbf16>
    %cst_7 = arith.constant dense<0.000000e+00> : vector<1x4xf32>
    %12 = tpu.matmul %10, %11, %cst_7 {dimension_numbers = #tpu.dot_dimension_numbers<[1], [0], [0], [1], [0, 0, 1, 1], [], []>} : vector<1x8xbf16>, vector<8x4xbf16>, vector<1x4xf32> -> vector<1x4xf32>
    %c0_8 = arith.constant 0 : index
    %c0_9 = arith.constant 0 : index
    %13 = vector.load %arg7[%c0_8, %c0_9] : memref<1x4xf32, #tpu.memory_space<vmem>>, vector<1x4xf32>
    %14 = arith.mulf %12, %13 : vector<1x4xf32>
    %c0_10 = arith.constant 0 : index
    %c0_11 = arith.constant 0 : index
    %15 = vector.load %arg8[%c0_10, %c0_11] : memref<1x4xf32, #tpu.memory_space<vmem>>, vector<1x4xf32>
    %16 = arith.addf %14, %15 : vector<1x4xf32>
    %cst_12 = arith.constant 0.000000e+00 : f32
    %17 = vector.broadcast %cst_12 : f32 to vector<1x4xf32>
    %18 = arith.maximumf %16, %17 : vector<1x4xf32>
    %19 = arith.truncf %18 : vector<1x4xf32> to vector<1x4xbf16>
    %c3 = arith.constant 3 : index
    %c0_13 = arith.constant 0 : index
    %c0_14 = arith.constant 0 : index
    %20 = vector.load %arg9[%c3, %c0_13, %c0_14] : memref<4x4x8xbf16, #tpu.memory_space<vmem>>, vector<1x4x8xbf16>
    %21 = vector.shape_cast %20 : vector<1x4x8xbf16> to vector<4x8xbf16>
    %cst_15 = arith.constant dense<0.000000e+00> : vector<1x8xf32>
    %22 = tpu.matmul %19, %21, %cst_15 {dimension_numbers = #tpu.dot_dimension_numbers<[1], [0], [0], [1], [0, 0, 1, 1], [], []>} : vector<1x4xbf16>, vector<4x8xbf16>, vector<1x8xf32> -> vector<1x8xf32>
    %c0_16 = arith.constant 0 : index
    %23 = arith.index_cast %1 : i32 to index
    %c0_17 = arith.constant 0 : index
    %c0_18 = arith.constant 0 : index
    %24 = vector.load %arg2[%c0_16, %23, %c0_17, %c0_18] : memref<1x22x22x8xbf16, #tpu.memory_space<vmem>>, vector<1x14x22x8xbf16>
    %25 = vector.shape_cast %24 : vector<1x14x22x8xbf16> to vector<14x22x8xbf16>
    %26 = vector.extract_strided_slice %25 {offsets = [0, 0, 0], sizes = [14, 16, 8], strides = [1, 1, 1]} : vector<14x22x8xbf16> to vector<14x16x8xbf16>
    %27 = vector.extract_strided_slice %25 {offsets = [0, 1, 0], sizes = [14, 16, 8], strides = [1, 1, 1]} : vector<14x22x8xbf16> to vector<14x16x8xbf16>
    %28 = vector.extract_strided_slice %25 {offsets = [0, 2, 0], sizes = [14, 16, 8], strides = [1, 1, 1]} : vector<14x22x8xbf16> to vector<14x16x8xbf16>
    %29 = vector.extract_strided_slice %25 {offsets = [0, 3, 0], sizes = [14, 16, 8], strides = [1, 1, 1]} : vector<14x22x8xbf16> to vector<14x16x8xbf16>
    %30 = vector.extract_strided_slice %25 {offsets = [0, 4, 0], sizes = [14, 16, 8], strides = [1, 1, 1]} : vector<14x22x8xbf16> to vector<14x16x8xbf16>
    %31 = vector.extract_strided_slice %25 {offsets = [0, 5, 0], sizes = [14, 16, 8], strides = [1, 1, 1]} : vector<14x22x8xbf16> to vector<14x16x8xbf16>
    %32 = vector.extract_strided_slice %25 {offsets = [0, 6, 0], sizes = [14, 16, 8], strides = [1, 1, 1]} : vector<14x22x8xbf16> to vector<14x16x8xbf16>
    %cst_19 = arith.constant 0.000000e+00 : f32
    %33 = vector.broadcast %cst_19 : f32 to vector<128x8xf32>
    %cst_20 = arith.constant 0.000000e+00 : f32
    %34 = vector.broadcast %cst_20 : f32 to vector<128x4xf32>
    %35 = vector.extract_strided_slice %28 {offsets = [2, 0, 0], sizes = [8, 16, 8], strides = [1, 1, 1]} : vector<14x16x8xbf16> to vector<8x16x8xbf16>
    %36 = vector.shape_cast %35 : vector<8x16x8xbf16> to vector<128x8xbf16>
    %c0_21 = arith.constant 0 : index
    %c0_22 = arith.constant 0 : index
    %c0_23 = arith.constant 0 : index
    %c0_24 = arith.constant 0 : index
    %c0_25 = arith.constant 0 : index
    %37 = vector.load %arg3[%c0_21, %c0_22, %c0_23, %c0_24, %c0_25] : memref<3x3x3x8x4xbf16, #tpu.memory_space<vmem>>, vector<1x1x1x8x4xbf16>
    %38 = vector.shape_cast %37 : vector<1x1x1x8x4xbf16> to vector<8x4xbf16>
    %cst_26 = arith.constant dense<0.000000e+00> : vector<128x4xf32>
    %39 = tpu.matmul %36, %38, %cst_26 {dimension_numbers = #tpu.dot_dimension_numbers<[1], [0], [0], [1], [0, 0, 1, 1], [], []>} : vector<128x8xbf16>, vector<8x4xbf16>, vector<128x4xf32> -> vector<128x4xf32>
    %40 = arith.addf %34, %39 : vector<128x4xf32>
    %41 = vector.extract_strided_slice %29 {offsets = [2, 0, 0], sizes = [8, 16, 8], strides = [1, 1, 1]} : vector<14x16x8xbf16> to vector<8x16x8xbf16>
    %42 = vector.shape_cast %41 : vector<8x16x8xbf16> to vector<128x8xbf16>
    %c0_27 = arith.constant 0 : index
    %c0_28 = arith.constant 0 : index
    %c1 = arith.constant 1 : index
    %c0_29 = arith.constant 0 : index
    %c0_30 = arith.constant 0 : index
    %43 = vector.load %arg3[%c0_27, %c0_28, %c1, %c0_29, %c0_30] : memref<3x3x3x8x4xbf16, #tpu.memory_space<vmem>>, vector<1x1x1x8x4xbf16>
    %44 = vector.shape_cast %43 : vector<1x1x1x8x4xbf16> to vector<8x4xbf16>
    %cst_31 = arith.constant dense<0.000000e+00> : vector<128x4xf32>
    %45 = tpu.matmul %42, %44, %cst_31 {dimension_numbers = #tpu.dot_dimension_numbers<[1], [0], [0], [1], [0, 0, 1, 1], [], []>} : vector<128x8xbf16>, vector<8x4xbf16>, vector<128x4xf32> -> vector<128x4xf32>
    %46 = arith.addf %40, %45 : vector<128x4xf32>
    %47 = vector.extract_strided_slice %30 {offsets = [2, 0, 0], sizes = [8, 16, 8], strides = [1, 1, 1]} : vector<14x16x8xbf16> to vector<8x16x8xbf16>
    %48 = vector.shape_cast %47 : vector<8x16x8xbf16> to vector<128x8xbf16>
    %c0_32 = arith.constant 0 : index
    %c0_33 = arith.constant 0 : index
    %c2 = arith.constant 2 : index
    %c0_34 = arith.constant 0 : index
    %c0_35 = arith.constant 0 : index
    %49 = vector.load %arg3[%c0_32, %c0_33, %c2, %c0_34, %c0_35] : memref<3x3x3x8x4xbf16, #tpu.memory_space<vmem>>, vector<1x1x1x8x4xbf16>
    %50 = vector.shape_cast %49 : vector<1x1x1x8x4xbf16> to vector<8x4xbf16>
    %cst_36 = arith.constant dense<0.000000e+00> : vector<128x4xf32>
    %51 = tpu.matmul %48, %50, %cst_36 {dimension_numbers = #tpu.dot_dimension_numbers<[1], [0], [0], [1], [0, 0, 1, 1], [], []>} : vector<128x8xbf16>, vector<8x4xbf16>, vector<128x4xf32> -> vector<128x4xf32>
    %52 = arith.addf %46, %51 : vector<128x4xf32>
    %53 = vector.extract_strided_slice %28 {offsets = [3, 0, 0], sizes = [8, 16, 8], strides = [1, 1, 1]} : vector<14x16x8xbf16> to vector<8x16x8xbf16>
    %54 = vector.shape_cast %53 : vector<8x16x8xbf16> to vector<128x8xbf16>
    %c0_37 = arith.constant 0 : index
    %c1_38 = arith.constant 1 : index
    %c0_39 = arith.constant 0 : index
    %c0_40 = arith.constant 0 : index
    %c0_41 = arith.constant 0 : index
    %55 = vector.load %arg3[%c0_37, %c1_38, %c0_39, %c0_40, %c0_41] : memref<3x3x3x8x4xbf16, #tpu.memory_space<vmem>>, vector<1x1x1x8x4xbf16>
    %56 = vector.shape_cast %55 : vector<1x1x1x8x4xbf16> to vector<8x4xbf16>
    %cst_42 = arith.constant dense<0.000000e+00> : vector<128x4xf32>
    %57 = tpu.matmul %54, %56, %cst_42 {dimension_numbers = #tpu.dot_dimension_numbers<[1], [0], [0], [1], [0, 0, 1, 1], [], []>} : vector<128x8xbf16>, vector<8x4xbf16>, vector<128x4xf32> -> vector<128x4xf32>
    %58 = arith.addf %52, %57 : vector<128x4xf32>
    %59 = vector.extract_strided_slice %29 {offsets = [3, 0, 0], sizes = [8, 16, 8], strides = [1, 1, 1]} : vector<14x16x8xbf16> to vector<8x16x8xbf16>
    %60 = vector.shape_cast %59 : vector<8x16x8xbf16> to vector<128x8xbf16>
    %c0_43 = arith.constant 0 : index
    %c1_44 = arith.constant 1 : index
    %c1_45 = arith.constant 1 : index
    %c0_46 = arith.constant 0 : index
    %c0_47 = arith.constant 0 : index
    %61 = vector.load %arg3[%c0_43, %c1_44, %c1_45, %c0_46, %c0_47] : memref<3x3x3x8x4xbf16, #tpu.memory_space<vmem>>, vector<1x1x1x8x4xbf16>
    %62 = vector.shape_cast %61 : vector<1x1x1x8x4xbf16> to vector<8x4xbf16>
    %cst_48 = arith.constant dense<0.000000e+00> : vector<128x4xf32>
    %63 = tpu.matmul %60, %62, %cst_48 {dimension_numbers = #tpu.dot_dimension_numbers<[1], [0], [0], [1], [0, 0, 1, 1], [], []>} : vector<128x8xbf16>, vector<8x4xbf16>, vector<128x4xf32> -> vector<128x4xf32>
    %64 = arith.addf %58, %63 : vector<128x4xf32>
    %65 = vector.extract_strided_slice %30 {offsets = [3, 0, 0], sizes = [8, 16, 8], strides = [1, 1, 1]} : vector<14x16x8xbf16> to vector<8x16x8xbf16>
    %66 = vector.shape_cast %65 : vector<8x16x8xbf16> to vector<128x8xbf16>
    %c0_49 = arith.constant 0 : index
    %c1_50 = arith.constant 1 : index
    %c2_51 = arith.constant 2 : index
    %c0_52 = arith.constant 0 : index
    %c0_53 = arith.constant 0 : index
    %67 = vector.load %arg3[%c0_49, %c1_50, %c2_51, %c0_52, %c0_53] : memref<3x3x3x8x4xbf16, #tpu.memory_space<vmem>>, vector<1x1x1x8x4xbf16>
    %68 = vector.shape_cast %67 : vector<1x1x1x8x4xbf16> to vector<8x4xbf16>
    %cst_54 = arith.constant dense<0.000000e+00> : vector<128x4xf32>
    %69 = tpu.matmul %66, %68, %cst_54 {dimension_numbers = #tpu.dot_dimension_numbers<[1], [0], [0], [1], [0, 0, 1, 1], [], []>} : vector<128x8xbf16>, vector<8x4xbf16>, vector<128x4xf32> -> vector<128x4xf32>
    %70 = arith.addf %64, %69 : vector<128x4xf32>
    %71 = vector.extract_strided_slice %28 {offsets = [4, 0, 0], sizes = [8, 16, 8], strides = [1, 1, 1]} : vector<14x16x8xbf16> to vector<8x16x8xbf16>
    %72 = vector.shape_cast %71 : vector<8x16x8xbf16> to vector<128x8xbf16>
    %c0_55 = arith.constant 0 : index
    %c2_56 = arith.constant 2 : index
    %c0_57 = arith.constant 0 : index
    %c0_58 = arith.constant 0 : index
    %c0_59 = arith.constant 0 : index
    %73 = vector.load %arg3[%c0_55, %c2_56, %c0_57, %c0_58, %c0_59] : memref<3x3x3x8x4xbf16, #tpu.memory_space<vmem>>, vector<1x1x1x8x4xbf16>
    %74 = vector.shape_cast %73 : vector<1x1x1x8x4xbf16> to vector<8x4xbf16>
    %cst_60 = arith.constant dense<0.000000e+00> : vector<128x4xf32>
    %75 = tpu.matmul %72, %74, %cst_60 {dimension_numbers = #tpu.dot_dimension_numbers<[1], [0], [0], [1], [0, 0, 1, 1], [], []>} : vector<128x8xbf16>, vector<8x4xbf16>, vector<128x4xf32> -> vector<128x4xf32>
    %76 = arith.addf %70, %75 : vector<128x4xf32>
    %77 = vector.extract_strided_slice %29 {offsets = [4, 0, 0], sizes = [8, 16, 8], strides = [1, 1, 1]} : vector<14x16x8xbf16> to vector<8x16x8xbf16>
    %78 = vector.shape_cast %77 : vector<8x16x8xbf16> to vector<128x8xbf16>
    %c0_61 = arith.constant 0 : index
    %c2_62 = arith.constant 2 : index
    %c1_63 = arith.constant 1 : index
    %c0_64 = arith.constant 0 : index
    %c0_65 = arith.constant 0 : index
    %79 = vector.load %arg3[%c0_61, %c2_62, %c1_63, %c0_64, %c0_65] : memref<3x3x3x8x4xbf16, #tpu.memory_space<vmem>>, vector<1x1x1x8x4xbf16>
    %80 = vector.shape_cast %79 : vector<1x1x1x8x4xbf16> to vector<8x4xbf16>
    %cst_66 = arith.constant dense<0.000000e+00> : vector<128x4xf32>
    %81 = tpu.matmul %78, %80, %cst_66 {dimension_numbers = #tpu.dot_dimension_numbers<[1], [0], [0], [1], [0, 0, 1, 1], [], []>} : vector<128x8xbf16>, vector<8x4xbf16>, vector<128x4xf32> -> vector<128x4xf32>
    %82 = arith.addf %76, %81 : vector<128x4xf32>
    %83 = vector.extract_strided_slice %30 {offsets = [4, 0, 0], sizes = [8, 16, 8], strides = [1, 1, 1]} : vector<14x16x8xbf16> to vector<8x16x8xbf16>
    %84 = vector.shape_cast %83 : vector<8x16x8xbf16> to vector<128x8xbf16>
    %c0_67 = arith.constant 0 : index
    %c2_68 = arith.constant 2 : index
    %c2_69 = arith.constant 2 : index
    %c0_70 = arith.constant 0 : index
    %c0_71 = arith.constant 0 : index
    %85 = vector.load %arg3[%c0_67, %c2_68, %c2_69, %c0_70, %c0_71] : memref<3x3x3x8x4xbf16, #tpu.memory_space<vmem>>, vector<1x1x1x8x4xbf16>
    %86 = vector.shape_cast %85 : vector<1x1x1x8x4xbf16> to vector<8x4xbf16>
    %cst_72 = arith.constant dense<0.000000e+00> : vector<128x4xf32>
    %87 = tpu.matmul %84, %86, %cst_72 {dimension_numbers = #tpu.dot_dimension_numbers<[1], [0], [0], [1], [0, 0, 1, 1], [], []>} : vector<128x8xbf16>, vector<8x4xbf16>, vector<128x4xf32> -> vector<128x4xf32>
    %88 = arith.addf %82, %87 : vector<128x4xf32>
    %c0_73 = arith.constant 0 : index
    %c0_74 = arith.constant 0 : index
    %c0_75 = arith.constant 0 : index
    %89 = vector.load %arg4[%c0_73, %c0_74, %c0_75] : memref<3x1x4xf32, #tpu.memory_space<vmem>>, vector<1x1x4xf32>
    %90 = vector.shape_cast %89 : vector<1x1x4xf32> to vector<1x4xf32>
    %91 = vector.broadcast %90 : vector<1x4xf32> to vector<128x4xf32>
    %92 = arith.mulf %88, %91 : vector<128x4xf32>
    %c0_76 = arith.constant 0 : index
    %c0_77 = arith.constant 0 : index
    %c0_78 = arith.constant 0 : index
    %93 = vector.load %arg5[%c0_76, %c0_77, %c0_78] : memref<3x1x4xf32, #tpu.memory_space<vmem>>, vector<1x1x4xf32>
    %94 = vector.shape_cast %93 : vector<1x1x4xf32> to vector<1x4xf32>
    %95 = vector.broadcast %94 : vector<1x4xf32> to vector<128x4xf32>
    %96 = arith.addf %92, %95 : vector<128x4xf32>
    %cst_79 = arith.constant 0.000000e+00 : f32
    %97 = vector.broadcast %cst_79 : f32 to vector<128x4xf32>
    %98 = arith.maximumf %96, %97 : vector<128x4xf32>
    %99 = arith.truncf %98 : vector<128x4xf32> to vector<128x4xbf16>
    %c0_80 = arith.constant 0 : index
    %c0_81 = arith.constant 0 : index
    %c0_82 = arith.constant 0 : index
    %100 = vector.load %arg9[%c0_80, %c0_81, %c0_82] : memref<4x4x8xbf16, #tpu.memory_space<vmem>>, vector<1x4x8xbf16>
    %101 = vector.shape_cast %100 : vector<1x4x8xbf16> to vector<4x8xbf16>
    %cst_83 = arith.constant dense<0.000000e+00> : vector<128x8xf32>
    %102 = tpu.matmul %99, %101, %cst_83 {dimension_numbers = #tpu.dot_dimension_numbers<[1], [0], [0], [1], [0, 0, 1, 1], [], []>} : vector<128x4xbf16>, vector<4x8xbf16>, vector<128x8xf32> -> vector<128x8xf32>
    %103 = arith.addf %33, %102 : vector<128x8xf32>
    %cst_84 = arith.constant 0.000000e+00 : f32
    %104 = vector.broadcast %cst_84 : f32 to vector<128x4xf32>
    %105 = vector.extract_strided_slice %27 {offsets = [1, 0, 0], sizes = [8, 16, 8], strides = [1, 1, 1]} : vector<14x16x8xbf16> to vector<8x16x8xbf16>
    %106 = vector.shape_cast %105 : vector<8x16x8xbf16> to vector<128x8xbf16>
    %c1_85 = arith.constant 1 : index
    %c0_86 = arith.constant 0 : index
    %c0_87 = arith.constant 0 : index
    %c0_88 = arith.constant 0 : index
    %c0_89 = arith.constant 0 : index
    %107 = vector.load %arg3[%c1_85, %c0_86, %c0_87, %c0_88, %c0_89] : memref<3x3x3x8x4xbf16, #tpu.memory_space<vmem>>, vector<1x1x1x8x4xbf16>
    %108 = vector.shape_cast %107 : vector<1x1x1x8x4xbf16> to vector<8x4xbf16>
    %cst_90 = arith.constant dense<0.000000e+00> : vector<128x4xf32>
    %109 = tpu.matmul %106, %108, %cst_90 {dimension_numbers = #tpu.dot_dimension_numbers<[1], [0], [0], [1], [0, 0, 1, 1], [], []>} : vector<128x8xbf16>, vector<8x4xbf16>, vector<128x4xf32> -> vector<128x4xf32>
    %110 = arith.addf %104, %109 : vector<128x4xf32>
    %111 = vector.extract_strided_slice %29 {offsets = [1, 0, 0], sizes = [8, 16, 8], strides = [1, 1, 1]} : vector<14x16x8xbf16> to vector<8x16x8xbf16>
    %112 = vector.shape_cast %111 : vector<8x16x8xbf16> to vector<128x8xbf16>
    %c1_91 = arith.constant 1 : index
    %c0_92 = arith.constant 0 : index
    %c1_93 = arith.constant 1 : index
    %c0_94 = arith.constant 0 : index
    %c0_95 = arith.constant 0 : index
    %113 = vector.load %arg3[%c1_91, %c0_92, %c1_93, %c0_94, %c0_95] : memref<3x3x3x8x4xbf16, #tpu.memory_space<vmem>>, vector<1x1x1x8x4xbf16>
    %114 = vector.shape_cast %113 : vector<1x1x1x8x4xbf16> to vector<8x4xbf16>
    %cst_96 = arith.constant dense<0.000000e+00> : vector<128x4xf32>
    %115 = tpu.matmul %112, %114, %cst_96 {dimension_numbers = #tpu.dot_dimension_numbers<[1], [0], [0], [1], [0, 0, 1, 1], [], []>} : vector<128x8xbf16>, vector<8x4xbf16>, vector<128x4xf32> -> vector<128x4xf32>
    %116 = arith.addf %110, %115 : vector<128x4xf32>
    %117 = vector.extract_strided_slice %31 {offsets = [1, 0, 0], sizes = [8, 16, 8], strides = [1, 1, 1]} : vector<14x16x8xbf16> to vector<8x16x8xbf16>
    %118 = vector.shape_cast %117 : vector<8x16x8xbf16> to vector<128x8xbf16>
    %c1_97 = arith.constant 1 : index
    %c0_98 = arith.constant 0 : index
    %c2_99 = arith.constant 2 : index
    %c0_100 = arith.constant 0 : index
    %c0_101 = arith.constant 0 : index
    %119 = vector.load %arg3[%c1_97, %c0_98, %c2_99, %c0_100, %c0_101] : memref<3x3x3x8x4xbf16, #tpu.memory_space<vmem>>, vector<1x1x1x8x4xbf16>
    %120 = vector.shape_cast %119 : vector<1x1x1x8x4xbf16> to vector<8x4xbf16>
    %cst_102 = arith.constant dense<0.000000e+00> : vector<128x4xf32>
    %121 = tpu.matmul %118, %120, %cst_102 {dimension_numbers = #tpu.dot_dimension_numbers<[1], [0], [0], [1], [0, 0, 1, 1], [], []>} : vector<128x8xbf16>, vector<8x4xbf16>, vector<128x4xf32> -> vector<128x4xf32>
    %122 = arith.addf %116, %121 : vector<128x4xf32>
    %123 = vector.extract_strided_slice %27 {offsets = [3, 0, 0], sizes = [8, 16, 8], strides = [1, 1, 1]} : vector<14x16x8xbf16> to vector<8x16x8xbf16>
    %124 = vector.shape_cast %123 : vector<8x16x8xbf16> to vector<128x8xbf16>
    %c1_103 = arith.constant 1 : index
    %c1_104 = arith.constant 1 : index
    %c0_105 = arith.constant 0 : index
    %c0_106 = arith.constant 0 : index
    %c0_107 = arith.constant 0 : index
    %125 = vector.load %arg3[%c1_103, %c1_104, %c0_105, %c0_106, %c0_107] : memref<3x3x3x8x4xbf16, #tpu.memory_space<vmem>>, vector<1x1x1x8x4xbf16>
    %126 = vector.shape_cast %125 : vector<1x1x1x8x4xbf16> to vector<8x4xbf16>
    %cst_108 = arith.constant dense<0.000000e+00> : vector<128x4xf32>
    %127 = tpu.matmul %124, %126, %cst_108 {dimension_numbers = #tpu.dot_dimension_numbers<[1], [0], [0], [1], [0, 0, 1, 1], [], []>} : vector<128x8xbf16>, vector<8x4xbf16>, vector<128x4xf32> -> vector<128x4xf32>
    %128 = arith.addf %122, %127 : vector<128x4xf32>
    %129 = vector.extract_strided_slice %29 {offsets = [3, 0, 0], sizes = [8, 16, 8], strides = [1, 1, 1]} : vector<14x16x8xbf16> to vector<8x16x8xbf16>
    %130 = vector.shape_cast %129 : vector<8x16x8xbf16> to vector<128x8xbf16>
    %c1_109 = arith.constant 1 : index
    %c1_110 = arith.constant 1 : index
    %c1_111 = arith.constant 1 : index
    %c0_112 = arith.constant 0 : index
    %c0_113 = arith.constant 0 : index
    %131 = vector.load %arg3[%c1_109, %c1_110, %c1_111, %c0_112, %c0_113] : memref<3x3x3x8x4xbf16, #tpu.memory_space<vmem>>, vector<1x1x1x8x4xbf16>
    %132 = vector.shape_cast %131 : vector<1x1x1x8x4xbf16> to vector<8x4xbf16>
    %cst_114 = arith.constant dense<0.000000e+00> : vector<128x4xf32>
    %133 = tpu.matmul %130, %132, %cst_114 {dimension_numbers = #tpu.dot_dimension_numbers<[1], [0], [0], [1], [0, 0, 1, 1], [], []>} : vector<128x8xbf16>, vector<8x4xbf16>, vector<128x4xf32> -> vector<128x4xf32>
    %134 = arith.addf %128, %133 : vector<128x4xf32>
    %135 = vector.extract_strided_slice %31 {offsets = [3, 0, 0], sizes = [8, 16, 8], strides = [1, 1, 1]} : vector<14x16x8xbf16> to vector<8x16x8xbf16>
    %136 = vector.shape_cast %135 : vector<8x16x8xbf16> to vector<128x8xbf16>
    %c1_115 = arith.constant 1 : index
    %c1_116 = arith.constant 1 : index
    %c2_117 = arith.constant 2 : index
    %c0_118 = arith.constant 0 : index
    %c0_119 = arith.constant 0 : index
    %137 = vector.load %arg3[%c1_115, %c1_116, %c2_117, %c0_118, %c0_119] : memref<3x3x3x8x4xbf16, #tpu.memory_space<vmem>>, vector<1x1x1x8x4xbf16>
    %138 = vector.shape_cast %137 : vector<1x1x1x8x4xbf16> to vector<8x4xbf16>
    %cst_120 = arith.constant dense<0.000000e+00> : vector<128x4xf32>
    %139 = tpu.matmul %136, %138, %cst_120 {dimension_numbers = #tpu.dot_dimension_numbers<[1], [0], [0], [1], [0, 0, 1, 1], [], []>} : vector<128x8xbf16>, vector<8x4xbf16>, vector<128x4xf32> -> vector<128x4xf32>
    %140 = arith.addf %134, %139 : vector<128x4xf32>
    %141 = vector.extract_strided_slice %27 {offsets = [5, 0, 0], sizes = [8, 16, 8], strides = [1, 1, 1]} : vector<14x16x8xbf16> to vector<8x16x8xbf16>
    %142 = vector.shape_cast %141 : vector<8x16x8xbf16> to vector<128x8xbf16>
    %c1_121 = arith.constant 1 : index
    %c2_122 = arith.constant 2 : index
    %c0_123 = arith.constant 0 : index
    %c0_124 = arith.constant 0 : index
    %c0_125 = arith.constant 0 : index
    %143 = vector.load %arg3[%c1_121, %c2_122, %c0_123, %c0_124, %c0_125] : memref<3x3x3x8x4xbf16, #tpu.memory_space<vmem>>, vector<1x1x1x8x4xbf16>
    %144 = vector.shape_cast %143 : vector<1x1x1x8x4xbf16> to vector<8x4xbf16>
    %cst_126 = arith.constant dense<0.000000e+00> : vector<128x4xf32>
    %145 = tpu.matmul %142, %144, %cst_126 {dimension_numbers = #tpu.dot_dimension_numbers<[1], [0], [0], [1], [0, 0, 1, 1], [], []>} : vector<128x8xbf16>, vector<8x4xbf16>, vector<128x4xf32> -> vector<128x4xf32>
    %146 = arith.addf %140, %145 : vector<128x4xf32>
    %147 = vector.extract_strided_slice %29 {offsets = [5, 0, 0], sizes = [8, 16, 8], strides = [1, 1, 1]} : vector<14x16x8xbf16> to vector<8x16x8xbf16>
    %148 = vector.shape_cast %147 : vector<8x16x8xbf16> to vector<128x8xbf16>
    %c1_127 = arith.constant 1 : index
    %c2_128 = arith.constant 2 : index
    %c1_129 = arith.constant 1 : index
    %c0_130 = arith.constant 0 : index
    %c0_131 = arith.constant 0 : index
    %149 = vector.load %arg3[%c1_127, %c2_128, %c1_129, %c0_130, %c0_131] : memref<3x3x3x8x4xbf16, #tpu.memory_space<vmem>>, vector<1x1x1x8x4xbf16>
    %150 = vector.shape_cast %149 : vector<1x1x1x8x4xbf16> to vector<8x4xbf16>
    %cst_132 = arith.constant dense<0.000000e+00> : vector<128x4xf32>
    %151 = tpu.matmul %148, %150, %cst_132 {dimension_numbers = #tpu.dot_dimension_numbers<[1], [0], [0], [1], [0, 0, 1, 1], [], []>} : vector<128x8xbf16>, vector<8x4xbf16>, vector<128x4xf32> -> vector<128x4xf32>
    %152 = arith.addf %146, %151 : vector<128x4xf32>
    %153 = vector.extract_strided_slice %31 {offsets = [5, 0, 0], sizes = [8, 16, 8], strides = [1, 1, 1]} : vector<14x16x8xbf16> to vector<8x16x8xbf16>
    %154 = vector.shape_cast %153 : vector<8x16x8xbf16> to vector<128x8xbf16>
    %c1_133 = arith.constant 1 : index
    %c2_134 = arith.constant 2 : index
    %c2_135 = arith.constant 2 : index
    %c0_136 = arith.constant 0 : index
    %c0_137 = arith.constant 0 : index
    %155 = vector.load %arg3[%c1_133, %c2_134, %c2_135, %c0_136, %c0_137] : memref<3x3x3x8x4xbf16, #tpu.memory_space<vmem>>, vector<1x1x1x8x4xbf16>
    %156 = vector.shape_cast %155 : vector<1x1x1x8x4xbf16> to vector<8x4xbf16>
    %cst_138 = arith.constant dense<0.000000e+00> : vector<128x4xf32>
    %157 = tpu.matmul %154, %156, %cst_138 {dimension_numbers = #tpu.dot_dimension_numbers<[1], [0], [0], [1], [0, 0, 1, 1], [], []>} : vector<128x8xbf16>, vector<8x4xbf16>, vector<128x4xf32> -> vector<128x4xf32>
    %158 = arith.addf %152, %157 : vector<128x4xf32>
    %c1_139 = arith.constant 1 : index
    %c0_140 = arith.constant 0 : index
    %c0_141 = arith.constant 0 : index
    %159 = vector.load %arg4[%c1_139, %c0_140, %c0_141] : memref<3x1x4xf32, #tpu.memory_space<vmem>>, vector<1x1x4xf32>
    %160 = vector.shape_cast %159 : vector<1x1x4xf32> to vector<1x4xf32>
    %161 = vector.broadcast %160 : vector<1x4xf32> to vector<128x4xf32>
    %162 = arith.mulf %158, %161 : vector<128x4xf32>
    %c1_142 = arith.constant 1 : index
    %c0_143 = arith.constant 0 : index
    %c0_144 = arith.constant 0 : index
    %163 = vector.load %arg5[%c1_142, %c0_143, %c0_144] : memref<3x1x4xf32, #tpu.memory_space<vmem>>, vector<1x1x4xf32>
    %164 = vector.shape_cast %163 : vector<1x1x4xf32> to vector<1x4xf32>
    %165 = vector.broadcast %164 : vector<1x4xf32> to vector<128x4xf32>
    %166 = arith.addf %162, %165 : vector<128x4xf32>
    %cst_145 = arith.constant 0.000000e+00 : f32
    %167 = vector.broadcast %cst_145 : f32 to vector<128x4xf32>
    %168 = arith.maximumf %166, %167 : vector<128x4xf32>
    %169 = arith.truncf %168 : vector<128x4xf32> to vector<128x4xbf16>
    %c1_146 = arith.constant 1 : index
    %c0_147 = arith.constant 0 : index
    %c0_148 = arith.constant 0 : index
    %170 = vector.load %arg9[%c1_146, %c0_147, %c0_148] : memref<4x4x8xbf16, #tpu.memory_space<vmem>>, vector<1x4x8xbf16>
    %171 = vector.shape_cast %170 : vector<1x4x8xbf16> to vector<4x8xbf16>
    %cst_149 = arith.constant dense<0.000000e+00> : vector<128x8xf32>
    %172 = tpu.matmul %169, %171, %cst_149 {dimension_numbers = #tpu.dot_dimension_numbers<[1], [0], [0], [1], [0, 0, 1, 1], [], []>} : vector<128x4xbf16>, vector<4x8xbf16>, vector<128x8xf32> -> vector<128x8xf32>
    %173 = arith.addf %103, %172 : vector<128x8xf32>
    %cst_150 = arith.constant 0.000000e+00 : f32
    %174 = vector.broadcast %cst_150 : f32 to vector<128x4xf32>
    %175 = vector.extract_strided_slice %26 {offsets = [0, 0, 0], sizes = [8, 16, 8], strides = [1, 1, 1]} : vector<14x16x8xbf16> to vector<8x16x8xbf16>
    %176 = vector.shape_cast %175 : vector<8x16x8xbf16> to vector<128x8xbf16>
    %c2_151 = arith.constant 2 : index
    %c0_152 = arith.constant 0 : index
    %c0_153 = arith.constant 0 : index
    %c0_154 = arith.constant 0 : index
    %c0_155 = arith.constant 0 : index
    %177 = vector.load %arg3[%c2_151, %c0_152, %c0_153, %c0_154, %c0_155] : memref<3x3x3x8x4xbf16, #tpu.memory_space<vmem>>, vector<1x1x1x8x4xbf16>
    %178 = vector.shape_cast %177 : vector<1x1x1x8x4xbf16> to vector<8x4xbf16>
    %cst_156 = arith.constant dense<0.000000e+00> : vector<128x4xf32>
    %179 = tpu.matmul %176, %178, %cst_156 {dimension_numbers = #tpu.dot_dimension_numbers<[1], [0], [0], [1], [0, 0, 1, 1], [], []>} : vector<128x8xbf16>, vector<8x4xbf16>, vector<128x4xf32> -> vector<128x4xf32>
    %180 = arith.addf %174, %179 : vector<128x4xf32>
    %181 = vector.extract_strided_slice %29 {offsets = [0, 0, 0], sizes = [8, 16, 8], strides = [1, 1, 1]} : vector<14x16x8xbf16> to vector<8x16x8xbf16>
    %182 = vector.shape_cast %181 : vector<8x16x8xbf16> to vector<128x8xbf16>
    %c2_157 = arith.constant 2 : index
    %c0_158 = arith.constant 0 : index
    %c1_159 = arith.constant 1 : index
    %c0_160 = arith.constant 0 : index
    %c0_161 = arith.constant 0 : index
    %183 = vector.load %arg3[%c2_157, %c0_158, %c1_159, %c0_160, %c0_161] : memref<3x3x3x8x4xbf16, #tpu.memory_space<vmem>>, vector<1x1x1x8x4xbf16>
    %184 = vector.shape_cast %183 : vector<1x1x1x8x4xbf16> to vector<8x4xbf16>
    %cst_162 = arith.constant dense<0.000000e+00> : vector<128x4xf32>
    %185 = tpu.matmul %182, %184, %cst_162 {dimension_numbers = #tpu.dot_dimension_numbers<[1], [0], [0], [1], [0, 0, 1, 1], [], []>} : vector<128x8xbf16>, vector<8x4xbf16>, vector<128x4xf32> -> vector<128x4xf32>
    %186 = arith.addf %180, %185 : vector<128x4xf32>
    %187 = vector.extract_strided_slice %32 {offsets = [0, 0, 0], sizes = [8, 16, 8], strides = [1, 1, 1]} : vector<14x16x8xbf16> to vector<8x16x8xbf16>
    %188 = vector.shape_cast %187 : vector<8x16x8xbf16> to vector<128x8xbf16>
    %c2_163 = arith.constant 2 : index
    %c0_164 = arith.constant 0 : index
    %c2_165 = arith.constant 2 : index
    %c0_166 = arith.constant 0 : index
    %c0_167 = arith.constant 0 : index
    %189 = vector.load %arg3[%c2_163, %c0_164, %c2_165, %c0_166, %c0_167] : memref<3x3x3x8x4xbf16, #tpu.memory_space<vmem>>, vector<1x1x1x8x4xbf16>
    %190 = vector.shape_cast %189 : vector<1x1x1x8x4xbf16> to vector<8x4xbf16>
    %cst_168 = arith.constant dense<0.000000e+00> : vector<128x4xf32>
    %191 = tpu.matmul %188, %190, %cst_168 {dimension_numbers = #tpu.dot_dimension_numbers<[1], [0], [0], [1], [0, 0, 1, 1], [], []>} : vector<128x8xbf16>, vector<8x4xbf16>, vector<128x4xf32> -> vector<128x4xf32>
    %192 = arith.addf %186, %191 : vector<128x4xf32>
    %193 = vector.extract_strided_slice %26 {offsets = [3, 0, 0], sizes = [8, 16, 8], strides = [1, 1, 1]} : vector<14x16x8xbf16> to vector<8x16x8xbf16>
    %194 = vector.shape_cast %193 : vector<8x16x8xbf16> to vector<128x8xbf16>
    %c2_169 = arith.constant 2 : index
    %c1_170 = arith.constant 1 : index
    %c0_171 = arith.constant 0 : index
    %c0_172 = arith.constant 0 : index
    %c0_173 = arith.constant 0 : index
    %195 = vector.load %arg3[%c2_169, %c1_170, %c0_171, %c0_172, %c0_173] : memref<3x3x3x8x4xbf16, #tpu.memory_space<vmem>>, vector<1x1x1x8x4xbf16>
    %196 = vector.shape_cast %195 : vector<1x1x1x8x4xbf16> to vector<8x4xbf16>
    %cst_174 = arith.constant dense<0.000000e+00> : vector<128x4xf32>
    %197 = tpu.matmul %194, %196, %cst_174 {dimension_numbers = #tpu.dot_dimension_numbers<[1], [0], [0], [1], [0, 0, 1, 1], [], []>} : vector<128x8xbf16>, vector<8x4xbf16>, vector<128x4xf32> -> vector<128x4xf32>
    %198 = arith.addf %192, %197 : vector<128x4xf32>
    %199 = vector.extract_strided_slice %29 {offsets = [3, 0, 0], sizes = [8, 16, 8], strides = [1, 1, 1]} : vector<14x16x8xbf16> to vector<8x16x8xbf16>
    %200 = vector.shape_cast %199 : vector<8x16x8xbf16> to vector<128x8xbf16>
    %c2_175 = arith.constant 2 : index
    %c1_176 = arith.constant 1 : index
    %c1_177 = arith.constant 1 : index
    %c0_178 = arith.constant 0 : index
    %c0_179 = arith.constant 0 : index
    %201 = vector.load %arg3[%c2_175, %c1_176, %c1_177, %c0_178, %c0_179] : memref<3x3x3x8x4xbf16, #tpu.memory_space<vmem>>, vector<1x1x1x8x4xbf16>
    %202 = vector.shape_cast %201 : vector<1x1x1x8x4xbf16> to vector<8x4xbf16>
    %cst_180 = arith.constant dense<0.000000e+00> : vector<128x4xf32>
    %203 = tpu.matmul %200, %202, %cst_180 {dimension_numbers = #tpu.dot_dimension_numbers<[1], [0], [0], [1], [0, 0, 1, 1], [], []>} : vector<128x8xbf16>, vector<8x4xbf16>, vector<128x4xf32> -> vector<128x4xf32>
    %204 = arith.addf %198, %203 : vector<128x4xf32>
    %205 = vector.extract_strided_slice %32 {offsets = [3, 0, 0], sizes = [8, 16, 8], strides = [1, 1, 1]} : vector<14x16x8xbf16> to vector<8x16x8xbf16>
    %206 = vector.shape_cast %205 : vector<8x16x8xbf16> to vector<128x8xbf16>
    %c2_181 = arith.constant 2 : index
    %c1_182 = arith.constant 1 : index
    %c2_183 = arith.constant 2 : index
    %c0_184 = arith.constant 0 : index
    %c0_185 = arith.constant 0 : index
    %207 = vector.load %arg3[%c2_181, %c1_182, %c2_183, %c0_184, %c0_185] : memref<3x3x3x8x4xbf16, #tpu.memory_space<vmem>>, vector<1x1x1x8x4xbf16>
    %208 = vector.shape_cast %207 : vector<1x1x1x8x4xbf16> to vector<8x4xbf16>
    %cst_186 = arith.constant dense<0.000000e+00> : vector<128x4xf32>
    %209 = tpu.matmul %206, %208, %cst_186 {dimension_numbers = #tpu.dot_dimension_numbers<[1], [0], [0], [1], [0, 0, 1, 1], [], []>} : vector<128x8xbf16>, vector<8x4xbf16>, vector<128x4xf32> -> vector<128x4xf32>
    %210 = arith.addf %204, %209 : vector<128x4xf32>
    %211 = vector.extract_strided_slice %26 {offsets = [6, 0, 0], sizes = [8, 16, 8], strides = [1, 1, 1]} : vector<14x16x8xbf16> to vector<8x16x8xbf16>
    %212 = vector.shape_cast %211 : vector<8x16x8xbf16> to vector<128x8xbf16>
    %c2_187 = arith.constant 2 : index
    %c2_188 = arith.constant 2 : index
    %c0_189 = arith.constant 0 : index
    %c0_190 = arith.constant 0 : index
    %c0_191 = arith.constant 0 : index
    %213 = vector.load %arg3[%c2_187, %c2_188, %c0_189, %c0_190, %c0_191] : memref<3x3x3x8x4xbf16, #tpu.memory_space<vmem>>, vector<1x1x1x8x4xbf16>
    %214 = vector.shape_cast %213 : vector<1x1x1x8x4xbf16> to vector<8x4xbf16>
    %cst_192 = arith.constant dense<0.000000e+00> : vector<128x4xf32>
    %215 = tpu.matmul %212, %214, %cst_192 {dimension_numbers = #tpu.dot_dimension_numbers<[1], [0], [0], [1], [0, 0, 1, 1], [], []>} : vector<128x8xbf16>, vector<8x4xbf16>, vector<128x4xf32> -> vector<128x4xf32>
    %216 = arith.addf %210, %215 : vector<128x4xf32>
    %217 = vector.extract_strided_slice %29 {offsets = [6, 0, 0], sizes = [8, 16, 8], strides = [1, 1, 1]} : vector<14x16x8xbf16> to vector<8x16x8xbf16>
    %218 = vector.shape_cast %217 : vector<8x16x8xbf16> to vector<128x8xbf16>
    %c2_193 = arith.constant 2 : index
    %c2_194 = arith.constant 2 : index
    %c1_195 = arith.constant 1 : index
    %c0_196 = arith.constant 0 : index
    %c0_197 = arith.constant 0 : index
    %219 = vector.load %arg3[%c2_193, %c2_194, %c1_195, %c0_196, %c0_197] : memref<3x3x3x8x4xbf16, #tpu.memory_space<vmem>>, vector<1x1x1x8x4xbf16>
    %220 = vector.shape_cast %219 : vector<1x1x1x8x4xbf16> to vector<8x4xbf16>
    %cst_198 = arith.constant dense<0.000000e+00> : vector<128x4xf32>
    %221 = tpu.matmul %218, %220, %cst_198 {dimension_numbers = #tpu.dot_dimension_numbers<[1], [0], [0], [1], [0, 0, 1, 1], [], []>} : vector<128x8xbf16>, vector<8x4xbf16>, vector<128x4xf32> -> vector<128x4xf32>
    %222 = arith.addf %216, %221 : vector<128x4xf32>
    %223 = vector.extract_strided_slice %32 {offsets = [6, 0, 0], sizes = [8, 16, 8], strides = [1, 1, 1]} : vector<14x16x8xbf16> to vector<8x16x8xbf16>
    %224 = vector.shape_cast %223 : vector<8x16x8xbf16> to vector<128x8xbf16>
    %c2_199 = arith.constant 2 : index
    %c2_200 = arith.constant 2 : index
    %c2_201 = arith.constant 2 : index
    %c0_202 = arith.constant 0 : index
    %c0_203 = arith.constant 0 : index
    %225 = vector.load %arg3[%c2_199, %c2_200, %c2_201, %c0_202, %c0_203] : memref<3x3x3x8x4xbf16, #tpu.memory_space<vmem>>, vector<1x1x1x8x4xbf16>
    %226 = vector.shape_cast %225 : vector<1x1x1x8x4xbf16> to vector<8x4xbf16>
    %cst_204 = arith.constant dense<0.000000e+00> : vector<128x4xf32>
    %227 = tpu.matmul %224, %226, %cst_204 {dimension_numbers = #tpu.dot_dimension_numbers<[1], [0], [0], [1], [0, 0, 1, 1], [], []>} : vector<128x8xbf16>, vector<8x4xbf16>, vector<128x4xf32> -> vector<128x4xf32>
    %228 = arith.addf %222, %227 : vector<128x4xf32>
    %c2_205 = arith.constant 2 : index
    %c0_206 = arith.constant 0 : index
    %c0_207 = arith.constant 0 : index
    %229 = vector.load %arg4[%c2_205, %c0_206, %c0_207] : memref<3x1x4xf32, #tpu.memory_space<vmem>>, vector<1x1x4xf32>
    %230 = vector.shape_cast %229 : vector<1x1x4xf32> to vector<1x4xf32>
    %231 = vector.broadcast %230 : vector<1x4xf32> to vector<128x4xf32>
    %232 = arith.mulf %228, %231 : vector<128x4xf32>
    %c2_208 = arith.constant 2 : index
    %c0_209 = arith.constant 0 : index
    %c0_210 = arith.constant 0 : index
    %233 = vector.load %arg5[%c2_208, %c0_209, %c0_210] : memref<3x1x4xf32, #tpu.memory_space<vmem>>, vector<1x1x4xf32>
    %234 = vector.shape_cast %233 : vector<1x1x4xf32> to vector<1x4xf32>
    %235 = vector.broadcast %234 : vector<1x4xf32> to vector<128x4xf32>
    %236 = arith.addf %232, %235 : vector<128x4xf32>
    %cst_211 = arith.constant 0.000000e+00 : f32
    %237 = vector.broadcast %cst_211 : f32 to vector<128x4xf32>
    %238 = arith.maximumf %236, %237 : vector<128x4xf32>
    %239 = arith.truncf %238 : vector<128x4xf32> to vector<128x4xbf16>
    %c2_212 = arith.constant 2 : index
    %c0_213 = arith.constant 0 : index
    %c0_214 = arith.constant 0 : index
    %240 = vector.load %arg9[%c2_212, %c0_213, %c0_214] : memref<4x4x8xbf16, #tpu.memory_space<vmem>>, vector<1x4x8xbf16>
    %241 = vector.shape_cast %240 : vector<1x4x8xbf16> to vector<4x8xbf16>
    %cst_215 = arith.constant dense<0.000000e+00> : vector<128x8xf32>
    %242 = tpu.matmul %239, %241, %cst_215 {dimension_numbers = #tpu.dot_dimension_numbers<[1], [0], [0], [1], [0, 0, 1, 1], [], []>} : vector<128x4xbf16>, vector<4x8xbf16>, vector<128x8xf32> -> vector<128x8xf32>
    %243 = arith.addf %173, %242 : vector<128x8xf32>
    %c0_216 = arith.constant 0 : index
    %c0_217 = arith.constant 0 : index
    %244 = vector.load %arg10[%c0_216, %c0_217] : memref<1x8xf32, #tpu.memory_space<vmem>>, vector<1x8xf32>
    %245 = arith.mulf %22, %244 : vector<1x8xf32>
    %c0_218 = arith.constant 0 : index
    %c0_219 = arith.constant 0 : index
    %246 = vector.load %arg11[%c0_218, %c0_219] : memref<1x8xf32, #tpu.memory_space<vmem>>, vector<1x8xf32>
    %247 = arith.addf %245, %246 : vector<1x8xf32>
    %c0_220 = arith.constant 0 : index
    %c0_221 = arith.constant 0 : index
    %248 = vector.load %arg10[%c0_220, %c0_221] : memref<1x8xf32, #tpu.memory_space<vmem>>, vector<1x8xf32>
    %249 = vector.broadcast %248 : vector<1x8xf32> to vector<128x8xf32>
    %250 = arith.mulf %243, %249 : vector<128x8xf32>
    %251 = vector.broadcast %247 : vector<1x8xf32> to vector<128x8xf32>
    %252 = arith.addf %250, %251 : vector<128x8xf32>
    %cst_222 = arith.constant 0.000000e+00 : f32
    %253 = vector.broadcast %cst_222 : f32 to vector<128x8xf32>
    %254 = arith.maximumf %252, %253 : vector<128x8xf32>
    %255 = vector.shape_cast %254 : vector<128x8xf32> to vector<8x16x8xf32>
    %c0_223 = arith.constant 0 : index
    %c0_224 = arith.constant 0 : index
    %c0_225 = arith.constant 0 : index
    %c0_226 = arith.constant 0 : index
    %256 = vector.load %arg12[%c0_223, %c0_224, %c0_225, %c0_226] : memref<1x8x16x8xf32, #tpu.memory_space<vmem>>, vector<1x8x16x8xf32>
    %257 = vector.shape_cast %256 : vector<1x8x16x8xf32> to vector<8x16x8xf32>
    %258 = vector.shape_cast %255 : vector<8x16x8xf32> to vector<1x8x16x8xf32>
    tpu.vector_store %arg12[%c0_223, %c0_224, %c0_225, %c0_226], %258 {strides = array<i32>} : memref<1x8x16x8xf32, #tpu.memory_space<vmem>>, vector<1x8x16x8xf32>,
    return
  }
  func.func @transform_0(%arg0: i32, %arg1: i32) -> (i32, i32, i32, i32) {
    %c0_i32 = arith.constant 0 : i32
    %c0_i32_0 = arith.constant 0 : i32
    %c0_i32_1 = arith.constant 0 : i32
    %c0_i32_2 = arith.constant 0 : i32
    return %arg0, %c0_i32, %c0_i32_0, %c0_i32_1 : i32, i32, i32, i32
  }
  func.func @transform_1(%arg0: i32, %arg1: i32) -> (i32, i32, i32, i32, i32) {
    %c0_i32 = arith.constant 0 : i32
    %c0_i32_0 = arith.constant 0 : i32
    %c0_i32_1 = arith.constant 0 : i32
    %c0_i32_2 = arith.constant 0 : i32
    %c0_i32_3 = arith.constant 0 : i32
    %c0_i32_4 = arith.constant 0 : i32
    return %c0_i32, %c0_i32_0, %c0_i32_1, %c0_i32_2, %c0_i32_3 : i32, i32, i32, i32, i32
  }
  func.func @transform_2(%arg0: i32, %arg1: i32) -> (i32, i32, i32) {
    %c0_i32 = arith.constant 0 : i32
    %c0_i32_0 = arith.constant 0 : i32
    %c0_i32_1 = arith.constant 0 : i32
    %c0_i32_2 = arith.constant 0 : i32
    return %c0_i32, %c0_i32_0, %c0_i32_1 : i32, i32, i32
  }
  func.func @transform_3(%arg0: i32, %arg1: i32) -> (i32, i32, i32) {
    %c0_i32 = arith.constant 0 : i32
    %c0_i32_0 = arith.constant 0 : i32
    %c0_i32_1 = arith.constant 0 : i32
    %c0_i32_2 = arith.constant 0 : i32
    return %c0_i32, %c0_i32_0, %c0_i32_1 : i32, i32, i32
  }
  func.func @transform_4(%arg0: i32, %arg1: i32) -> (i32, i32) {
    %c0_i32 = arith.constant 0 : i32
    %c0_i32_0 = arith.constant 0 : i32
    %c0_i32_1 = arith.constant 0 : i32
    return %c0_i32, %c0_i32_0 : i32, i32
  }
  func.func @transform_5(%arg0: i32, %arg1: i32) -> (i32, i32) {
    %c0_i32 = arith.constant 0 : i32
    %c0_i32_0 = arith.constant 0 : i32
    %c0_i32_1 = arith.constant 0 : i32
    return %c0_i32, %c0_i32_0 : i32, i32
  }
  func.func @transform_6(%arg0: i32, %arg1: i32) -> (i32, i32) {
    %c0_i32 = arith.constant 0 : i32
    %c0_i32_0 = arith.constant 0 : i32
    %c0_i32_1 = arith.constant 0 : i32
    return %c0_i32, %c0_i32_0 : i32, i32
  }
  func.func @transform_7(%arg0: i32, %arg1: i32) -> (i32, i32, i32) {
    %c0_i32 = arith.constant 0 : i32
    %c0_i32_0 = arith.constant 0 : i32
    %c0_i32_1 = arith.constant 0 : i32
    %c0_i32_2 = arith.constant 0 : i32
    return %c0_i32, %c0_i32_0, %c0_i32_1 : i32, i32, i32
  }
  func.func @transform_8(%arg0: i32, %arg1: i32) -> (i32, i32) {
    %c0_i32 = arith.constant 0 : i32
    %c0_i32_0 = arith.constant 0 : i32
    %c0_i32_1 = arith.constant 0 : i32
    return %c0_i32, %c0_i32_0 : i32, i32
  }
  func.func @transform_9(%arg0: i32, %arg1: i32) -> (i32, i32) {
    %c0_i32 = arith.constant 0 : i32
    %c0_i32_0 = arith.constant 0 : i32
    %c0_i32_1 = arith.constant 0 : i32
    return %c0_i32, %c0_i32_0 : i32, i32
  }
  func.func @transform_10(%arg0: i32, %arg1: i32) -> (i32, i32, i32, i32) {
    %c0_i32 = arith.constant 0 : i32
    %c0_i32_0 = arith.constant 0 : i32
    %c0_i32_1 = arith.constant 0 : i32
    return %arg0, %arg1, %c0_i32, %c0_i32_0 : i32, i32, i32, i32
  }
}

</mosaic_0001>

<llo_original>
// kernel: tpu_custom_call.1
$region0: #{tpu_custom_call.1}
  #allocation0 [shape = 'u32[]', space=smem, size = 0x4, offset = 0x4, fixed_abs, tag = 'smem constant byte address 0x4 - core index']
  #allocation1 [shape = 'u32[144,128]{1,0:T(1,128)}', space=vmem, size = 0x12000, scoped, tag = 'internal scratch']
  %s0 = inlined_call_operand.vmem [shape: bf16[2,22,22,8], index: 0, kind: input, shape index: {}]
  %s1 = inlined_call_operand.vmem [shape: bf16[3,3,3,8,4], index: 1, kind: input, shape index: {}]
  %s2 = inlined_call_operand.vmem [shape: f32[3,1,4], index: 2, kind: input, shape index: {}]
  %s3 = inlined_call_operand.vmem [shape: f32[3,1,4], index: 3, kind: input, shape index: {}]
  %s4 = inlined_call_operand.vmem [shape: bf16[8,4], index: 4, kind: input, shape index: {}]
  %s5 = inlined_call_operand.vmem [shape: f32[1,4], index: 5, kind: input, shape index: {}]
  %s6 = inlined_call_operand.vmem [shape: f32[1,4], index: 6, kind: input, shape index: {}]
  %s7 = inlined_call_operand.vmem [shape: bf16[4,4,8], index: 7, kind: input, shape index: {}]
  %s8 = inlined_call_operand.vmem [shape: f32[1,8], index: 8, kind: input, shape index: {}]
  %s9 = inlined_call_operand.vmem [shape: f32[1,8], index: 9, kind: input, shape index: {}]
  %s10 = inlined_call_operand.vmem [shape: f32[2,16,16,8], index: 10, kind: output, shape index: {}]
  %s11 = sld [smem:[#allocation0]]
  $region73: #{tpu_custom_call.1} parent=0
    _
  %s13 = ssub.s32 1, %s11
  %s14 = scalar_select 0, %s13, %s11
  loop: start=0, step=1, limit=6
  $region2: #{tpu_custom_call.1} parent=0 // loop_pre_header
    _
  $region3: #{tpu_custom_call.1} parent=0 // loop_header
    %s16 = sphi 0, %s20
    %p17 = scmp.ge.s32.totalorder %s16, 6
    %s23 = sphi 0, %s35
    %s24 = sphi 0, %s31
    %s25 = sphi 0, %s23
    %s26 = sphi 0, %s24
    %s27 = sphi 0, %s25
    %s28 = sphi 0, %s26
    %s38 = sphi 0, %s40
    %s41 = sphi 0, %s38
    %s42 = sphi 0, %s41
    %s58 = sphi 0, %s42
    %s62 = sphi 0, %s62
    %s64 = sphi 0, %s62
    %s65 = sphi 0, %s64
    %s79 = sphi 0, %s65
    %s83 = sphi 0, %s83
    %s85 = sphi 0, %s83
    %s86 = sphi 0, %s85
    %s100 = sphi 0, %s86
    %s104 = sphi 0, %s104
    %s106 = sphi 0, %s104
    %s107 = sphi 0, %s106
    %s121 = sphi 0, %s107
    %s125 = sphi 0, %s125
    %s127 = sphi 0, %s125
    %s128 = sphi 0, %s127
    %s142 = sphi 0, %s128
    %s146 = sphi 0, %s146
    %s148 = sphi 0, %s146
    %s149 = sphi 0, %s148
    %s163 = sphi 0, %s149
    %s167 = sphi 0, %s167
    %s169 = sphi 0, %s167
    %s170 = sphi 0, %s169
    %s184 = sphi 0, %s170
    %s188 = sphi 0, %s188
    %s190 = sphi 0, %s188
    %s191 = sphi 0, %s190
    %s205 = sphi 0, %s191
    %s209 = sphi 0, %s209
    %s211 = sphi 0, %s209
    %s212 = sphi 0, %s211
    %s226 = sphi 0, %s212
    %s230 = sphi 0, %s230
    %s232 = sphi 0, %s230
    %s233 = sphi 0, %s232
    %s247 = sphi 0, %s233
    %s255 = sphi 0, %s257
    %s258 = sphi 0, %s255
    %s259 = sphi 0, %s258
    %s275 = sphi 0, %s259
  $region4: #{tpu_custom_call.1} parent=0 // loop_header_branch
    %19 = sbr.rel (%p17) target = $region8
  $region5: #{tpu_custom_call.1} parent=0 // loop_body
    %s21 = ssub.s32 %s16, 1
    %s22 = ssub.s32 %s16, 2
    %s29 = sadd.s32 1, %s24
    %p30 = scmp.ge.s32.totalorder %s29, 2
    %s31 = scalar_select %p30, 0, %s29
    %s32 = sadd.s32 1, %s23
    %s33 = scalar_select %p30, %s32, %s23
    %p34 = scmp.ge.s32.totalorder %s33, 2
    %s35 = scalar_select %p34, 0, %s33
    %s36 = ssub.s32 %s23, %s35
    %p37 = scmp.eq.s32.totalorder %s36, 0
    %s39 = sadd.s32 %s38, 1
    %s40 = scalar_select %p37, %s38, %s39
    %p43 = pneg %p37
    %p44 = scmp.eq.s32.totalorder %s16, 3
    %p45 = por %p43, %p44
    %p46 = scmp.ne.s32.totalorder %s38, %s41
    %p47 = scmp.eq.s32.totalorder %s16, 0
    %p48 = por %p46, %p47
    %p49 = scmp.ne.s32.totalorder %s38, %s41
    %p50 = scmp.eq.s32.totalorder %s21, 3
    %p51 = por %p49, %p50
    %p52 = scmp.ne.s32.totalorder %s41, %s42
    %p53 = scmp.eq.s32.totalorder %s21, 0
    %p54 = por %p52, %p53
    %p55 = scmp.ne.s32.totalorder %s41, %s42
    %p56 = scmp.eq.s32.totalorder %s22, 3
    %p57 = por %p55, %p56
    %p59 = scmp.ne.s32.totalorder %s42, %s58
    %p60 = scmp.eq.s32.totalorder %s22, 0
    %p61 = por %p59, %p60
    %s63 = sadd.s32 %s62, 1
    %p66 = scmp.eq.s32.totalorder %s16, 3
    %p67 = scmp.ne.s32.totalorder %s62, %s64
    %p68 = scmp.eq.s32.totalorder %s16, 0
    %p69 = por %p67, %p68
    %p70 = scmp.ne.s32.totalorder %s62, %s64
    %p71 = scmp.eq.s32.totalorder %s21, 3
    %p72 = por %p70, %p71
    %p73 = scmp.ne.s32.totalorder %s64, %s65
    %p74 = scmp.eq.s32.totalorder %s21, 0
    %p75 = por %p73, %p74
    %p76 = scmp.ne.s32.totalorder %s64, %s65
    %p77 = scmp.eq.s32.totalorder %s22, 3
    %p78 = por %p76, %p77
    %p80 = scmp.ne.s32.totalorder %s65, %s79
    %p81 = scmp.eq.s32.totalorder %s22, 0
    %p82 = por %p80, %p81
    %s84 = sadd.s32 %s83, 1
    %p87 = scmp.eq.s32.totalorder %s16, 3
    %p88 = scmp.ne.s32.totalorder %s83, %s85
    %p89 = scmp.eq.s32.totalorder %s16, 0
    %p90 = por %p88, %p89
    %p91 = scmp.ne.s32.totalorder %s83, %s85
    %p92 = scmp.eq.s32.totalorder %s21, 3
    %p93 = por %p91, %p92
    %p94 = scmp.ne.s32.totalorder %s85, %s86
    %p95 = scmp.eq.s32.totalorder %s21, 0
    %p96 = por %p94, %p95
    %p97 = scmp.ne.s32.totalorder %s85, %s86
    %p98 = scmp.eq.s32.totalorder %s22, 3
    %p99 = por %p97, %p98
    %p101 = scmp.ne.s32.totalorder %s86, %s100
    %p102 = scmp.eq.s32.totalorder %s22, 0
    %p103 = por %p101, %p102
    %s105 = sadd.s32 %s104, 1
    %p108 = scmp.eq.s32.totalorder %s16, 3
    %p109 = scmp.ne.s32.totalorder %s104, %s106
    %p110 = scmp.eq.s32.totalorder %s16, 0
    %p111 = por %p109, %p110
    %p112 = scmp.ne.s32.totalorder %s104, %s106
    %p113 = scmp.eq.s32.totalorder %s21, 3
    %p114 = por %p112, %p113
    %p115 = scmp.ne.s32.totalorder %s106, %s107
    %p116 = scmp.eq.s32.totalorder %s21, 0
    %p117 = por %p115, %p116
    %p118 = scmp.ne.s32.totalorder %s106, %s107
    %p119 = scmp.eq.s32.totalorder %s22, 3
    %p120 = por %p118, %p119
    %p122 = scmp.ne.s32.totalorder %s107, %s121
    %p123 = scmp.eq.s32.totalorder %s22, 0
    %p124 = por %p122, %p123
    %s126 = sadd.s32 %s125, 1
    %p129 = scmp.eq.s32.totalorder %s16, 3
    %p130 = scmp.ne.s32.totalorder %s125, %s127
    %p131 = scmp.eq.s32.totalorder %s16, 0
    %p132 = por %p130, %p131
    %p133 = scmp.ne.s32.totalorder %s125, %s127
    %p134 = scmp.eq.s32.totalorder %s21, 3
    %p135 = por %p133, %p134
    %p136 = scmp.ne.s32.totalorder %s127, %s128
    %p137 = scmp.eq.s32.totalorder %s21, 0
    %p138 = por %p136, %p137
    %p139 = scmp.ne.s32.totalorder %s127, %s128
    %p140 = scmp.eq.s32.totalorder %s22, 3
    %p141 = por %p139, %p140
    %p143 = scmp.ne.s32.totalorder %s128, %s142
    %p144 = scmp.eq.s32.totalorder %s22, 0
    %p145 = por %p143, %p144
    %s147 = sadd.s32 %s146, 1
    %p150 = scmp.eq.s32.totalorder %s16, 3
    %p151 = scmp.ne.s32.totalorder %s146, %s148
    %p152 = scmp.eq.s32.totalorder %s16, 0
    %p153 = por %p151, %p152
    %p154 = scmp.ne.s32.totalorder %s146, %s148
    %p155 = scmp.eq.s32.totalorder %s21, 3
    %p156 = por %p154, %p155
    %p157 = scmp.ne.s32.totalorder %s148, %s149
    %p158 = scmp.eq.s32.totalorder %s21, 0
    %p159 = por %p157, %p158
    %p160 = scmp.ne.s32.totalorder %s148, %s149
    %p161 = scmp.eq.s32.totalorder %s22, 3
    %p162 = por %p160, %p161
    %p164 = scmp.ne.s32.totalorder %s149, %s163
    %p165 = scmp.eq.s32.totalorder %s22, 0
    %p166 = por %p164, %p165
    %s168 = sadd.s32 %s167, 1
    %p171 = scmp.eq.s32.totalorder %s16, 3
    %p172 = scmp.ne.s32.totalorder %s167, %s169
    %p173 = scmp.eq.s32.totalorder %s16, 0
    %p174 = por %p172, %p173
    %p175 = scmp.ne.s32.totalorder %s167, %s169
    %p176 = scmp.eq.s32.totalorder %s21, 3
    %p177 = por %p175, %p176
    %p178 = scmp.ne.s32.totalorder %s169, %s170
    %p179 = scmp.eq.s32.totalorder %s21, 0
    %p180 = por %p178, %p179
    %p181 = scmp.ne.s32.totalorder %s169, %s170
    %p182 = scmp.eq.s32.totalorder %s22, 3
    %p183 = por %p181, %p182
    %p185 = scmp.ne.s32.totalorder %s170, %s184
    %p186 = scmp.eq.s32.totalorder %s22, 0
    %p187 = por %p185, %p186
    %s189 = sadd.s32 %s188, 1
    %p192 = scmp.eq.s32.totalorder %s16, 3
    %p193 = scmp.ne.s32.totalorder %s188, %s190
    %p194 = scmp.eq.s32.totalorder %s16, 0
    %p195 = por %p193, %p194
    %p196 = scmp.ne.s32.totalorder %s188, %s190
    %p197 = scmp.eq.s32.totalorder %s21, 3
    %p198 = por %p196, %p197
    %p199 = scmp.ne.s32.totalorder %s190, %s191
    %p200 = scmp.eq.s32.totalorder %s21, 0
    %p201 = por %p199, %p200
    %p202 = scmp.ne.s32.totalorder %s190, %s191
    %p203 = scmp.eq.s32.totalorder %s22, 3
    %p204 = por %p202, %p203
    %p206 = scmp.ne.s32.totalorder %s191, %s205
    %p207 = scmp.eq.s32.totalorder %s22, 0
    %p208 = por %p206, %p207
    %s210 = sadd.s32 %s209, 1
    %p213 = scmp.eq.s32.totalorder %s16, 3
    %p214 = scmp.ne.s32.totalorder %s209, %s211
    %p215 = scmp.eq.s32.totalorder %s16, 0
    %p216 = por %p214, %p215
    %p217 = scmp.ne.s32.totalorder %s209, %s211
    %p218 = scmp.eq.s32.totalorder %s21, 3
    %p219 = por %p217, %p218
    %p220 = scmp.ne.s32.totalorder %s211, %s212
    %p221 = scmp.eq.s32.totalorder %s21, 0
    %p222 = por %p220, %p221
    %p223 = scmp.ne.s32.totalorder %s211, %s212
    %p224 = scmp.eq.s32.totalorder %s22, 3
    %p225 = por %p223, %p224
    %p227 = scmp.ne.s32.totalorder %s212, %s226
    %p228 = scmp.eq.s32.totalorder %s22, 0
    %p229 = por %p227, %p228
    %s231 = sadd.s32 %s230, 1
    %p234 = scmp.eq.s32.totalorder %s16, 3
    %p235 = scmp.ne.s32.totalorder %s230, %s232
    %p236 = scmp.eq.s32.totalorder %s16, 0
    %p237 = por %p235, %p236
    %p238 = scmp.ne.s32.totalorder %s230, %s232
    %p239 = scmp.eq.s32.totalorder %s21, 3
    %p240 = por %p238, %p239
    %p241 = scmp.ne.s32.totalorder %s232, %s233
    %p242 = scmp.eq.s32.totalorder %s21, 0
    %p243 = por %p241, %p242
    %p244 = scmp.ne.s32.totalorder %s232, %s233
    %p245 = scmp.eq.s32.totalorder %s22, 3
    %p246 = por %p244, %p245
    %p248 = scmp.ne.s32.totalorder %s233, %s247
    %p249 = scmp.eq.s32.totalorder %s22, 0
    %p250 = por %p248, %p249
    %s251 = ssub.s32 %s23, %s35
    %s252 = ssub.s32 %s24, %s31
    %s253 = sor.u32 %s251, %s252
    %p254 = scmp.eq.s32.totalorder %s253, 0
    %s256 = sadd.s32 %s255, 1
    %s257 = scalar_select %p254, %s255, %s256
    %p260 = pneg %p254
    %p261 = scmp.eq.s32.totalorder %s16, 3
    %p262 = por %p260, %p261
    %p263 = scmp.ne.s32.totalorder %s255, %s258
    %p264 = scmp.eq.s32.totalorder %s16, 0
    %p265 = por %p263, %p264
    %p266 = scmp.ne.s32.totalorder %s255, %s258
    %p267 = scmp.eq.s32.totalorder %s21, 3
    %p268 = por %p266, %p267
    %p269 = scmp.ne.s32.totalorder %s258, %s259
    %p270 = scmp.eq.s32.totalorder %s21, 0
    %p271 = por %p269, %p270
    %p272 = scmp.ne.s32.totalorder %s258, %s259
    %p273 = scmp.eq.s32.totalorder %s22, 3
    %p274 = por %p272, %p273
    %p276 = scmp.ne.s32.totalorder %s259, %s275
    %p277 = scmp.eq.s32.totalorder %s22, 0
    %p278 = por %p276, %p277
    %p279 = scmp.le.s32.totalorder 1, %s16
    %p280 = scmp.lt.s32.totalorder %s16, 5
    %p281 = pnand %p279, %p280
    %p282 = pneg %p281
    // Predicated region
    $region9: #{tpu_custom_call.1} parent=5 // pred_check
      _
    $region10: #{tpu_custom_call.1} parent=5 // pred_check_branch
      %284 = sbr.rel (%p281) target = $region12
    $region11: #{tpu_custom_call.1} parent=5 // pred_region
      %s285 = ssub.s32 %s16, 1
      // Predicated region
      $region13: #{tpu_custom_call.1} parent=11 // pred_check
        %p286 = pneg %p75
      $region14: #{tpu_custom_call.1} parent=11 // pred_check_branch
        %288 = sbr.rel (%p286) target = $region16
      $region15: #{tpu_custom_call.1} parent=11 // pred_region
        _
      $region16: #{tpu_custom_call.1} parent=11 // pred_fallthru
        _
      // Predicated region
      $region17: #{tpu_custom_call.1} parent=11 // pred_check
        %p289 = pneg %p96
      $region18: #{tpu_custom_call.1} parent=11 // pred_check_branch
        %291 = sbr.rel (%p289) target = $region20
      $region19: #{tpu_custom_call.1} parent=11 // pred_region
        _
      $region20: #{tpu_custom_call.1} parent=11 // pred_fallthru
        _
      // Predicated region
      $region21: #{tpu_custom_call.1} parent=11 // pred_check
        %p292 = pneg %p117
      $region22: #{tpu_custom_call.1} parent=11 // pred_check_branch
        %294 = sbr.rel (%p292) target = $region24
      $region23: #{tpu_custom_call.1} parent=11 // pred_region
        _
      $region24: #{tpu_custom_call.1} parent=11 // pred_fallthru
        _
      // Predicated region
      $region25: #{tpu_custom_call.1} parent=11 // pred_check
        %p295 = pneg %p138
      $region26: #{tpu_custom_call.1} parent=11 // pred_check_branch
        %297 = sbr.rel (%p295) target = $region28
      $region27: #{tpu_custom_call.1} parent=11 // pred_region
        _
      $region28: #{tpu_custom_call.1} parent=11 // pred_fallthru
        _
      // Predicated region
      $region29: #{tpu_custom_call.1} parent=11 // pred_check
        %p298 = pneg %p159
      $region30: #{tpu_custom_call.1} parent=11 // pred_check_branch
        %300 = sbr.rel (%p298) target = $region32
      $region31: #{tpu_custom_call.1} parent=11 // pred_region
        _
      $region32: #{tpu_custom_call.1} parent=11 // pred_fallthru
        _
      // Predicated region
      $region33: #{tpu_custom_call.1} parent=11 // pred_check
        %p301 = pneg %p180
      $region34: #{tpu_custom_call.1} parent=11 // pred_check_branch
        %303 = sbr.rel (%p301) target = $region36
      $region35: #{tpu_custom_call.1} parent=11 // pred_region
        _
      $region36: #{tpu_custom_call.1} parent=11 // pred_fallthru
        _
      // Predicated region
      $region37: #{tpu_custom_call.1} parent=11 // pred_check
        %p304 = pneg %p201
      $region38: #{tpu_custom_call.1} parent=11 // pred_check_branch
        %306 = sbr.rel (%p304) target = $region40
      $region39: #{tpu_custom_call.1} parent=11 // pred_region
        _
      $region40: #{tpu_custom_call.1} parent=11 // pred_fallthru
        _
      // Predicated region
      $region41: #{tpu_custom_call.1} parent=11 // pred_check
        %p307 = pneg %p222
      $region42: #{tpu_custom_call.1} parent=11 // pred_check_branch
        %309 = sbr.rel (%p307) target = $region44
      $region43: #{tpu_custom_call.1} parent=11 // pred_region
        _
      $region44: #{tpu_custom_call.1} parent=11 // pred_fallthru
        _
      // Predicated region
      $region45: #{tpu_custom_call.1} parent=11 // pred_check
        %p310 = pneg %p243
      $region46: #{tpu_custom_call.1} parent=11 // pred_check_branch
        %312 = sbr.rel (%p310) target = $region48
      $region47: #{tpu_custom_call.1} parent=11 // pred_region
        _
      $region48: #{tpu_custom_call.1} parent=11 // pred_fallthru
        _
    $region12: #{tpu_custom_call.1} parent=5 // pred_fallthru
      _
    %p313 = scmp.lt.s32.totalorder %s16, 4
    // Predicated region
    $region49: #{tpu_custom_call.1} parent=5 // pred_check
      %p314 = pneg %p313
    $region50: #{tpu_custom_call.1} parent=5 // pred_check_branch
      %316 = sbr.rel (%p314) target = $region52
    $region51: #{tpu_custom_call.1} parent=5 // pred_region
      // Predicated region
      $region53: #{tpu_custom_call.1} parent=51 // pred_check
        %p317 = pneg %p48
      $region54: #{tpu_custom_call.1} parent=51 // pred_check_branch
        %319 = sbr.rel (%p317) target = $region56
      $region55: #{tpu_custom_call.1} parent=51 // pred_region
        %p320 = scmp.lt.s32.totalorder %s23, 1
        %s321 = scalar_select %p320, %s23, 1
        %s322 = smul.addr %s321, 66
        %s323 = smul.addr %s322, 4
        %s324 = scalar_lea.vmem %s0, %s323
      $region56: #{tpu_custom_call.1} parent=51 // pred_fallthru
        _
    $region52: #{tpu_custom_call.1} parent=5 // pred_fallthru
      _
    %p325 = scmp.le.s32.totalorder 1, %s16
    %p326 = scmp.lt.s32.totalorder %s16, 5
    %p327 = pnand %p325, %p326
    %p328 = pneg %p327
    // Predicated region
    $region57: #{tpu_custom_call.1} parent=5 // pred_check
      _
    $region58: #{tpu_custom_call.1} parent=5 // pred_check_branch
      %330 = sbr.rel (%p327) target = $region60
    $region59: #{tpu_custom_call.1} parent=5 // pred_region
      %s331 = ssub.s32 %s16, 1
      %p332 = scmp.lt.s32.totalorder %s25, 1
      %s333 = scalar_select %p332, %s25, 1
      %s334 = smul.addr %s333, 66
      %s335 = smul.addr %s334, 4
      %s336 = scalar_lea.vmem %s0, %s335
      %p337 = pneg %p54
      %p338 = pneg %p51
      %p339 = pneg %p75
      %p340 = pneg %p72
      %p341 = pneg %p96
      %p342 = pneg %p93
      %p343 = pneg %p117
      %p344 = pneg %p114
      %p345 = pneg %p138
      %p346 = pneg %p135
      %p347 = pneg %p159
      %p348 = pneg %p156
      %p349 = pneg %p180
      %p350 = pneg %p177
      %p351 = pneg %p201
      %p352 = pneg %p198
      %p353 = pneg %p222
      %p354 = pneg %p219
      %p355 = pneg %p243
      %p356 = pneg %p240
      %p357 = pneg %p271
      %p358 = pneg %p268
      %s359 = smul.u32 8, %s26
      %p360 = scmp.lt.s32.totalorder %s25, 1
      %s361 = scalar_select %p360, %s25, 1
      %p362 = scmp.lt.s32.totalorder %s359, 15
      %s363 = scalar_select %p362, %s359, 15
      %s364 = smul.addr %s363, 2
      %s365 = smul.addr %s361, 32
      %s366 = sadd.s32 %s364, %s365
      %s367 = smul.addr %s366, 8
      %s368 = scalar_lea.vmem %s10, %s367
      %p369 = scmp.lt.s32.totalorder %s25, 1
      %s370 = scalar_select %p369, %s25, 1
      %s371 = smul.addr %s370, 66
      %s372 = smul.addr %s371, 4
      %s373 = scalar_lea.vmem %s0, %s372
      %s374 = smul.u32 8, %s26
      %p375 = scmp.lt.s32.totalorder %s25, 1
      %s376 = scalar_select %p375, %s25, 1
      %p377 = scmp.lt.s32.totalorder %s374, 15
      %s378 = scalar_select %p377, %s374, 15
      %s379 = smul.addr %s378, 2
      %s380 = smul.addr %s376, 32
      %s381 = sadd.s32 %s379, %s380
      %s382 = smul.addr %s381, 8
      %s383 = scalar_lea.vmem %s10, %s382
      %s384 = smul.u32 8, %s26
      %s386 = smul.u32 %s26, 8
      %v387 = vld [vmem:[%s373] sm:$0xf]
      %v388 = vld [vmem:[%s373 + $0x4] sm:$0xf]
      %v389 = vld [vmem:[%s373 + $0x8] sm:$0x7]
      %v390 = vld [vmem:[%s373 + $0xc] sm:$0xf]
      %v391 = vld [vmem:[%s373 + $0x10] sm:$0xf]
      %v392 = vld [vmem:[%s373 + $0x14] sm:$0x7]
      %v393 = vld [vmem:[%s373 + $0x18] sm:$0xf]
      %v394 = vld [vmem:[%s373 + $0x1c] sm:$0xf]
      %v395 = vld [vmem:[%s373 + $0x20] sm:$0x7]
      %v396 = vld [vmem:[%s373 + $0x24] sm:$0xf]
      %v397 = vld [vmem:[%s373 + $0x28] sm:$0xf]
      %v398 = vld [vmem:[%s373 + $0x2c] sm:$0x7]
      %v399 = vld [vmem:[%s373 + $0x30] sm:$0xf]
      %v400 = vld [vmem:[%s373 + $0x34] sm:$0xf]
      %v401 = vld [vmem:[%s373 + $0x38] sm:$0x7]
      %v402 = vld [vmem:[%s373 + $0x3c] sm:$0xf]
      %v403 = vld [vmem:[%s373 + $0x40] sm:$0xf]
      %v404 = vld [vmem:[%s373 + $0x44] sm:$0x7]
      %v405 = vld [vmem:[%s373 + $0x48] sm:$0xf]
      %v406 = vld [vmem:[%s373 + $0x4c] sm:$0xf]
      %v407 = vld [vmem:[%s373 + $0x50] sm:$0x7]
      %v408 = vld [vmem:[%s373 + $0x54] sm:$0xf]
      %v409 = vld [vmem:[%s373 + $0x58] sm:$0xf]
      %v410 = vld [vmem:[%s373 + $0x5c] sm:$0x7]
      %v411 = vld [vmem:[%s373 + $0x60] sm:$0xf]
      %v412 = vld [vmem:[%s373 + $0x64] sm:$0xf]
      %v413 = vld [vmem:[%s373 + $0x68] sm:$0x7]
      %v414 = vld [vmem:[%s373 + $0x6c] sm:$0xf]
      %v415 = vld [vmem:[%s373 + $0x70] sm:$0xf]
      %v416 = vld [vmem:[%s373 + $0x74] sm:$0x7]
      %v417 = vld [vmem:[%s373 + $0x78] sm:$0xf]
      %v418 = vld [vmem:[%s373 + $0x7c] sm:$0xf]
      %v419 = vld [vmem:[%s373 + $0x80] sm:$0x7]
      %v420 = vld [vmem:[%s373 + $0x84] sm:$0xf]
      %v421 = vld [vmem:[%s373 + $0x88] sm:$0xf]
      %v422 = vld [vmem:[%s373 + $0x8c] sm:$0x7]
      %v423 = vld [vmem:[%s373 + $0x90] sm:$0xf]
      %v424 = vld [vmem:[%s373 + $0x94] sm:$0xf]
      %v425 = vld [vmem:[%s373 + $0x98] sm:$0x7]
      %v426 = vld [vmem:[%s373 + $0x9c] sm:$0xf]
      %v427 = vld [vmem:[%s373 + $0xa0] sm:$0xf]
      %v428 = vld [vmem:[%s373 + $0xa4] sm:$0x7]
      %v429 = vld [vmem:[%s373 + $0xa8] sm:$0xf]
      %v430 = vld [vmem:[%s373 + $0xac] sm:$0xf]
      %v431 = vld [vmem:[%s373 + $0xb0] sm:$0x7]
      %v432 = vld [vmem:[%s373 + $0xb4] sm:$0xf]
      %v433 = vld [vmem:[%s373 + $0xb8] sm:$0xf]
      %v434 = vld [vmem:[%s373 + $0xbc] sm:$0x7]
      %v435 = vld [vmem:[%s373 + $0xc0] sm:$0xf]
      %v436 = vld [vmem:[%s373 + $0xc4] sm:$0xf]
      %v437 = vld [vmem:[%s373 + $0xc8] sm:$0x7]
      %v438 = vld [vmem:[%s373 + $0xcc] sm:$0xf]
      %v439 = vld [vmem:[%s373 + $0xd0] sm:$0xf]
      %v440 = vld [vmem:[%s373 + $0xd4] sm:$0x7]
      %v441 = vld [vmem:[%s373 + $0xd8] sm:$0xf]
      %v442 = vld [vmem:[%s373 + $0xdc] sm:$0xf]
      %v443 = vld [vmem:[%s373 + $0xe0] sm:$0x7]
      %v444 = vld [vmem:[%s373 + $0xe4] sm:$0xf]
      %v445 = vld [vmem:[%s373 + $0xe8] sm:$0xf]
      %v446 = vld [vmem:[%s373 + $0xec] sm:$0x7]
      %v447 = vld [vmem:[%s373 + $0xf0] sm:$0xf]
      %v448 = vld [vmem:[%s373 + $0xf4] sm:$0xf]
      %v449 = vld [vmem:[%s373 + $0xf8] sm:$0x7]
      %v450 = vld [vmem:[%s373 + $0xfc] sm:$0xf]
      %v451 = vld [vmem:[%s373 + $0x100] sm:$0xf]
      %v452 = vld [vmem:[%s373 + $0x104] sm:$0x7]
      %v453 = vunpack.c.l.bf16 %v387
      %v454 = vunpack.c.l.bf16 %v388
      %v455 = vunpack.c.l.bf16 %v389
      %v456 = vunpack.c.l.bf16 %v390
      %v457 = vunpack.c.l.bf16 %v391
      %v458 = vunpack.c.l.bf16 %v392
      %v459 = vunpack.c.l.bf16 %v393
      %v460 = vunpack.c.l.bf16 %v394
      %v461 = vunpack.c.l.bf16 %v395
      %v462 = vunpack.c.l.bf16 %v396
      %v463 = vunpack.c.l.bf16 %v397
      %v464 = vunpack.c.l.bf16 %v398
      %v465 = vunpack.c.l.bf16 %v399
      %v466 = vunpack.c.l.bf16 %v400
      %v467 = vunpack.c.l.bf16 %v401
      %v468 = vunpack.c.l.bf16 %v402
      %v469 = vunpack.c.l.bf16 %v403
      %v470 = vunpack.c.l.bf16 %v404
      %v471 = vunpack.c.l.bf16 %v405
      %v472 = vunpack.c.l.bf16 %v406
      %v473 = vunpack.c.l.bf16 %v407
      %v474 = vunpack.c.l.bf16 %v408
      %v475 = vunpack.c.l.bf16 %v409
      %v476 = vunpack.c.l.bf16 %v410
      %v477 = vunpack.c.l.bf16 %v411
      %v478 = vunpack.c.l.bf16 %v412
      %v479 = vunpack.c.l.bf16 %v413
      %v480 = vunpack.c.l.bf16 %v414
      %v481 = vunpack.c.l.bf16 %v415
      %v482 = vunpack.c.l.bf16 %v416
      %v483 = vunpack.c.l.bf16 %v417
      %v484 = vunpack.c.l.bf16 %v418
      %v485 = vunpack.c.l.bf16 %v419
      %v486 = vunpack.c.l.bf16 %v420
      %v487 = vunpack.c.l.bf16 %v421
      %v488 = vunpack.c.l.bf16 %v422
      %v489 = vunpack.c.l.bf16 %v423
      %v490 = vunpack.c.l.bf16 %v424
      %v491 = vunpack.c.l.bf16 %v425
      %v492 = vunpack.c.l.bf16 %v426
      %v493 = vunpack.c.l.bf16 %v427
      %v494 = vunpack.c.l.bf16 %v428
      %v495 = vunpack.c.l.bf16 %v429
      %v496 = vunpack.c.l.bf16 %v430
      %v497 = vunpack.c.l.bf16 %v431
      %v498 = vunpack.c.l.bf16 %v432
      %v499 = vunpack.c.l.bf16 %v433
      %v500 = vunpack.c.l.bf16 %v434
      %v501 = vunpack.c.l.bf16 %v435
      %v502 = vunpack.c.l.bf16 %v436
      %v503 = vunpack.c.l.bf16 %v437
      %v504 = vunpack.c.l.bf16 %v438
      %v505 = vunpack.c.l.bf16 %v439
      %v506 = vunpack.c.l.bf16 %v440
      %v507 = vunpack.c.l.bf16 %v441
      %v508 = vunpack.c.l.bf16 %v442
      %v509 = vunpack.c.l.bf16 %v443
      %v510 = vunpack.c.l.bf16 %v444
      %v511 = vunpack.c.l.bf16 %v445
      %v512 = vunpack.c.l.bf16 %v446
      %v513 = vunpack.c.l.bf16 %v447
      %v514 = vunpack.c.l.bf16 %v448
      %v515 = vunpack.c.l.bf16 %v449
      %v516 = vunpack.c.l.bf16 %v450
      %v517 = vunpack.c.l.bf16 %v451
      %v518 = vunpack.c.l.bf16 %v452
      %vm519 = vcmask 64512
      %v520 = vsel %vm519, %v453, 0.0
      %v521 = vsel %vm519, %v456, 0.0
      %v522 = vadd.f32 %v520, %v521
      %v523 = vsel %vm519, %v459, 0.0
      %v524 = vadd.f32 %v522, %v523
      %v525 = vsel %vm519, %v462, 0.0
      %v526 = vadd.f32 %v524, %v525
      %v527 = vsel %vm519, %v465, 0.0
      %v528 = vadd.f32 %v526, %v527
      %v529 = vsel %vm519, %v468, 0.0
      %v530 = vadd.f32 %v528, %v529
      %v531 = vsel %vm519, %v471, 0.0
      %v532 = vadd.f32 %v530, %v531
      %v533 = vsel %vm519, %v474, 0.0
      %v534 = vadd.f32 %v532, %v533
      %v535 = vsel %vm519, %v477, 0.0
      %v536 = vadd.f32 %v534, %v535
      %v537 = vsel %vm519, %v480, 0.0
      %v538 = vadd.f32 %v536, %v537
      %v539 = vsel %vm519, %v483, 0.0
      %v540 = vadd.f32 %v538, %v539
      %v541 = vsel %vm519, %v486, 0.0
      %v542 = vadd.f32 %v540, %v541
      %v543 = vsel %vm519, %v489, 0.0
      %v544 = vadd.f32 %v542, %v543
      %v545 = vsel %vm519, %v492, 0.0
      %v546 = vadd.f32 %v544, %v545
      %v547 = vsel %vm519, %v495, 0.0
      %v548 = vadd.f32 %v546, %v547
      %v549 = vsel %vm519, %v498, 0.0
      %v550 = vadd.f32 %v548, %v549
      %v551 = vsel %vm519, %v501, 0.0
      %v552 = vadd.f32 %v550, %v551
      %v553 = vsel %vm519, %v504, 0.0
      %v554 = vadd.f32 %v552, %v553
      %v555 = vsel %vm519, %v507, 0.0
      %v556 = vadd.f32 %v554, %v555
      %v557 = vsel %vm519, %v510, 0.0
      %v558 = vadd.f32 %v556, %v557
      %v559 = vsel %vm519, %v513, 0.0
      %v560 = vadd.f32 %v558, %v559
      %v561 = vsel %vm519, %v516, 0.0
      %v562 = vadd.f32 %v560, %v561
      %v563 = vsel %vm519, %v454, 0.0
      %v564 = vsel %vm519, %v457, 0.0
      %v565 = vadd.f32 %v563, %v564
      %v566 = vsel %vm519, %v460, 0.0
      %v567 = vadd.f32 %v565, %v566
      %v568 = vsel %vm519, %v463, 0.0
      %v569 = vadd.f32 %v567, %v568
      %v570 = vsel %vm519, %v466, 0.0
      %v571 = vadd.f32 %v569, %v570
      %v572 = vsel %vm519, %v469, 0.0
      %v573 = vadd.f32 %v571, %v572
      %v574 = vsel %vm519, %v472, 0.0
      %v575 = vadd.f32 %v573, %v574
      %v576 = vsel %vm519, %v475, 0.0
      %v577 = vadd.f32 %v575, %v576
      %v578 = vsel %vm519, %v478, 0.0
      %v579 = vadd.f32 %v577, %v578
      %v580 = vsel %vm519, %v481, 0.0
      %v581 = vadd.f32 %v579, %v580
      %v582 = vsel %vm519, %v484, 0.0
      %v583 = vadd.f32 %v581, %v582
      %v584 = vsel %vm519, %v487, 0.0
      %v585 = vadd.f32 %v583, %v584
      %v586 = vsel %vm519, %v490, 0.0
      %v587 = vadd.f32 %v585, %v586
      %v588 = vsel %vm519, %v493, 0.0
      %v589 = vadd.f32 %v587, %v588
      %v590 = vsel %vm519, %v496, 0.0
      %v591 = vadd.f32 %v589, %v590
      %v592 = vsel %vm519, %v499, 0.0
      %v593 = vadd.f32 %v591, %v592
      %v594 = vsel %vm519, %v502, 0.0
      %v595 = vadd.f32 %v593, %v594
      %v596 = vsel %vm519, %v505, 0.0
      %v597 = vadd.f32 %v595, %v596
      %v598 = vsel %vm519, %v508, 0.0
      %v599 = vadd.f32 %v597, %v598
      %v600 = vsel %vm519, %v511, 0.0
      %v601 = vadd.f32 %v599, %v600
      %v602 = vsel %vm519, %v514, 0.0
      %v603 = vadd.f32 %v601, %v602
      %v604 = vsel %vm519, %v517, 0.0
      %v605 = vadd.f32 %v603, %v604
      %vm606 = vcmask 62464
      %v607 = vsel %vm606, %v455, 0.0
      %v608 = vsel %vm606, %v458, 0.0
      %v609 = vadd.f32 %v607, %v608
      %v610 = vsel %vm606, %v461, 0.0
      %v611 = vadd.f32 %v609, %v610
      %v612 = vsel %vm606, %v464, 0.0
      %v613 = vadd.f32 %v611, %v612
      %v614 = vsel %vm606, %v467, 0.0
      %v615 = vadd.f32 %v613, %v614
      %v616 = vsel %vm606, %v470, 0.0
      %v617 = vadd.f32 %v615, %v616
      %v618 = vsel %vm606, %v473, 0.0
      %v619 = vadd.f32 %v617, %v618
      %v620 = vsel %vm606, %v476, 0.0
      %v621 = vadd.f32 %v619, %v620
      %v622 = vsel %vm606, %v479, 0.0
      %v623 = vadd.f32 %v621, %v622
      %v624 = vsel %vm606, %v482, 0.0
      %v625 = vadd.f32 %v623, %v624
      %v626 = vsel %vm606, %v485, 0.0
      %v627 = vadd.f32 %v625, %v626
      %v628 = vsel %vm606, %v488, 0.0
      %v629 = vadd.f32 %v627, %v628
      %v630 = vsel %vm606, %v491, 0.0
      %v631 = vadd.f32 %v629, %v630
      %v632 = vsel %vm606, %v494, 0.0
      %v633 = vadd.f32 %v631, %v632
      %v634 = vsel %vm606, %v497, 0.0
      %v635 = vadd.f32 %v633, %v634
      %v636 = vsel %vm606, %v500, 0.0
      %v637 = vadd.f32 %v635, %v636
      %v638 = vsel %vm606, %v503, 0.0
      %v639 = vadd.f32 %v637, %v638
      %v640 = vsel %vm606, %v506, 0.0
      %v641 = vadd.f32 %v639, %v640
      %v642 = vsel %vm606, %v509, 0.0
      %v643 = vadd.f32 %v641, %v642
      %v644 = vsel %vm606, %v512, 0.0
      %v645 = vadd.f32 %v643, %v644
      %v646 = vsel %vm606, %v515, 0.0
      %v647 = vadd.f32 %v645, %v646
      %v648 = vsel %vm606, %v518, 0.0
      %v649 = vadd.f32 %v647, %v648
      %v650 = vsel %vm519, %v562, 0.0
      %v651 = vsel %vm519, %v605, 0.0
      %v652 = vadd.f32 %v650, %v651
      %v653 = vsel %vm606, %v649, 0.0
      %v654 = vadd.f32 %v652, %v653
      %v655 = vrot.slane %v654, 4
      %v656 = vadd.f32 %v654, %v655
      %v657 = vrot.slane %v656, 2
      %v658 = vadd.f32 %v656, %v657
      %v659 = vrot.slane %v658, 1
      %v660 = vadd.f32 %v658, %v659
      %v661 = vmul.f32 %v660, 0.00390625
      %v662 = vpack.c.bf16 %v661, %v661
      %v663 = vld [vmem:[%s4] sm:$0xf]
      %v665 = vsel %vm519, %v662, 0
      %vm667 = vcmask 1043456
      %v669 = vsel %vm667, %v663, 0
      %671 = vmatprep.subr.bf16.mxu0 0
      %672 = vmatpush1.bf16.msra.mxu0 %v669
      %673 = vmatprep.subr.bf16.mxu0 0
      %674 = vmatpush1.bf16.msra.mxu0 0
      %675 = vmatprep.subr.bf16.mxu0 0
      %676 = vmatpush1.bf16.msra.mxu0 0
      %677 = vmatprep.subr.bf16.mxu0 0
      %678 = vmatpush1.bf16.msra.mxu0 0
      %679 = vmatprep.subr.bf16.mxu0 0
      %680 = vmatpush1.bf16.msra.mxu0 0
      %681 = vmatprep.subr.bf16.mxu0 0
      %682 = vmatpush1.bf16.msra.mxu0 0
      %683 = vmatprep.subr.bf16.mxu0 0
      %684 = vmatpush1.bf16.msra.mxu0 0
      %685 = vmatprep.subr.bf16.mxu0 0
      %686 = vmatpush1.bf16.msra.mxu0 0
      %687 = vmatprep.subr.bf16.mxu0 0
      %688 = vmatpush1.bf16.msra.mxu0 0
      %689 = vmatprep.subr.bf16.mxu0 0
      %690 = vmatpush1.bf16.msra.mxu0 0
      %691 = vmatprep.subr.bf16.mxu0 0
      %692 = vmatpush1.bf16.msra.mxu0 0
      %693 = vmatprep.subr.bf16.mxu0 0
      %694 = vmatpush1.bf16.msra.mxu0 0
      %695 = vmatprep.subr.bf16.mxu0 0
      %696 = vmatpush1.bf16.msra.mxu0 0
      %697 = vmatprep.subr.bf16.mxu0 0
      %698 = vmatpush1.bf16.msra.mxu0 0
      %699 = vmatprep.subr.bf16.mxu0 0
      %700 = vmatpush1.bf16.msra.mxu0 0
      %701 = vmatprep.subr.bf16.mxu0 0
      %702 = vmatpush1.bf16.msra.mxu0 0
      %703 = vmatprep.mubr.bf16.mxu0 0
      %704 = vmatmul.mubr.bf16.gmra.mrb[0].mxu0 %v665
      %v705 = vpop.f32.mrb[0].mxu0
      %v706 = vadd.f32 0.0, %v705
      %v707 = vpop.f32.mrb[0].mxu0
      %v708 = vpop.f32.mrb[0].mxu0
      %v709 = vpop.f32.mrb[0].mxu0
      %710 = vdwg.mxu0
      %v711 = vld [vmem:[%s5] sm:$0x1]
      %v712 = vmul.f32 %v706, %v711
      %v713 = vld [vmem:[%s6] sm:$0x1]
      %v714 = vadd.f32 %v712, %v713
      %v715 = vmax.f32 %v714, 0.0
      %v716 = vpack.c.bf16 %v715, %v715
      %s717 = scalar_lea.vmem %s7, 6
      %v718 = vld [vmem:[%s717] sm:$0x3]
      %vm719 = vcmask 31744
      %v721 = vsel %vm719, %v716, 0
      %vm723 = vcmask 1041408
      %v725 = vsel %vm723, %v718, 0
      %727 = vmatprep.subr.bf16.mxu0 0
      %728 = vmatpush1.bf16.msra.mxu0 %v725
      %729 = vmatprep.subr.bf16.mxu0 0
      %730 = vmatpush1.bf16.msra.mxu0 0
      %731 = vmatprep.subr.bf16.mxu0 0
      %732 = vmatpush1.bf16.msra.mxu0 0
      %733 = vmatprep.subr.bf16.mxu0 0
      %734 = vmatpush1.bf16.msra.mxu0 0
      %735 = vmatprep.subr.bf16.mxu0 0
      %736 = vmatpush1.bf16.msra.mxu0 0
      %737 = vmatprep.subr.bf16.mxu0 0
      %738 = vmatpush1.bf16.msra.mxu0 0
      %739 = vmatprep.subr.bf16.mxu0 0
      %740 = vmatpush1.bf16.msra.mxu0 0
      %741 = vmatprep.subr.bf16.mxu0 0
      %742 = vmatpush1.bf16.msra.mxu0 0
      %743 = vmatprep.subr.bf16.mxu0 0
      %744 = vmatpush1.bf16.msra.mxu0 0
      %745 = vmatprep.subr.bf16.mxu0 0
      %746 = vmatpush1.bf16.msra.mxu0 0
      %747 = vmatprep.subr.bf16.mxu0 0
      %748 = vmatpush1.bf16.msra.mxu0 0
      %749 = vmatprep.subr.bf16.mxu0 0
      %750 = vmatpush1.bf16.msra.mxu0 0
      %751 = vmatprep.subr.bf16.mxu0 0
      %752 = vmatpush1.bf16.msra.mxu0 0
      %753 = vmatprep.subr.bf16.mxu0 0
      %754 = vmatpush1.bf16.msra.mxu0 0
      %755 = vmatprep.subr.bf16.mxu0 0
      %756 = vmatpush1.bf16.msra.mxu0 0
      %757 = vmatprep.subr.bf16.mxu0 0
      %758 = vmatpush1.bf16.msra.mxu0 0
      %759 = vmatprep.mubr.bf16.mxu0 0
      %760 = vmatmul.mubr.bf16.gmra.mrb[0].mxu0 %v721
      %v761 = vpop.f32.mrb[0].mxu0
      %v762 = vadd.f32 0.0, %v761
      %v763 = vpop.f32.mrb[0].mxu0
      %v764 = vpop.f32.mrb[0].mxu0
      %v765 = vpop.f32.mrb[0].mxu0
      %766 = vdwg.mxu0
      %s767 = smul.u32 %s386, 3
      %s768 = smul.addr %s767, 4
      %s769 = scalar_lea.vmem %s373, %s768
      %v770 = vld [vmem:[%s769] sm:$0xf]
      %v771 = vld [vmem:[%s769 + $0x4] sm:$0xf]
      %v772 = vld [vmem:[%s769 + $0x8] sm:$0x7]
      %v773 = vld [vmem:[%s769 + $0xc] sm:$0xf]
      %v774 = vld [vmem:[%s769 + $0x10] sm:$0xf]
      %v775 = vld [vmem:[%s769 + $0x14] sm:$0x7]
      %v776 = vld [vmem:[%s769 + $0x18] sm:$0xf]
      %v777 = vld [vmem:[%s769 + $0x1c] sm:$0xf]
      %v778 = vld [vmem:[%s769 + $0x20] sm:$0x7]
      %v779 = vld [vmem:[%s769 + $0x24] sm:$0xf]
      %v780 = vld [vmem:[%s769 + $0x28] sm:$0xf]
      %v781 = vld [vmem:[%s769 + $0x2c] sm:$0x7]
      %v782 = vld [vmem:[%s769 + $0x30] sm:$0xf]
      %v783 = vld [vmem:[%s769 + $0x34] sm:$0xf]
      %v784 = vld [vmem:[%s769 + $0x38] sm:$0x7]
      %v785 = vld [vmem:[%s769 + $0x3c] sm:$0xf]
      %v786 = vld [vmem:[%s769 + $0x40] sm:$0xf]
      %v787 = vld [vmem:[%s769 + $0x44] sm:$0x7]
      %v788 = vld [vmem:[%s769 + $0x48] sm:$0xf]
      %v789 = vld [vmem:[%s769 + $0x4c] sm:$0xf]
      %v790 = vld [vmem:[%s769 + $0x50] sm:$0x7]
      %v791 = vld [vmem:[%s769 + $0x54] sm:$0xf]
      %v792 = vld [vmem:[%s769 + $0x58] sm:$0xf]
      %v793 = vld [vmem:[%s769 + $0x5c] sm:$0x7]
      %v794 = vld [vmem:[%s769 + $0x60] sm:$0xf]
      %v795 = vld [vmem:[%s769 + $0x64] sm:$0xf]
      %v796 = vld [vmem:[%s769 + $0x68] sm:$0x7]
      %v797 = vld [vmem:[%s769 + $0x6c] sm:$0xf]
      %v798 = vld [vmem:[%s769 + $0x70] sm:$0xf]
      %v799 = vld [vmem:[%s769 + $0x74] sm:$0x7]
      %v800 = vld [vmem:[%s769 + $0x78] sm:$0xf]
      %v801 = vld [vmem:[%s769 + $0x7c] sm:$0xf]
      %v802 = vld [vmem:[%s769 + $0x80] sm:$0x7]
      %v803 = vld [vmem:[%s769 + $0x84] sm:$0xf]
      %v804 = vld [vmem:[%s769 + $0x88] sm:$0xf]
      %v805 = vld [vmem:[%s769 + $0x8c] sm:$0x7]
      %v806 = vld [vmem:[%s769 + $0x90] sm:$0xf]
      %v807 = vld [vmem:[%s769 + $0x94] sm:$0xf]
      %v808 = vld [vmem:[%s769 + $0x98] sm:$0x7]
      %v809 = vld [vmem:[%s769 + $0x9c] sm:$0xf]
      %v810 = vld [vmem:[%s769 + $0xa0] sm:$0xf]
      %v811 = vld [vmem:[%s769 + $0xa4] sm:$0x7]
      %vm836 = vcmask 1042432
      %vm837 = vcmask 1046532
      %vm838 = vmor %vm836, %vm837
      %v839 = vrot.slane %v776, 5
      %v840 = vrot.slane %v839, 4
      %v841 = vrot.slane %v777, 5
      %v842 = vsel %vm838, %v840, %v841
      %v843 = vrot.slane %v841, 4
      %v844 = vrot.slane %v778, 5
      %v845 = vsel %vm838, %v843, %v844
      %v846 = vrot.slane %v779, 5
      %v847 = vrot.slane %v846, 4
      %v848 = vrot.slane %v780, 5
      %v849 = vsel %vm838, %v847, %v848
      %v850 = vrot.slane %v848, 4
      %v851 = vrot.slane %v781, 5
      %v852 = vsel %vm838, %v850, %v851
      %v853 = vrot.slane %v782, 5
      %v854 = vrot.slane %v853, 4
      %v855 = vrot.slane %v783, 5
      %v856 = vsel %vm838, %v854, %v855
      %v857 = vrot.slane %v855, 4
      %v858 = vrot.slane %v784, 5
      %v859 = vsel %vm838, %v857, %v858
      %v860 = vrot.slane %v785, 5
      %v861 = vrot.slane %v860, 4
      %v862 = vrot.slane %v786, 5
      %v863 = vsel %vm838, %v861, %v862
      %v864 = vrot.slane %v862, 4
      %v865 = vrot.slane %v787, 5
      %v866 = vsel %vm838, %v864, %v865
      %v867 = vrot.slane %v788, 5
      %v868 = vrot.slane %v867, 4
      %v869 = vrot.slane %v789, 5
      %v870 = vsel %vm838, %v868, %v869
      %v871 = vrot.slane %v869, 4
      %v872 = vrot.slane %v790, 5
      %v873 = vsel %vm838, %v871, %v872
      %v874 = vrot.slane %v791, 5
      %v875 = vrot.slane %v874, 4
      %v876 = vrot.slane %v792, 5
      %v877 = vsel %vm838, %v875, %v876
      %v878 = vrot.slane %v876, 4
      %v879 = vrot.slane %v793, 5
      %v880 = vsel %vm838, %v878, %v879
      %v881 = vrot.slane %v794, 5
      %v882 = vrot.slane %v881, 4
      %v883 = vrot.slane %v795, 5
      %v884 = vsel %vm838, %v882, %v883
      %v885 = vrot.slane %v883, 4
      %v886 = vrot.slane %v796, 5
      %v887 = vsel %vm838, %v885, %v886
      %v888 = vrot.slane %v797, 5
      %v889 = vrot.slane %v888, 4
      %v890 = vrot.slane %v798, 5
      %v891 = vsel %vm838, %v889, %v890
      %v892 = vrot.slane %v890, 4
      %v893 = vrot.slane %v799, 5
      %v894 = vsel %vm838, %v892, %v893
      %v895 = vld [vmem:[%s1] sm:$0xf]
      %vm896 = vsmask.f32 2304
      %vm897 = vsmask.f32 6416
      %vm898 = vmor %vm896, %vm897
      %v900 = vshrl.u32 %v776, 16
      %v902 = vrot.slane %v900, 5
      %v903 = vshll.u32 %v776, 16
      %v905 = vrot.slane %v903, 6
      %v906 = vor.u32 %v902, %v905
      %v907 = vrot.slane %v906, 4
      %v909 = vshrl.u32 %v777, 16
      %v911 = vrot.slane %v909, 5
      %v912 = vshll.u32 %v777, 16
      %v914 = vrot.slane %v912, 6
      %v915 = vor.u32 %v911, %v914
      %v916 = vsel %vm898, %v907, %v915
      %v917 = vrot.slane %v915, 4
      %v919 = vshrl.u32 %v778, 16
      %v921 = vrot.slane %v919, 5
      %v922 = vshll.u32 %v778, 16
      %v924 = vrot.slane %v922, 6
      %v925 = vor.u32 %v921, %v924
      %v926 = vsel %vm898, %v917, %v925
      %v928 = vshrl.u32 %v779, 16
      %v930 = vrot.slane %v928, 5
      %v931 = vshll.u32 %v779, 16
      %v933 = vrot.slane %v931, 6
      %v934 = vor.u32 %v930, %v933
      %v935 = vrot.slane %v934, 4
      %v937 = vshrl.u32 %v780, 16
      %v939 = vrot.slane %v937, 5
      %v940 = vshll.u32 %v780, 16
      %v942 = vrot.slane %v940, 6
      %v943 = vor.u32 %v939, %v942
      %v944 = vsel %vm898, %v935, %v943
      %v945 = vrot.slane %v943, 4
      %v947 = vshrl.u32 %v781, 16
      %v949 = vrot.slane %v947, 5
      %v950 = vshll.u32 %v781, 16
      %v952 = vrot.slane %v950, 6
      %v953 = vor.u32 %v949, %v952
      %v954 = vsel %vm898, %v945, %v953
      %v956 = vshrl.u32 %v782, 16
      %v958 = vrot.slane %v956, 5
      %v959 = vshll.u32 %v782, 16
      %v961 = vrot.slane %v959, 6
      %v962 = vor.u32 %v958, %v961
      %v963 = vrot.slane %v962, 4
      %v965 = vshrl.u32 %v783, 16
      %v967 = vrot.slane %v965, 5
      %v968 = vshll.u32 %v783, 16
      %v970 = vrot.slane %v968, 6
      %v971 = vor.u32 %v967, %v970
      %v972 = vsel %vm898, %v963, %v971
      %v973 = vrot.slane %v971, 4
      %v975 = vshrl.u32 %v784, 16
      %v977 = vrot.slane %v975, 5
      %v978 = vshll.u32 %v784, 16
      %v980 = vrot.slane %v978, 6
      %v981 = vor.u32 %v977, %v980
      %v982 = vsel %vm898, %v973, %v981
      %v984 = vshrl.u32 %v785, 16
      %v986 = vrot.slane %v984, 5
      %v987 = vshll.u32 %v785, 16
      %v989 = vrot.slane %v987, 6
      %v990 = vor.u32 %v986, %v989
      %v991 = vrot.slane %v990, 4
      %v993 = vshrl.u32 %v786, 16
      %v995 = vrot.slane %v993, 5
      %v996 = vshll.u32 %v786, 16
      %v998 = vrot.slane %v996, 6
      %v999 = vor.u32 %v995, %v998
      %v1000 = vsel %vm898, %v991, %v999
      %v1001 = vrot.slane %v999, 4
      %v1003 = vshrl.u32 %v787, 16
      %v1005 = vrot.slane %v1003, 5
      %v1006 = vshll.u32 %v787, 16
      %v1008 = vrot.slane %v1006, 6
      %v1009 = vor.u32 %v1005, %v1008
      %v1010 = vsel %vm898, %v1001, %v1009
      %v1012 = vshrl.u32 %v788, 16
      %v1014 = vrot.slane %v1012, 5
      %v1015 = vshll.u32 %v788, 16
      %v1017 = vrot.slane %v1015, 6
      %v1018 = vor.u32 %v1014, %v1017
      %v1019 = vrot.slane %v1018, 4
      %v1021 = vshrl.u32 %v789, 16
      %v1023 = vrot.slane %v1021, 5
      %v1024 = vshll.u32 %v789, 16
      %v1026 = vrot.slane %v1024, 6
      %v1027 = vor.u32 %v1023, %v1026
      %v1028 = vsel %vm898, %v1019, %v1027
      %v1029 = vrot.slane %v1027, 4
      %v1031 = vshrl.u32 %v790, 16
      %v1033 = vrot.slane %v1031, 5
      %v1034 = vshll.u32 %v790, 16
      %v1036 = vrot.slane %v1034, 6
      %v1037 = vor.u32 %v1033, %v1036
      %v1038 = vsel %vm898, %v1029, %v1037
      %v1040 = vshrl.u32 %v791, 16
      %v1042 = vrot.slane %v1040, 5
      %v1043 = vshll.u32 %v791, 16
      %v1045 = vrot.slane %v1043, 6
      %v1046 = vor.u32 %v1042, %v1045
      %v1047 = vrot.slane %v1046, 4
      %v1049 = vshrl.u32 %v792, 16
      %v1051 = vrot.slane %v1049, 5
      %v1052 = vshll.u32 %v792, 16
      %v1054 = vrot.slane %v1052, 6
      %v1055 = vor.u32 %v1051, %v1054
      %v1056 = vsel %vm898, %v1047, %v1055
      %v1057 = vrot.slane %v1055, 4
      %v1059 = vshrl.u32 %v793, 16
      %v1061 = vrot.slane %v1059, 5
      %v1062 = vshll.u32 %v793, 16
      %v1064 = vrot.slane %v1062, 6
      %v1065 = vor.u32 %v1061, %v1064
      %v1066 = vsel %vm898, %v1057, %v1065
      %v1068 = vshrl.u32 %v794, 16
      %v1070 = vrot.slane %v1068, 5
      %v1071 = vshll.u32 %v794, 16
      %v1073 = vrot.slane %v1071, 6
      %v1074 = vor.u32 %v1070, %v1073
      %v1075 = vrot.slane %v1074, 4
      %v1077 = vshrl.u32 %v795, 16
      %v1079 = vrot.slane %v1077, 5
      %v1080 = vshll.u32 %v795, 16
      %v1082 = vrot.slane %v1080, 6
      %v1083 = vor.u32 %v1079, %v1082
      %v1084 = vsel %vm898, %v1075, %v1083
      %v1085 = vrot.slane %v1083, 4
      %v1087 = vshrl.u32 %v796, 16
      %v1089 = vrot.slane %v1087, 5
      %v1090 = vshll.u32 %v796, 16
      %v1092 = vrot.slane %v1090, 6
      %v1093 = vor.u32 %v1089, %v1092
      %v1094 = vsel %vm898, %v1085, %v1093
      %v1096 = vshrl.u32 %v797, 16
      %v1098 = vrot.slane %v1096, 5
      %v1099 = vshll.u32 %v797, 16
      %v1101 = vrot.slane %v1099, 6
      %v1102 = vor.u32 %v1098, %v1101
      %v1103 = vrot.slane %v1102, 4
      %v1105 = vshrl.u32 %v798, 16
      %v1107 = vrot.slane %v1105, 5
      %v1108 = vshll.u32 %v798, 16
      %v1110 = vrot.slane %v1108, 6
      %v1111 = vor.u32 %v1107, %v1110
      %v1112 = vsel %vm898, %v1103, %v1111
      %v1113 = vrot.slane %v1111, 4
      %v1115 = vshrl.u32 %v799, 16
      %v1117 = vrot.slane %v1115, 5
      %v1118 = vshll.u32 %v799, 16
      %v1120 = vrot.slane %v1118, 6
      %v1121 = vor.u32 %v1117, %v1120
      %v1122 = vsel %vm898, %v1113, %v1121
      %s1123 = scalar_lea.vmem %s1, 4
      %v1124 = vld [vmem:[%s1123] sm:$0xf]
      %v1125 = vunpack.c.l.b16 %v916
      %v1126 = vunpack.c.l.b16 %v926
      %v1127 = vunpack.c.l.b16 %v944
      %v1128 = vunpack.c.l.b16 %v954
      %v1129 = vunpack.c.l.b16 %v972
      %v1130 = vunpack.c.l.b16 %v982
      %v1131 = vunpack.c.l.b16 %v1000
      %v1132 = vunpack.c.l.b16 %v1010
      %v1133 = vunpack.c.l.b16 %v1028
      %v1134 = vunpack.c.l.b16 %v1038
      %v1135 = vunpack.c.l.b16 %v1056
      %v1136 = vunpack.c.l.b16 %v1066
      %v1137 = vunpack.c.l.b16 %v1084
      %v1138 = vunpack.c.l.b16 %v1094
      %v1139 = vunpack.c.l.b16 %v1112
      %v1140 = vunpack.c.l.b16 %v1122
      %v1141 = vpack.c.b16 %v1126, %v1125
      %v1142 = vpack.c.b16 %v1128, %v1127
      %v1143 = vpack.c.b16 %v1130, %v1129
      %v1144 = vpack.c.b16 %v1132, %v1131
      %v1145 = vpack.c.b16 %v1134, %v1133
      %v1146 = vpack.c.b16 %v1136, %v1135
      %v1147 = vpack.c.b16 %v1138, %v1137
      %v1148 = vpack.c.b16 %v1140, %v1139
      %v1150 = vsel %vm519, %v1141, 0
      %v1153 = vsel %vm519, %v1142, 0
      %v1156 = vsel %vm519, %v1143, 0
      %v1159 = vsel %vm519, %v1144, 0
      %v1162 = vsel %vm519, %v1145, 0
      %v1165 = vsel %vm519, %v1146, 0
      %v1168 = vsel %vm519, %v1147, 0
      %v1171 = vsel %vm519, %v1148, 0
      %v1174 = vsel %vm667, %v1124, 0
      %1176 = vmatprep.subr.bf16.mxu0 0
      %1177 = vmatpush1.bf16.msra.mxu0 %v1174
      %1178 = vmatprep.subr.bf16.mxu0 0
      %1179 = vmatpush1.bf16.msra.mxu0 0
      %1180 = vmatprep.subr.bf16.mxu0 0
      %1181 = vmatpush1.bf16.msra.mxu0 0
      %1182 = vmatprep.subr.bf16.mxu0 0
      %1183 = vmatpush1.bf16.msra.mxu0 0
      %1184 = vmatprep.subr.bf16.mxu0 0
      %1185 = vmatpush1.bf16.msra.mxu0 0
      %1186 = vmatprep.subr.bf16.mxu0 0
      %1187 = vmatpush1.bf16.msra.mxu0 0
      %1188 = vmatprep.subr.bf16.mxu0 0
      %1189 = vmatpush1.bf16.msra.mxu0 0
      %1190 = vmatprep.subr.bf16.mxu0 0
      %1191 = vmatpush1.bf16.msra.mxu0 0
      %1192 = vmatprep.subr.bf16.mxu0 0
      %1193 = vmatpush1.bf16.msra.mxu0 0
      %1194 = vmatprep.subr.bf16.mxu0 0
      %1195 = vmatpush1.bf16.msra.mxu0 0
      %1196 = vmatprep.subr.bf16.mxu0 0
      %1197 = vmatpush1.bf16.msra.mxu0 0
      %1198 = vmatprep.subr.bf16.mxu0 0
      %1199 = vmatpush1.bf16.msra.mxu0 0
      %1200 = vmatprep.subr.bf16.mxu0 0
      %1201 = vmatpush1.bf16.msra.mxu0 0
      %1202 = vmatprep.subr.bf16.mxu0 0
      %1203 = vmatpush1.bf16.msra.mxu0 0
      %1204 = vmatprep.subr.bf16.mxu0 0
      %1205 = vmatpush1.bf16.msra.mxu0 0
      %1206 = vmatprep.subr.bf16.mxu0 0
      %1207 = vmatpush1.bf16.msra.mxu0 0
      %1208 = vmatprep.mubr.bf16.mxu0 0
      %1209 = vmatmul.mubr.bf16.gmra.mrb[0].mxu0 %v1150
      %v1210 = vpop.f32.mrb[0].mxu0
      %v1211 = vadd.f32 0.0, %v1210
      %v1212 = vpop.f32.mrb[0].mxu0
      %v1213 = vpop.f32.mrb[0].mxu0
      %v1214 = vadd.f32 0.0, %v1213
      %v1215 = vpop.f32.mrb[0].mxu0
      %1216 = vmatprep.mubr.bf16.mxu0 0
      %1217 = vmatmul.mubr.bf16.gmra.mrb[0].mxu0 %v1153
      %v1218 = vpop.f32.mrb[0].mxu0
      %v1219 = vadd.f32 0.0, %v1218
      %v1220 = vpop.f32.mrb[0].mxu0
      %v1221 = vpop.f32.mrb[0].mxu0
      %v1222 = vadd.f32 0.0, %v1221
      %v1223 = vpop.f32.mrb[0].mxu0
      %1224 = vmatprep.mubr.bf16.mxu0 0
      %1225 = vmatmul.mubr.bf16.gmra.mrb[0].mxu0 %v1156
      %v1226 = vpop.f32.mrb[0].mxu0
      %v1227 = vadd.f32 0.0, %v1226
      %v1228 = vpop.f32.mrb[0].mxu0
      %v1229 = vpop.f32.mrb[0].mxu0
      %v1230 = vadd.f32 0.0, %v1229
      %v1231 = vpop.f32.mrb[0].mxu0
      %1232 = vmatprep.mubr.bf16.mxu0 0
      %1233 = vmatmul.mubr.bf16.gmra.mrb[0].mxu0 %v1159
      %v1234 = vpop.f32.mrb[0].mxu0
      %v1235 = vadd.f32 0.0, %v1234
      %v1236 = vpop.f32.mrb[0].mxu0
      %v1237 = vpop.f32.mrb[0].mxu0
      %v1238 = vadd.f32 0.0, %v1237
      %v1239 = vpop.f32.mrb[0].mxu0
      %1240 = vmatprep.mubr.bf16.mxu0 0
      %1241 = vmatmul.mubr.bf16.gmra.mrb[0].mxu0 %v1162
      %v1242 = vpop.f32.mrb[0].mxu0
      %v1243 = vadd.f32 0.0, %v1242
      %v1244 = vpop.f32.mrb[0].mxu0
      %v1245 = vpop.f32.mrb[0].mxu0
      %v1246 = vadd.f32 0.0, %v1245
      %v1247 = vpop.f32.mrb[0].mxu0
      %1248 = vmatprep.mubr.bf16.mxu0 0
      %1249 = vmatmul.mubr.bf16.gmra.mrb[0].mxu0 %v1165
      %v1250 = vpop.f32.mrb[0].mxu0
      %v1251 = vadd.f32 0.0, %v1250
      %v1252 = vpop.f32.mrb[0].mxu0
      %v1253 = vpop.f32.mrb[0].mxu0
      %v1254 = vadd.f32 0.0, %v1253
      %v1255 = vpop.f32.mrb[0].mxu0
      %1256 = vmatprep.mubr.bf16.mxu0 0
      %1257 = vmatmul.mubr.bf16.gmra.mrb[0].mxu0 %v1168
      %v1258 = vpop.f32.mrb[0].mxu0
      %v1259 = vadd.f32 0.0, %v1258
      %v1260 = vpop.f32.mrb[0].mxu0
      %v1261 = vpop.f32.mrb[0].mxu0
      %v1262 = vadd.f32 0.0, %v1261
      %v1263 = vpop.f32.mrb[0].mxu0
      %1264 = vmatprep.mubr.bf16.mxu0 0
      %1265 = vmatmul.mubr.bf16.gmra.mrb[0].mxu0 %v1171
      %v1266 = vpop.f32.mrb[0].mxu0
      %v1267 = vadd.f32 0.0, %v1266
      %v1268 = vpop.f32.mrb[0].mxu0
      %v1269 = vpop.f32.mrb[0].mxu0
      %v1270 = vadd.f32 0.0, %v1269
      %v1271 = vpop.f32.mrb[0].mxu0
      %1272 = vdwg.mxu0
      %v1273 = vunpack.c.l.b16 %v842
      %v1274 = vunpack.c.l.b16 %v845
      %v1275 = vunpack.c.l.b16 %v849
      %v1276 = vunpack.c.l.b16 %v852
      %v1277 = vunpack.c.l.b16 %v856
      %v1278 = vunpack.c.l.b16 %v859
      %v1279 = vunpack.c.l.b16 %v863
      %v1280 = vunpack.c.l.b16 %v866
      %v1281 = vunpack.c.l.b16 %v870
      %v1282 = vunpack.c.l.b16 %v873
      %v1283 = vunpack.c.l.b16 %v877
      %v1284 = vunpack.c.l.b16 %v880
      %v1285 = vunpack.c.l.b16 %v884
      %v1286 = vunpack.c.l.b16 %v887
      %v1287 = vunpack.c.l.b16 %v891
      %v1288 = vunpack.c.l.b16 %v894
      %v1289 = vpack.c.b16 %v1274, %v1273
      %v1290 = vpack.c.b16 %v1276, %v1275
      %v1291 = vpack.c.b16 %v1278, %v1277
      %v1292 = vpack.c.b16 %v1280, %v1279
      %v1293 = vpack.c.b16 %v1282, %v1281
      %v1294 = vpack.c.b16 %v1284, %v1283
      %v1295 = vpack.c.b16 %v1286, %v1285
      %v1296 = vpack.c.b16 %v1288, %v1287
      %v1298 = vsel %vm519, %v1289, 0
      %v1301 = vsel %vm519, %v1290, 0
      %v1304 = vsel %vm519, %v1291, 0
      %v1307 = vsel %vm519, %v1292, 0
      %v1310 = vsel %vm519, %v1293, 0
      %v1313 = vsel %vm519, %v1294, 0
      %v1316 = vsel %vm519, %v1295, 0
      %v1319 = vsel %vm519, %v1296, 0
      %v1322 = vsel %vm667, %v895, 0
      %1324 = vmatprep.subr.bf16.mxu0 0
      %1325 = vmatpush1.bf16.msra.mxu0 %v1322
      %1326 = vmatprep.subr.bf16.mxu0 0
      %1327 = vmatpush1.bf16.msra.mxu0 0
      %1328 = vmatprep.subr.bf16.mxu0 0
      %1329 = vmatpush1.bf16.msra.mxu0 0
      %1330 = vmatprep.subr.bf16.mxu0 0
      %1331 = vmatpush1.bf16.msra.mxu0 0
      %1332 = vmatprep.subr.bf16.mxu0 0
      %1333 = vmatpush1.bf16.msra.mxu0 0
      %1334 = vmatprep.subr.bf16.mxu0 0
      %1335 = vmatpush1.bf16.msra.mxu0 0
      %1336 = vmatprep.subr.bf16.mxu0 0
      %1337 = vmatpush1.bf16.msra.mxu0 0
      %1338 = vmatprep.subr.bf16.mxu0 0
      %1339 = vmatpush1.bf16.msra.mxu0 0
      %1340 = vmatprep.subr.bf16.mxu0 0
      %1341 = vmatpush1.bf16.msra.mxu0 0
      %1342 = vmatprep.subr.bf16.mxu0 0
      %1343 = vmatpush1.bf16.msra.mxu0 0
      %1344 = vmatprep.subr.bf16.mxu0 0
      %1345 = vmatpush1.bf16.msra.mxu0 0
      %1346 = vmatprep.subr.bf16.mxu0 0
      %1347 = vmatpush1.bf16.msra.mxu0 0
      %1348 = vmatprep.subr.bf16.mxu0 0
      %1349 = vmatpush1.bf16.msra.mxu0 0
      %1350 = vmatprep.subr.bf16.mxu0 0
      %1351 = vmatpush1.bf16.msra.mxu0 0
      %1352 = vmatprep.subr.bf16.mxu0 0
      %1353 = vmatpush1.bf16.msra.mxu0 0
      %1354 = vmatprep.subr.bf16.mxu0 0
      %1355 = vmatpush1.bf16.msra.mxu0 0
      %1356 = vmatprep.mubr.bf16.mxu0 0
      %1357 = vmatmul.mubr.bf16.gmra.mrb[0].mxu0 %v1298
      %v1358 = vpop.f32.mrb[0].mxu0
      %v1359 = vadd.f32 %v1211, %v1358
      %v1360 = vpop.f32.mrb[0].mxu0
      %v1361 = vpop.f32.mrb[0].mxu0
      %v1362 = vadd.f32 %v1214, %v1361
      %v1363 = vpop.f32.mrb[0].mxu0
      %1364 = vmatprep.mubr.bf16.mxu0 0
      %1365 = vmatmul.mubr.bf16.gmra.mrb[0].mxu0 %v1301
      %v1366 = vpop.f32.mrb[0].mxu0
      %v1367 = vadd.f32 %v1219, %v1366
      %v1368 = vpop.f32.mrb[0].mxu0
      %v1369 = vpop.f32.mrb[0].mxu0
      %v1370 = vadd.f32 %v1222, %v1369
      %v1371 = vpop.f32.mrb[0].mxu0
      %1372 = vmatprep.mubr.bf16.mxu0 0
      %1373 = vmatmul.mubr.bf16.gmra.mrb[0].mxu0 %v1304
      %v1374 = vpop.f32.mrb[0].mxu0
      %v1375 = vadd.f32 %v1227, %v1374
      %v1376 = vpop.f32.mrb[0].mxu0
      %v1377 = vpop.f32.mrb[0].mxu0
      %v1378 = vadd.f32 %v1230, %v1377
      %v1379 = vpop.f32.mrb[0].mxu0
      %1380 = vmatprep.mubr.bf16.mxu0 0
      %1381 = vmatmul.mubr.bf16.gmra.mrb[0].mxu0 %v1307
      %v1382 = vpop.f32.mrb[0].mxu0
      %v1383 = vadd.f32 %v1235, %v1382
      %v1384 = vpop.f32.mrb[0].mxu0
      %v1385 = vpop.f32.mrb[0].mxu0
      %v1386 = vadd.f32 %v1238, %v1385
      %v1387 = vpop.f32.mrb[0].mxu0
      %1388 = vmatprep.mubr.bf16.mxu0 0
      %1389 = vmatmul.mubr.bf16.gmra.mrb[0].mxu0 %v1310
      %v1390 = vpop.f32.mrb[0].mxu0
      %v1391 = vadd.f32 %v1243, %v1390
      %v1392 = vpop.f32.mrb[0].mxu0
      %v1393 = vpop.f32.mrb[0].mxu0
      %v1394 = vadd.f32 %v1246, %v1393
      %v1395 = vpop.f32.mrb[0].mxu0
      %1396 = vmatprep.mubr.bf16.mxu0 0
      %1397 = vmatmul.mubr.bf16.gmra.mrb[0].mxu0 %v1313
      %v1398 = vpop.f32.mrb[0].mxu0
      %v1399 = vadd.f32 %v1251, %v1398
      %v1400 = vpop.f32.mrb[0].mxu0
      %v1401 = vpop.f32.mrb[0].mxu0
      %v1402 = vadd.f32 %v1254, %v1401
      %v1403 = vpop.f32.mrb[0].mxu0
      %1404 = vmatprep.mubr.bf16.mxu0 0
      %1405 = vmatmul.mubr.bf16.gmra.mrb[0].mxu0 %v1316
      %v1406 = vpop.f32.mrb[0].mxu0
      %v1407 = vadd.f32 %v1259, %v1406
      %v1408 = vpop.f32.mrb[0].mxu0
      %v1409 = vpop.f32.mrb[0].mxu0
      %v1410 = vadd.f32 %v1262, %v1409
      %v1411 = vpop.f32.mrb[0].mxu0
      %1412 = vmatprep.mubr.bf16.mxu0 0
      %1413 = vmatmul.mubr.bf16.gmra.mrb[0].mxu0 %v1319
      %v1414 = vpop.f32.mrb[0].mxu0
      %v1415 = vadd.f32 %v1267, %v1414
      %v1416 = vpop.f32.mrb[0].mxu0
      %v1417 = vpop.f32.mrb[0].mxu0
      %v1418 = vadd.f32 %v1270, %v1417
      %v1419 = vpop.f32.mrb[0].mxu0
      %1420 = vdwg.mxu0
      %vm1421 = vcmask 1041408
      %vm1422 = vcmask 1045508
      %vm1423 = vmor %vm1421, %vm1422
      %v1424 = vrot.slane %v776, 6
      %v1425 = vrot.slane %v1424, 4
      %v1426 = vrot.slane %v777, 6
      %v1427 = vsel %vm1423, %v1425, %v1426
      %v1428 = vrot.slane %v1426, 4
      %v1429 = vrot.slane %v778, 6
      %v1430 = vsel %vm1423, %v1428, %v1429
      %v1431 = vrot.slane %v779, 6
      %v1432 = vrot.slane %v1431, 4
      %v1433 = vrot.slane %v780, 6
      %v1434 = vsel %vm1423, %v1432, %v1433
      %v1435 = vrot.slane %v1433, 4
      %v1436 = vrot.slane %v781, 6
      %v1437 = vsel %vm1423, %v1435, %v1436
      %v1438 = vrot.slane %v782, 6
      %v1439 = vrot.slane %v1438, 4
      %v1440 = vrot.slane %v783, 6
      %v1441 = vsel %vm1423, %v1439, %v1440
      %v1442 = vrot.slane %v1440, 4
      %v1443 = vrot.slane %v784, 6
      %v1444 = vsel %vm1423, %v1442, %v1443
      %v1445 = vrot.slane %v785, 6
      %v1446 = vrot.slane %v1445, 4
      %v1447 = vrot.slane %v786, 6
      %v1448 = vsel %vm1423, %v1446, %v1447
      %v1449 = vrot.slane %v1447, 4
      %v1450 = vrot.slane %v787, 6
      %v1451 = vsel %vm1423, %v1449, %v1450
      %v1452 = vrot.slane %v788, 6
      %v1453 = vrot.slane %v1452, 4
      %v1454 = vrot.slane %v789, 6
      %v1455 = vsel %vm1423, %v1453, %v1454
      %v1456 = vrot.slane %v1454, 4
      %v1457 = vrot.slane %v790, 6
      %v1458 = vsel %vm1423, %v1456, %v1457
      %v1459 = vrot.slane %v791, 6
      %v1460 = vrot.slane %v1459, 4
      %v1461 = vrot.slane %v792, 6
      %v1462 = vsel %vm1423, %v1460, %v1461
      %v1463 = vrot.slane %v1461, 4
      %v1464 = vrot.slane %v793, 6
      %v1465 = vsel %vm1423, %v1463, %v1464
      %v1466 = vrot.slane %v794, 6
      %v1467 = vrot.slane %v1466, 4
      %v1468 = vrot.slane %v795, 6
      %v1469 = vsel %vm1423, %v1467, %v1468
      %v1470 = vrot.slane %v1468, 4
      %v1471 = vrot.slane %v796, 6
      %v1472 = vsel %vm1423, %v1470, %v1471
      %v1473 = vrot.slane %v797, 6
      %v1474 = vrot.slane %v1473, 4
      %v1475 = vrot.slane %v798, 6
      %v1476 = vsel %vm1423, %v1474, %v1475
      %v1477 = vrot.slane %v1475, 4
      %v1478 = vrot.slane %v799, 6
      %v1479 = vsel %vm1423, %v1477, %v1478
      %s1480 = scalar_lea.vmem %s1, 8
      %v1481 = vld [vmem:[%s1480] sm:$0xf]
      %v1482 = vunpack.c.l.b16 %v1427
      %v1483 = vunpack.c.l.b16 %v1430
      %v1484 = vunpack.c.l.b16 %v1434
      %v1485 = vunpack.c.l.b16 %v1437
      %v1486 = vunpack.c.l.b16 %v1441
      %v1487 = vunpack.c.l.b16 %v1444
      %v1488 = vunpack.c.l.b16 %v1448
      %v1489 = vunpack.c.l.b16 %v1451
      %v1490 = vunpack.c.l.b16 %v1455
      %v1491 = vunpack.c.l.b16 %v1458
      %v1492 = vunpack.c.l.b16 %v1462
      %v1493 = vunpack.c.l.b16 %v1465
      %v1494 = vunpack.c.l.b16 %v1469
      %v1495 = vunpack.c.l.b16 %v1472
      %v1496 = vunpack.c.l.b16 %v1476
      %v1497 = vunpack.c.l.b16 %v1479
      %v1498 = vpack.c.b16 %v1483, %v1482
      %v1499 = vpack.c.b16 %v1485, %v1484
      %v1500 = vpack.c.b16 %v1487, %v1486
      %v1501 = vpack.c.b16 %v1489, %v1488
      %v1502 = vpack.c.b16 %v1491, %v1490
      %v1503 = vpack.c.b16 %v1493, %v1492
      %v1504 = vpack.c.b16 %v1495, %v1494
      %v1505 = vpack.c.b16 %v1497, %v1496
      %v1507 = vsel %vm519, %v1498, 0
      %v1510 = vsel %vm519, %v1499, 0
      %v1513 = vsel %vm519, %v1500, 0
      %v1516 = vsel %vm519, %v1501, 0
      %v1519 = vsel %vm519, %v1502, 0
      %v1522 = vsel %vm519, %v1503, 0
      %v1525 = vsel %vm519, %v1504, 0
      %v1528 = vsel %vm519, %v1505, 0
      %v1531 = vsel %vm667, %v1481, 0
      %1533 = vmatprep.subr.bf16.mxu0 0
      %1534 = vmatpush1.bf16.msra.mxu0 %v1531
      %1535 = vmatprep.subr.bf16.mxu0 0
      %1536 = vmatpush1.bf16.msra.mxu0 0
      %1537 = vmatprep.subr.bf16.mxu0 0
      %1538 = vmatpush1.bf16.msra.mxu0 0
      %1539 = vmatprep.subr.bf16.mxu0 0
      %1540 = vmatpush1.bf16.msra.mxu0 0
      %1541 = vmatprep.subr.bf16.mxu0 0
      %1542 = vmatpush1.bf16.msra.mxu0 0
      %1543 = vmatprep.subr.bf16.mxu0 0
      %1544 = vmatpush1.bf16.msra.mxu0 0
      %1545 = vmatprep.subr.bf16.mxu0 0
      %1546 = vmatpush1.bf16.msra.mxu0 0
      %1547 = vmatprep.subr.bf16.mxu0 0
      %1548 = vmatpush1.bf16.msra.mxu0 0
      %1549 = vmatprep.subr.bf16.mxu0 0
      %1550 = vmatpush1.bf16.msra.mxu0 0
      %1551 = vmatprep.subr.bf16.mxu0 0
      %1552 = vmatpush1.bf16.msra.mxu0 0
      %1553 = vmatprep.subr.bf16.mxu0 0
      %1554 = vmatpush1.bf16.msra.mxu0 0
      %1555 = vmatprep.subr.bf16.mxu0 0
      %1556 = vmatpush1.bf16.msra.mxu0 0
      %1557 = vmatprep.subr.bf16.mxu0 0
      %1558 = vmatpush1.bf16.msra.mxu0 0
      %1559 = vmatprep.subr.bf16.mxu0 0
      %1560 = vmatpush1.bf16.msra.mxu0 0
      %1561 = vmatprep.subr.bf16.mxu0 0
      %1562 = vmatpush1.bf16.msra.mxu0 0
      %1563 = vmatprep.subr.bf16.mxu0 0
      %1564 = vmatpush1.bf16.msra.mxu0 0
      %1565 = vmatprep.mubr.bf16.mxu0 0
      %1566 = vmatmul.mubr.bf16.gmra.mrb[0].mxu0 %v1507
      %v1567 = vpop.f32.mrb[0].mxu0
      %v1568 = vadd.f32 0.0, %v1567
      %v1569 = vpop.f32.mrb[0].mxu0
      %v1570 = vpop.f32.mrb[0].mxu0
      %v1571 = vadd.f32 0.0, %v1570
      %v1572 = vpop.f32.mrb[0].mxu0
      %1573 = vmatprep.mubr.bf16.mxu0 0
      %1574 = vmatmul.mubr.bf16.gmra.mrb[0].mxu0 %v1510
      %v1575 = vpop.f32.mrb[0].mxu0
      %v1576 = vadd.f32 0.0, %v1575
      %v1577 = vpop.f32.mrb[0].mxu0
      %v1578 = vpop.f32.mrb[0].mxu0
      %v1579 = vadd.f32 0.0, %v1578
      %v1580 = vpop.f32.mrb[0].mxu0
      %1581 = vmatprep.mubr.bf16.mxu0 0
      %1582 = vmatmul.mubr.bf16.gmra.mrb[0].mxu0 %v1513
      %v1583 = vpop.f32.mrb[0].mxu0
      %v1584 = vadd.f32 0.0, %v1583
      %v1585 = vpop.f32.mrb[0].mxu0
      %v1586 = vpop.f32.mrb[0].mxu0
      %v1587 = vadd.f32 0.0, %v1586
      %v1588 = vpop.f32.mrb[0].mxu0
      %1589 = vmatprep.mubr.bf16.mxu0 0
      %1590 = vmatmul.mubr.bf16.gmra.mrb[0].mxu0 %v1516
      %v1591 = vpop.f32.mrb[0].mxu0
      %v1592 = vadd.f32 0.0, %v1591
      %v1593 = vpop.f32.mrb[0].mxu0
      %v1594 = vpop.f32.mrb[0].mxu0
      %v1595 = vadd.f32 0.0, %v1594
      %v1596 = vpop.f32.mrb[0].mxu0
      %1597 = vmatprep.mubr.bf16.mxu0 0
      %1598 = vmatmul.mubr.bf16.gmra.mrb[0].mxu0 %v1519
      %v1599 = vpop.f32.mrb[0].mxu0
      %v1600 = vadd.f32 0.0, %v1599
      %v1601 = vpop.f32.mrb[0].mxu0
      %v1602 = vpop.f32.mrb[0].mxu0
      %v1603 = vadd.f32 0.0, %v1602
      %v1604 = vpop.f32.mrb[0].mxu0
      %1605 = vmatprep.mubr.bf16.mxu0 0
      %1606 = vmatmul.mubr.bf16.gmra.mrb[0].mxu0 %v1522
      %v1607 = vpop.f32.mrb[0].mxu0
      %v1608 = vadd.f32 0.0, %v1607
      %v1609 = vpop.f32.mrb[0].mxu0
      %v1610 = vpop.f32.mrb[0].mxu0
      %v1611 = vadd.f32 0.0, %v1610
      %v1612 = vpop.f32.mrb[0].mxu0
      %1613 = vmatprep.mubr.bf16.mxu0 0
      %1614 = vmatmul.mubr.bf16.gmra.mrb[0].mxu0 %v1525
      %v1615 = vpop.f32.mrb[0].mxu0
      %v1616 = vadd.f32 0.0, %v1615
      %v1617 = vpop.f32.mrb[0].mxu0
      %v1618 = vpop.f32.mrb[0].mxu0
      %v1619 = vadd.f32 0.0, %v1618
      %v1620 = vpop.f32.mrb[0].mxu0
      %1621 = vmatprep.mubr.bf16.mxu0 0
      %1622 = vmatmul.mubr.bf16.gmra.mrb[0].mxu0 %v1528
      %v1623 = vpop.f32.mrb[0].mxu0
      %v1624 = vadd.f32 0.0, %v1623
      %v1625 = vpop.f32.mrb[0].mxu0
      %v1626 = vpop.f32.mrb[0].mxu0
      %v1627 = vadd.f32 0.0, %v1626
      %v1628 = vpop.f32.mrb[0].mxu0
      %1629 = vdwg.mxu0
      %v1630 = vadd.f32 %v1359, %v1568
      %v1631 = vadd.f32 %v1362, %v1571
      %v1632 = vadd.f32 %v1367, %v1576
      %v1633 = vadd.f32 %v1370, %v1579
      %v1634 = vadd.f32 %v1375, %v1584
      %v1635 = vadd.f32 %v1378, %v1587
      %v1636 = vadd.f32 %v1383, %v1592
      %v1637 = vadd.f32 %v1386, %v1595
      %v1638 = vadd.f32 %v1391, %v1600
      %v1639 = vadd.f32 %v1394, %v1603
      %v1640 = vadd.f32 %v1399, %v1608
      %v1641 = vadd.f32 %v1402, %v1611
      %v1642 = vadd.f32 %v1407, %v1616
      %v1643 = vadd.f32 %v1410, %v1619
      %v1644 = vadd.f32 %v1415, %v1624
      %v1645 = vadd.f32 %v1418, %v1627
      %v1649 = vrot.slane %v800, 5
      %v1650 = vrot.slane %v1649, 4
      %v1651 = vrot.slane %v801, 5
      %v1652 = vsel %vm838, %v1650, %v1651
      %v1653 = vrot.slane %v1651, 4
      %v1654 = vrot.slane %v802, 5
      %v1655 = vsel %vm838, %v1653, %v1654
      %s1656 = scalar_lea.vmem %s1, 12
      %v1657 = vld [vmem:[%s1656] sm:$0xf]
      %v1658 = vunpack.c.l.b16 %v1652
      %v1659 = vunpack.c.l.b16 %v1655
      %v1660 = vpack.c.b16 %v1659, %v1658
      %v1662 = vsel %vm519, %v1660, 0
      %v1665 = vsel %vm667, %v1657, 0
      %1667 = vmatprep.subr.bf16.mxu0 0
      %1668 = vmatpush1.bf16.msra.mxu0 %v1665
      %1669 = vmatprep.subr.bf16.mxu0 0
      %1670 = vmatpush1.bf16.msra.mxu0 0
      %1671 = vmatprep.subr.bf16.mxu0 0
      %1672 = vmatpush1.bf16.msra.mxu0 0
      %1673 = vmatprep.subr.bf16.mxu0 0
      %1674 = vmatpush1.bf16.msra.mxu0 0
      %1675 = vmatprep.subr.bf16.mxu0 0
      %1676 = vmatpush1.bf16.msra.mxu0 0
      %1677 = vmatprep.subr.bf16.mxu0 0
      %1678 = vmatpush1.bf16.msra.mxu0 0
      %1679 = vmatprep.subr.bf16.mxu0 0
      %1680 = vmatpush1.bf16.msra.mxu0 0
      %1681 = vmatprep.subr.bf16.mxu0 0
      %1682 = vmatpush1.bf16.msra.mxu0 0
      %1683 = vmatprep.subr.bf16.mxu0 0
      %1684 = vmatpush1.bf16.msra.mxu0 0
      %1685 = vmatprep.subr.bf16.mxu0 0
      %1686 = vmatpush1.bf16.msra.mxu0 0
      %1687 = vmatprep.subr.bf16.mxu0 0
      %1688 = vmatpush1.bf16.msra.mxu0 0
      %1689 = vmatprep.subr.bf16.mxu0 0
      %1690 = vmatpush1.bf16.msra.mxu0 0
      %1691 = vmatprep.subr.bf16.mxu0 0
      %1692 = vmatpush1.bf16.msra.mxu0 0
      %1693 = vmatprep.subr.bf16.mxu0 0
      %1694 = vmatpush1.bf16.msra.mxu0 0
      %1695 = vmatprep.subr.bf16.mxu0 0
      %1696 = vmatpush1.bf16.msra.mxu0 0
      %1697 = vmatprep.subr.bf16.mxu0 0
      %1698 = vmatpush1.bf16.msra.mxu0 0
      %1699 = vmatprep.mubr.bf16.mxu0 0
      %1700 = vmatmul.mubr.bf16.gmra.mrb[0].mxu0 %v1301
      %v1701 = vpop.f32.mrb[0].mxu0
      %v1702 = vadd.f32 0.0, %v1701
      %v1703 = vpop.f32.mrb[0].mxu0
      %v1704 = vpop.f32.mrb[0].mxu0
      %v1705 = vadd.f32 0.0, %v1704
      %v1706 = vpop.f32.mrb[0].mxu0
      %1707 = vmatprep.mubr.bf16.mxu0 0
      %1708 = vmatmul.mubr.bf16.gmra.mrb[0].mxu0 %v1304
      %v1709 = vpop.f32.mrb[0].mxu0
      %v1710 = vadd.f32 0.0, %v1709
      %v1711 = vpop.f32.mrb[0].mxu0
      %v1712 = vpop.f32.mrb[0].mxu0
      %v1713 = vadd.f32 0.0, %v1712
      %v1714 = vpop.f32.mrb[0].mxu0
      %1715 = vmatprep.mubr.bf16.mxu0 0
      %1716 = vmatmul.mubr.bf16.gmra.mrb[0].mxu0 %v1307
      %v1717 = vpop.f32.mrb[0].mxu0
      %v1718 = vadd.f32 0.0, %v1717
      %v1719 = vpop.f32.mrb[0].mxu0
      %v1720 = vpop.f32.mrb[0].mxu0
      %v1721 = vadd.f32 0.0, %v1720
      %v1722 = vpop.f32.mrb[0].mxu0
      %1723 = vmatprep.mubr.bf16.mxu0 0
      %1724 = vmatmul.mubr.bf16.gmra.mrb[0].mxu0 %v1310
      %v1725 = vpop.f32.mrb[0].mxu0
      %v1726 = vadd.f32 0.0, %v1725
      %v1727 = vpop.f32.mrb[0].mxu0
      %v1728 = vpop.f32.mrb[0].mxu0
      %v1729 = vadd.f32 0.0, %v1728
      %v1730 = vpop.f32.mrb[0].mxu0
      %1731 = vmatprep.mubr.bf16.mxu0 0
      %1732 = vmatmul.mubr.bf16.gmra.mrb[0].mxu0 %v1313
      %v1733 = vpop.f32.mrb[0].mxu0
      %v1734 = vadd.f32 0.0, %v1733
      %v1735 = vpop.f32.mrb[0].mxu0
      %v1736 = vpop.f32.mrb[0].mxu0
      %v1737 = vadd.f32 0.0, %v1736
      %v1738 = vpop.f32.mrb[0].mxu0
      %1739 = vmatprep.mubr.bf16.mxu0 0
      %1740 = vmatmul.mubr.bf16.gmra.mrb[0].mxu0 %v1316
      %v1741 = vpop.f32.mrb[0].mxu0
      %v1742 = vadd.f32 0.0, %v1741
      %v1743 = vpop.f32.mrb[0].mxu0
      %v1744 = vpop.f32.mrb[0].mxu0
      %v1745 = vadd.f32 0.0, %v1744
      %v1746 = vpop.f32.mrb[0].mxu0
      %1747 = vmatprep.mubr.bf16.mxu0 0
      %1748 = vmatmul.mubr.bf16.gmra.mrb[0].mxu0 %v1319
      %v1749 = vpop.f32.mrb[0].mxu0
      %v1750 = vadd.f32 0.0, %v1749
      %v1751 = vpop.f32.mrb[0].mxu0
      %v1752 = vpop.f32.mrb[0].mxu0
      %v1753 = vadd.f32 0.0, %v1752
      %v1754 = vpop.f32.mrb[0].mxu0
      %1755 = vmatprep.mubr.bf16.mxu0 0
      %1756 = vmatmul.mubr.bf16.gmra.mrb[0].mxu0 %v1662
      %v1757 = vpop.f32.mrb[0].mxu0
      %v1758 = vadd.f32 0.0, %v1757
      %v1759 = vpop.f32.mrb[0].mxu0
      %v1760 = vpop.f32.mrb[0].mxu0
      %v1761 = vadd.f32 0.0, %v1760
      %v1762 = vpop.f32.mrb[0].mxu0
      %1763 = vdwg.mxu0
      %v1764 = vadd.f32 %v1630, %v1702
      %v1765 = vadd.f32 %v1631, %v1705
      %v1766 = vadd.f32 %v1632, %v1710
      %v1767 = vadd.f32 %v1633, %v1713
      %v1768 = vadd.f32 %v1634, %v1718
      %v1769 = vadd.f32 %v1635, %v1721
      %v1770 = vadd.f32 %v1636, %v1726
      %v1771 = vadd.f32 %v1637, %v1729
      %v1772 = vadd.f32 %v1638, %v1734
      %v1773 = vadd.f32 %v1639, %v1737
      %v1774 = vadd.f32 %v1640, %v1742
      %v1775 = vadd.f32 %v1641, %v1745
      %v1776 = vadd.f32 %v1642, %v1750
      %v1777 = vadd.f32 %v1643, %v1753
      %v1778 = vadd.f32 %v1644, %v1758
      %v1779 = vadd.f32 %v1645, %v1761
      %v1781 = vshrl.u32 %v800, 16
      %v1783 = vrot.slane %v1781, 5
      %v1784 = vshll.u32 %v800, 16
      %v1786 = vrot.slane %v1784, 6
      %v1787 = vor.u32 %v1783, %v1786
      %v1788 = vrot.slane %v1787, 4
      %v1790 = vshrl.u32 %v801, 16
      %v1792 = vrot.slane %v1790, 5
      %v1793 = vshll.u32 %v801, 16
      %v1795 = vrot.slane %v1793, 6
      %v1796 = vor.u32 %v1792, %v1795
      %v1797 = vsel %vm898, %v1788, %v1796
      %v1798 = vrot.slane %v1796, 4
      %v1800 = vshrl.u32 %v802, 16
      %v1802 = vrot.slane %v1800, 5
      %v1803 = vshll.u32 %v802, 16
      %v1805 = vrot.slane %v1803, 6
      %v1806 = vor.u32 %v1802, %v1805
      %v1807 = vsel %vm898, %v1798, %v1806
      %s1808 = scalar_lea.vmem %s1, 16
      %v1809 = vld [vmem:[%s1808] sm:$0xf]
      %v1810 = vunpack.c.l.b16 %v1797
      %v1811 = vunpack.c.l.b16 %v1807
      %v1812 = vpack.c.b16 %v1811, %v1810
      %v1814 = vsel %vm519, %v1812, 0
      %v1817 = vsel %vm667, %v1809, 0
      %1819 = vmatprep.subr.bf16.mxu0 0
      %1820 = vmatpush1.bf16.msra.mxu0 %v1817
      %1821 = vmatprep.subr.bf16.mxu0 0
      %1822 = vmatpush1.bf16.msra.mxu0 0
      %1823 = vmatprep.subr.bf16.mxu0 0
      %1824 = vmatpush1.bf16.msra.mxu0 0
      %1825 = vmatprep.subr.bf16.mxu0 0
      %1826 = vmatpush1.bf16.msra.mxu0 0
      %1827 = vmatprep.subr.bf16.mxu0 0
      %1828 = vmatpush1.bf16.msra.mxu0 0
      %1829 = vmatprep.subr.bf16.mxu0 0
      %1830 = vmatpush1.bf16.msra.mxu0 0
      %1831 = vmatprep.subr.bf16.mxu0 0
      %1832 = vmatpush1.bf16.msra.mxu0 0
      %1833 = vmatprep.subr.bf16.mxu0 0
      %1834 = vmatpush1.bf16.msra.mxu0 0
      %1835 = vmatprep.subr.bf16.mxu0 0
      %1836 = vmatpush1.bf16.msra.mxu0 0
      %1837 = vmatprep.subr.bf16.mxu0 0
      %1838 = vmatpush1.bf16.msra.mxu0 0
      %1839 = vmatprep.subr.bf16.mxu0 0
      %1840 = vmatpush1.bf16.msra.mxu0 0
      %1841 = vmatprep.subr.bf16.mxu0 0
      %1842 = vmatpush1.bf16.msra.mxu0 0
      %1843 = vmatprep.subr.bf16.mxu0 0
      %1844 = vmatpush1.bf16.msra.mxu0 0
      %1845 = vmatprep.subr.bf16.mxu0 0
      %1846 = vmatpush1.bf16.msra.mxu0 0
      %1847 = vmatprep.subr.bf16.mxu0 0
      %1848 = vmatpush1.bf16.msra.mxu0 0
      %1849 = vmatprep.subr.bf16.mxu0 0
      %1850 = vmatpush1.bf16.msra.mxu0 0
      %1851 = vmatprep.mubr.bf16.mxu0 0
      %1852 = vmatmul.mubr.bf16.gmra.mrb[0].mxu0 %v1153
      %v1853 = vpop.f32.mrb[0].mxu0
      %v1854 = vadd.f32 0.0, %v1853
      %v1855 = vpop.f32.mrb[0].mxu0
      %v1856 = vpop.f32.mrb[0].mxu0
      %v1857 = vadd.f32 0.0, %v1856
      %v1858 = vpop.f32.mrb[0].mxu0
      %1859 = vmatprep.mubr.bf16.mxu0 0
      %1860 = vmatmul.mubr.bf16.gmra.mrb[0].mxu0 %v1156
      %v1861 = vpop.f32.mrb[0].mxu0
      %v1862 = vadd.f32 0.0, %v1861
      %v1863 = vpop.f32.mrb[0].mxu0
      %v1864 = vpop.f32.mrb[0].mxu0
      %v1865 = vadd.f32 0.0, %v1864
      %v1866 = vpop.f32.mrb[0].mxu0
      %1867 = vmatprep.mubr.bf16.mxu0 0
      %1868 = vmatmul.mubr.bf16.gmra.mrb[0].mxu0 %v1159
      %v1869 = vpop.f32.mrb[0].mxu0
      %v1870 = vadd.f32 0.0, %v1869
      %v1871 = vpop.f32.mrb[0].mxu0
      %v1872 = vpop.f32.mrb[0].mxu0
      %v1873 = vadd.f32 0.0, %v1872
      %v1874 = vpop.f32.mrb[0].mxu0
      %1875 = vmatprep.mubr.bf16.mxu0 0
      %1876 = vmatmul.mubr.bf16.gmra.mrb[0].mxu0 %v1162
      %v1877 = vpop.f32.mrb[0].mxu0
      %v1878 = vadd.f32 0.0, %v1877
      %v1879 = vpop.f32.mrb[0].mxu0
      %v1880 = vpop.f32.mrb[0].mxu0
      %v1881 = vadd.f32 0.0, %v1880
      %v1882 = vpop.f32.mrb[0].mxu0
      %1883 = vmatprep.mubr.bf16.mxu0 0
      %1884 = vmatmul.mubr.bf16.gmra.mrb[0].mxu0 %v1165
      %v1885 = vpop.f32.mrb[0].mxu0
      %v1886 = vadd.f32 0.0, %v1885
      %v1887 = vpop.f32.mrb[0].mxu0
      %v1888 = vpop.f32.mrb[0].mxu0
      %v1889 = vadd.f32 0.0, %v1888
      %v1890 = vpop.f32.mrb[0].mxu0
      %1891 = vmatprep.mubr.bf16.mxu0 0
      %1892 = vmatmul.mubr.bf16.gmra.mrb[0].mxu0 %v1168
      %v1893 = vpop.f32.mrb[0].mxu0
      %v1894 = vadd.f32 0.0, %v1893
      %v1895 = vpop.f32.mrb[0].mxu0
      %v1896 = vpop.f32.mrb[0].mxu0
      %v1897 = vadd.f32 0.0, %v1896
      %v1898 = vpop.f32.mrb[0].mxu0
      %1899 = vmatprep.mubr.bf16.mxu0 0
      %1900 = vmatmul.mubr.bf16.gmra.mrb[0].mxu0 %v1171
      %v1901 = vpop.f32.mrb[0].mxu0
      %v1902 = vadd.f32 0.0, %v1901
      %v1903 = vpop.f32.mrb[0].mxu0
      %v1904 = vpop.f32.mrb[0].mxu0
      %v1905 = vadd.f32 0.0, %v1904
      %v1906 = vpop.f32.mrb[0].mxu0
      %1907 = vmatprep.mubr.bf16.mxu0 0
      %1908 = vmatmul.mubr.bf16.gmra.mrb[0].mxu0 %v1814
      %v1909 = vpop.f32.mrb[0].mxu0
      %v1910 = vadd.f32 0.0, %v1909
      %v1911 = vpop.f32.mrb[0].mxu0
      %v1912 = vpop.f32.mrb[0].mxu0
      %v1913 = vadd.f32 0.0, %v1912
      %v1914 = vpop.f32.mrb[0].mxu0
      %1915 = vdwg.mxu0
      %v1916 = vadd.f32 %v1764, %v1854
      %v1917 = vadd.f32 %v1765, %v1857
      %v1918 = vadd.f32 %v1766, %v1862
      %v1919 = vadd.f32 %v1767, %v1865
      %v1920 = vadd.f32 %v1768, %v1870
      %v1921 = vadd.f32 %v1769, %v1873
      %v1922 = vadd.f32 %v1770, %v1878
      %v1923 = vadd.f32 %v1771, %v1881
      %v1924 = vadd.f32 %v1772, %v1886
      %v1925 = vadd.f32 %v1773, %v1889
      %v1926 = vadd.f32 %v1774, %v1894
      %v1927 = vadd.f32 %v1775, %v1897
      %v1928 = vadd.f32 %v1776, %v1902
      %v1929 = vadd.f32 %v1777, %v1905
      %v1930 = vadd.f32 %v1778, %v1910
      %v1931 = vadd.f32 %v1779, %v1913
      %v1932 = vrot.slane %v800, 6
      %v1933 = vrot.slane %v1932, 4
      %v1934 = vrot.slane %v801, 6
      %v1935 = vsel %vm1423, %v1933, %v1934
      %v1936 = vrot.slane %v1934, 4
      %v1937 = vrot.slane %v802, 6
      %v1938 = vsel %vm1423, %v1936, %v1937
      %s1939 = scalar_lea.vmem %s1, 20
      %v1940 = vld [vmem:[%s1939] sm:$0xf]
      %v1941 = vunpack.c.l.b16 %v1935
      %v1942 = vunpack.c.l.b16 %v1938
      %v1943 = vpack.c.b16 %v1942, %v1941
      %v1945 = vsel %vm519, %v1943, 0
      %v1948 = vsel %vm667, %v1940, 0
      %1950 = vmatprep.subr.bf16.mxu0 0
      %1951 = vmatpush1.bf16.msra.mxu0 %v1948
      %1952 = vmatprep.subr.bf16.mxu0 0
      %1953 = vmatpush1.bf16.msra.mxu0 0
      %1954 = vmatprep.subr.bf16.mxu0 0
      %1955 = vmatpush1.bf16.msra.mxu0 0
      %1956 = vmatprep.subr.bf16.mxu0 0
      %1957 = vmatpush1.bf16.msra.mxu0 0
      %1958 = vmatprep.subr.bf16.mxu0 0
      %1959 = vmatpush1.bf16.msra.mxu0 0
      %1960 = vmatprep.subr.bf16.mxu0 0
      %1961 = vmatpush1.bf16.msra.mxu0 0
      %1962 = vmatprep.subr.bf16.mxu0 0
      %1963 = vmatpush1.bf16.msra.mxu0 0
      %1964 = vmatprep.subr.bf16.mxu0 0
      %1965 = vmatpush1.bf16.msra.mxu0 0
      %1966 = vmatprep.subr.bf16.mxu0 0
      %1967 = vmatpush1.bf16.msra.mxu0 0
      %1968 = vmatprep.subr.bf16.mxu0 0
      %1969 = vmatpush1.bf16.msra.mxu0 0
      %1970 = vmatprep.subr.bf16.mxu0 0
      %1971 = vmatpush1.bf16.msra.mxu0 0
      %1972 = vmatprep.subr.bf16.mxu0 0
      %1973 = vmatpush1.bf16.msra.mxu0 0
      %1974 = vmatprep.subr.bf16.mxu0 0
      %1975 = vmatpush1.bf16.msra.mxu0 0
      %1976 = vmatprep.subr.bf16.mxu0 0
      %1977 = vmatpush1.bf16.msra.mxu0 0
      %1978 = vmatprep.subr.bf16.mxu0 0
      %1979 = vmatpush1.bf16.msra.mxu0 0
      %1980 = vmatprep.subr.bf16.mxu0 0
      %1981 = vmatpush1.bf16.msra.mxu0 0
      %1982 = vmatprep.mubr.bf16.mxu0 0
      %1983 = vmatmul.mubr.bf16.gmra.mrb[0].mxu0 %v1510
      %v1984 = vpop.f32.mrb[0].mxu0
      %v1985 = vadd.f32 0.0, %v1984
      %v1986 = vpop.f32.mrb[0].mxu0
      %v1987 = vpop.f32.mrb[0].mxu0
      %v1988 = vadd.f32 0.0, %v1987
      %v1989 = vpop.f32.mrb[0].mxu0
      %1990 = vmatprep.mubr.bf16.mxu0 0
      %1991 = vmatmul.mubr.bf16.gmra.mrb[0].mxu0 %v1513
      %v1992 = vpop.f32.mrb[0].mxu0
      %v1993 = vadd.f32 0.0, %v1992
      %v1994 = vpop.f32.mrb[0].mxu0
      %v1995 = vpop.f32.mrb[0].mxu0
      %v1996 = vadd.f32 0.0, %v1995
      %v1997 = vpop.f32.mrb[0].mxu0
      %1998 = vmatprep.mubr.bf16.mxu0 0
      %1999 = vmatmul.mubr.bf16.gmra.mrb[0].mxu0 %v1516
      %v2000 = vpop.f32.mrb[0].mxu0
      %v2001 = vadd.f32 0.0, %v2000
      %v2002 = vpop.f32.mrb[0].mxu0
      %v2003 = vpop.f32.mrb[0].mxu0
      %v2004 = vadd.f32 0.0, %v2003
      %v2005 = vpop.f32.mrb[0].mxu0
      %2006 = vmatprep.mubr.bf16.mxu0 0
      %2007 = vmatmul.mubr.bf16.gmra.mrb[0].mxu0 %v1519
      %v2008 = vpop.f32.mrb[0].mxu0
      %v2009 = vadd.f32 0.0, %v2008
      %v2010 = vpop.f32.mrb[0].mxu0
      %v2011 = vpop.f32.mrb[0].mxu0
      %v2012 = vadd.f32 0.0, %v2011
      %v2013 = vpop.f32.mrb[0].mxu0
      %2014 = vmatprep.mubr.bf16.mxu0 0
      %2015 = vmatmul.mubr.bf16.gmra.mrb[0].mxu0 %v1522
      %v2016 = vpop.f32.mrb[0].mxu0
      %v2017 = vadd.f32 0.0, %v2016
      %v2018 = vpop.f32.mrb[0].mxu0
      %v2019 = vpop.f32.mrb[0].mxu0
      %v2020 = vadd.f32 0.0, %v2019
      %v2021 = vpop.f32.mrb[0].mxu0
      %2022 = vmatprep.mubr.bf16.mxu0 0
      %2023 = vmatmul.mubr.bf16.gmra.mrb[0].mxu0 %v1525
      %v2024 = vpop.f32.mrb[0].mxu0
      %v2025 = vadd.f32 0.0, %v2024
      %v2026 = vpop.f32.mrb[0].mxu0
      %v2027 = vpop.f32.mrb[0].mxu0
      %v2028 = vadd.f32 0.0, %v2027
      %v2029 = vpop.f32.mrb[0].mxu0
      %2030 = vmatprep.mubr.bf16.mxu0 0
      %2031 = vmatmul.mubr.bf16.gmra.mrb[0].mxu0 %v1528
      %v2032 = vpop.f32.mrb[0].mxu0
      %v2033 = vadd.f32 0.0, %v2032
      %v2034 = vpop.f32.mrb[0].mxu0
      %v2035 = vpop.f32.mrb[0].mxu0
      %v2036 = vadd.f32 0.0, %v2035
      %v2037 = vpop.f32.mrb[0].mxu0
      %2038 = vmatprep.mubr.bf16.mxu0 0
      %2039 = vmatmul.mubr.bf16.gmra.mrb[0].mxu0 %v1945
      %v2040 = vpop.f32.mrb[0].mxu0
      %v2041 = vadd.f32 0.0, %v2040
      %v2042 = vpop.f32.mrb[0].mxu0
      %v2043 = vpop.f32.mrb[0].mxu0
      %v2044 = vadd.f32 0.0, %v2043
      %v2045 = vpop.f32.mrb[0].mxu0
      %2046 = vdwg.mxu0
      %v2047 = vadd.f32 %v1916, %v1985
      %v2048 = vadd.f32 %v1917, %v1988
      %v2049 = vadd.f32 %v1918, %v1993
      %v2050 = vadd.f32 %v1919, %v1996
      %v2051 = vadd.f32 %v1920, %v2001
      %v2052 = vadd.f32 %v1921, %v2004
      %v2053 = vadd.f32 %v1922, %v2009
      %v2054 = vadd.f32 %v1923, %v2012
      %v2055 = vadd.f32 %v1924, %v2017
      %v2056 = vadd.f32 %v1925, %v2020
      %v2057 = vadd.f32 %v1926, %v2025
      %v2058 = vadd.f32 %v1927, %v2028
      %v2059 = vadd.f32 %v1928, %v2033
      %v2060 = vadd.f32 %v1929, %v2036
      %v2061 = vadd.f32 %v1930, %v2041
      %v2062 = vadd.f32 %v1931, %v2044
      %v2066 = vrot.slane %v803, 5
      %v2067 = vrot.slane %v2066, 4
      %v2068 = vrot.slane %v804, 5
      %v2069 = vsel %vm838, %v2067, %v2068
      %v2070 = vrot.slane %v2068, 4
      %v2071 = vrot.slane %v805, 5
      %v2072 = vsel %vm838, %v2070, %v2071
      %s2073 = scalar_lea.vmem %s1, 24
      %v2074 = vld [vmem:[%s2073] sm:$0xf]
      %v2075 = vunpack.c.l.b16 %v2069
      %v2076 = vunpack.c.l.b16 %v2072
      %v2077 = vpack.c.b16 %v2076, %v2075
      %v2079 = vsel %vm519, %v2077, 0
      %v2082 = vsel %vm667, %v2074, 0
      %2084 = vmatprep.subr.bf16.mxu0 0
      %2085 = vmatpush1.bf16.msra.mxu0 %v2082
      %2086 = vmatprep.subr.bf16.mxu0 0
      %2087 = vmatpush1.bf16.msra.mxu0 0
      %2088 = vmatprep.subr.bf16.mxu0 0
      %2089 = vmatpush1.bf16.msra.mxu0 0
      %2090 = vmatprep.subr.bf16.mxu0 0
      %2091 = vmatpush1.bf16.msra.mxu0 0
      %2092 = vmatprep.subr.bf16.mxu0 0
      %2093 = vmatpush1.bf16.msra.mxu0 0
      %2094 = vmatprep.subr.bf16.mxu0 0
      %2095 = vmatpush1.bf16.msra.mxu0 0
      %2096 = vmatprep.subr.bf16.mxu0 0
      %2097 = vmatpush1.bf16.msra.mxu0 0
      %2098 = vmatprep.subr.bf16.mxu0 0
      %2099 = vmatpush1.bf16.msra.mxu0 0
      %2100 = vmatprep.subr.bf16.mxu0 0
      %2101 = vmatpush1.bf16.msra.mxu0 0
      %2102 = vmatprep.subr.bf16.mxu0 0
      %2103 = vmatpush1.bf16.msra.mxu0 0
      %2104 = vmatprep.subr.bf16.mxu0 0
      %2105 = vmatpush1.bf16.msra.mxu0 0
      %2106 = vmatprep.subr.bf16.mxu0 0
      %2107 = vmatpush1.bf16.msra.mxu0 0
      %2108 = vmatprep.subr.bf16.mxu0 0
      %2109 = vmatpush1.bf16.msra.mxu0 0
      %2110 = vmatprep.subr.bf16.mxu0 0
      %2111 = vmatpush1.bf16.msra.mxu0 0
      %2112 = vmatprep.subr.bf16.mxu0 0
      %2113 = vmatpush1.bf16.msra.mxu0 0
      %2114 = vmatprep.subr.bf16.mxu0 0
      %2115 = vmatpush1.bf16.msra.mxu0 0
      %2116 = vmatprep.mubr.bf16.mxu0 0
      %2117 = vmatmul.mubr.bf16.gmra.mrb[0].mxu0 %v1304
      %v2118 = vpop.f32.mrb[0].mxu0
      %v2119 = vadd.f32 0.0, %v2118
      %v2120 = vpop.f32.mrb[0].mxu0
      %v2121 = vpop.f32.mrb[0].mxu0
      %v2122 = vadd.f32 0.0, %v2121
      %v2123 = vpop.f32.mrb[0].mxu0
      %2124 = vmatprep.mubr.bf16.mxu0 0
      %2125 = vmatmul.mubr.bf16.gmra.mrb[0].mxu0 %v1307
      %v2126 = vpop.f32.mrb[0].mxu0
      %v2127 = vadd.f32 0.0, %v2126
      %v2128 = vpop.f32.mrb[0].mxu0
      %v2129 = vpop.f32.mrb[0].mxu0
      %v2130 = vadd.f32 0.0, %v2129
      %v2131 = vpop.f32.mrb[0].mxu0
      %2132 = vmatprep.mubr.bf16.mxu0 0
      %2133 = vmatmul.mubr.bf16.gmra.mrb[0].mxu0 %v1310
      %v2134 = vpop.f32.mrb[0].mxu0
      %v2135 = vadd.f32 0.0, %v2134
      %v2136 = vpop.f32.mrb[0].mxu0
      %v2137 = vpop.f32.mrb[0].mxu0
      %v2138 = vadd.f32 0.0, %v2137
      %v2139 = vpop.f32.mrb[0].mxu0
      %2140 = vmatprep.mubr.bf16.mxu0 0
      %2141 = vmatmul.mubr.bf16.gmra.mrb[0].mxu0 %v1313
      %v2142 = vpop.f32.mrb[0].mxu0
      %v2143 = vadd.f32 0.0, %v2142
      %v2144 = vpop.f32.mrb[0].mxu0
      %v2145 = vpop.f32.mrb[0].mxu0
      %v2146 = vadd.f32 0.0, %v2145
      %v2147 = vpop.f32.mrb[0].mxu0
      %2148 = vmatprep.mubr.bf16.mxu0 0
      %2149 = vmatmul.mubr.bf16.gmra.mrb[0].mxu0 %v1316
      %v2150 = vpop.f32.mrb[0].mxu0
      %v2151 = vadd.f32 0.0, %v2150
      %v2152 = vpop.f32.mrb[0].mxu0
      %v2153 = vpop.f32.mrb[0].mxu0
      %v2154 = vadd.f32 0.0, %v2153
      %v2155 = vpop.f32.mrb[0].mxu0
      %2156 = vmatprep.mubr.bf16.mxu0 0
      %2157 = vmatmul.mubr.bf16.gmra.mrb[0].mxu0 %v1319
      %v2158 = vpop.f32.mrb[0].mxu0
      %v2159 = vadd.f32 0.0, %v2158
      %v2160 = vpop.f32.mrb[0].mxu0
      %v2161 = vpop.f32.mrb[0].mxu0
      %v2162 = vadd.f32 0.0, %v2161
      %v2163 = vpop.f32.mrb[0].mxu0
      %2164 = vmatprep.mubr.bf16.mxu0 0
      %2165 = vmatmul.mubr.bf16.gmra.mrb[0].mxu0 %v1662
      %v2166 = vpop.f32.mrb[0].mxu0
      %v2167 = vadd.f32 0.0, %v2166
      %v2168 = vpop.f32.mrb[0].mxu0
      %v2169 = vpop.f32.mrb[0].mxu0
      %v2170 = vadd.f32 0.0, %v2169
      %v2171 = vpop.f32.mrb[0].mxu0
      %2172 = vmatprep.mubr.bf16.mxu0 0
      %2173 = vmatmul.mubr.bf16.gmra.mrb[0].mxu0 %v2079
      %v2174 = vpop.f32.mrb[0].mxu0
      %v2175 = vadd.f32 0.0, %v2174
      %v2176 = vpop.f32.mrb[0].mxu0
      %v2177 = vpop.f32.mrb[0].mxu0
      %v2178 = vadd.f32 0.0, %v2177
      %v2179 = vpop.f32.mrb[0].mxu0
      %2180 = vdwg.mxu0
      %v2181 = vadd.f32 %v2047, %v2119
      %v2182 = vadd.f32 %v2048, %v2122
      %v2183 = vadd.f32 %v2049, %v2127
      %v2184 = vadd.f32 %v2050, %v2130
      %v2185 = vadd.f32 %v2051, %v2135
      %v2186 = vadd.f32 %v2052, %v2138
      %v2187 = vadd.f32 %v2053, %v2143
      %v2188 = vadd.f32 %v2054, %v2146
      %v2189 = vadd.f32 %v2055, %v2151
      %v2190 = vadd.f32 %v2056, %v2154
      %v2191 = vadd.f32 %v2057, %v2159
      %v2192 = vadd.f32 %v2058, %v2162
      %v2193 = vadd.f32 %v2059, %v2167
      %v2194 = vadd.f32 %v2060, %v2170
      %v2195 = vadd.f32 %v2061, %v2175
      %v2196 = vadd.f32 %v2062, %v2178
      %v2198 = vshrl.u32 %v803, 16
      %v2200 = vrot.slane %v2198, 5
      %v2201 = vshll.u32 %v803, 16
      %v2203 = vrot.slane %v2201, 6
      %v2204 = vor.u32 %v2200, %v2203
      %v2205 = vrot.slane %v2204, 4
      %v2207 = vshrl.u32 %v804, 16
      %v2209 = vrot.slane %v2207, 5
      %v2210 = vshll.u32 %v804, 16
      %v2212 = vrot.slane %v2210, 6
      %v2213 = vor.u32 %v2209, %v2212
      %v2214 = vsel %vm898, %v2205, %v2213
      %v2215 = vrot.slane %v2213, 4
      %v2217 = vshrl.u32 %v805, 16
      %v2219 = vrot.slane %v2217, 5
      %v2220 = vshll.u32 %v805, 16
      %v2222 = vrot.slane %v2220, 6
      %v2223 = vor.u32 %v2219, %v2222
      %v2224 = vsel %vm898, %v2215, %v2223
      %s2225 = scalar_lea.vmem %s1, 28
      %v2226 = vld [vmem:[%s2225] sm:$0xf]
      %v2227 = vunpack.c.l.b16 %v2214
      %v2228 = vunpack.c.l.b16 %v2224
      %v2229 = vpack.c.b16 %v2228, %v2227
      %v2231 = vsel %vm519, %v2229, 0
      %v2234 = vsel %vm667, %v2226, 0
      %2236 = vmatprep.subr.bf16.mxu0 0
      %2237 = vmatpush1.bf16.msra.mxu0 %v2234
      %2238 = vmatprep.subr.bf16.mxu0 0
      %2239 = vmatpush1.bf16.msra.mxu0 0
      %2240 = vmatprep.subr.bf16.mxu0 0
      %2241 = vmatpush1.bf16.msra.mxu0 0
      %2242 = vmatprep.subr.bf16.mxu0 0
      %2243 = vmatpush1.bf16.msra.mxu0 0
      %2244 = vmatprep.subr.bf16.mxu0 0
      %2245 = vmatpush1.bf16.msra.mxu0 0
      %2246 = vmatprep.subr.bf16.mxu0 0
      %2247 = vmatpush1.bf16.msra.mxu0 0
      %2248 = vmatprep.subr.bf16.mxu0 0
      %2249 = vmatpush1.bf16.msra.mxu0 0
      %2250 = vmatprep.subr.bf16.mxu0 0
      %2251 = vmatpush1.bf16.msra.mxu0 0
      %2252 = vmatprep.subr.bf16.mxu0 0
      %2253 = vmatpush1.bf16.msra.mxu0 0
      %2254 = vmatprep.subr.bf16.mxu0 0
      %2255 = vmatpush1.bf16.msra.mxu0 0
      %2256 = vmatprep.subr.bf16.mxu0 0
      %2257 = vmatpush1.bf16.msra.mxu0 0
      %2258 = vmatprep.subr.bf16.mxu0 0
      %2259 = vmatpush1.bf16.msra.mxu0 0
      %2260 = vmatprep.subr.bf16.mxu0 0
      %2261 = vmatpush1.bf16.msra.mxu0 0
      %2262 = vmatprep.subr.bf16.mxu0 0
      %2263 = vmatpush1.bf16.msra.mxu0 0
      %2264 = vmatprep.subr.bf16.mxu0 0
      %2265 = vmatpush1.bf16.msra.mxu0 0
      %2266 = vmatprep.subr.bf16.mxu0 0
      %2267 = vmatpush1.bf16.msra.mxu0 0
      %2268 = vmatprep.mubr.bf16.mxu0 0
      %2269 = vmatmul.mubr.bf16.gmra.mrb[0].mxu0 %v1156
      %v2270 = vpop.f32.mrb[0].mxu0
      %v2271 = vadd.f32 0.0, %v2270
      %v2272 = vpop.f32.mrb[0].mxu0
      %v2273 = vpop.f32.mrb[0].mxu0
      %v2274 = vadd.f32 0.0, %v2273
      %v2275 = vpop.f32.mrb[0].mxu0
      %2276 = vmatprep.mubr.bf16.mxu0 0
      %2277 = vmatmul.mubr.bf16.gmra.mrb[0].mxu0 %v1159
      %v2278 = vpop.f32.mrb[0].mxu0
      %v2279 = vadd.f32 0.0, %v2278
      %v2280 = vpop.f32.mrb[0].mxu0
      %v2281 = vpop.f32.mrb[0].mxu0
      %v2282 = vadd.f32 0.0, %v2281
      %v2283 = vpop.f32.mrb[0].mxu0
      %2284 = vmatprep.mubr.bf16.mxu0 0
      %2285 = vmatmul.mubr.bf16.gmra.mrb[0].mxu0 %v1162
      %v2286 = vpop.f32.mrb[0].mxu0
      %v2287 = vadd.f32 0.0, %v2286
      %v2288 = vpop.f32.mrb[0].mxu0
      %v2289 = vpop.f32.mrb[0].mxu0
      %v2290 = vadd.f32 0.0, %v2289
      %v2291 = vpop.f32.mrb[0].mxu0
      %2292 = vmatprep.mubr.bf16.mxu0 0
      %2293 = vmatmul.mubr.bf16.gmra.mrb[0].mxu0 %v1165
      %v2294 = vpop.f32.mrb[0].mxu0
      %v2295 = vadd.f32 0.0, %v2294
      %v2296 = vpop.f32.mrb[0].mxu0
      %v2297 = vpop.f32.mrb[0].mxu0
      %v2298 = vadd.f32 0.0, %v2297
      %v2299 = vpop.f32.mrb[0].mxu0
      %2300 = vmatprep.mubr.bf16.mxu0 0
      %2301 = vmatmul.mubr.bf16.gmra.mrb[0].mxu0 %v1168
      %v2302 = vpop.f32.mrb[0].mxu0
      %v2303 = vadd.f32 0.0, %v2302
      %v2304 = vpop.f32.mrb[0].mxu0
      %v2305 = vpop.f32.mrb[0].mxu0
      %v2306 = vadd.f32 0.0, %v2305
      %v2307 = vpop.f32.mrb[0].mxu0
      %2308 = vmatprep.mubr.bf16.mxu0 0
      %2309 = vmatmul.mubr.bf16.gmra.mrb[0].mxu0 %v1171
      %v2310 = vpop.f32.mrb[0].mxu0
      %v2311 = vadd.f32 0.0, %v2310
      %v2312 = vpop.f32.mrb[0].mxu0
      %v2313 = vpop.f32.mrb[0].mxu0
      %v2314 = vadd.f32 0.0, %v2313
      %v2315 = vpop.f32.mrb[0].mxu0
      %2316 = vmatprep.mubr.bf16.mxu0 0
      %2317 = vmatmul.mubr.bf16.gmra.mrb[0].mxu0 %v1814
      %v2318 = vpop.f32.mrb[0].mxu0
      %v2319 = vadd.f32 0.0, %v2318
      %v2320 = vpop.f32.mrb[0].mxu0
      %v2321 = vpop.f32.mrb[0].mxu0
      %v2322 = vadd.f32 0.0, %v2321
      %v2323 = vpop.f32.mrb[0].mxu0
      %2324 = vmatprep.mubr.bf16.mxu0 0
      %2325 = vmatmul.mubr.bf16.gmra.mrb[0].mxu0 %v2231
      %v2326 = vpop.f32.mrb[0].mxu0
      %v2327 = vadd.f32 0.0, %v2326
      %v2328 = vpop.f32.mrb[0].mxu0
      %v2329 = vpop.f32.mrb[0].mxu0
      %v2330 = vadd.f32 0.0, %v2329
      %v2331 = vpop.f32.mrb[0].mxu0
      %2332 = vdwg.mxu0
      %v2333 = vadd.f32 %v2181, %v2271
      %v2334 = vadd.f32 %v2182, %v2274
      %v2335 = vadd.f32 %v2183, %v2279
      %v2336 = vadd.f32 %v2184, %v2282
      %v2337 = vadd.f32 %v2185, %v2287
      %v2338 = vadd.f32 %v2186, %v2290
      %v2339 = vadd.f32 %v2187, %v2295
      %v2340 = vadd.f32 %v2188, %v2298
      %v2341 = vadd.f32 %v2189, %v2303
      %v2342 = vadd.f32 %v2190, %v2306
      %v2343 = vadd.f32 %v2191, %v2311
      %v2344 = vadd.f32 %v2192, %v2314
      %v2345 = vadd.f32 %v2193, %v2319
      %v2346 = vadd.f32 %v2194, %v2322
      %v2347 = vadd.f32 %v2195, %v2327
      %v2348 = vadd.f32 %v2196, %v2330
      %v2349 = vrot.slane %v803, 6
      %v2350 = vrot.slane %v2349, 4
      %v2351 = vrot.slane %v804, 6
      %v2352 = vsel %vm1423, %v2350, %v2351
      %v2353 = vrot.slane %v2351, 4
      %v2354 = vrot.slane %v805, 6
      %v2355 = vsel %vm1423, %v2353, %v2354
      %s2356 = scalar_lea.vmem %s1, 32
      %v2357 = vld [vmem:[%s2356] sm:$0xf]
      %v2358 = vunpack.c.l.b16 %v2352
      %v2359 = vunpack.c.l.b16 %v2355
      %v2360 = vpack.c.b16 %v2359, %v2358
      %v2362 = vsel %vm519, %v2360, 0
      %v2365 = vsel %vm667, %v2357, 0
      %2367 = vmatprep.subr.bf16.mxu0 0
      %2368 = vmatpush1.bf16.msra.mxu0 %v2365
      %2369 = vmatprep.subr.bf16.mxu0 0
      %2370 = vmatpush1.bf16.msra.mxu0 0
      %2371 = vmatprep.subr.bf16.mxu0 0
      %2372 = vmatpush1.bf16.msra.mxu0 0
      %2373 = vmatprep.subr.bf16.mxu0 0
      %2374 = vmatpush1.bf16.msra.mxu0 0
      %2375 = vmatprep.subr.bf16.mxu0 0
      %2376 = vmatpush1.bf16.msra.mxu0 0
      %2377 = vmatprep.subr.bf16.mxu0 0
      %2378 = vmatpush1.bf16.msra.mxu0 0
      %2379 = vmatprep.subr.bf16.mxu0 0
      %2380 = vmatpush1.bf16.msra.mxu0 0
      %2381 = vmatprep.subr.bf16.mxu0 0
      %2382 = vmatpush1.bf16.msra.mxu0 0
      %2383 = vmatprep.subr.bf16.mxu0 0
      %2384 = vmatpush1.bf16.msra.mxu0 0
      %2385 = vmatprep.subr.bf16.mxu0 0
      %2386 = vmatpush1.bf16.msra.mxu0 0
      %2387 = vmatprep.subr.bf16.mxu0 0
      %2388 = vmatpush1.bf16.msra.mxu0 0
      %2389 = vmatprep.subr.bf16.mxu0 0
      %2390 = vmatpush1.bf16.msra.mxu0 0
      %2391 = vmatprep.subr.bf16.mxu0 0
      %2392 = vmatpush1.bf16.msra.mxu0 0
      %2393 = vmatprep.subr.bf16.mxu0 0
      %2394 = vmatpush1.bf16.msra.mxu0 0
      %2395 = vmatprep.subr.bf16.mxu0 0
      %2396 = vmatpush1.bf16.msra.mxu0 0
      %2397 = vmatprep.subr.bf16.mxu0 0
      %2398 = vmatpush1.bf16.msra.mxu0 0
      %2399 = vmatprep.mubr.bf16.mxu0 0
      %2400 = vmatmul.mubr.bf16.gmra.mrb[0].mxu0 %v1513
      %v2401 = vpop.f32.mrb[0].mxu0
      %v2402 = vadd.f32 0.0, %v2401
      %v2403 = vpop.f32.mrb[0].mxu0
      %v2404 = vpop.f32.mrb[0].mxu0
      %v2405 = vadd.f32 0.0, %v2404
      %v2406 = vpop.f32.mrb[0].mxu0
      %2407 = vmatprep.mubr.bf16.mxu0 0
      %2408 = vmatmul.mubr.bf16.gmra.mrb[0].mxu0 %v1516
      %v2409 = vpop.f32.mrb[0].mxu0
      %v2410 = vadd.f32 0.0, %v2409
      %v2411 = vpop.f32.mrb[0].mxu0
      %v2412 = vpop.f32.mrb[0].mxu0
      %v2413 = vadd.f32 0.0, %v2412
      %v2414 = vpop.f32.mrb[0].mxu0
      %2415 = vmatprep.mubr.bf16.mxu0 0
      %2416 = vmatmul.mubr.bf16.gmra.mrb[0].mxu0 %v1519
      %v2417 = vpop.f32.mrb[0].mxu0
      %v2418 = vadd.f32 0.0, %v2417
      %v2419 = vpop.f32.mrb[0].mxu0
      %v2420 = vpop.f32.mrb[0].mxu0
      %v2421 = vadd.f32 0.0, %v2420
      %v2422 = vpop.f32.mrb[0].mxu0
      %2423 = vmatprep.mubr.bf16.mxu0 0
      %2424 = vmatmul.mubr.bf16.gmra.mrb[0].mxu0 %v1522
      %v2425 = vpop.f32.mrb[0].mxu0
      %v2426 = vadd.f32 0.0, %v2425
      %v2427 = vpop.f32.mrb[0].mxu0
      %v2428 = vpop.f32.mrb[0].mxu0
      %v2429 = vadd.f32 0.0, %v2428
      %v2430 = vpop.f32.mrb[0].mxu0
      %2431 = vmatprep.mubr.bf16.mxu0 0
      %2432 = vmatmul.mubr.bf16.gmra.mrb[0].mxu0 %v1525
      %v2433 = vpop.f32.mrb[0].mxu0
      %v2434 = vadd.f32 0.0, %v2433
      %v2435 = vpop.f32.mrb[0].mxu0
      %v2436 = vpop.f32.mrb[0].mxu0
      %v2437 = vadd.f32 0.0, %v2436
      %v2438 = vpop.f32.mrb[0].mxu0
      %2439 = vmatprep.mubr.bf16.mxu0 0
      %2440 = vmatmul.mubr.bf16.gmra.mrb[0].mxu0 %v1528
      %v2441 = vpop.f32.mrb[0].mxu0
      %v2442 = vadd.f32 0.0, %v2441
      %v2443 = vpop.f32.mrb[0].mxu0
      %v2444 = vpop.f32.mrb[0].mxu0
      %v2445 = vadd.f32 0.0, %v2444
      %v2446 = vpop.f32.mrb[0].mxu0
      %2447 = vmatprep.mubr.bf16.mxu0 0
      %2448 = vmatmul.mubr.bf16.gmra.mrb[0].mxu0 %v1945
      %v2449 = vpop.f32.mrb[0].mxu0
      %v2450 = vadd.f32 0.0, %v2449
      %v2451 = vpop.f32.mrb[0].mxu0
      %v2452 = vpop.f32.mrb[0].mxu0
      %v2453 = vadd.f32 0.0, %v2452
      %v2454 = vpop.f32.mrb[0].mxu0
      %2455 = vmatprep.mubr.bf16.mxu0 0
      %2456 = vmatmul.mubr.bf16.gmra.mrb[0].mxu0 %v2362
      %v2457 = vpop.f32.mrb[0].mxu0
      %v2458 = vadd.f32 0.0, %v2457
      %v2459 = vpop.f32.mrb[0].mxu0
      %v2460 = vpop.f32.mrb[0].mxu0
      %v2461 = vadd.f32 0.0, %v2460
      %v2462 = vpop.f32.mrb[0].mxu0
      %2463 = vdwg.mxu0
      %v2464 = vadd.f32 %v2333, %v2402
      %v2465 = vadd.f32 %v2334, %v2405
      %v2466 = vadd.f32 %v2335, %v2410
      %v2467 = vadd.f32 %v2336, %v2413
      %v2468 = vadd.f32 %v2337, %v2418
      %v2469 = vadd.f32 %v2338, %v2421
      %v2470 = vadd.f32 %v2339, %v2426
      %v2471 = vadd.f32 %v2340, %v2429
      %v2472 = vadd.f32 %v2341, %v2434
      %v2473 = vadd.f32 %v2342, %v2437
      %v2474 = vadd.f32 %v2343, %v2442
      %v2475 = vadd.f32 %v2344, %v2445
      %v2476 = vadd.f32 %v2345, %v2450
      %v2477 = vadd.f32 %v2346, %v2453
      %v2478 = vadd.f32 %v2347, %v2458
      %v2479 = vadd.f32 %v2348, %v2461
      %v2480 = vld [vmem:[%s2] sm:$0x1]
      %v2482 = vlaneseq
      %v2483 = vshrl.u32 %v2482, 7
      %v2484 = vsub.s32 0, %v2483
      %v2485 = vrot.slane %v2480, %v2484
      %v2487 = vmul.f32 %v2464, %v2485
      %v2488 = vmul.f32 %v2465, %v2485
      %v2489 = vmul.f32 %v2466, %v2485
      %v2490 = vmul.f32 %v2467, %v2485
      %v2491 = vmul.f32 %v2468, %v2485
      %v2492 = vmul.f32 %v2469, %v2485
      %v2493 = vmul.f32 %v2470, %v2485
      %v2494 = vmul.f32 %v2471, %v2485
      %v2495 = vmul.f32 %v2472, %v2485
      %v2496 = vmul.f32 %v2473, %v2485
      %v2497 = vmul.f32 %v2474, %v2485
      %v2498 = vmul.f32 %v2475, %v2485
      %v2499 = vmul.f32 %v2476, %v2485
      %v2500 = vmul.f32 %v2477, %v2485
      %v2501 = vmul.f32 %v2478, %v2485
      %v2502 = vmul.f32 %v2479, %v2485
      %v2503 = vld [vmem:[%s3] sm:$0x1]
      %v2505 = vlaneseq
      %v2506 = vshrl.u32 %v2505, 7
      %v2507 = vsub.s32 0, %v2506
      %v2508 = vrot.slane %v2503, %v2507
      %v2510 = vadd.f32 %v2487, %v2508
      %v2511 = vadd.f32 %v2488, %v2508
      %v2512 = vadd.f32 %v2489, %v2508
      %v2513 = vadd.f32 %v2490, %v2508
      %v2514 = vadd.f32 %v2491, %v2508
      %v2515 = vadd.f32 %v2492, %v2508
      %v2516 = vadd.f32 %v2493, %v2508
      %v2517 = vadd.f32 %v2494, %v2508
      %v2518 = vadd.f32 %v2495, %v2508
      %v2519 = vadd.f32 %v2496, %v2508
      %v2520 = vadd.f32 %v2497, %v2508
      %v2521 = vadd.f32 %v2498, %v2508
      %v2522 = vadd.f32 %v2499, %v2508
      %v2523 = vadd.f32 %v2500, %v2508
      %v2524 = vadd.f32 %v2501, %v2508
      %v2525 = vadd.f32 %v2502, %v2508
      %v2526 = vmax.f32 %v2510, 0.0
      %v2527 = vmax.f32 %v2511, 0.0
      %v2528 = vmax.f32 %v2512, 0.0
      %v2529 = vmax.f32 %v2513, 0.0
      %v2530 = vmax.f32 %v2514, 0.0
      %v2531 = vmax.f32 %v2515, 0.0
      %v2532 = vmax.f32 %v2516, 0.0
      %v2533 = vmax.f32 %v2517, 0.0
      %v2534 = vmax.f32 %v2518, 0.0
      %v2535 = vmax.f32 %v2519, 0.0
      %v2536 = vmax.f32 %v2520, 0.0
      %v2537 = vmax.f32 %v2521, 0.0
      %v2538 = vmax.f32 %v2522, 0.0
      %v2539 = vmax.f32 %v2523, 0.0
      %v2540 = vmax.f32 %v2524, 0.0
      %v2541 = vmax.f32 %v2525, 0.0
      %v2542 = vpack.c.bf16 %v2527, %v2526
      %v2543 = vpack.c.bf16 %v2529, %v2528
      %v2544 = vpack.c.bf16 %v2531, %v2530
      %v2545 = vpack.c.bf16 %v2533, %v2532
      %v2546 = vpack.c.bf16 %v2535, %v2534
      %v2547 = vpack.c.bf16 %v2537, %v2536
      %v2548 = vpack.c.bf16 %v2539, %v2538
      %v2549 = vpack.c.bf16 %v2541, %v2540
      %v2550 = vld [vmem:[%s7] sm:$0x3]
      %vm2551 = vsmask.f32 3328
      %vm2552 = vsmask.f32 7440
      %vm2553 = vmor %vm2551, %vm2552
      %v2555 = vshrl.u32 %v773, 16
      %v2557 = vrot.slane %v2555, 4
      %v2558 = vshll.u32 %v773, 16
      %v2560 = vrot.slane %v2558, 5
      %v2561 = vor.u32 %v2557, %v2560
      %v2562 = vrot.slane %v2561, 4
      %v2564 = vshll.u32 %v774, 16
      %v2566 = vrot.slane %v2564, 5
      %v2567 = vsel %vm2553, %v2562, %v2566
      %v2568 = vshrl.u32 %v774, 16
      %v2570 = vrot.slane %v2568, 4
      %v2571 = vor.u32 %v2570, %v2566
      %v2572 = vrot.slane %v2571, 4
      %v2574 = vshll.u32 %v775, 16
      %v2576 = vrot.slane %v2574, 5
      %v2577 = vsel %vm2553, %v2572, %v2576
      %v2578 = vrot.slane %v900, 4
      %v2579 = vrot.slane %v903, 5
      %v2580 = vor.u32 %v2578, %v2579
      %v2581 = vrot.slane %v2580, 4
      %v2582 = vrot.slane %v912, 5
      %v2583 = vsel %vm2553, %v2581, %v2582
      %v2584 = vrot.slane %v909, 4
      %v2585 = vor.u32 %v2584, %v2582
      %v2586 = vrot.slane %v2585, 4
      %v2587 = vrot.slane %v922, 5
      %v2588 = vsel %vm2553, %v2586, %v2587
      %v2589 = vrot.slane %v928, 4
      %v2590 = vrot.slane %v931, 5
      %v2591 = vor.u32 %v2589, %v2590
      %v2592 = vrot.slane %v2591, 4
      %v2593 = vrot.slane %v940, 5
      %v2594 = vsel %vm2553, %v2592, %v2593
      %v2595 = vrot.slane %v937, 4
      %v2596 = vor.u32 %v2595, %v2593
      %v2597 = vrot.slane %v2596, 4
      %v2598 = vrot.slane %v950, 5
      %v2599 = vsel %vm2553, %v2597, %v2598
      %v2600 = vrot.slane %v956, 4
      %v2601 = vrot.slane %v959, 5
      %v2602 = vor.u32 %v2600, %v2601
      %v2603 = vrot.slane %v2602, 4
      %v2604 = vrot.slane %v968, 5
      %v2605 = vsel %vm2553, %v2603, %v2604
      %v2606 = vrot.slane %v965, 4
      %v2607 = vor.u32 %v2606, %v2604
      %v2608 = vrot.slane %v2607, 4
      %v2609 = vrot.slane %v978, 5
      %v2610 = vsel %vm2553, %v2608, %v2609
      %v2611 = vrot.slane %v984, 4
      %v2612 = vrot.slane %v987, 5
      %v2613 = vor.u32 %v2611, %v2612
      %v2614 = vrot.slane %v2613, 4
      %v2615 = vrot.slane %v996, 5
      %v2616 = vsel %vm2553, %v2614, %v2615
      %v2617 = vrot.slane %v993, 4
      %v2618 = vor.u32 %v2617, %v2615
      %v2619 = vrot.slane %v2618, 4
      %v2620 = vrot.slane %v1006, 5
      %v2621 = vsel %vm2553, %v2619, %v2620
      %v2622 = vrot.slane %v1012, 4
      %v2623 = vrot.slane %v1015, 5
      %v2624 = vor.u32 %v2622, %v2623
      %v2625 = vrot.slane %v2624, 4
      %v2626 = vrot.slane %v1024, 5
      %v2627 = vsel %vm2553, %v2625, %v2626
      %v2628 = vrot.slane %v1021, 4
      %v2629 = vor.u32 %v2628, %v2626
      %v2630 = vrot.slane %v2629, 4
      %v2631 = vrot.slane %v1034, 5
      %v2632 = vsel %vm2553, %v2630, %v2631
      %v2633 = vrot.slane %v1040, 4
      %v2634 = vrot.slane %v1043, 5
      %v2635 = vor.u32 %v2633, %v2634
      %v2636 = vrot.slane %v2635, 4
      %v2637 = vrot.slane %v1052, 5
      %v2638 = vsel %vm2553, %v2636, %v2637
      %v2639 = vrot.slane %v1049, 4
      %v2640 = vor.u32 %v2639, %v2637
      %v2641 = vrot.slane %v2640, 4
      %v2642 = vrot.slane %v1062, 5
      %v2643 = vsel %vm2553, %v2641, %v2642
      %v2644 = vrot.slane %v1068, 4
      %v2645 = vrot.slane %v1071, 5
      %v2646 = vor.u32 %v2644, %v2645
      %v2647 = vrot.slane %v2646, 4
      %v2648 = vrot.slane %v1080, 5
      %v2649 = vsel %vm2553, %v2647, %v2648
      %v2650 = vrot.slane %v1077, 4
      %v2651 = vor.u32 %v2650, %v2648
      %v2652 = vrot.slane %v2651, 4
      %v2653 = vrot.slane %v1090, 5
      %v2654 = vsel %vm2553, %v2652, %v2653
      %s2655 = scalar_lea.vmem %s1, 36
      %v2656 = vld [vmem:[%s2655] sm:$0xf]
      %v2657 = vrot.slane %v2555, 5
      %v2658 = vrot.slane %v2558, 6
      %v2659 = vor.u32 %v2657, %v2658
      %v2660 = vrot.slane %v2659, 4
      %v2661 = vrot.slane %v2568, 5
      %v2662 = vrot.slane %v2564, 6
      %v2663 = vor.u32 %v2661, %v2662
      %v2664 = vsel %vm898, %v2660, %v2663
      %v2665 = vrot.slane %v2663, 4
      %v2666 = vshrl.u32 %v775, 16
      %v2668 = vrot.slane %v2666, 5
      %v2669 = vrot.slane %v2574, 6
      %v2670 = vor.u32 %v2668, %v2669
      %v2671 = vsel %vm898, %v2665, %v2670
      %s2672 = scalar_lea.vmem %s1, 40
      %v2673 = vld [vmem:[%s2672] sm:$0xf]
      %v2674 = vunpack.c.l.b16 %v2664
      %v2675 = vunpack.c.l.b16 %v2671
      %v2676 = vpack.c.b16 %v2675, %v2674
      %v2678 = vsel %vm519, %v2676, 0
      %v2681 = vsel %vm667, %v2673, 0
      %2683 = vmatprep.subr.bf16.mxu0 0
      %2684 = vmatpush1.bf16.msra.mxu0 %v2681
      %2685 = vmatprep.subr.bf16.mxu0 0
      %2686 = vmatpush1.bf16.msra.mxu0 0
      %2687 = vmatprep.subr.bf16.mxu0 0
      %2688 = vmatpush1.bf16.msra.mxu0 0
      %2689 = vmatprep.subr.bf16.mxu0 0
      %2690 = vmatpush1.bf16.msra.mxu0 0
      %2691 = vmatprep.subr.bf16.mxu0 0
      %2692 = vmatpush1.bf16.msra.mxu0 0
      %2693 = vmatprep.subr.bf16.mxu0 0
      %2694 = vmatpush1.bf16.msra.mxu0 0
      %2695 = vmatprep.subr.bf16.mxu0 0
      %2696 = vmatpush1.bf16.msra.mxu0 0
      %2697 = vmatprep.subr.bf16.mxu0 0
      %2698 = vmatpush1.bf16.msra.mxu0 0
      %2699 = vmatprep.subr.bf16.mxu0 0
      %2700 = vmatpush1.bf16.msra.mxu0 0
      %2701 = vmatprep.subr.bf16.mxu0 0
      %2702 = vmatpush1.bf16.msra.mxu0 0
      %2703 = vmatprep.subr.bf16.mxu0 0
      %2704 = vmatpush1.bf16.msra.mxu0 0
      %2705 = vmatprep.subr.bf16.mxu0 0
      %2706 = vmatpush1.bf16.msra.mxu0 0
      %2707 = vmatprep.subr.bf16.mxu0 0
      %2708 = vmatpush1.bf16.msra.mxu0 0
      %2709 = vmatprep.subr.bf16.mxu0 0
      %2710 = vmatpush1.bf16.msra.mxu0 0
      %2711 = vmatprep.subr.bf16.mxu0 0
      %2712 = vmatpush1.bf16.msra.mxu0 0
      %2713 = vmatprep.subr.bf16.mxu0 0
      %2714 = vmatpush1.bf16.msra.mxu0 0
      %2715 = vmatprep.mubr.bf16.mxu0 0
      %2716 = vmatmul.mubr.bf16.gmra.mrb[0].mxu0 %v2678
      %v2717 = vpop.f32.mrb[0].mxu0
      %v2718 = vadd.f32 0.0, %v2717
      %v2719 = vpop.f32.mrb[0].mxu0
      %v2720 = vpop.f32.mrb[0].mxu0
      %v2721 = vadd.f32 0.0, %v2720
      %v2722 = vpop.f32.mrb[0].mxu0
      %2723 = vmatprep.mubr.bf16.mxu0 0
      %2724 = vmatmul.mubr.bf16.gmra.mrb[0].mxu0 %v1150
      %v2725 = vpop.f32.mrb[0].mxu0
      %v2726 = vadd.f32 0.0, %v2725
      %v2727 = vpop.f32.mrb[0].mxu0
      %v2728 = vpop.f32.mrb[0].mxu0
      %v2729 = vadd.f32 0.0, %v2728
      %v2730 = vpop.f32.mrb[0].mxu0
      %2731 = vmatprep.mubr.bf16.mxu0 0
      %2732 = vmatmul.mubr.bf16.gmra.mrb[0].mxu0 %v1153
      %v2733 = vpop.f32.mrb[0].mxu0
      %v2734 = vadd.f32 0.0, %v2733
      %v2735 = vpop.f32.mrb[0].mxu0
      %v2736 = vpop.f32.mrb[0].mxu0
      %v2737 = vadd.f32 0.0, %v2736
      %v2738 = vpop.f32.mrb[0].mxu0
      %2739 = vmatprep.mubr.bf16.mxu0 0
      %2740 = vmatmul.mubr.bf16.gmra.mrb[0].mxu0 %v1156
      %v2741 = vpop.f32.mrb[0].mxu0
      %v2742 = vadd.f32 0.0, %v2741
      %v2743 = vpop.f32.mrb[0].mxu0
      %v2744 = vpop.f32.mrb[0].mxu0
      %v2745 = vadd.f32 0.0, %v2744
      %v2746 = vpop.f32.mrb[0].mxu0
      %2747 = vmatprep.mubr.bf16.mxu0 0
      %2748 = vmatmul.mubr.bf16.gmra.mrb[0].mxu0 %v1159
      %v2749 = vpop.f32.mrb[0].mxu0
      %v2750 = vadd.f32 0.0, %v2749
      %v2751 = vpop.f32.mrb[0].mxu0
      %v2752 = vpop.f32.mrb[0].mxu0
      %v2753 = vadd.f32 0.0, %v2752
      %v2754 = vpop.f32.mrb[0].mxu0
      %2755 = vmatprep.mubr.bf16.mxu0 0
      %2756 = vmatmul.mubr.bf16.gmra.mrb[0].mxu0 %v1162
      %v2757 = vpop.f32.mrb[0].mxu0
      %v2758 = vadd.f32 0.0, %v2757
      %v2759 = vpop.f32.mrb[0].mxu0
      %v2760 = vpop.f32.mrb[0].mxu0
      %v2761 = vadd.f32 0.0, %v2760
      %v2762 = vpop.f32.mrb[0].mxu0
      %2763 = vmatprep.mubr.bf16.mxu0 0
      %2764 = vmatmul.mubr.bf16.gmra.mrb[0].mxu0 %v1165
      %v2765 = vpop.f32.mrb[0].mxu0
      %v2766 = vadd.f32 0.0, %v2765
      %v2767 = vpop.f32.mrb[0].mxu0
      %v2768 = vpop.f32.mrb[0].mxu0
      %v2769 = vadd.f32 0.0, %v2768
      %v2770 = vpop.f32.mrb[0].mxu0
      %2771 = vmatprep.mubr.bf16.mxu0 0
      %2772 = vmatmul.mubr.bf16.gmra.mrb[0].mxu0 %v1168
      %v2773 = vpop.f32.mrb[0].mxu0
      %v2774 = vadd.f32 0.0, %v2773
      %v2775 = vpop.f32.mrb[0].mxu0
      %v2776 = vpop.f32.mrb[0].mxu0
      %v2777 = vadd.f32 0.0, %v2776
      %v2778 = vpop.f32.mrb[0].mxu0
      %2779 = vdwg.mxu0
      %v2780 = vunpack.c.l.b16 %v2567
      %v2781 = vunpack.c.l.b16 %v2577
      %v2782 = vunpack.c.l.b16 %v2583
      %v2783 = vunpack.c.l.b16 %v2588
      %v2784 = vunpack.c.l.b16 %v2594
      %v2785 = vunpack.c.l.b16 %v2599
      %v2786 = vunpack.c.l.b16 %v2605
      %v2787 = vunpack.c.l.b16 %v2610
      %v2788 = vunpack.c.l.b16 %v2616
      %v2789 = vunpack.c.l.b16 %v2621
      %v2790 = vunpack.c.l.b16 %v2627
      %v2791 = vunpack.c.l.b16 %v2632
      %v2792 = vunpack.c.l.b16 %v2638
      %v2793 = vunpack.c.l.b16 %v2643
      %v2794 = vunpack.c.l.b16 %v2649
      %v2795 = vunpack.c.l.b16 %v2654
      %v2796 = vpack.c.b16 %v2781, %v2780
      %v2797 = vpack.c.b16 %v2783, %v2782
      %v2798 = vpack.c.b16 %v2785, %v2784
      %v2799 = vpack.c.b16 %v2787, %v2786
      %v2800 = vpack.c.b16 %v2789, %v2788
      %v2801 = vpack.c.b16 %v2791, %v2790
      %v2802 = vpack.c.b16 %v2793, %v2792
      %v2803 = vpack.c.b16 %v2795, %v2794
      %v2805 = vsel %vm519, %v2796, 0
      %v2808 = vsel %vm519, %v2797, 0
      %v2811 = vsel %vm519, %v2798, 0
      %v2814 = vsel %vm519, %v2799, 0
      %v2817 = vsel %vm519, %v2800, 0
      %v2820 = vsel %vm519, %v2801, 0
      %v2823 = vsel %vm519, %v2802, 0
      %v2826 = vsel %vm519, %v2803, 0
      %v2829 = vsel %vm667, %v2656, 0
      %2831 = vmatprep.subr.bf16.mxu0 0
      %2832 = vmatpush1.bf16.msra.mxu0 %v2829
      %2833 = vmatprep.subr.bf16.mxu0 0
      %2834 = vmatpush1.bf16.msra.mxu0 0
      %2835 = vmatprep.subr.bf16.mxu0 0
      %2836 = vmatpush1.bf16.msra.mxu0 0
      %2837 = vmatprep.subr.bf16.mxu0 0
      %2838 = vmatpush1.bf16.msra.mxu0 0
      %2839 = vmatprep.subr.bf16.mxu0 0
      %2840 = vmatpush1.bf16.msra.mxu0 0
      %2841 = vmatprep.subr.bf16.mxu0 0
      %2842 = vmatpush1.bf16.msra.mxu0 0
      %2843 = vmatprep.subr.bf16.mxu0 0
      %2844 = vmatpush1.bf16.msra.mxu0 0
      %2845 = vmatprep.subr.bf16.mxu0 0
      %2846 = vmatpush1.bf16.msra.mxu0 0
      %2847 = vmatprep.subr.bf16.mxu0 0
      %2848 = vmatpush1.bf16.msra.mxu0 0
      %2849 = vmatprep.subr.bf16.mxu0 0
      %2850 = vmatpush1.bf16.msra.mxu0 0
      %2851 = vmatprep.subr.bf16.mxu0 0
      %2852 = vmatpush1.bf16.msra.mxu0 0
      %2853 = vmatprep.subr.bf16.mxu0 0
      %2854 = vmatpush1.bf16.msra.mxu0 0
      %2855 = vmatprep.subr.bf16.mxu0 0
      %2856 = vmatpush1.bf16.msra.mxu0 0
      %2857 = vmatprep.subr.bf16.mxu0 0
      %2858 = vmatpush1.bf16.msra.mxu0 0
      %2859 = vmatprep.subr.bf16.mxu0 0
      %2860 = vmatpush1.bf16.msra.mxu0 0
      %2861 = vmatprep.subr.bf16.mxu0 0
      %2862 = vmatpush1.bf16.msra.mxu0 0
      %2863 = vmatprep.mubr.bf16.mxu0 0
      %2864 = vmatmul.mubr.bf16.gmra.mrb[0].mxu0 %v2805
      %v2865 = vpop.f32.mrb[0].mxu0
      %v2866 = vadd.f32 %v2718, %v2865
      %v2867 = vpop.f32.mrb[0].mxu0
      %v2868 = vpop.f32.mrb[0].mxu0
      %v2869 = vadd.f32 %v2721, %v2868
      %v2870 = vpop.f32.mrb[0].mxu0
      %2871 = vmatprep.mubr.bf16.mxu0 0
      %2872 = vmatmul.mubr.bf16.gmra.mrb[0].mxu0 %v2808
      %v2873 = vpop.f32.mrb[0].mxu0
      %v2874 = vadd.f32 %v2726, %v2873
      %v2875 = vpop.f32.mrb[0].mxu0
      %v2876 = vpop.f32.mrb[0].mxu0
      %v2877 = vadd.f32 %v2729, %v2876
      %v2878 = vpop.f32.mrb[0].mxu0
      %2879 = vmatprep.mubr.bf16.mxu0 0
      %2880 = vmatmul.mubr.bf16.gmra.mrb[0].mxu0 %v2811
      %v2881 = vpop.f32.mrb[0].mxu0
      %v2882 = vadd.f32 %v2734, %v2881
      %v2883 = vpop.f32.mrb[0].mxu0
      %v2884 = vpop.f32.mrb[0].mxu0
      %v2885 = vadd.f32 %v2737, %v2884
      %v2886 = vpop.f32.mrb[0].mxu0
      %2887 = vmatprep.mubr.bf16.mxu0 0
      %2888 = vmatmul.mubr.bf16.gmra.mrb[0].mxu0 %v2814
      %v2889 = vpop.f32.mrb[0].mxu0
      %v2890 = vadd.f32 %v2742, %v2889
      %v2891 = vpop.f32.mrb[0].mxu0
      %v2892 = vpop.f32.mrb[0].mxu0
      %v2893 = vadd.f32 %v2745, %v2892
      %v2894 = vpop.f32.mrb[0].mxu0
      %2895 = vmatprep.mubr.bf16.mxu0 0
      %2896 = vmatmul.mubr.bf16.gmra.mrb[0].mxu0 %v2817
      %v2897 = vpop.f32.mrb[0].mxu0
      %v2898 = vadd.f32 %v2750, %v2897
      %v2899 = vpop.f32.mrb[0].mxu0
      %v2900 = vpop.f32.mrb[0].mxu0
      %v2901 = vadd.f32 %v2753, %v2900
      %v2902 = vpop.f32.mrb[0].mxu0
      %2903 = vmatprep.mubr.bf16.mxu0 0
      %2904 = vmatmul.mubr.bf16.gmra.mrb[0].mxu0 %v2820
      %v2905 = vpop.f32.mrb[0].mxu0
      %v2906 = vadd.f32 %v2758, %v2905
      %v2907 = vpop.f32.mrb[0].mxu0
      %v2908 = vpop.f32.mrb[0].mxu0
      %v2909 = vadd.f32 %v2761, %v2908
      %v2910 = vpop.f32.mrb[0].mxu0
      %2911 = vmatprep.mubr.bf16.mxu0 0
      %2912 = vmatmul.mubr.bf16.gmra.mrb[0].mxu0 %v2823
      %v2913 = vpop.f32.mrb[0].mxu0
      %v2914 = vadd.f32 %v2766, %v2913
      %v2915 = vpop.f32.mrb[0].mxu0
      %v2916 = vpop.f32.mrb[0].mxu0
      %v2917 = vadd.f32 %v2769, %v2916
      %v2918 = vpop.f32.mrb[0].mxu0
      %2919 = vmatprep.mubr.bf16.mxu0 0
      %2920 = vmatmul.mubr.bf16.gmra.mrb[0].mxu0 %v2826
      %v2921 = vpop.f32.mrb[0].mxu0
      %v2922 = vadd.f32 %v2774, %v2921
      %v2923 = vpop.f32.mrb[0].mxu0
      %v2924 = vpop.f32.mrb[0].mxu0
      %v2925 = vadd.f32 %v2777, %v2924
      %v2926 = vpop.f32.mrb[0].mxu0
      %2927 = vdwg.mxu0
      %vm2928 = vsmask.f32 1280
      %vm2929 = vsmask.f32 5392
      %vm2930 = vmor %vm2928, %vm2929
      %v2931 = vrot.slane %v2555, 6
      %v2932 = vrot.slane %v2558, 7
      %v2933 = vor.u32 %v2931, %v2932
      %v2934 = vrot.slane %v2933, 4
      %v2935 = vrot.slane %v2568, 6
      %v2936 = vrot.slane %v2564, 7
      %v2937 = vor.u32 %v2935, %v2936
      %v2938 = vsel %vm2930, %v2934, %v2937
      %v2939 = vrot.slane %v2937, 4
      %v2940 = vrot.slane %v2666, 6
      %v2941 = vrot.slane %v2574, 7
      %v2942 = vor.u32 %v2940, %v2941
      %v2943 = vsel %vm2930, %v2939, %v2942
      %v2944 = vrot.slane %v900, 6
      %v2945 = vrot.slane %v903, 7
      %v2946 = vor.u32 %v2944, %v2945
      %v2947 = vrot.slane %v2946, 4
      %v2948 = vrot.slane %v909, 6
      %v2949 = vrot.slane %v912, 7
      %v2950 = vor.u32 %v2948, %v2949
      %v2951 = vsel %vm2930, %v2947, %v2950
      %v2952 = vrot.slane %v2950, 4
      %v2953 = vrot.slane %v919, 6
      %v2954 = vrot.slane %v922, 7
      %v2955 = vor.u32 %v2953, %v2954
      %v2956 = vsel %vm2930, %v2952, %v2955
      %v2957 = vrot.slane %v928, 6
      %v2958 = vrot.slane %v931, 7
      %v2959 = vor.u32 %v2957, %v2958
      %v2960 = vrot.slane %v2959, 4
      %v2961 = vrot.slane %v937, 6
      %v2962 = vrot.slane %v940, 7
      %v2963 = vor.u32 %v2961, %v2962
      %v2964 = vsel %vm2930, %v2960, %v2963
      %v2965 = vrot.slane %v2963, 4
      %v2966 = vrot.slane %v947, 6
      %v2967 = vrot.slane %v950, 7
      %v2968 = vor.u32 %v2966, %v2967
      %v2969 = vsel %vm2930, %v2965, %v2968
      %v2970 = vrot.slane %v956, 6
      %v2971 = vrot.slane %v959, 7
      %v2972 = vor.u32 %v2970, %v2971
      %v2973 = vrot.slane %v2972, 4
      %v2974 = vrot.slane %v965, 6
      %v2975 = vrot.slane %v968, 7
      %v2976 = vor.u32 %v2974, %v2975
      %v2977 = vsel %vm2930, %v2973, %v2976
      %v2978 = vrot.slane %v2976, 4
      %v2979 = vrot.slane %v975, 6
      %v2980 = vrot.slane %v978, 7
      %v2981 = vor.u32 %v2979, %v2980
      %v2982 = vsel %vm2930, %v2978, %v2981
      %v2983 = vrot.slane %v984, 6
      %v2984 = vrot.slane %v987, 7
      %v2985 = vor.u32 %v2983, %v2984
      %v2986 = vrot.slane %v2985, 4
      %v2987 = vrot.slane %v993, 6
      %v2988 = vrot.slane %v996, 7
      %v2989 = vor.u32 %v2987, %v2988
      %v2990 = vsel %vm2930, %v2986, %v2989
      %v2991 = vrot.slane %v2989, 4
      %v2992 = vrot.slane %v1003, 6
      %v2993 = vrot.slane %v1006, 7
      %v2994 = vor.u32 %v2992, %v2993
      %v2995 = vsel %vm2930, %v2991, %v2994
      %v2996 = vrot.slane %v1012, 6
      %v2997 = vrot.slane %v1015, 7
      %v2998 = vor.u32 %v2996, %v2997
      %v2999 = vrot.slane %v2998, 4
      %v3000 = vrot.slane %v1021, 6
      %v3001 = vrot.slane %v1024, 7
      %v3002 = vor.u32 %v3000, %v3001
      %v3003 = vsel %vm2930, %v2999, %v3002
      %v3004 = vrot.slane %v3002, 4
      %v3005 = vrot.slane %v1031, 6
      %v3006 = vrot.slane %v1034, 7
      %v3007 = vor.u32 %v3005, %v3006
      %v3008 = vsel %vm2930, %v3004, %v3007
      %v3009 = vrot.slane %v1040, 6
      %v3010 = vrot.slane %v1043, 7
      %v3011 = vor.u32 %v3009, %v3010
      %v3012 = vrot.slane %v3011, 4
      %v3013 = vrot.slane %v1049, 6
      %v3014 = vrot.slane %v1052, 7
      %v3015 = vor.u32 %v3013, %v3014
      %v3016 = vsel %vm2930, %v3012, %v3015
      %v3017 = vrot.slane %v3015, 4
      %v3018 = vrot.slane %v1059, 6
      %v3019 = vrot.slane %v1062, 7
      %v3020 = vor.u32 %v3018, %v3019
      %v3021 = vsel %vm2930, %v3017, %v3020
      %v3022 = vrot.slane %v1068, 6
      %v3023 = vrot.slane %v1071, 7
      %v3024 = vor.u32 %v3022, %v3023
      %v3025 = vrot.slane %v3024, 4
      %v3026 = vrot.slane %v1077, 6
      %v3027 = vrot.slane %v1080, 7
      %v3028 = vor.u32 %v3026, %v3027
      %v3029 = vsel %vm2930, %v3025, %v3028
      %v3030 = vrot.slane %v3028, 4
      %v3031 = vrot.slane %v1087, 6
      %v3032 = vrot.slane %v1090, 7
      %v3033 = vor.u32 %v3031, %v3032
      %v3034 = vsel %vm2930, %v3030, %v3033
      %s3035 = scalar_lea.vmem %s1, 44
      %v3036 = vld [vmem:[%s3035] sm:$0xf]
      %v3037 = vunpack.c.l.b16 %v2938
      %v3038 = vunpack.c.l.b16 %v2943
      %v3039 = vunpack.c.l.b16 %v2951
      %v3040 = vunpack.c.l.b16 %v2956
      %v3041 = vunpack.c.l.b16 %v2964
      %v3042 = vunpack.c.l.b16 %v2969
      %v3043 = vunpack.c.l.b16 %v2977
      %v3044 = vunpack.c.l.b16 %v2982
      %v3045 = vunpack.c.l.b16 %v2990
      %v3046 = vunpack.c.l.b16 %v2995
      %v3047 = vunpack.c.l.b16 %v3003
      %v3048 = vunpack.c.l.b16 %v3008
      %v3049 = vunpack.c.l.b16 %v3016
      %v3050 = vunpack.c.l.b16 %v3021
      %v3051 = vunpack.c.l.b16 %v3029
      %v3052 = vunpack.c.l.b16 %v3034
      %v3053 = vpack.c.b16 %v3038, %v3037
      %v3054 = vpack.c.b16 %v3040, %v3039
      %v3055 = vpack.c.b16 %v3042, %v3041
      %v3056 = vpack.c.b16 %v3044, %v3043
      %v3057 = vpack.c.b16 %v3046, %v3045
      %v3058 = vpack.c.b16 %v3048, %v3047
      %v3059 = vpack.c.b16 %v3050, %v3049
      %v3060 = vpack.c.b16 %v3052, %v3051
      %v3062 = vsel %vm519, %v3053, 0
      %v3065 = vsel %vm519, %v3054, 0
      %v3068 = vsel %vm519, %v3055, 0
      %v3071 = vsel %vm519, %v3056, 0
      %v3074 = vsel %vm519, %v3057, 0
      %v3077 = vsel %vm519, %v3058, 0
      %v3080 = vsel %vm519, %v3059, 0
      %v3083 = vsel %vm519, %v3060, 0
      %v3086 = vsel %vm667, %v3036, 0
      %3088 = vmatprep.subr.bf16.mxu0 0
      %3089 = vmatpush1.bf16.msra.mxu0 %v3086
      %3090 = vmatprep.subr.bf16.mxu0 0
      %3091 = vmatpush1.bf16.msra.mxu0 0
      %3092 = vmatprep.subr.bf16.mxu0 0
      %3093 = vmatpush1.bf16.msra.mxu0 0
      %3094 = vmatprep.subr.bf16.mxu0 0
      %3095 = vmatpush1.bf16.msra.mxu0 0
      %3096 = vmatprep.subr.bf16.mxu0 0
      %3097 = vmatpush1.bf16.msra.mxu0 0
      %3098 = vmatprep.subr.bf16.mxu0 0
      %3099 = vmatpush1.bf16.msra.mxu0 0
      %3100 = vmatprep.subr.bf16.mxu0 0
      %3101 = vmatpush1.bf16.msra.mxu0 0
      %3102 = vmatprep.subr.bf16.mxu0 0
      %3103 = vmatpush1.bf16.msra.mxu0 0
      %3104 = vmatprep.subr.bf16.mxu0 0
      %3105 = vmatpush1.bf16.msra.mxu0 0
      %3106 = vmatprep.subr.bf16.mxu0 0
      %3107 = vmatpush1.bf16.msra.mxu0 0
      %3108 = vmatprep.subr.bf16.mxu0 0
      %3109 = vmatpush1.bf16.msra.mxu0 0
      %3110 = vmatprep.subr.bf16.mxu0 0
      %3111 = vmatpush1.bf16.msra.mxu0 0
      %3112 = vmatprep.subr.bf16.mxu0 0
      %3113 = vmatpush1.bf16.msra.mxu0 0
      %3114 = vmatprep.subr.bf16.mxu0 0
      %3115 = vmatpush1.bf16.msra.mxu0 0
      %3116 = vmatprep.subr.bf16.mxu0 0
      %3117 = vmatpush1.bf16.msra.mxu0 0
      %3118 = vmatprep.subr.bf16.mxu0 0
      %3119 = vmatpush1.bf16.msra.mxu0 0
      %3120 = vmatprep.mubr.bf16.mxu0 0
      %3121 = vmatmul.mubr.bf16.gmra.mrb[0].mxu0 %v3062
      %v3122 = vpop.f32.mrb[0].mxu0
      %v3123 = vadd.f32 0.0, %v3122
      %v3124 = vpop.f32.mrb[0].mxu0
      %v3125 = vpop.f32.mrb[0].mxu0
      %v3126 = vadd.f32 0.0, %v3125
      %v3127 = vpop.f32.mrb[0].mxu0
      %3128 = vmatprep.mubr.bf16.mxu0 0
      %3129 = vmatmul.mubr.bf16.gmra.mrb[0].mxu0 %v3065
      %v3130 = vpop.f32.mrb[0].mxu0
      %v3131 = vadd.f32 0.0, %v3130
      %v3132 = vpop.f32.mrb[0].mxu0
      %v3133 = vpop.f32.mrb[0].mxu0
      %v3134 = vadd.f32 0.0, %v3133
      %v3135 = vpop.f32.mrb[0].mxu0
      %3136 = vmatprep.mubr.bf16.mxu0 0
      %3137 = vmatmul.mubr.bf16.gmra.mrb[0].mxu0 %v3068
      %v3138 = vpop.f32.mrb[0].mxu0
      %v3139 = vadd.f32 0.0, %v3138
      %v3140 = vpop.f32.mrb[0].mxu0
      %v3141 = vpop.f32.mrb[0].mxu0
      %v3142 = vadd.f32 0.0, %v3141
      %v3143 = vpop.f32.mrb[0].mxu0
      %3144 = vmatprep.mubr.bf16.mxu0 0
      %3145 = vmatmul.mubr.bf16.gmra.mrb[0].mxu0 %v3071
      %v3146 = vpop.f32.mrb[0].mxu0
      %v3147 = vadd.f32 0.0, %v3146
      %v3148 = vpop.f32.mrb[0].mxu0
      %v3149 = vpop.f32.mrb[0].mxu0
      %v3150 = vadd.f32 0.0, %v3149
      %v3151 = vpop.f32.mrb[0].mxu0
      %3152 = vmatprep.mubr.bf16.mxu0 0
      %3153 = vmatmul.mubr.bf16.gmra.mrb[0].mxu0 %v3074
      %v3154 = vpop.f32.mrb[0].mxu0
      %v3155 = vadd.f32 0.0, %v3154
      %v3156 = vpop.f32.mrb[0].mxu0
      %v3157 = vpop.f32.mrb[0].mxu0
      %v3158 = vadd.f32 0.0, %v3157
      %v3159 = vpop.f32.mrb[0].mxu0
      %3160 = vmatprep.mubr.bf16.mxu0 0
      %3161 = vmatmul.mubr.bf16.gmra.mrb[0].mxu0 %v3077
      %v3162 = vpop.f32.mrb[0].mxu0
      %v3163 = vadd.f32 0.0, %v3162
      %v3164 = vpop.f32.mrb[0].mxu0
      %v3165 = vpop.f32.mrb[0].mxu0
      %v3166 = vadd.f32 0.0, %v3165
      %v3167 = vpop.f32.mrb[0].mxu0
      %3168 = vmatprep.mubr.bf16.mxu0 0
      %3169 = vmatmul.mubr.bf16.gmra.mrb[0].mxu0 %v3080
      %v3170 = vpop.f32.mrb[0].mxu0
      %v3171 = vadd.f32 0.0, %v3170
      %v3172 = vpop.f32.mrb[0].mxu0
      %v3173 = vpop.f32.mrb[0].mxu0
      %v3174 = vadd.f32 0.0, %v3173
      %v3175 = vpop.f32.mrb[0].mxu0
      %3176 = vmatprep.mubr.bf16.mxu0 0
      %3177 = vmatmul.mubr.bf16.gmra.mrb[0].mxu0 %v3083
      %v3178 = vpop.f32.mrb[0].mxu0
      %v3179 = vadd.f32 0.0, %v3178
      %v3180 = vpop.f32.mrb[0].mxu0
      %v3181 = vpop.f32.mrb[0].mxu0
      %v3182 = vadd.f32 0.0, %v3181
      %v3183 = vpop.f32.mrb[0].mxu0
      %3184 = vdwg.mxu0
      %v3185 = vadd.f32 %v2866, %v3123
      %v3186 = vadd.f32 %v2869, %v3126
      %v3187 = vadd.f32 %v2874, %v3131
      %v3188 = vadd.f32 %v2877, %v3134
      %v3189 = vadd.f32 %v2882, %v3139
      %v3190 = vadd.f32 %v2885, %v3142
      %v3191 = vadd.f32 %v2890, %v3147
      %v3192 = vadd.f32 %v2893, %v3150
      %v3193 = vadd.f32 %v2898, %v3155
      %v3194 = vadd.f32 %v2901, %v3158
      %v3195 = vadd.f32 %v2906, %v3163
      %v3196 = vadd.f32 %v2909, %v3166
      %v3197 = vadd.f32 %v2914, %v3171
      %v3198 = vadd.f32 %v2917, %v3174
      %v3199 = vadd.f32 %v2922, %v3179
      %v3200 = vadd.f32 %v2925, %v3182
      %v3201 = vrot.slane %v1096, 4
      %v3202 = vrot.slane %v1099, 5
      %v3203 = vor.u32 %v3201, %v3202
      %v3204 = vrot.slane %v3203, 4
      %v3205 = vrot.slane %v1108, 5
      %v3206 = vsel %vm2553, %v3204, %v3205
      %v3207 = vrot.slane %v1105, 4
      %v3208 = vor.u32 %v3207, %v3205
      %v3209 = vrot.slane %v3208, 4
      %v3210 = vrot.slane %v1118, 5
      %v3211 = vsel %vm2553, %v3209, %v3210
      %v3212 = vrot.slane %v1781, 4
      %v3213 = vrot.slane %v1784, 5
      %v3214 = vor.u32 %v3212, %v3213
      %v3215 = vrot.slane %v3214, 4
      %v3216 = vrot.slane %v1793, 5
      %v3217 = vsel %vm2553, %v3215, %v3216
      %v3218 = vrot.slane %v1790, 4
      %v3219 = vor.u32 %v3218, %v3216
      %v3220 = vrot.slane %v3219, 4
      %v3221 = vrot.slane %v1803, 5
      %v3222 = vsel %vm2553, %v3220, %v3221
      %s3223 = scalar_lea.vmem %s1, 48
      %v3224 = vld [vmem:[%s3223] sm:$0xf]
      %v3225 = vunpack.c.l.b16 %v3206
      %v3226 = vunpack.c.l.b16 %v3211
      %v3227 = vunpack.c.l.b16 %v3217
      %v3228 = vunpack.c.l.b16 %v3222
      %v3229 = vpack.c.b16 %v3226, %v3225
      %v3230 = vpack.c.b16 %v3228, %v3227
      %v3232 = vsel %vm519, %v3229, 0
      %v3235 = vsel %vm519, %v3230, 0
      %v3238 = vsel %vm667, %v3224, 0
      %3240 = vmatprep.subr.bf16.mxu0 0
      %3241 = vmatpush1.bf16.msra.mxu0 %v3238
      %3242 = vmatprep.subr.bf16.mxu0 0
      %3243 = vmatpush1.bf16.msra.mxu0 0
      %3244 = vmatprep.subr.bf16.mxu0 0
      %3245 = vmatpush1.bf16.msra.mxu0 0
      %3246 = vmatprep.subr.bf16.mxu0 0
      %3247 = vmatpush1.bf16.msra.mxu0 0
      %3248 = vmatprep.subr.bf16.mxu0 0
      %3249 = vmatpush1.bf16.msra.mxu0 0
      %3250 = vmatprep.subr.bf16.mxu0 0
      %3251 = vmatpush1.bf16.msra.mxu0 0
      %3252 = vmatprep.subr.bf16.mxu0 0
      %3253 = vmatpush1.bf16.msra.mxu0 0
      %3254 = vmatprep.subr.bf16.mxu0 0
      %3255 = vmatpush1.bf16.msra.mxu0 0
      %3256 = vmatprep.subr.bf16.mxu0 0
      %3257 = vmatpush1.bf16.msra.mxu0 0
      %3258 = vmatprep.subr.bf16.mxu0 0
      %3259 = vmatpush1.bf16.msra.mxu0 0
      %3260 = vmatprep.subr.bf16.mxu0 0
      %3261 = vmatpush1.bf16.msra.mxu0 0
      %3262 = vmatprep.subr.bf16.mxu0 0
      %3263 = vmatpush1.bf16.msra.mxu0 0
      %3264 = vmatprep.subr.bf16.mxu0 0
      %3265 = vmatpush1.bf16.msra.mxu0 0
      %3266 = vmatprep.subr.bf16.mxu0 0
      %3267 = vmatpush1.bf16.msra.mxu0 0
      %3268 = vmatprep.subr.bf16.mxu0 0
      %3269 = vmatpush1.bf16.msra.mxu0 0
      %3270 = vmatprep.subr.bf16.mxu0 0
      %3271 = vmatpush1.bf16.msra.mxu0 0
      %3272 = vmatprep.mubr.bf16.mxu0 0
      %3273 = vmatmul.mubr.bf16.gmra.mrb[0].mxu0 %v2811
      %v3274 = vpop.f32.mrb[0].mxu0
      %v3275 = vadd.f32 0.0, %v3274
      %v3276 = vpop.f32.mrb[0].mxu0
      %v3277 = vpop.f32.mrb[0].mxu0
      %v3278 = vadd.f32 0.0, %v3277
      %v3279 = vpop.f32.mrb[0].mxu0
      %3280 = vmatprep.mubr.bf16.mxu0 0
      %3281 = vmatmul.mubr.bf16.gmra.mrb[0].mxu0 %v2814
      %v3282 = vpop.f32.mrb[0].mxu0
      %v3283 = vadd.f32 0.0, %v3282
      %v3284 = vpop.f32.mrb[0].mxu0
      %v3285 = vpop.f32.mrb[0].mxu0
      %v3286 = vadd.f32 0.0, %v3285
      %v3287 = vpop.f32.mrb[0].mxu0
      %3288 = vmatprep.mubr.bf16.mxu0 0
      %3289 = vmatmul.mubr.bf16.gmra.mrb[0].mxu0 %v2817
      %v3290 = vpop.f32.mrb[0].mxu0
      %v3291 = vadd.f32 0.0, %v3290
      %v3292 = vpop.f32.mrb[0].mxu0
      %v3293 = vpop.f32.mrb[0].mxu0
      %v3294 = vadd.f32 0.0, %v3293
      %v3295 = vpop.f32.mrb[0].mxu0
      %3296 = vmatprep.mubr.bf16.mxu0 0
      %3297 = vmatmul.mubr.bf16.gmra.mrb[0].mxu0 %v2820
      %v3298 = vpop.f32.mrb[0].mxu0
      %v3299 = vadd.f32 0.0, %v3298
      %v3300 = vpop.f32.mrb[0].mxu0
      %v3301 = vpop.f32.mrb[0].mxu0
      %v3302 = vadd.f32 0.0, %v3301
      %v3303 = vpop.f32.mrb[0].mxu0
      %3304 = vmatprep.mubr.bf16.mxu0 0
      %3305 = vmatmul.mubr.bf16.gmra.mrb[0].mxu0 %v2823
      %v3306 = vpop.f32.mrb[0].mxu0
      %v3307 = vadd.f32 0.0, %v3306
      %v3308 = vpop.f32.mrb[0].mxu0
      %v3309 = vpop.f32.mrb[0].mxu0
      %v3310 = vadd.f32 0.0, %v3309
      %v3311 = vpop.f32.mrb[0].mxu0
      %3312 = vmatprep.mubr.bf16.mxu0 0
      %3313 = vmatmul.mubr.bf16.gmra.mrb[0].mxu0 %v2826
      %v3314 = vpop.f32.mrb[0].mxu0
      %v3315 = vadd.f32 0.0, %v3314
      %v3316 = vpop.f32.mrb[0].mxu0
      %v3317 = vpop.f32.mrb[0].mxu0
      %v3318 = vadd.f32 0.0, %v3317
      %v3319 = vpop.f32.mrb[0].mxu0
      %3320 = vmatprep.mubr.bf16.mxu0 0
      %3321 = vmatmul.mubr.bf16.gmra.mrb[0].mxu0 %v3232
      %v3322 = vpop.f32.mrb[0].mxu0
      %v3323 = vadd.f32 0.0, %v3322
      %v3324 = vpop.f32.mrb[0].mxu0
      %v3325 = vpop.f32.mrb[0].mxu0
      %v3326 = vadd.f32 0.0, %v3325
      %v3327 = vpop.f32.mrb[0].mxu0
      %3328 = vmatprep.mubr.bf16.mxu0 0
      %3329 = vmatmul.mubr.bf16.gmra.mrb[0].mxu0 %v3235
      %v3330 = vpop.f32.mrb[0].mxu0
      %v3331 = vadd.f32 0.0, %v3330
      %v3332 = vpop.f32.mrb[0].mxu0
      %v3333 = vpop.f32.mrb[0].mxu0
      %v3334 = vadd.f32 0.0, %v3333
      %v3335 = vpop.f32.mrb[0].mxu0
      %3336 = vdwg.mxu0
      %v3337 = vadd.f32 %v3185, %v3275
      %v3338 = vadd.f32 %v3186, %v3278
      %v3339 = vadd.f32 %v3187, %v3283
      %v3340 = vadd.f32 %v3188, %v3286
      %v3341 = vadd.f32 %v3189, %v3291
      %v3342 = vadd.f32 %v3190, %v3294
      %v3343 = vadd.f32 %v3191, %v3299
      %v3344 = vadd.f32 %v3192, %v3302
      %v3345 = vadd.f32 %v3193, %v3307
      %v3346 = vadd.f32 %v3194, %v3310
      %v3347 = vadd.f32 %v3195, %v3315
      %v3348 = vadd.f32 %v3196, %v3318
      %v3349 = vadd.f32 %v3197, %v3323
      %v3350 = vadd.f32 %v3198, %v3326
      %v3351 = vadd.f32 %v3199, %v3331
      %v3352 = vadd.f32 %v3200, %v3334
      %s3353 = scalar_lea.vmem %s1, 52
      %v3354 = vld [vmem:[%s3353] sm:$0xf]
      %v3356 = vsel %vm667, %v3354, 0
      %3358 = vmatprep.subr.bf16.mxu0 0
      %3359 = vmatpush1.bf16.msra.mxu0 %v3356
      %3360 = vmatprep.subr.bf16.mxu0 0
      %3361 = vmatpush1.bf16.msra.mxu0 0
      %3362 = vmatprep.subr.bf16.mxu0 0
      %3363 = vmatpush1.bf16.msra.mxu0 0
      %3364 = vmatprep.subr.bf16.mxu0 0
      %3365 = vmatpush1.bf16.msra.mxu0 0
      %3366 = vmatprep.subr.bf16.mxu0 0
      %3367 = vmatpush1.bf16.msra.mxu0 0
      %3368 = vmatprep.subr.bf16.mxu0 0
      %3369 = vmatpush1.bf16.msra.mxu0 0
      %3370 = vmatprep.subr.bf16.mxu0 0
      %3371 = vmatpush1.bf16.msra.mxu0 0
      %3372 = vmatprep.subr.bf16.mxu0 0
      %3373 = vmatpush1.bf16.msra.mxu0 0
      %3374 = vmatprep.subr.bf16.mxu0 0
      %3375 = vmatpush1.bf16.msra.mxu0 0
      %3376 = vmatprep.subr.bf16.mxu0 0
      %3377 = vmatpush1.bf16.msra.mxu0 0
      %3378 = vmatprep.subr.bf16.mxu0 0
      %3379 = vmatpush1.bf16.msra.mxu0 0
      %3380 = vmatprep.subr.bf16.mxu0 0
      %3381 = vmatpush1.bf16.msra.mxu0 0
      %3382 = vmatprep.subr.bf16.mxu0 0
      %3383 = vmatpush1.bf16.msra.mxu0 0
      %3384 = vmatprep.subr.bf16.mxu0 0
      %3385 = vmatpush1.bf16.msra.mxu0 0
      %3386 = vmatprep.subr.bf16.mxu0 0
      %3387 = vmatpush1.bf16.msra.mxu0 0
      %3388 = vmatprep.subr.bf16.mxu0 0
      %3389 = vmatpush1.bf16.msra.mxu0 0
      %3390 = vmatprep.mubr.bf16.mxu0 0
      %3391 = vmatmul.mubr.bf16.gmra.mrb[0].mxu0 %v1153
      %v3392 = vpop.f32.mrb[0].mxu0
      %v3393 = vadd.f32 0.0, %v3392
      %v3394 = vpop.f32.mrb[0].mxu0
      %v3395 = vpop.f32.mrb[0].mxu0
      %v3396 = vadd.f32 0.0, %v3395
      %v3397 = vpop.f32.mrb[0].mxu0
      %3398 = vmatprep.mubr.bf16.mxu0 0
      %3399 = vmatmul.mubr.bf16.gmra.mrb[0].mxu0 %v1156
      %v3400 = vpop.f32.mrb[0].mxu0
      %v3401 = vadd.f32 0.0, %v3400
      %v3402 = vpop.f32.mrb[0].mxu0
      %v3403 = vpop.f32.mrb[0].mxu0
      %v3404 = vadd.f32 0.0, %v3403
      %v3405 = vpop.f32.mrb[0].mxu0
      %3406 = vmatprep.mubr.bf16.mxu0 0
      %3407 = vmatmul.mubr.bf16.gmra.mrb[0].mxu0 %v1159
      %v3408 = vpop.f32.mrb[0].mxu0
      %v3409 = vadd.f32 0.0, %v3408
      %v3410 = vpop.f32.mrb[0].mxu0
      %v3411 = vpop.f32.mrb[0].mxu0
      %v3412 = vadd.f32 0.0, %v3411
      %v3413 = vpop.f32.mrb[0].mxu0
      %3414 = vmatprep.mubr.bf16.mxu0 0
      %3415 = vmatmul.mubr.bf16.gmra.mrb[0].mxu0 %v1162
      %v3416 = vpop.f32.mrb[0].mxu0
      %v3417 = vadd.f32 0.0, %v3416
      %v3418 = vpop.f32.mrb[0].mxu0
      %v3419 = vpop.f32.mrb[0].mxu0
      %v3420 = vadd.f32 0.0, %v3419
      %v3421 = vpop.f32.mrb[0].mxu0
      %3422 = vmatprep.mubr.bf16.mxu0 0
      %3423 = vmatmul.mubr.bf16.gmra.mrb[0].mxu0 %v1165
      %v3424 = vpop.f32.mrb[0].mxu0
      %v3425 = vadd.f32 0.0, %v3424
      %v3426 = vpop.f32.mrb[0].mxu0
      %v3427 = vpop.f32.mrb[0].mxu0
      %v3428 = vadd.f32 0.0, %v3427
      %v3429 = vpop.f32.mrb[0].mxu0
      %3430 = vmatprep.mubr.bf16.mxu0 0
      %3431 = vmatmul.mubr.bf16.gmra.mrb[0].mxu0 %v1168
      %v3432 = vpop.f32.mrb[0].mxu0
      %v3433 = vadd.f32 0.0, %v3432
      %v3434 = vpop.f32.mrb[0].mxu0
      %v3435 = vpop.f32.mrb[0].mxu0
      %v3436 = vadd.f32 0.0, %v3435
      %v3437 = vpop.f32.mrb[0].mxu0
      %3438 = vmatprep.mubr.bf16.mxu0 0
      %3439 = vmatmul.mubr.bf16.gmra.mrb[0].mxu0 %v1171
      %v3440 = vpop.f32.mrb[0].mxu0
      %v3441 = vadd.f32 0.0, %v3440
      %v3442 = vpop.f32.mrb[0].mxu0
      %v3443 = vpop.f32.mrb[0].mxu0
      %v3444 = vadd.f32 0.0, %v3443
      %v3445 = vpop.f32.mrb[0].mxu0
      %3446 = vmatprep.mubr.bf16.mxu0 0
      %3447 = vmatmul.mubr.bf16.gmra.mrb[0].mxu0 %v1814
      %v3448 = vpop.f32.mrb[0].mxu0
      %v3449 = vadd.f32 0.0, %v3448
      %v3450 = vpop.f32.mrb[0].mxu0
      %v3451 = vpop.f32.mrb[0].mxu0
      %v3452 = vadd.f32 0.0, %v3451
      %v3453 = vpop.f32.mrb[0].mxu0
      %3454 = vdwg.mxu0
      %v3455 = vadd.f32 %v3337, %v3393
      %v3456 = vadd.f32 %v3338, %v3396
      %v3457 = vadd.f32 %v3339, %v3401
      %v3458 = vadd.f32 %v3340, %v3404
      %v3459 = vadd.f32 %v3341, %v3409
      %v3460 = vadd.f32 %v3342, %v3412
      %v3461 = vadd.f32 %v3343, %v3417
      %v3462 = vadd.f32 %v3344, %v3420
      %v3463 = vadd.f32 %v3345, %v3425
      %v3464 = vadd.f32 %v3346, %v3428
      %v3465 = vadd.f32 %v3347, %v3433
      %v3466 = vadd.f32 %v3348, %v3436
      %v3467 = vadd.f32 %v3349, %v3441
      %v3468 = vadd.f32 %v3350, %v3444
      %v3469 = vadd.f32 %v3351, %v3449
      %v3470 = vadd.f32 %v3352, %v3452
      %v3471 = vrot.slane %v1096, 6
      %v3472 = vrot.slane %v1099, 7
      %v3473 = vor.u32 %v3471, %v3472
      %v3474 = vrot.slane %v3473, 4
      %v3475 = vrot.slane %v1105, 6
      %v3476 = vrot.slane %v1108, 7
      %v3477 = vor.u32 %v3475, %v3476
      %v3478 = vsel %vm2930, %v3474, %v3477
      %v3479 = vrot.slane %v3477, 4
      %v3480 = vrot.slane %v1115, 6
      %v3481 = vrot.slane %v1118, 7
      %v3482 = vor.u32 %v3480, %v3481
      %v3483 = vsel %vm2930, %v3479, %v3482
      %v3484 = vrot.slane %v1781, 6
      %v3485 = vrot.slane %v1784, 7
      %v3486 = vor.u32 %v3484, %v3485
      %v3487 = vrot.slane %v3486, 4
      %v3488 = vrot.slane %v1790, 6
      %v3489 = vrot.slane %v1793, 7
      %v3490 = vor.u32 %v3488, %v3489
      %v3491 = vsel %vm2930, %v3487, %v3490
      %v3492 = vrot.slane %v3490, 4
      %v3493 = vrot.slane %v1800, 6
      %v3494 = vrot.slane %v1803, 7
      %v3495 = vor.u32 %v3493, %v3494
      %v3496 = vsel %vm2930, %v3492, %v3495
      %s3497 = scalar_lea.vmem %s1, 56
      %v3498 = vld [vmem:[%s3497] sm:$0xf]
      %v3499 = vunpack.c.l.b16 %v3478
      %v3500 = vunpack.c.l.b16 %v3483
      %v3501 = vunpack.c.l.b16 %v3491
      %v3502 = vunpack.c.l.b16 %v3496
      %v3503 = vpack.c.b16 %v3500, %v3499
      %v3504 = vpack.c.b16 %v3502, %v3501
      %v3506 = vsel %vm519, %v3503, 0
      %v3509 = vsel %vm519, %v3504, 0
      %v3512 = vsel %vm667, %v3498, 0
      %3514 = vmatprep.subr.bf16.mxu0 0
      %3515 = vmatpush1.bf16.msra.mxu0 %v3512
      %3516 = vmatprep.subr.bf16.mxu0 0
      %3517 = vmatpush1.bf16.msra.mxu0 0
      %3518 = vmatprep.subr.bf16.mxu0 0
      %3519 = vmatpush1.bf16.msra.mxu0 0
      %3520 = vmatprep.subr.bf16.mxu0 0
      %3521 = vmatpush1.bf16.msra.mxu0 0
      %3522 = vmatprep.subr.bf16.mxu0 0
      %3523 = vmatpush1.bf16.msra.mxu0 0
      %3524 = vmatprep.subr.bf16.mxu0 0
      %3525 = vmatpush1.bf16.msra.mxu0 0
      %3526 = vmatprep.subr.bf16.mxu0 0
      %3527 = vmatpush1.bf16.msra.mxu0 0
      %3528 = vmatprep.subr.bf16.mxu0 0
      %3529 = vmatpush1.bf16.msra.mxu0 0
      %3530 = vmatprep.subr.bf16.mxu0 0
      %3531 = vmatpush1.bf16.msra.mxu0 0
      %3532 = vmatprep.subr.bf16.mxu0 0
      %3533 = vmatpush1.bf16.msra.mxu0 0
      %3534 = vmatprep.subr.bf16.mxu0 0
      %3535 = vmatpush1.bf16.msra.mxu0 0
      %3536 = vmatprep.subr.bf16.mxu0 0
      %3537 = vmatpush1.bf16.msra.mxu0 0
      %3538 = vmatprep.subr.bf16.mxu0 0
      %3539 = vmatpush1.bf16.msra.mxu0 0
      %3540 = vmatprep.subr.bf16.mxu0 0
      %3541 = vmatpush1.bf16.msra.mxu0 0
      %3542 = vmatprep.subr.bf16.mxu0 0
      %3543 = vmatpush1.bf16.msra.mxu0 0
      %3544 = vmatprep.subr.bf16.mxu0 0
      %3545 = vmatpush1.bf16.msra.mxu0 0
      %3546 = vmatprep.mubr.bf16.mxu0 0
      %3547 = vmatmul.mubr.bf16.gmra.mrb[0].mxu0 %v3068
      %v3548 = vpop.f32.mrb[0].mxu0
      %v3549 = vadd.f32 0.0, %v3548
      %v3550 = vpop.f32.mrb[0].mxu0
      %v3551 = vpop.f32.mrb[0].mxu0
      %v3552 = vadd.f32 0.0, %v3551
      %v3553 = vpop.f32.mrb[0].mxu0
      %3554 = vmatprep.mubr.bf16.mxu0 0
      %3555 = vmatmul.mubr.bf16.gmra.mrb[0].mxu0 %v3071
      %v3556 = vpop.f32.mrb[0].mxu0
      %v3557 = vadd.f32 0.0, %v3556
      %v3558 = vpop.f32.mrb[0].mxu0
      %v3559 = vpop.f32.mrb[0].mxu0
      %v3560 = vadd.f32 0.0, %v3559
      %v3561 = vpop.f32.mrb[0].mxu0
      %3562 = vmatprep.mubr.bf16.mxu0 0
      %3563 = vmatmul.mubr.bf16.gmra.mrb[0].mxu0 %v3074
      %v3564 = vpop.f32.mrb[0].mxu0
      %v3565 = vadd.f32 0.0, %v3564
      %v3566 = vpop.f32.mrb[0].mxu0
      %v3567 = vpop.f32.mrb[0].mxu0
      %v3568 = vadd.f32 0.0, %v3567
      %v3569 = vpop.f32.mrb[0].mxu0
      %3570 = vmatprep.mubr.bf16.mxu0 0
      %3571 = vmatmul.mubr.bf16.gmra.mrb[0].mxu0 %v3077
      %v3572 = vpop.f32.mrb[0].mxu0
      %v3573 = vadd.f32 0.0, %v3572
      %v3574 = vpop.f32.mrb[0].mxu0
      %v3575 = vpop.f32.mrb[0].mxu0
      %v3576 = vadd.f32 0.0, %v3575
      %v3577 = vpop.f32.mrb[0].mxu0
      %3578 = vmatprep.mubr.bf16.mxu0 0
      %3579 = vmatmul.mubr.bf16.gmra.mrb[0].mxu0 %v3080
      %v3580 = vpop.f32.mrb[0].mxu0
      %v3581 = vadd.f32 0.0, %v3580
      %v3582 = vpop.f32.mrb[0].mxu0
      %v3583 = vpop.f32.mrb[0].mxu0
      %v3584 = vadd.f32 0.0, %v3583
      %v3585 = vpop.f32.mrb[0].mxu0
      %3586 = vmatprep.mubr.bf16.mxu0 0
      %3587 = vmatmul.mubr.bf16.gmra.mrb[0].mxu0 %v3083
      %v3588 = vpop.f32.mrb[0].mxu0
      %v3589 = vadd.f32 0.0, %v3588
      %v3590 = vpop.f32.mrb[0].mxu0
      %v3591 = vpop.f32.mrb[0].mxu0
      %v3592 = vadd.f32 0.0, %v3591
      %v3593 = vpop.f32.mrb[0].mxu0
      %3594 = vmatprep.mubr.bf16.mxu0 0
      %3595 = vmatmul.mubr.bf16.gmra.mrb[0].mxu0 %v3506
      %v3596 = vpop.f32.mrb[0].mxu0
      %v3597 = vadd.f32 0.0, %v3596
      %v3598 = vpop.f32.mrb[0].mxu0
      %v3599 = vpop.f32.mrb[0].mxu0
      %v3600 = vadd.f32 0.0, %v3599
      %v3601 = vpop.f32.mrb[0].mxu0
      %3602 = vmatprep.mubr.bf16.mxu0 0
      %3603 = vmatmul.mubr.bf16.gmra.mrb[0].mxu0 %v3509
      %v3604 = vpop.f32.mrb[0].mxu0
      %v3605 = vadd.f32 0.0, %v3604
      %v3606 = vpop.f32.mrb[0].mxu0
      %v3607 = vpop.f32.mrb[0].mxu0
      %v3608 = vadd.f32 0.0, %v3607
      %v3609 = vpop.f32.mrb[0].mxu0
      %3610 = vdwg.mxu0
      %v3611 = vadd.f32 %v3455, %v3549
      %v3612 = vadd.f32 %v3456, %v3552
      %v3613 = vadd.f32 %v3457, %v3557
      %v3614 = vadd.f32 %v3458, %v3560
      %v3615 = vadd.f32 %v3459, %v3565
      %v3616 = vadd.f32 %v3460, %v3568
      %v3617 = vadd.f32 %v3461, %v3573
      %v3618 = vadd.f32 %v3462, %v3576
      %v3619 = vadd.f32 %v3463, %v3581
      %v3620 = vadd.f32 %v3464, %v3584
      %v3621 = vadd.f32 %v3465, %v3589
      %v3622 = vadd.f32 %v3466, %v3592
      %v3623 = vadd.f32 %v3467, %v3597
      %v3624 = vadd.f32 %v3468, %v3600
      %v3625 = vadd.f32 %v3469, %v3605
      %v3626 = vadd.f32 %v3470, %v3608
      %v3627 = vrot.slane %v2198, 4
      %v3628 = vrot.slane %v2201, 5
      %v3629 = vor.u32 %v3627, %v3628
      %v3630 = vrot.slane %v3629, 4
      %v3631 = vrot.slane %v2210, 5
      %v3632 = vsel %vm2553, %v3630, %v3631
      %v3633 = vrot.slane %v2207, 4
      %v3634 = vor.u32 %v3633, %v3631
      %v3635 = vrot.slane %v3634, 4
      %v3636 = vrot.slane %v2220, 5
      %v3637 = vsel %vm2553, %v3635, %v3636
      %v3639 = vshrl.u32 %v806, 16
      %v3641 = vrot.slane %v3639, 4
      %v3642 = vshll.u32 %v806, 16
      %v3644 = vrot.slane %v3642, 5
      %v3645 = vor.u32 %v3641, %v3644
      %v3646 = vrot.slane %v3645, 4
      %v3648 = vshll.u32 %v807, 16
      %v3650 = vrot.slane %v3648, 5
      %v3651 = vsel %vm2553, %v3646, %v3650
      %v3652 = vshrl.u32 %v807, 16
      %v3654 = vrot.slane %v3652, 4
      %v3655 = vor.u32 %v3654, %v3650
      %v3656 = vrot.slane %v3655, 4
      %v3658 = vshll.u32 %v808, 16
      %v3660 = vrot.slane %v3658, 5
      %v3661 = vsel %vm2553, %v3656, %v3660
      %s3662 = scalar_lea.vmem %s1, 60
      %v3663 = vld [vmem:[%s3662] sm:$0xf]
      %v3664 = vunpack.c.l.b16 %v3632
      %v3665 = vunpack.c.l.b16 %v3637
      %v3666 = vunpack.c.l.b16 %v3651
      %v3667 = vunpack.c.l.b16 %v3661
      %v3668 = vpack.c.b16 %v3665, %v3664
      %v3669 = vpack.c.b16 %v3667, %v3666
      %v3671 = vsel %vm519, %v3668, 0
      %v3674 = vsel %vm519, %v3669, 0
      %v3677 = vsel %vm667, %v3663, 0
      %3679 = vmatprep.subr.bf16.mxu0 0
      %3680 = vmatpush1.bf16.msra.mxu0 %v3677
      %3681 = vmatprep.subr.bf16.mxu0 0
      %3682 = vmatpush1.bf16.msra.mxu0 0
      %3683 = vmatprep.subr.bf16.mxu0 0
      %3684 = vmatpush1.bf16.msra.mxu0 0
      %3685 = vmatprep.subr.bf16.mxu0 0
      %3686 = vmatpush1.bf16.msra.mxu0 0
      %3687 = vmatprep.subr.bf16.mxu0 0
      %3688 = vmatpush1.bf16.msra.mxu0 0
      %3689 = vmatprep.subr.bf16.mxu0 0
      %3690 = vmatpush1.bf16.msra.mxu0 0
      %3691 = vmatprep.subr.bf16.mxu0 0
      %3692 = vmatpush1.bf16.msra.mxu0 0
      %3693 = vmatprep.subr.bf16.mxu0 0
      %3694 = vmatpush1.bf16.msra.mxu0 0
      %3695 = vmatprep.subr.bf16.mxu0 0
      %3696 = vmatpush1.bf16.msra.mxu0 0
      %3697 = vmatprep.subr.bf16.mxu0 0
      %3698 = vmatpush1.bf16.msra.mxu0 0
      %3699 = vmatprep.subr.bf16.mxu0 0
      %3700 = vmatpush1.bf16.msra.mxu0 0
      %3701 = vmatprep.subr.bf16.mxu0 0
      %3702 = vmatpush1.bf16.msra.mxu0 0
      %3703 = vmatprep.subr.bf16.mxu0 0
      %3704 = vmatpush1.bf16.msra.mxu0 0
      %3705 = vmatprep.subr.bf16.mxu0 0
      %3706 = vmatpush1.bf16.msra.mxu0 0
      %3707 = vmatprep.subr.bf16.mxu0 0
      %3708 = vmatpush1.bf16.msra.mxu0 0
      %3709 = vmatprep.subr.bf16.mxu0 0
      %3710 = vmatpush1.bf16.msra.mxu0 0
      %3711 = vmatprep.mubr.bf16.mxu0 0
      %3712 = vmatmul.mubr.bf16.gmra.mrb[0].mxu0 %v2817
      %v3713 = vpop.f32.mrb[0].mxu0
      %v3714 = vadd.f32 0.0, %v3713
      %v3715 = vpop.f32.mrb[0].mxu0
      %v3716 = vpop.f32.mrb[0].mxu0
      %v3717 = vadd.f32 0.0, %v3716
      %v3718 = vpop.f32.mrb[0].mxu0
      %3719 = vmatprep.mubr.bf16.mxu0 0
      %3720 = vmatmul.mubr.bf16.gmra.mrb[0].mxu0 %v2820
      %v3721 = vpop.f32.mrb[0].mxu0
      %v3722 = vadd.f32 0.0, %v3721
      %v3723 = vpop.f32.mrb[0].mxu0
      %v3724 = vpop.f32.mrb[0].mxu0
      %v3725 = vadd.f32 0.0, %v3724
      %v3726 = vpop.f32.mrb[0].mxu0
      %3727 = vmatprep.mubr.bf16.mxu0 0
      %3728 = vmatmul.mubr.bf16.gmra.mrb[0].mxu0 %v2823
      %v3729 = vpop.f32.mrb[0].mxu0
      %v3730 = vadd.f32 0.0, %v3729
      %v3731 = vpop.f32.mrb[0].mxu0
      %v3732 = vpop.f32.mrb[0].mxu0
      %v3733 = vadd.f32 0.0, %v3732
      %v3734 = vpop.f32.mrb[0].mxu0
      %3735 = vmatprep.mubr.bf16.mxu0 0
      %3736 = vmatmul.mubr.bf16.gmra.mrb[0].mxu0 %v2826
      %v3737 = vpop.f32.mrb[0].mxu0
      %v3738 = vadd.f32 0.0, %v3737
      %v3739 = vpop.f32.mrb[0].mxu0
      %v3740 = vpop.f32.mrb[0].mxu0
      %v3741 = vadd.f32 0.0, %v3740
      %v3742 = vpop.f32.mrb[0].mxu0
      %3743 = vmatprep.mubr.bf16.mxu0 0
      %3744 = vmatmul.mubr.bf16.gmra.mrb[0].mxu0 %v3232
      %v3745 = vpop.f32.mrb[0].mxu0
      %v3746 = vadd.f32 0.0, %v3745
      %v3747 = vpop.f32.mrb[0].mxu0
      %v3748 = vpop.f32.mrb[0].mxu0
      %v3749 = vadd.f32 0.0, %v3748
      %v3750 = vpop.f32.mrb[0].mxu0
      %3751 = vmatprep.mubr.bf16.mxu0 0
      %3752 = vmatmul.mubr.bf16.gmra.mrb[0].mxu0 %v3235
      %v3753 = vpop.f32.mrb[0].mxu0
      %v3754 = vadd.f32 0.0, %v3753
      %v3755 = vpop.f32.mrb[0].mxu0
      %v3756 = vpop.f32.mrb[0].mxu0
      %v3757 = vadd.f32 0.0, %v3756
      %v3758 = vpop.f32.mrb[0].mxu0
      %3759 = vmatprep.mubr.bf16.mxu0 0
      %3760 = vmatmul.mubr.bf16.gmra.mrb[0].mxu0 %v3671
      %v3761 = vpop.f32.mrb[0].mxu0
      %v3762 = vadd.f32 0.0, %v3761
      %v3763 = vpop.f32.mrb[0].mxu0
      %v3764 = vpop.f32.mrb[0].mxu0
      %v3765 = vadd.f32 0.0, %v3764
      %v3766 = vpop.f32.mrb[0].mxu0
      %3767 = vmatprep.mubr.bf16.mxu0 0
      %3768 = vmatmul.mubr.bf16.gmra.mrb[0].mxu0 %v3674
      %v3769 = vpop.f32.mrb[0].mxu0
      %v3770 = vadd.f32 0.0, %v3769
      %v3771 = vpop.f32.mrb[0].mxu0
      %v3772 = vpop.f32.mrb[0].mxu0
      %v3773 = vadd.f32 0.0, %v3772
      %v3774 = vpop.f32.mrb[0].mxu0
      %3775 = vdwg.mxu0
      %v3776 = vadd.f32 %v3611, %v3714
      %v3777 = vadd.f32 %v3612, %v3717
      %v3778 = vadd.f32 %v3613, %v3722
      %v3779 = vadd.f32 %v3614, %v3725
      %v3780 = vadd.f32 %v3615, %v3730
      %v3781 = vadd.f32 %v3616, %v3733
      %v3782 = vadd.f32 %v3617, %v3738
      %v3783 = vadd.f32 %v3618, %v3741
      %v3784 = vadd.f32 %v3619, %v3746
      %v3785 = vadd.f32 %v3620, %v3749
      %v3786 = vadd.f32 %v3621, %v3754
      %v3787 = vadd.f32 %v3622, %v3757
      %v3788 = vadd.f32 %v3623, %v3762
      %v3789 = vadd.f32 %v3624, %v3765
      %v3790 = vadd.f32 %v3625, %v3770
      %v3791 = vadd.f32 %v3626, %v3773
      %v3792 = vrot.slane %v3639, 5
      %v3793 = vrot.slane %v3642, 6
      %v3794 = vor.u32 %v3792, %v3793
      %v3795 = vrot.slane %v3794, 4
      %v3796 = vrot.slane %v3652, 5
      %v3797 = vrot.slane %v3648, 6
      %v3798 = vor.u32 %v3796, %v3797
      %v3799 = vsel %vm898, %v3795, %v3798
      %v3800 = vrot.slane %v3798, 4
      %v3801 = vshrl.u32 %v808, 16
      %v3803 = vrot.slane %v3801, 5
      %v3804 = vrot.slane %v3658, 6
      %v3805 = vor.u32 %v3803, %v3804
      %v3806 = vsel %vm898, %v3800, %v3805
      %s3807 = scalar_lea.vmem %s1, 64
      %v3808 = vld [vmem:[%s3807] sm:$0xf]
      %v3809 = vunpack.c.l.b16 %v3799
      %v3810 = vunpack.c.l.b16 %v3806
      %v3811 = vpack.c.b16 %v3810, %v3809
      %v3813 = vsel %vm519, %v3811, 0
      %v3816 = vsel %vm667, %v3808, 0
      %3818 = vmatprep.subr.bf16.mxu0 0
      %3819 = vmatpush1.bf16.msra.mxu0 %v3816
      %3820 = vmatprep.subr.bf16.mxu0 0
      %3821 = vmatpush1.bf16.msra.mxu0 0
      %3822 = vmatprep.subr.bf16.mxu0 0
      %3823 = vmatpush1.bf16.msra.mxu0 0
      %3824 = vmatprep.subr.bf16.mxu0 0
      %3825 = vmatpush1.bf16.msra.mxu0 0
      %3826 = vmatprep.subr.bf16.mxu0 0
      %3827 = vmatpush1.bf16.msra.mxu0 0
      %3828 = vmatprep.subr.bf16.mxu0 0
      %3829 = vmatpush1.bf16.msra.mxu0 0
      %3830 = vmatprep.subr.bf16.mxu0 0
      %3831 = vmatpush1.bf16.msra.mxu0 0
      %3832 = vmatprep.subr.bf16.mxu0 0
      %3833 = vmatpush1.bf16.msra.mxu0 0
      %3834 = vmatprep.subr.bf16.mxu0 0
      %3835 = vmatpush1.bf16.msra.mxu0 0
      %3836 = vmatprep.subr.bf16.mxu0 0
      %3837 = vmatpush1.bf16.msra.mxu0 0
      %3838 = vmatprep.subr.bf16.mxu0 0
      %3839 = vmatpush1.bf16.msra.mxu0 0
      %3840 = vmatprep.subr.bf16.mxu0 0
      %3841 = vmatpush1.bf16.msra.mxu0 0
      %3842 = vmatprep.subr.bf16.mxu0 0
      %3843 = vmatpush1.bf16.msra.mxu0 0
      %3844 = vmatprep.subr.bf16.mxu0 0
      %3845 = vmatpush1.bf16.msra.mxu0 0
      %3846 = vmatprep.subr.bf16.mxu0 0
      %3847 = vmatpush1.bf16.msra.mxu0 0
      %3848 = vmatprep.subr.bf16.mxu0 0
      %3849 = vmatpush1.bf16.msra.mxu0 0
      %3850 = vmatprep.mubr.bf16.mxu0 0
      %3851 = vmatmul.mubr.bf16.gmra.mrb[0].mxu0 %v1159
      %v3852 = vpop.f32.mrb[0].mxu0
      %v3853 = vadd.f32 0.0, %v3852
      %v3854 = vpop.f32.mrb[0].mxu0
      %v3855 = vpop.f32.mrb[0].mxu0
      %v3856 = vadd.f32 0.0, %v3855
      %v3857 = vpop.f32.mrb[0].mxu0
      %3858 = vmatprep.mubr.bf16.mxu0 0
      %3859 = vmatmul.mubr.bf16.gmra.mrb[0].mxu0 %v1162
      %v3860 = vpop.f32.mrb[0].mxu0
      %v3861 = vadd.f32 0.0, %v3860
      %v3862 = vpop.f32.mrb[0].mxu0
      %v3863 = vpop.f32.mrb[0].mxu0
      %v3864 = vadd.f32 0.0, %v3863
      %v3865 = vpop.f32.mrb[0].mxu0
      %3866 = vmatprep.mubr.bf16.mxu0 0
      %3867 = vmatmul.mubr.bf16.gmra.mrb[0].mxu0 %v1165
      %v3868 = vpop.f32.mrb[0].mxu0
      %v3869 = vadd.f32 0.0, %v3868
      %v3870 = vpop.f32.mrb[0].mxu0
      %v3871 = vpop.f32.mrb[0].mxu0
      %v3872 = vadd.f32 0.0, %v3871
      %v3873 = vpop.f32.mrb[0].mxu0
      %3874 = vmatprep.mubr.bf16.mxu0 0
      %3875 = vmatmul.mubr.bf16.gmra.mrb[0].mxu0 %v1168
      %v3876 = vpop.f32.mrb[0].mxu0
      %v3877 = vadd.f32 0.0, %v3876
      %v3878 = vpop.f32.mrb[0].mxu0
      %v3879 = vpop.f32.mrb[0].mxu0
      %v3880 = vadd.f32 0.0, %v3879
      %v3881 = vpop.f32.mrb[0].mxu0
      %3882 = vmatprep.mubr.bf16.mxu0 0
      %3883 = vmatmul.mubr.bf16.gmra.mrb[0].mxu0 %v1171
      %v3884 = vpop.f32.mrb[0].mxu0
      %v3885 = vadd.f32 0.0, %v3884
      %v3886 = vpop.f32.mrb[0].mxu0
      %v3887 = vpop.f32.mrb[0].mxu0
      %v3888 = vadd.f32 0.0, %v3887
      %v3889 = vpop.f32.mrb[0].mxu0
      %3890 = vmatprep.mubr.bf16.mxu0 0
      %3891 = vmatmul.mubr.bf16.gmra.mrb[0].mxu0 %v1814
      %v3892 = vpop.f32.mrb[0].mxu0
      %v3893 = vadd.f32 0.0, %v3892
      %v3894 = vpop.f32.mrb[0].mxu0
      %v3895 = vpop.f32.mrb[0].mxu0
      %v3896 = vadd.f32 0.0, %v3895
      %v3897 = vpop.f32.mrb[0].mxu0
      %3898 = vmatprep.mubr.bf16.mxu0 0
      %3899 = vmatmul.mubr.bf16.gmra.mrb[0].mxu0 %v2231
      %v3900 = vpop.f32.mrb[0].mxu0
      %v3901 = vadd.f32 0.0, %v3900
      %v3902 = vpop.f32.mrb[0].mxu0
      %v3903 = vpop.f32.mrb[0].mxu0
      %v3904 = vadd.f32 0.0, %v3903
      %v3905 = vpop.f32.mrb[0].mxu0
      %3906 = vmatprep.mubr.bf16.mxu0 0
      %3907 = vmatmul.mubr.bf16.gmra.mrb[0].mxu0 %v3813
      %v3908 = vpop.f32.mrb[0].mxu0
      %v3909 = vadd.f32 0.0, %v3908
      %v3910 = vpop.f32.mrb[0].mxu0
      %v3911 = vpop.f32.mrb[0].mxu0
      %v3912 = vadd.f32 0.0, %v3911
      %v3913 = vpop.f32.mrb[0].mxu0
      %3914 = vdwg.mxu0
      %v3915 = vadd.f32 %v3776, %v3853
      %v3916 = vadd.f32 %v3777, %v3856
      %v3917 = vadd.f32 %v3778, %v3861
      %v3918 = vadd.f32 %v3779, %v3864
      %v3919 = vadd.f32 %v3780, %v3869
      %v3920 = vadd.f32 %v3781, %v3872
      %v3921 = vadd.f32 %v3782, %v3877
      %v3922 = vadd.f32 %v3783, %v3880
      %v3923 = vadd.f32 %v3784, %v3885
      %v3924 = vadd.f32 %v3785, %v3888
      %v3925 = vadd.f32 %v3786, %v3893
      %v3926 = vadd.f32 %v3787, %v3896
      %v3927 = vadd.f32 %v3788, %v3901
      %v3928 = vadd.f32 %v3789, %v3904
      %v3929 = vadd.f32 %v3790, %v3909
      %v3930 = vadd.f32 %v3791, %v3912
      %v3931 = vrot.slane %v2198, 6
      %v3932 = vrot.slane %v2201, 7
      %v3933 = vor.u32 %v3931, %v3932
      %v3934 = vrot.slane %v3933, 4
      %v3935 = vrot.slane %v2207, 6
      %v3936 = vrot.slane %v2210, 7
      %v3937 = vor.u32 %v3935, %v3936
      %v3938 = vsel %vm2930, %v3934, %v3937
      %v3939 = vrot.slane %v3937, 4
      %v3940 = vrot.slane %v2217, 6
      %v3941 = vrot.slane %v2220, 7
      %v3942 = vor.u32 %v3940, %v3941
      %v3943 = vsel %vm2930, %v3939, %v3942
      %v3944 = vrot.slane %v3639, 6
      %v3945 = vrot.slane %v3642, 7
      %v3946 = vor.u32 %v3944, %v3945
      %v3947 = vrot.slane %v3946, 4
      %v3948 = vrot.slane %v3652, 6
      %v3949 = vrot.slane %v3648, 7
      %v3950 = vor.u32 %v3948, %v3949
      %v3951 = vsel %vm2930, %v3947, %v3950
      %v3952 = vrot.slane %v3950, 4
      %v3953 = vrot.slane %v3801, 6
      %v3954 = vrot.slane %v3658, 7
      %v3955 = vor.u32 %v3953, %v3954
      %v3956 = vsel %vm2930, %v3952, %v3955
      %s3957 = scalar_lea.vmem %s1, 68
      %v3958 = vld [vmem:[%s3957] sm:$0xf]
      %v3959 = vunpack.c.l.b16 %v3938
      %v3960 = vunpack.c.l.b16 %v3943
      %v3961 = vunpack.c.l.b16 %v3951
      %v3962 = vunpack.c.l.b16 %v3956
      %v3963 = vpack.c.b16 %v3960, %v3959
      %v3964 = vpack.c.b16 %v3962, %v3961
      %v3966 = vsel %vm519, %v3963, 0
      %v3969 = vsel %vm519, %v3964, 0
      %v3972 = vsel %vm667, %v3958, 0
      %3974 = vmatprep.subr.bf16.mxu0 0
      %3975 = vmatpush1.bf16.msra.mxu0 %v3972
      %3976 = vmatprep.subr.bf16.mxu0 0
      %3977 = vmatpush1.bf16.msra.mxu0 0
      %3978 = vmatprep.subr.bf16.mxu0 0
      %3979 = vmatpush1.bf16.msra.mxu0 0
      %3980 = vmatprep.subr.bf16.mxu0 0
      %3981 = vmatpush1.bf16.msra.mxu0 0
      %3982 = vmatprep.subr.bf16.mxu0 0
      %3983 = vmatpush1.bf16.msra.mxu0 0
      %3984 = vmatprep.subr.bf16.mxu0 0
      %3985 = vmatpush1.bf16.msra.mxu0 0
      %3986 = vmatprep.subr.bf16.mxu0 0
      %3987 = vmatpush1.bf16.msra.mxu0 0
      %3988 = vmatprep.subr.bf16.mxu0 0
      %3989 = vmatpush1.bf16.msra.mxu0 0
      %3990 = vmatprep.subr.bf16.mxu0 0
      %3991 = vmatpush1.bf16.msra.mxu0 0
      %3992 = vmatprep.subr.bf16.mxu0 0
      %3993 = vmatpush1.bf16.msra.mxu0 0
      %3994 = vmatprep.subr.bf16.mxu0 0
      %3995 = vmatpush1.bf16.msra.mxu0 0
      %3996 = vmatprep.subr.bf16.mxu0 0
      %3997 = vmatpush1.bf16.msra.mxu0 0
      %3998 = vmatprep.subr.bf16.mxu0 0
      %3999 = vmatpush1.bf16.msra.mxu0 0
      %4000 = vmatprep.subr.bf16.mxu0 0
      %4001 = vmatpush1.bf16.msra.mxu0 0
      %4002 = vmatprep.subr.bf16.mxu0 0
      %4003 = vmatpush1.bf16.msra.mxu0 0
      %4004 = vmatprep.subr.bf16.mxu0 0
      %4005 = vmatpush1.bf16.msra.mxu0 0
      %4006 = vmatprep.mubr.bf16.mxu0 0
      %4007 = vmatmul.mubr.bf16.gmra.mrb[0].mxu0 %v3074
      %v4008 = vpop.f32.mrb[0].mxu0
      %v4009 = vadd.f32 0.0, %v4008
      %v4010 = vpop.f32.mrb[0].mxu0
      %v4011 = vpop.f32.mrb[0].mxu0
      %v4012 = vadd.f32 0.0, %v4011
      %v4013 = vpop.f32.mrb[0].mxu0
      %4014 = vmatprep.mubr.bf16.mxu0 0
      %4015 = vmatmul.mubr.bf16.gmra.mrb[0].mxu0 %v3077
      %v4016 = vpop.f32.mrb[0].mxu0
      %v4017 = vadd.f32 0.0, %v4016
      %v4018 = vpop.f32.mrb[0].mxu0
      %v4019 = vpop.f32.mrb[0].mxu0
      %v4020 = vadd.f32 0.0, %v4019
      %v4021 = vpop.f32.mrb[0].mxu0
      %4022 = vmatprep.mubr.bf16.mxu0 0
      %4023 = vmatmul.mubr.bf16.gmra.mrb[0].mxu0 %v3080
      %v4024 = vpop.f32.mrb[0].mxu0
      %v4025 = vadd.f32 0.0, %v4024
      %v4026 = vpop.f32.mrb[0].mxu0
      %v4027 = vpop.f32.mrb[0].mxu0
      %v4028 = vadd.f32 0.0, %v4027
      %v4029 = vpop.f32.mrb[0].mxu0
      %4030 = vmatprep.mubr.bf16.mxu0 0
      %4031 = vmatmul.mubr.bf16.gmra.mrb[0].mxu0 %v3083
      %v4032 = vpop.f32.mrb[0].mxu0
      %v4033 = vadd.f32 0.0, %v4032
      %v4034 = vpop.f32.mrb[0].mxu0
      %v4035 = vpop.f32.mrb[0].mxu0
      %v4036 = vadd.f32 0.0, %v4035
      %v4037 = vpop.f32.mrb[0].mxu0
      %4038 = vmatprep.mubr.bf16.mxu0 0
      %4039 = vmatmul.mubr.bf16.gmra.mrb[0].mxu0 %v3506
      %v4040 = vpop.f32.mrb[0].mxu0
      %v4041 = vadd.f32 0.0, %v4040
      %v4042 = vpop.f32.mrb[0].mxu0
      %v4043 = vpop.f32.mrb[0].mxu0
      %v4044 = vadd.f32 0.0, %v4043
      %v4045 = vpop.f32.mrb[0].mxu0
      %4046 = vmatprep.mubr.bf16.mxu0 0
      %4047 = vmatmul.mubr.bf16.gmra.mrb[0].mxu0 %v3509
      %v4048 = vpop.f32.mrb[0].mxu0
      %v4049 = vadd.f32 0.0, %v4048
      %v4050 = vpop.f32.mrb[0].mxu0
      %v4051 = vpop.f32.mrb[0].mxu0
      %v4052 = vadd.f32 0.0, %v4051
      %v4053 = vpop.f32.mrb[0].mxu0
      %4054 = vmatprep.mubr.bf16.mxu0 0
      %4055 = vmatmul.mubr.bf16.gmra.mrb[0].mxu0 %v3966
      %v4056 = vpop.f32.mrb[0].mxu0
      %v4057 = vadd.f32 0.0, %v4056
      %v4058 = vpop.f32.mrb[0].mxu0
      %v4059 = vpop.f32.mrb[0].mxu0
      %v4060 = vadd.f32 0.0, %v4059
      %v4061 = vpop.f32.mrb[0].mxu0
      %4062 = vmatprep.mubr.bf16.mxu0 0
      %4063 = vmatmul.mubr.bf16.gmra.mrb[0].mxu0 %v3969
      %v4064 = vpop.f32.mrb[0].mxu0
      %v4065 = vadd.f32 0.0, %v4064
      %v4066 = vpop.f32.mrb[0].mxu0
      %v4067 = vpop.f32.mrb[0].mxu0
      %v4068 = vadd.f32 0.0, %v4067
      %v4069 = vpop.f32.mrb[0].mxu0
      %4070 = vdwg.mxu0
      %v4071 = vadd.f32 %v3915, %v4009
      %v4072 = vadd.f32 %v3916, %v4012
      %v4073 = vadd.f32 %v3917, %v4017
      %v4074 = vadd.f32 %v3918, %v4020
      %v4075 = vadd.f32 %v3919, %v4025
      %v4076 = vadd.f32 %v3920, %v4028
      %v4077 = vadd.f32 %v3921, %v4033
      %v4078 = vadd.f32 %v3922, %v4036
      %v4079 = vadd.f32 %v3923, %v4041
      %v4080 = vadd.f32 %v3924, %v4044
      %v4081 = vadd.f32 %v3925, %v4049
      %v4082 = vadd.f32 %v3926, %v4052
      %v4083 = vadd.f32 %v3927, %v4057
      %v4084 = vadd.f32 %v3928, %v4060
      %v4085 = vadd.f32 %v3929, %v4065
      %v4086 = vadd.f32 %v3930, %v4068
      %s4087 = scalar_lea.vmem %s2, 1
      %v4088 = vld [vmem:[%s4087] sm:$0x1]
      %v4090 = vlaneseq
      %v4091 = vshrl.u32 %v4090, 7
      %v4092 = vsub.s32 0, %v4091
      %v4093 = vrot.slane %v4088, %v4092
      %v4095 = vmul.f32 %v4071, %v4093
      %v4096 = vmul.f32 %v4072, %v4093
      %v4097 = vmul.f32 %v4073, %v4093
      %v4098 = vmul.f32 %v4074, %v4093
      %v4099 = vmul.f32 %v4075, %v4093
      %v4100 = vmul.f32 %v4076, %v4093
      %v4101 = vmul.f32 %v4077, %v4093
      %v4102 = vmul.f32 %v4078, %v4093
      %v4103 = vmul.f32 %v4079, %v4093
      %v4104 = vmul.f32 %v4080, %v4093
      %v4105 = vmul.f32 %v4081, %v4093
      %v4106 = vmul.f32 %v4082, %v4093
      %v4107 = vmul.f32 %v4083, %v4093
      %v4108 = vmul.f32 %v4084, %v4093
      %v4109 = vmul.f32 %v4085, %v4093
      %v4110 = vmul.f32 %v4086, %v4093
      %s4111 = scalar_lea.vmem %s3, 1
      %v4112 = vld [vmem:[%s4111] sm:$0x1]
      %v4114 = vlaneseq
      %v4115 = vshrl.u32 %v4114, 7
      %v4116 = vsub.s32 0, %v4115
      %v4117 = vrot.slane %v4112, %v4116
      %v4119 = vadd.f32 %v4095, %v4117
      %v4120 = vadd.f32 %v4096, %v4117
      %v4121 = vadd.f32 %v4097, %v4117
      %v4122 = vadd.f32 %v4098, %v4117
      %v4123 = vadd.f32 %v4099, %v4117
      %v4124 = vadd.f32 %v4100, %v4117
      %v4125 = vadd.f32 %v4101, %v4117
      %v4126 = vadd.f32 %v4102, %v4117
      %v4127 = vadd.f32 %v4103, %v4117
      %v4128 = vadd.f32 %v4104, %v4117
      %v4129 = vadd.f32 %v4105, %v4117
      %v4130 = vadd.f32 %v4106, %v4117
      %v4131 = vadd.f32 %v4107, %v4117
      %v4132 = vadd.f32 %v4108, %v4117
      %v4133 = vadd.f32 %v4109, %v4117
      %v4134 = vadd.f32 %v4110, %v4117
      %v4135 = vmax.f32 %v4119, 0.0
      %v4136 = vmax.f32 %v4120, 0.0
      %v4137 = vmax.f32 %v4121, 0.0
      %v4138 = vmax.f32 %v4122, 0.0
      %v4139 = vmax.f32 %v4123, 0.0
      %v4140 = vmax.f32 %v4124, 0.0
      %v4141 = vmax.f32 %v4125, 0.0
      %v4142 = vmax.f32 %v4126, 0.0
      %v4143 = vmax.f32 %v4127, 0.0
      %v4144 = vmax.f32 %v4128, 0.0
      %v4145 = vmax.f32 %v4129, 0.0
      %v4146 = vmax.f32 %v4130, 0.0
      %v4147 = vmax.f32 %v4131, 0.0
      %v4148 = vmax.f32 %v4132, 0.0
      %v4149 = vmax.f32 %v4133, 0.0
      %v4150 = vmax.f32 %v4134, 0.0
      %v4151 = vpack.c.bf16 %v4136, %v4135
      %v4152 = vpack.c.bf16 %v4138, %v4137
      %v4153 = vpack.c.bf16 %v4140, %v4139
      %v4154 = vpack.c.bf16 %v4142, %v4141
      %v4155 = vpack.c.bf16 %v4144, %v4143
      %v4156 = vpack.c.bf16 %v4146, %v4145
      %v4157 = vpack.c.bf16 %v4148, %v4147
      %v4158 = vpack.c.bf16 %v4150, %v4149
      %s4159 = scalar_lea.vmem %s7, 2
      %v4160 = vld [vmem:[%s4159] sm:$0x3]
      %v4162 = vsel %vm719, %v4151, 0
      %v4165 = vsel %vm719, %v4152, 0
      %v4168 = vsel %vm719, %v4153, 0
      %v4171 = vsel %vm719, %v4154, 0
      %v4174 = vsel %vm719, %v4155, 0
      %v4177 = vsel %vm719, %v4156, 0
      %v4180 = vsel %vm719, %v4157, 0
      %v4183 = vsel %vm719, %v4158, 0
      %v4186 = vsel %vm723, %v4160, 0
      %4188 = vmatprep.subr.bf16.mxu0 0
      %4189 = vmatpush1.bf16.msra.mxu0 %v4186
      %4190 = vmatprep.subr.bf16.mxu0 0
      %4191 = vmatpush1.bf16.msra.mxu0 0
      %4192 = vmatprep.subr.bf16.mxu0 0
      %4193 = vmatpush1.bf16.msra.mxu0 0
      %4194 = vmatprep.subr.bf16.mxu0 0
      %4195 = vmatpush1.bf16.msra.mxu0 0
      %4196 = vmatprep.subr.bf16.mxu0 0
      %4197 = vmatpush1.bf16.msra.mxu0 0
      %4198 = vmatprep.subr.bf16.mxu0 0
      %4199 = vmatpush1.bf16.msra.mxu0 0
      %4200 = vmatprep.subr.bf16.mxu0 0
      %4201 = vmatpush1.bf16.msra.mxu0 0
      %4202 = vmatprep.subr.bf16.mxu0 0
      %4203 = vmatpush1.bf16.msra.mxu0 0
      %4204 = vmatprep.subr.bf16.mxu0 0
      %4205 = vmatpush1.bf16.msra.mxu0 0
      %4206 = vmatprep.subr.bf16.mxu0 0
      %4207 = vmatpush1.bf16.msra.mxu0 0
      %4208 = vmatprep.subr.bf16.mxu0 0
      %4209 = vmatpush1.bf16.msra.mxu0 0
      %4210 = vmatprep.subr.bf16.mxu0 0
      %4211 = vmatpush1.bf16.msra.mxu0 0
      %4212 = vmatprep.subr.bf16.mxu0 0
      %4213 = vmatpush1.bf16.msra.mxu0 0
      %4214 = vmatprep.subr.bf16.mxu0 0
      %4215 = vmatpush1.bf16.msra.mxu0 0
      %4216 = vmatprep.subr.bf16.mxu0 0
      %4217 = vmatpush1.bf16.msra.mxu0 0
      %4218 = vmatprep.subr.bf16.mxu0 0
      %4219 = vmatpush1.bf16.msra.mxu0 0
      %4220 = vmatprep.mubr.bf16.mxu0 0
      %4221 = vmatmul.mubr.bf16.gmra.mrb[0].mxu0 %v4162
      %v4222 = vpop.f32.mrb[0].mxu0
      %v4223 = vadd.f32 0.0, %v4222
      %v4224 = vpop.f32.mrb[0].mxu0
      %v4225 = vpop.f32.mrb[0].mxu0
      %v4226 = vadd.f32 0.0, %v4225
      %v4227 = vpop.f32.mrb[0].mxu0
      %4228 = vmatprep.mubr.bf16.mxu0 0
      %4229 = vmatmul.mubr.bf16.gmra.mrb[0].mxu0 %v4165
      %v4230 = vpop.f32.mrb[0].mxu0
      %v4231 = vadd.f32 0.0, %v4230
      %v4232 = vpop.f32.mrb[0].mxu0
      %v4233 = vpop.f32.mrb[0].mxu0
      %v4234 = vadd.f32 0.0, %v4233
      %v4235 = vpop.f32.mrb[0].mxu0
      %4236 = vmatprep.mubr.bf16.mxu0 0
      %4237 = vmatmul.mubr.bf16.gmra.mrb[0].mxu0 %v4168
      %v4238 = vpop.f32.mrb[0].mxu0
      %v4239 = vadd.f32 0.0, %v4238
      %v4240 = vpop.f32.mrb[0].mxu0
      %v4241 = vpop.f32.mrb[0].mxu0
      %v4242 = vadd.f32 0.0, %v4241
      %v4243 = vpop.f32.mrb[0].mxu0
      %4244 = vmatprep.mubr.bf16.mxu0 0
      %4245 = vmatmul.mubr.bf16.gmra.mrb[0].mxu0 %v4171
      %v4246 = vpop.f32.mrb[0].mxu0
      %v4247 = vadd.f32 0.0, %v4246
      %v4248 = vpop.f32.mrb[0].mxu0
      %v4249 = vpop.f32.mrb[0].mxu0
      %v4250 = vadd.f32 0.0, %v4249
      %v4251 = vpop.f32.mrb[0].mxu0
      %4252 = vmatprep.mubr.bf16.mxu0 0
      %4253 = vmatmul.mubr.bf16.gmra.mrb[0].mxu0 %v4174
      %v4254 = vpop.f32.mrb[0].mxu0
      %v4255 = vadd.f32 0.0, %v4254
      %v4256 = vpop.f32.mrb[0].mxu0
      %v4257 = vpop.f32.mrb[0].mxu0
      %v4258 = vadd.f32 0.0, %v4257
      %v4259 = vpop.f32.mrb[0].mxu0
      %4260 = vmatprep.mubr.bf16.mxu0 0
      %4261 = vmatmul.mubr.bf16.gmra.mrb[0].mxu0 %v4177
      %v4262 = vpop.f32.mrb[0].mxu0
      %v4263 = vadd.f32 0.0, %v4262
      %v4264 = vpop.f32.mrb[0].mxu0
      %v4265 = vpop.f32.mrb[0].mxu0
      %v4266 = vadd.f32 0.0, %v4265
      %v4267 = vpop.f32.mrb[0].mxu0
      %4268 = vmatprep.mubr.bf16.mxu0 0
      %4269 = vmatmul.mubr.bf16.gmra.mrb[0].mxu0 %v4180
      %v4270 = vpop.f32.mrb[0].mxu0
      %v4271 = vadd.f32 0.0, %v4270
      %v4272 = vpop.f32.mrb[0].mxu0
      %v4273 = vpop.f32.mrb[0].mxu0
      %v4274 = vadd.f32 0.0, %v4273
      %v4275 = vpop.f32.mrb[0].mxu0
      %4276 = vmatprep.mubr.bf16.mxu0 0
      %4277 = vmatmul.mubr.bf16.gmra.mrb[0].mxu0 %v4183
      %v4278 = vpop.f32.mrb[0].mxu0
      %v4279 = vadd.f32 0.0, %v4278
      %v4280 = vpop.f32.mrb[0].mxu0
      %v4281 = vpop.f32.mrb[0].mxu0
      %v4282 = vadd.f32 0.0, %v4281
      %v4283 = vpop.f32.mrb[0].mxu0
      %4284 = vdwg.mxu0
      %v4286 = vsel %vm719, %v2542, 0
      %v4289 = vsel %vm719, %v2543, 0
      %v4292 = vsel %vm719, %v2544, 0
      %v4295 = vsel %vm719, %v2545, 0
      %v4298 = vsel %vm719, %v2546, 0
      %v4301 = vsel %vm719, %v2547, 0
      %v4304 = vsel %vm719, %v2548, 0
      %v4307 = vsel %vm719, %v2549, 0
      %v4310 = vsel %vm723, %v2550, 0
      %4312 = vmatprep.subr.bf16.mxu0 0
      %4313 = vmatpush1.bf16.msra.mxu0 %v4310
      %4314 = vmatprep.subr.bf16.mxu0 0
      %4315 = vmatpush1.bf16.msra.mxu0 0
      %4316 = vmatprep.subr.bf16.mxu0 0
      %4317 = vmatpush1.bf16.msra.mxu0 0
      %4318 = vmatprep.subr.bf16.mxu0 0
      %4319 = vmatpush1.bf16.msra.mxu0 0
      %4320 = vmatprep.subr.bf16.mxu0 0
      %4321 = vmatpush1.bf16.msra.mxu0 0
      %4322 = vmatprep.subr.bf16.mxu0 0
      %4323 = vmatpush1.bf16.msra.mxu0 0
      %4324 = vmatprep.subr.bf16.mxu0 0
      %4325 = vmatpush1.bf16.msra.mxu0 0
      %4326 = vmatprep.subr.bf16.mxu0 0
      %4327 = vmatpush1.bf16.msra.mxu0 0
      %4328 = vmatprep.subr.bf16.mxu0 0
      %4329 = vmatpush1.bf16.msra.mxu0 0
      %4330 = vmatprep.subr.bf16.mxu0 0
      %4331 = vmatpush1.bf16.msra.mxu0 0
      %4332 = vmatprep.subr.bf16.mxu0 0
      %4333 = vmatpush1.bf16.msra.mxu0 0
      %4334 = vmatprep.subr.bf16.mxu0 0
      %4335 = vmatpush1.bf16.msra.mxu0 0
      %4336 = vmatprep.subr.bf16.mxu0 0
      %4337 = vmatpush1.bf16.msra.mxu0 0
      %4338 = vmatprep.subr.bf16.mxu0 0
      %4339 = vmatpush1.bf16.msra.mxu0 0
      %4340 = vmatprep.subr.bf16.mxu0 0
      %4341 = vmatpush1.bf16.msra.mxu0 0
      %4342 = vmatprep.subr.bf16.mxu0 0
      %4343 = vmatpush1.bf16.msra.mxu0 0
      %4344 = vmatprep.mubr.bf16.mxu0 0
      %4345 = vmatmul.mubr.bf16.gmra.mrb[0].mxu0 %v4286
      %v4346 = vpop.f32.mrb[0].mxu0
      %v4347 = vadd.f32 %v4223, %v4346
      %v4348 = vpop.f32.mrb[0].mxu0
      %v4349 = vpop.f32.mrb[0].mxu0
      %v4350 = vadd.f32 %v4226, %v4349
      %v4351 = vpop.f32.mrb[0].mxu0
      %4352 = vmatprep.mubr.bf16.mxu0 0
      %4353 = vmatmul.mubr.bf16.gmra.mrb[0].mxu0 %v4289
      %v4354 = vpop.f32.mrb[0].mxu0
      %v4355 = vadd.f32 %v4231, %v4354
      %v4356 = vpop.f32.mrb[0].mxu0
      %v4357 = vpop.f32.mrb[0].mxu0
      %v4358 = vadd.f32 %v4234, %v4357
      %v4359 = vpop.f32.mrb[0].mxu0
      %4360 = vmatprep.mubr.bf16.mxu0 0
      %4361 = vmatmul.mubr.bf16.gmra.mrb[0].mxu0 %v4292
      %v4362 = vpop.f32.mrb[0].mxu0
      %v4363 = vadd.f32 %v4239, %v4362
      %v4364 = vpop.f32.mrb[0].mxu0
      %v4365 = vpop.f32.mrb[0].mxu0
      %v4366 = vadd.f32 %v4242, %v4365
      %v4367 = vpop.f32.mrb[0].mxu0
      %4368 = vmatprep.mubr.bf16.mxu0 0
      %4369 = vmatmul.mubr.bf16.gmra.mrb[0].mxu0 %v4295
      %v4370 = vpop.f32.mrb[0].mxu0
      %v4371 = vadd.f32 %v4247, %v4370
      %v4372 = vpop.f32.mrb[0].mxu0
      %v4373 = vpop.f32.mrb[0].mxu0
      %v4374 = vadd.f32 %v4250, %v4373
      %v4375 = vpop.f32.mrb[0].mxu0
      %4376 = vmatprep.mubr.bf16.mxu0 0
      %4377 = vmatmul.mubr.bf16.gmra.mrb[0].mxu0 %v4298
      %v4378 = vpop.f32.mrb[0].mxu0
      %v4379 = vadd.f32 %v4255, %v4378
      %v4380 = vpop.f32.mrb[0].mxu0
      %v4381 = vpop.f32.mrb[0].mxu0
      %v4382 = vadd.f32 %v4258, %v4381
      %v4383 = vpop.f32.mrb[0].mxu0
      %4384 = vmatprep.mubr.bf16.mxu0 0
      %4385 = vmatmul.mubr.bf16.gmra.mrb[0].mxu0 %v4301
      %v4386 = vpop.f32.mrb[0].mxu0
      %v4387 = vadd.f32 %v4263, %v4386
      %v4388 = vpop.f32.mrb[0].mxu0
      %v4389 = vpop.f32.mrb[0].mxu0
      %v4390 = vadd.f32 %v4266, %v4389
      %v4391 = vpop.f32.mrb[0].mxu0
      %4392 = vmatprep.mubr.bf16.mxu0 0
      %4393 = vmatmul.mubr.bf16.gmra.mrb[0].mxu0 %v4304
      %v4394 = vpop.f32.mrb[0].mxu0
      %v4395 = vadd.f32 %v4271, %v4394
      %v4396 = vpop.f32.mrb[0].mxu0
      %v4397 = vpop.f32.mrb[0].mxu0
      %v4398 = vadd.f32 %v4274, %v4397
      %v4399 = vpop.f32.mrb[0].mxu0
      %4400 = vmatprep.mubr.bf16.mxu0 0
      %4401 = vmatmul.mubr.bf16.gmra.mrb[0].mxu0 %v4307
      %v4402 = vpop.f32.mrb[0].mxu0
      %v4403 = vadd.f32 %v4279, %v4402
      %v4404 = vpop.f32.mrb[0].mxu0
      %v4405 = vpop.f32.mrb[0].mxu0
      %v4406 = vadd.f32 %v4282, %v4405
      %v4407 = vpop.f32.mrb[0].mxu0
      %4408 = vdwg.mxu0
      %s4409 = scalar_lea.vmem %s1, 72
      %v4410 = vld [vmem:[%s4409] sm:$0xf]
      %v4412 = vshrl.u32 %v770, 16
      %v4414 = vrot.slane %v4412, 5
      %v4415 = vshll.u32 %v770, 16
      %v4417 = vrot.slane %v4415, 6
      %v4418 = vor.u32 %v4414, %v4417
      %v4419 = vrot.slane %v4418, 4
      %v4421 = vshrl.u32 %v771, 16
      %v4423 = vrot.slane %v4421, 5
      %v4424 = vshll.u32 %v771, 16
      %v4426 = vrot.slane %v4424, 6
      %v4427 = vor.u32 %v4423, %v4426
      %v4428 = vsel %vm898, %v4419, %v4427
      %v4429 = vrot.slane %v4427, 4
      %v4431 = vshrl.u32 %v772, 16
      %v4433 = vrot.slane %v4431, 5
      %v4434 = vshll.u32 %v772, 16
      %v4436 = vrot.slane %v4434, 6
      %v4437 = vor.u32 %v4433, %v4436
      %v4438 = vsel %vm898, %v4429, %v4437
      %s4439 = scalar_lea.vmem %s1, 76
      %v4440 = vld [vmem:[%s4439] sm:$0xf]
      %v4441 = vunpack.c.l.b16 %v4428
      %v4442 = vunpack.c.l.b16 %v4438
      %v4443 = vpack.c.b16 %v4442, %v4441
      %v4445 = vsel %vm519, %v4443, 0
      %v4448 = vsel %vm667, %v4440, 0
      %4450 = vmatprep.subr.bf16.mxu0 0
      %4451 = vmatpush1.bf16.msra.mxu0 %v4448
      %4452 = vmatprep.subr.bf16.mxu0 0
      %4453 = vmatpush1.bf16.msra.mxu0 0
      %4454 = vmatprep.subr.bf16.mxu0 0
      %4455 = vmatpush1.bf16.msra.mxu0 0
      %4456 = vmatprep.subr.bf16.mxu0 0
      %4457 = vmatpush1.bf16.msra.mxu0 0
      %4458 = vmatprep.subr.bf16.mxu0 0
      %4459 = vmatpush1.bf16.msra.mxu0 0
      %4460 = vmatprep.subr.bf16.mxu0 0
      %4461 = vmatpush1.bf16.msra.mxu0 0
      %4462 = vmatprep.subr.bf16.mxu0 0
      %4463 = vmatpush1.bf16.msra.mxu0 0
      %4464 = vmatprep.subr.bf16.mxu0 0
      %4465 = vmatpush1.bf16.msra.mxu0 0
      %4466 = vmatprep.subr.bf16.mxu0 0
      %4467 = vmatpush1.bf16.msra.mxu0 0
      %4468 = vmatprep.subr.bf16.mxu0 0
      %4469 = vmatpush1.bf16.msra.mxu0 0
      %4470 = vmatprep.subr.bf16.mxu0 0
      %4471 = vmatpush1.bf16.msra.mxu0 0
      %4472 = vmatprep.subr.bf16.mxu0 0
      %4473 = vmatpush1.bf16.msra.mxu0 0
      %4474 = vmatprep.subr.bf16.mxu0 0
      %4475 = vmatpush1.bf16.msra.mxu0 0
      %4476 = vmatprep.subr.bf16.mxu0 0
      %4477 = vmatpush1.bf16.msra.mxu0 0
      %4478 = vmatprep.subr.bf16.mxu0 0
      %4479 = vmatpush1.bf16.msra.mxu0 0
      %4480 = vmatprep.subr.bf16.mxu0 0
      %4481 = vmatpush1.bf16.msra.mxu0 0
      %4482 = vmatprep.mubr.bf16.mxu0 0
      %4483 = vmatmul.mubr.bf16.gmra.mrb[0].mxu0 %v4445
      %v4484 = vpop.f32.mrb[0].mxu0
      %v4485 = vadd.f32 0.0, %v4484
      %v4486 = vpop.f32.mrb[0].mxu0
      %v4487 = vpop.f32.mrb[0].mxu0
      %v4488 = vadd.f32 0.0, %v4487
      %v4489 = vpop.f32.mrb[0].mxu0
      %4490 = vmatprep.mubr.bf16.mxu0 0
      %4491 = vmatmul.mubr.bf16.gmra.mrb[0].mxu0 %v2678
      %v4492 = vpop.f32.mrb[0].mxu0
      %v4493 = vadd.f32 0.0, %v4492
      %v4494 = vpop.f32.mrb[0].mxu0
      %v4495 = vpop.f32.mrb[0].mxu0
      %v4496 = vadd.f32 0.0, %v4495
      %v4497 = vpop.f32.mrb[0].mxu0
      %4498 = vmatprep.mubr.bf16.mxu0 0
      %4499 = vmatmul.mubr.bf16.gmra.mrb[0].mxu0 %v1150
      %v4500 = vpop.f32.mrb[0].mxu0
      %v4501 = vadd.f32 0.0, %v4500
      %v4502 = vpop.f32.mrb[0].mxu0
      %v4503 = vpop.f32.mrb[0].mxu0
      %v4504 = vadd.f32 0.0, %v4503
      %v4505 = vpop.f32.mrb[0].mxu0
      %4506 = vmatprep.mubr.bf16.mxu0 0
      %4507 = vmatmul.mubr.bf16.gmra.mrb[0].mxu0 %v1153
      %v4508 = vpop.f32.mrb[0].mxu0
      %v4509 = vadd.f32 0.0, %v4508
      %v4510 = vpop.f32.mrb[0].mxu0
      %v4511 = vpop.f32.mrb[0].mxu0
      %v4512 = vadd.f32 0.0, %v4511
      %v4513 = vpop.f32.mrb[0].mxu0
      %4514 = vmatprep.mubr.bf16.mxu0 0
      %4515 = vmatmul.mubr.bf16.gmra.mrb[0].mxu0 %v1156
      %v4516 = vpop.f32.mrb[0].mxu0
      %v4517 = vadd.f32 0.0, %v4516
      %v4518 = vpop.f32.mrb[0].mxu0
      %v4519 = vpop.f32.mrb[0].mxu0
      %v4520 = vadd.f32 0.0, %v4519
      %v4521 = vpop.f32.mrb[0].mxu0
      %4522 = vmatprep.mubr.bf16.mxu0 0
      %4523 = vmatmul.mubr.bf16.gmra.mrb[0].mxu0 %v1159
      %v4524 = vpop.f32.mrb[0].mxu0
      %v4525 = vadd.f32 0.0, %v4524
      %v4526 = vpop.f32.mrb[0].mxu0
      %v4527 = vpop.f32.mrb[0].mxu0
      %v4528 = vadd.f32 0.0, %v4527
      %v4529 = vpop.f32.mrb[0].mxu0
      %4530 = vmatprep.mubr.bf16.mxu0 0
      %4531 = vmatmul.mubr.bf16.gmra.mrb[0].mxu0 %v1162
      %v4532 = vpop.f32.mrb[0].mxu0
      %v4533 = vadd.f32 0.0, %v4532
      %v4534 = vpop.f32.mrb[0].mxu0
      %v4535 = vpop.f32.mrb[0].mxu0
      %v4536 = vadd.f32 0.0, %v4535
      %v4537 = vpop.f32.mrb[0].mxu0
      %4538 = vmatprep.mubr.bf16.mxu0 0
      %4539 = vmatmul.mubr.bf16.gmra.mrb[0].mxu0 %v1165
      %v4540 = vpop.f32.mrb[0].mxu0
      %v4541 = vadd.f32 0.0, %v4540
      %v4542 = vpop.f32.mrb[0].mxu0
      %v4543 = vpop.f32.mrb[0].mxu0
      %v4544 = vadd.f32 0.0, %v4543
      %v4545 = vpop.f32.mrb[0].mxu0
      %4546 = vdwg.mxu0
      %v4551 = vunpack.c.l.b16 %v770
      %v4552 = vunpack.c.l.b16 %v771
      %v4553 = vunpack.c.l.b16 %v773
      %v4554 = vunpack.c.l.b16 %v774
      %v4555 = vunpack.c.l.b16 %v776
      %v4556 = vunpack.c.l.b16 %v777
      %v4557 = vunpack.c.l.b16 %v779
      %v4558 = vunpack.c.l.b16 %v780
      %v4559 = vunpack.c.l.b16 %v782
      %v4560 = vunpack.c.l.b16 %v783
      %v4561 = vunpack.c.l.b16 %v785
      %v4562 = vunpack.c.l.b16 %v786
      %v4563 = vunpack.c.l.b16 %v788
      %v4564 = vunpack.c.l.b16 %v789
      %v4565 = vunpack.c.l.b16 %v791
      %v4566 = vunpack.c.l.b16 %v792
      %v4567 = vpack.c.b16 %v4552, %v4551
      %v4568 = vpack.c.b16 %v4554, %v4553
      %v4569 = vpack.c.b16 %v4556, %v4555
      %v4570 = vpack.c.b16 %v4558, %v4557
      %v4571 = vpack.c.b16 %v4560, %v4559
      %v4572 = vpack.c.b16 %v4562, %v4561
      %v4573 = vpack.c.b16 %v4564, %v4563
      %v4574 = vpack.c.b16 %v4566, %v4565
      %v4576 = vsel %vm519, %v4567, 0
      %v4579 = vsel %vm519, %v4568, 0
      %v4582 = vsel %vm519, %v4569, 0
      %v4585 = vsel %vm519, %v4570, 0
      %v4588 = vsel %vm519, %v4571, 0
      %v4591 = vsel %vm519, %v4572, 0
      %v4594 = vsel %vm519, %v4573, 0
      %v4597 = vsel %vm519, %v4574, 0
      %v4600 = vsel %vm667, %v4410, 0
      %4602 = vmatprep.subr.bf16.mxu0 0
      %4603 = vmatpush1.bf16.msra.mxu0 %v4600
      %4604 = vmatprep.subr.bf16.mxu0 0
      %4605 = vmatpush1.bf16.msra.mxu0 0
      %4606 = vmatprep.subr.bf16.mxu0 0
      %4607 = vmatpush1.bf16.msra.mxu0 0
      %4608 = vmatprep.subr.bf16.mxu0 0
      %4609 = vmatpush1.bf16.msra.mxu0 0
      %4610 = vmatprep.subr.bf16.mxu0 0
      %4611 = vmatpush1.bf16.msra.mxu0 0
      %4612 = vmatprep.subr.bf16.mxu0 0
      %4613 = vmatpush1.bf16.msra.mxu0 0
      %4614 = vmatprep.subr.bf16.mxu0 0
      %4615 = vmatpush1.bf16.msra.mxu0 0
      %4616 = vmatprep.subr.bf16.mxu0 0
      %4617 = vmatpush1.bf16.msra.mxu0 0
      %4618 = vmatprep.subr.bf16.mxu0 0
      %4619 = vmatpush1.bf16.msra.mxu0 0
      %4620 = vmatprep.subr.bf16.mxu0 0
      %4621 = vmatpush1.bf16.msra.mxu0 0
      %4622 = vmatprep.subr.bf16.mxu0 0
      %4623 = vmatpush1.bf16.msra.mxu0 0
      %4624 = vmatprep.subr.bf16.mxu0 0
      %4625 = vmatpush1.bf16.msra.mxu0 0
      %4626 = vmatprep.subr.bf16.mxu0 0
      %4627 = vmatpush1.bf16.msra.mxu0 0
      %4628 = vmatprep.subr.bf16.mxu0 0
      %4629 = vmatpush1.bf16.msra.mxu0 0
      %4630 = vmatprep.subr.bf16.mxu0 0
      %4631 = vmatpush1.bf16.msra.mxu0 0
      %4632 = vmatprep.subr.bf16.mxu0 0
      %4633 = vmatpush1.bf16.msra.mxu0 0
      %4634 = vmatprep.mubr.bf16.mxu0 0
      %4635 = vmatmul.mubr.bf16.gmra.mrb[0].mxu0 %v4576
      %v4636 = vpop.f32.mrb[0].mxu0
      %v4637 = vadd.f32 %v4485, %v4636
      %v4638 = vpop.f32.mrb[0].mxu0
      %v4639 = vpop.f32.mrb[0].mxu0
      %v4640 = vadd.f32 %v4488, %v4639
      %v4641 = vpop.f32.mrb[0].mxu0
      %4642 = vmatprep.mubr.bf16.mxu0 0
      %4643 = vmatmul.mubr.bf16.gmra.mrb[0].mxu0 %v4579
      %v4644 = vpop.f32.mrb[0].mxu0
      %v4645 = vadd.f32 %v4493, %v4644
      %v4646 = vpop.f32.mrb[0].mxu0
      %v4647 = vpop.f32.mrb[0].mxu0
      %v4648 = vadd.f32 %v4496, %v4647
      %v4649 = vpop.f32.mrb[0].mxu0
      %4650 = vmatprep.mubr.bf16.mxu0 0
      %4651 = vmatmul.mubr.bf16.gmra.mrb[0].mxu0 %v4582
      %v4652 = vpop.f32.mrb[0].mxu0
      %v4653 = vadd.f32 %v4501, %v4652
      %v4654 = vpop.f32.mrb[0].mxu0
      %v4655 = vpop.f32.mrb[0].mxu0
      %v4656 = vadd.f32 %v4504, %v4655
      %v4657 = vpop.f32.mrb[0].mxu0
      %4658 = vmatprep.mubr.bf16.mxu0 0
      %4659 = vmatmul.mubr.bf16.gmra.mrb[0].mxu0 %v4585
      %v4660 = vpop.f32.mrb[0].mxu0
      %v4661 = vadd.f32 %v4509, %v4660
      %v4662 = vpop.f32.mrb[0].mxu0
      %v4663 = vpop.f32.mrb[0].mxu0
      %v4664 = vadd.f32 %v4512, %v4663
      %v4665 = vpop.f32.mrb[0].mxu0
      %4666 = vmatprep.mubr.bf16.mxu0 0
      %4667 = vmatmul.mubr.bf16.gmra.mrb[0].mxu0 %v4588
      %v4668 = vpop.f32.mrb[0].mxu0
      %v4669 = vadd.f32 %v4517, %v4668
      %v4670 = vpop.f32.mrb[0].mxu0
      %v4671 = vpop.f32.mrb[0].mxu0
      %v4672 = vadd.f32 %v4520, %v4671
      %v4673 = vpop.f32.mrb[0].mxu0
      %4674 = vmatprep.mubr.bf16.mxu0 0
      %4675 = vmatmul.mubr.bf16.gmra.mrb[0].mxu0 %v4591
      %v4676 = vpop.f32.mrb[0].mxu0
      %v4677 = vadd.f32 %v4525, %v4676
      %v4678 = vpop.f32.mrb[0].mxu0
      %v4679 = vpop.f32.mrb[0].mxu0
      %v4680 = vadd.f32 %v4528, %v4679
      %v4681 = vpop.f32.mrb[0].mxu0
      %4682 = vmatprep.mubr.bf16.mxu0 0
      %4683 = vmatmul.mubr.bf16.gmra.mrb[0].mxu0 %v4594
      %v4684 = vpop.f32.mrb[0].mxu0
      %v4685 = vadd.f32 %v4533, %v4684
      %v4686 = vpop.f32.mrb[0].mxu0
      %v4687 = vpop.f32.mrb[0].mxu0
      %v4688 = vadd.f32 %v4536, %v4687
      %v4689 = vpop.f32.mrb[0].mxu0
      %4690 = vmatprep.mubr.bf16.mxu0 0
      %4691 = vmatmul.mubr.bf16.gmra.mrb[0].mxu0 %v4597
      %v4692 = vpop.f32.mrb[0].mxu0
      %v4693 = vadd.f32 %v4541, %v4692
      %v4694 = vpop.f32.mrb[0].mxu0
      %v4695 = vpop.f32.mrb[0].mxu0
      %v4696 = vadd.f32 %v4544, %v4695
      %v4697 = vpop.f32.mrb[0].mxu0
      %4698 = vdwg.mxu0
      %vm4701 = vcmask 1040384
      %vm4702 = vcmask 1044484
      %vm4703 = vmor %vm4701, %vm4702
      %v4704 = vrot.slane %v770, 7
      %v4705 = vrot.slane %v4704, 4
      %v4706 = vrot.slane %v771, 7
      %v4707 = vsel %vm4703, %v4705, %v4706
      %v4708 = vrot.slane %v4706, 4
      %v4709 = vrot.slane %v772, 7
      %v4710 = vsel %vm4703, %v4708, %v4709
      %v4711 = vrot.slane %v773, 7
      %v4712 = vrot.slane %v4711, 4
      %v4713 = vrot.slane %v774, 7
      %v4714 = vsel %vm4703, %v4712, %v4713
      %v4715 = vrot.slane %v4713, 4
      %v4716 = vrot.slane %v775, 7
      %v4717 = vsel %vm4703, %v4715, %v4716
      %v4718 = vrot.slane %v776, 7
      %v4719 = vrot.slane %v4718, 4
      %v4720 = vrot.slane %v777, 7
      %v4721 = vsel %vm4703, %v4719, %v4720
      %v4722 = vrot.slane %v4720, 4
      %v4723 = vrot.slane %v778, 7
      %v4724 = vsel %vm4703, %v4722, %v4723
      %v4725 = vrot.slane %v779, 7
      %v4726 = vrot.slane %v4725, 4
      %v4727 = vrot.slane %v780, 7
      %v4728 = vsel %vm4703, %v4726, %v4727
      %v4729 = vrot.slane %v4727, 4
      %v4730 = vrot.slane %v781, 7
      %v4731 = vsel %vm4703, %v4729, %v4730
      %v4732 = vrot.slane %v782, 7
      %v4733 = vrot.slane %v4732, 4
      %v4734 = vrot.slane %v783, 7
      %v4735 = vsel %vm4703, %v4733, %v4734
      %v4736 = vrot.slane %v4734, 4
      %v4737 = vrot.slane %v784, 7
      %v4738 = vsel %vm4703, %v4736, %v4737
      %v4739 = vrot.slane %v785, 7
      %v4740 = vrot.slane %v4739, 4
      %v4741 = vrot.slane %v786, 7
      %v4742 = vsel %vm4703, %v4740, %v4741
      %v4743 = vrot.slane %v4741, 4
      %v4744 = vrot.slane %v787, 7
      %v4745 = vsel %vm4703, %v4743, %v4744
      %v4746 = vrot.slane %v788, 7
      %v4747 = vrot.slane %v4746, 4
      %v4748 = vrot.slane %v789, 7
      %v4749 = vsel %vm4703, %v4747, %v4748
      %v4750 = vrot.slane %v4748, 4
      %v4751 = vrot.slane %v790, 7
      %v4752 = vsel %vm4703, %v4750, %v4751
      %v4753 = vrot.slane %v791, 7
      %v4754 = vrot.slane %v4753, 4
      %v4755 = vrot.slane %v792, 7
      %v4756 = vsel %vm4703, %v4754, %v4755
      %v4757 = vrot.slane %v4755, 4
      %v4758 = vrot.slane %v793, 7
      %v4759 = vsel %vm4703, %v4757, %v4758
      %s4760 = scalar_lea.vmem %s1, 80
      %v4761 = vld [vmem:[%s4760] sm:$0xf]
      %v4762 = vunpack.c.l.b16 %v4707
      %v4763 = vunpack.c.l.b16 %v4710
      %v4764 = vunpack.c.l.b16 %v4714
      %v4765 = vunpack.c.l.b16 %v4717
      %v4766 = vunpack.c.l.b16 %v4721
      %v4767 = vunpack.c.l.b16 %v4724
      %v4768 = vunpack.c.l.b16 %v4728
      %v4769 = vunpack.c.l.b16 %v4731
      %v4770 = vunpack.c.l.b16 %v4735
      %v4771 = vunpack.c.l.b16 %v4738
      %v4772 = vunpack.c.l.b16 %v4742
      %v4773 = vunpack.c.l.b16 %v4745
      %v4774 = vunpack.c.l.b16 %v4749
      %v4775 = vunpack.c.l.b16 %v4752
      %v4776 = vunpack.c.l.b16 %v4756
      %v4777 = vunpack.c.l.b16 %v4759
      %v4778 = vpack.c.b16 %v4763, %v4762
      %v4779 = vpack.c.b16 %v4765, %v4764
      %v4780 = vpack.c.b16 %v4767, %v4766
      %v4781 = vpack.c.b16 %v4769, %v4768
      %v4782 = vpack.c.b16 %v4771, %v4770
      %v4783 = vpack.c.b16 %v4773, %v4772
      %v4784 = vpack.c.b16 %v4775, %v4774
      %v4785 = vpack.c.b16 %v4777, %v4776
      %v4787 = vsel %vm519, %v4778, 0
      %v4790 = vsel %vm519, %v4779, 0
      %v4793 = vsel %vm519, %v4780, 0
      %v4796 = vsel %vm519, %v4781, 0
      %v4799 = vsel %vm519, %v4782, 0
      %v4802 = vsel %vm519, %v4783, 0
      %v4805 = vsel %vm519, %v4784, 0
      %v4808 = vsel %vm519, %v4785, 0
      %v4811 = vsel %vm667, %v4761, 0
      %4813 = vmatprep.subr.bf16.mxu0 0
      %4814 = vmatpush1.bf16.msra.mxu0 %v4811
      %4815 = vmatprep.subr.bf16.mxu0 0
      %4816 = vmatpush1.bf16.msra.mxu0 0
      %4817 = vmatprep.subr.bf16.mxu0 0
      %4818 = vmatpush1.bf16.msra.mxu0 0
      %4819 = vmatprep.subr.bf16.mxu0 0
      %4820 = vmatpush1.bf16.msra.mxu0 0
      %4821 = vmatprep.subr.bf16.mxu0 0
      %4822 = vmatpush1.bf16.msra.mxu0 0
      %4823 = vmatprep.subr.bf16.mxu0 0
      %4824 = vmatpush1.bf16.msra.mxu0 0
      %4825 = vmatprep.subr.bf16.mxu0 0
      %4826 = vmatpush1.bf16.msra.mxu0 0
      %4827 = vmatprep.subr.bf16.mxu0 0
      %4828 = vmatpush1.bf16.msra.mxu0 0
      %4829 = vmatprep.subr.bf16.mxu0 0
      %4830 = vmatpush1.bf16.msra.mxu0 0
      %4831 = vmatprep.subr.bf16.mxu0 0
      %4832 = vmatpush1.bf16.msra.mxu0 0
      %4833 = vmatprep.subr.bf16.mxu0 0
      %4834 = vmatpush1.bf16.msra.mxu0 0
      %4835 = vmatprep.subr.bf16.mxu0 0
      %4836 = vmatpush1.bf16.msra.mxu0 0
      %4837 = vmatprep.subr.bf16.mxu0 0
      %4838 = vmatpush1.bf16.msra.mxu0 0
      %4839 = vmatprep.subr.bf16.mxu0 0
      %4840 = vmatpush1.bf16.msra.mxu0 0
      %4841 = vmatprep.subr.bf16.mxu0 0
      %4842 = vmatpush1.bf16.msra.mxu0 0
      %4843 = vmatprep.subr.bf16.mxu0 0
      %4844 = vmatpush1.bf16.msra.mxu0 0
      %4845 = vmatprep.mubr.bf16.mxu0 0
      %4846 = vmatmul.mubr.bf16.gmra.mrb[0].mxu0 %v4787
      %v4847 = vpop.f32.mrb[0].mxu0
      %v4848 = vadd.f32 0.0, %v4847
      %v4849 = vpop.f32.mrb[0].mxu0
      %v4850 = vpop.f32.mrb[0].mxu0
      %v4851 = vadd.f32 0.0, %v4850
      %v4852 = vpop.f32.mrb[0].mxu0
      %4853 = vmatprep.mubr.bf16.mxu0 0
      %4854 = vmatmul.mubr.bf16.gmra.mrb[0].mxu0 %v4790
      %v4855 = vpop.f32.mrb[0].mxu0
      %v4856 = vadd.f32 0.0, %v4855
      %v4857 = vpop.f32.mrb[0].mxu0
      %v4858 = vpop.f32.mrb[0].mxu0
      %v4859 = vadd.f32 0.0, %v4858
      %v4860 = vpop.f32.mrb[0].mxu0
      %4861 = vmatprep.mubr.bf16.mxu0 0
      %4862 = vmatmul.mubr.bf16.gmra.mrb[0].mxu0 %v4793
      %v4863 = vpop.f32.mrb[0].mxu0
      %v4864 = vadd.f32 0.0, %v4863
      %v4865 = vpop.f32.mrb[0].mxu0
      %v4866 = vpop.f32.mrb[0].mxu0
      %v4867 = vadd.f32 0.0, %v4866
      %v4868 = vpop.f32.mrb[0].mxu0
      %4869 = vmatprep.mubr.bf16.mxu0 0
      %4870 = vmatmul.mubr.bf16.gmra.mrb[0].mxu0 %v4796
      %v4871 = vpop.f32.mrb[0].mxu0
      %v4872 = vadd.f32 0.0, %v4871
      %v4873 = vpop.f32.mrb[0].mxu0
      %v4874 = vpop.f32.mrb[0].mxu0
      %v4875 = vadd.f32 0.0, %v4874
      %v4876 = vpop.f32.mrb[0].mxu0
      %4877 = vmatprep.mubr.bf16.mxu0 0
      %4878 = vmatmul.mubr.bf16.gmra.mrb[0].mxu0 %v4799
      %v4879 = vpop.f32.mrb[0].mxu0
      %v4880 = vadd.f32 0.0, %v4879
      %v4881 = vpop.f32.mrb[0].mxu0
      %v4882 = vpop.f32.mrb[0].mxu0
      %v4883 = vadd.f32 0.0, %v4882
      %v4884 = vpop.f32.mrb[0].mxu0
      %4885 = vmatprep.mubr.bf16.mxu0 0
      %4886 = vmatmul.mubr.bf16.gmra.mrb[0].mxu0 %v4802
      %v4887 = vpop.f32.mrb[0].mxu0
      %v4888 = vadd.f32 0.0, %v4887
      %v4889 = vpop.f32.mrb[0].mxu0
      %v4890 = vpop.f32.mrb[0].mxu0
      %v4891 = vadd.f32 0.0, %v4890
      %v4892 = vpop.f32.mrb[0].mxu0
      %4893 = vmatprep.mubr.bf16.mxu0 0
      %4894 = vmatmul.mubr.bf16.gmra.mrb[0].mxu0 %v4805
      %v4895 = vpop.f32.mrb[0].mxu0
      %v4896 = vadd.f32 0.0, %v4895
      %v4897 = vpop.f32.mrb[0].mxu0
      %v4898 = vpop.f32.mrb[0].mxu0
      %v4899 = vadd.f32 0.0, %v4898
      %v4900 = vpop.f32.mrb[0].mxu0
      %4901 = vmatprep.mubr.bf16.mxu0 0
      %4902 = vmatmul.mubr.bf16.gmra.mrb[0].mxu0 %v4808
      %v4903 = vpop.f32.mrb[0].mxu0
      %v4904 = vadd.f32 0.0, %v4903
      %v4905 = vpop.f32.mrb[0].mxu0
      %v4906 = vpop.f32.mrb[0].mxu0
      %v4907 = vadd.f32 0.0, %v4906
      %v4908 = vpop.f32.mrb[0].mxu0
      %4909 = vdwg.mxu0
      %v4910 = vadd.f32 %v4637, %v4848
      %v4911 = vadd.f32 %v4640, %v4851
      %v4912 = vadd.f32 %v4645, %v4856
      %v4913 = vadd.f32 %v4648, %v4859
      %v4914 = vadd.f32 %v4653, %v4864
      %v4915 = vadd.f32 %v4656, %v4867
      %v4916 = vadd.f32 %v4661, %v4872
      %v4917 = vadd.f32 %v4664, %v4875
      %v4918 = vadd.f32 %v4669, %v4880
      %v4919 = vadd.f32 %v4672, %v4883
      %v4920 = vadd.f32 %v4677, %v4888
      %v4921 = vadd.f32 %v4680, %v4891
      %v4922 = vadd.f32 %v4685, %v4896
      %v4923 = vadd.f32 %v4688, %v4899
      %v4924 = vadd.f32 %v4693, %v4904
      %v4925 = vadd.f32 %v4696, %v4907
      %s4926 = scalar_lea.vmem %s1, 84
      %v4927 = vld [vmem:[%s4926] sm:$0xf]
      %v4928 = vunpack.c.l.b16 %v794
      %v4929 = vunpack.c.l.b16 %v795
      %v4930 = vunpack.c.l.b16 %v797
      %v4931 = vunpack.c.l.b16 %v798
      %v4932 = vunpack.c.l.b16 %v800
      %v4933 = vunpack.c.l.b16 %v801
      %v4934 = vpack.c.b16 %v4929, %v4928
      %v4935 = vpack.c.b16 %v4931, %v4930
      %v4936 = vpack.c.b16 %v4933, %v4932
      %v4938 = vsel %vm519, %v4934, 0
      %v4941 = vsel %vm519, %v4935, 0
      %v4944 = vsel %vm519, %v4936, 0
      %v4947 = vsel %vm667, %v4927, 0
      %4949 = vmatprep.subr.bf16.mxu0 0
      %4950 = vmatpush1.bf16.msra.mxu0 %v4947
      %4951 = vmatprep.subr.bf16.mxu0 0
      %4952 = vmatpush1.bf16.msra.mxu0 0
      %4953 = vmatprep.subr.bf16.mxu0 0
      %4954 = vmatpush1.bf16.msra.mxu0 0
      %4955 = vmatprep.subr.bf16.mxu0 0
      %4956 = vmatpush1.bf16.msra.mxu0 0
      %4957 = vmatprep.subr.bf16.mxu0 0
      %4958 = vmatpush1.bf16.msra.mxu0 0
      %4959 = vmatprep.subr.bf16.mxu0 0
      %4960 = vmatpush1.bf16.msra.mxu0 0
      %4961 = vmatprep.subr.bf16.mxu0 0
      %4962 = vmatpush1.bf16.msra.mxu0 0
      %4963 = vmatprep.subr.bf16.mxu0 0
      %4964 = vmatpush1.bf16.msra.mxu0 0
      %4965 = vmatprep.subr.bf16.mxu0 0
      %4966 = vmatpush1.bf16.msra.mxu0 0
      %4967 = vmatprep.subr.bf16.mxu0 0
      %4968 = vmatpush1.bf16.msra.mxu0 0
      %4969 = vmatprep.subr.bf16.mxu0 0
      %4970 = vmatpush1.bf16.msra.mxu0 0
      %4971 = vmatprep.subr.bf16.mxu0 0
      %4972 = vmatpush1.bf16.msra.mxu0 0
      %4973 = vmatprep.subr.bf16.mxu0 0
      %4974 = vmatpush1.bf16.msra.mxu0 0
      %4975 = vmatprep.subr.bf16.mxu0 0
      %4976 = vmatpush1.bf16.msra.mxu0 0
      %4977 = vmatprep.subr.bf16.mxu0 0
      %4978 = vmatpush1.bf16.msra.mxu0 0
      %4979 = vmatprep.subr.bf16.mxu0 0
      %4980 = vmatpush1.bf16.msra.mxu0 0
      %4981 = vmatprep.mubr.bf16.mxu0 0
      %4982 = vmatmul.mubr.bf16.gmra.mrb[0].mxu0 %v4585
      %v4983 = vpop.f32.mrb[0].mxu0
      %v4984 = vadd.f32 0.0, %v4983
      %v4985 = vpop.f32.mrb[0].mxu0
      %v4986 = vpop.f32.mrb[0].mxu0
      %v4987 = vadd.f32 0.0, %v4986
      %v4988 = vpop.f32.mrb[0].mxu0
      %4989 = vmatprep.mubr.bf16.mxu0 0
      %4990 = vmatmul.mubr.bf16.gmra.mrb[0].mxu0 %v4588
      %v4991 = vpop.f32.mrb[0].mxu0
      %v4992 = vadd.f32 0.0, %v4991
      %v4993 = vpop.f32.mrb[0].mxu0
      %v4994 = vpop.f32.mrb[0].mxu0
      %v4995 = vadd.f32 0.0, %v4994
      %v4996 = vpop.f32.mrb[0].mxu0
      %4997 = vmatprep.mubr.bf16.mxu0 0
      %4998 = vmatmul.mubr.bf16.gmra.mrb[0].mxu0 %v4591
      %v4999 = vpop.f32.mrb[0].mxu0
      %v5000 = vadd.f32 0.0, %v4999
      %v5001 = vpop.f32.mrb[0].mxu0
      %v5002 = vpop.f32.mrb[0].mxu0
      %v5003 = vadd.f32 0.0, %v5002
      %v5004 = vpop.f32.mrb[0].mxu0
      %5005 = vmatprep.mubr.bf16.mxu0 0
      %5006 = vmatmul.mubr.bf16.gmra.mrb[0].mxu0 %v4594
      %v5007 = vpop.f32.mrb[0].mxu0
      %v5008 = vadd.f32 0.0, %v5007
      %v5009 = vpop.f32.mrb[0].mxu0
      %v5010 = vpop.f32.mrb[0].mxu0
      %v5011 = vadd.f32 0.0, %v5010
      %v5012 = vpop.f32.mrb[0].mxu0
      %5013 = vmatprep.mubr.bf16.mxu0 0
      %5014 = vmatmul.mubr.bf16.gmra.mrb[0].mxu0 %v4597
      %v5015 = vpop.f32.mrb[0].mxu0
      %v5016 = vadd.f32 0.0, %v5015
      %v5017 = vpop.f32.mrb[0].mxu0
      %v5018 = vpop.f32.mrb[0].mxu0
      %v5019 = vadd.f32 0.0, %v5018
      %v5020 = vpop.f32.mrb[0].mxu0
      %5021 = vmatprep.mubr.bf16.mxu0 0
      %5022 = vmatmul.mubr.bf16.gmra.mrb[0].mxu0 %v4938
      %v5023 = vpop.f32.mrb[0].mxu0
      %v5024 = vadd.f32 0.0, %v5023
      %v5025 = vpop.f32.mrb[0].mxu0
      %v5026 = vpop.f32.mrb[0].mxu0
      %v5027 = vadd.f32 0.0, %v5026
      %v5028 = vpop.f32.mrb[0].mxu0
      %5029 = vmatprep.mubr.bf16.mxu0 0
      %5030 = vmatmul.mubr.bf16.gmra.mrb[0].mxu0 %v4941
      %v5031 = vpop.f32.mrb[0].mxu0
      %v5032 = vadd.f32 0.0, %v5031
      %v5033 = vpop.f32.mrb[0].mxu0
      %v5034 = vpop.f32.mrb[0].mxu0
      %v5035 = vadd.f32 0.0, %v5034
      %v5036 = vpop.f32.mrb[0].mxu0
      %5037 = vmatprep.mubr.bf16.mxu0 0
      %5038 = vmatmul.mubr.bf16.gmra.mrb[0].mxu0 %v4944
      %v5039 = vpop.f32.mrb[0].mxu0
      %v5040 = vadd.f32 0.0, %v5039
      %v5041 = vpop.f32.mrb[0].mxu0
      %v5042 = vpop.f32.mrb[0].mxu0
      %v5043 = vadd.f32 0.0, %v5042
      %v5044 = vpop.f32.mrb[0].mxu0
      %5045 = vdwg.mxu0
      %v5046 = vadd.f32 %v4910, %v4984
      %v5047 = vadd.f32 %v4911, %v4987
      %v5048 = vadd.f32 %v4912, %v4992
      %v5049 = vadd.f32 %v4913, %v4995
      %v5050 = vadd.f32 %v4914, %v5000
      %v5051 = vadd.f32 %v4915, %v5003
      %v5052 = vadd.f32 %v4916, %v5008
      %v5053 = vadd.f32 %v4917, %v5011
      %v5054 = vadd.f32 %v4918, %v5016
      %v5055 = vadd.f32 %v4919, %v5019
      %v5056 = vadd.f32 %v4920, %v5024
      %v5057 = vadd.f32 %v4921, %v5027
      %v5058 = vadd.f32 %v4922, %v5032
      %v5059 = vadd.f32 %v4923, %v5035
      %v5060 = vadd.f32 %v4924, %v5040
      %v5061 = vadd.f32 %v4925, %v5043
      %s5062 = scalar_lea.vmem %s1, 88
      %v5063 = vld [vmem:[%s5062] sm:$0xf]
      %v5065 = vsel %vm667, %v5063, 0
      %5067 = vmatprep.subr.bf16.mxu0 0
      %5068 = vmatpush1.bf16.msra.mxu0 %v5065
      %5069 = vmatprep.subr.bf16.mxu0 0
      %5070 = vmatpush1.bf16.msra.mxu0 0
      %5071 = vmatprep.subr.bf16.mxu0 0
      %5072 = vmatpush1.bf16.msra.mxu0 0
      %5073 = vmatprep.subr.bf16.mxu0 0
      %5074 = vmatpush1.bf16.msra.mxu0 0
      %5075 = vmatprep.subr.bf16.mxu0 0
      %5076 = vmatpush1.bf16.msra.mxu0 0
      %5077 = vmatprep.subr.bf16.mxu0 0
      %5078 = vmatpush1.bf16.msra.mxu0 0
      %5079 = vmatprep.subr.bf16.mxu0 0
      %5080 = vmatpush1.bf16.msra.mxu0 0
      %5081 = vmatprep.subr.bf16.mxu0 0
      %5082 = vmatpush1.bf16.msra.mxu0 0
      %5083 = vmatprep.subr.bf16.mxu0 0
      %5084 = vmatpush1.bf16.msra.mxu0 0
      %5085 = vmatprep.subr.bf16.mxu0 0
      %5086 = vmatpush1.bf16.msra.mxu0 0
      %5087 = vmatprep.subr.bf16.mxu0 0
      %5088 = vmatpush1.bf16.msra.mxu0 0
      %5089 = vmatprep.subr.bf16.mxu0 0
      %5090 = vmatpush1.bf16.msra.mxu0 0
      %5091 = vmatprep.subr.bf16.mxu0 0
      %5092 = vmatpush1.bf16.msra.mxu0 0
      %5093 = vmatprep.subr.bf16.mxu0 0
      %5094 = vmatpush1.bf16.msra.mxu0 0
      %5095 = vmatprep.subr.bf16.mxu0 0
      %5096 = vmatpush1.bf16.msra.mxu0 0
      %5097 = vmatprep.subr.bf16.mxu0 0
      %5098 = vmatpush1.bf16.msra.mxu0 0
      %5099 = vmatprep.mubr.bf16.mxu0 0
      %5100 = vmatmul.mubr.bf16.gmra.mrb[0].mxu0 %v1153
      %v5101 = vpop.f32.mrb[0].mxu0
      %v5102 = vadd.f32 0.0, %v5101
      %v5103 = vpop.f32.mrb[0].mxu0
      %v5104 = vpop.f32.mrb[0].mxu0
      %v5105 = vadd.f32 0.0, %v5104
      %v5106 = vpop.f32.mrb[0].mxu0
      %5107 = vmatprep.mubr.bf16.mxu0 0
      %5108 = vmatmul.mubr.bf16.gmra.mrb[0].mxu0 %v1156
      %v5109 = vpop.f32.mrb[0].mxu0
      %v5110 = vadd.f32 0.0, %v5109
      %v5111 = vpop.f32.mrb[0].mxu0
      %v5112 = vpop.f32.mrb[0].mxu0
      %v5113 = vadd.f32 0.0, %v5112
      %v5114 = vpop.f32.mrb[0].mxu0
      %5115 = vmatprep.mubr.bf16.mxu0 0
      %5116 = vmatmul.mubr.bf16.gmra.mrb[0].mxu0 %v1159
      %v5117 = vpop.f32.mrb[0].mxu0
      %v5118 = vadd.f32 0.0, %v5117
      %v5119 = vpop.f32.mrb[0].mxu0
      %v5120 = vpop.f32.mrb[0].mxu0
      %v5121 = vadd.f32 0.0, %v5120
      %v5122 = vpop.f32.mrb[0].mxu0
      %5123 = vmatprep.mubr.bf16.mxu0 0
      %5124 = vmatmul.mubr.bf16.gmra.mrb[0].mxu0 %v1162
      %v5125 = vpop.f32.mrb[0].mxu0
      %v5126 = vadd.f32 0.0, %v5125
      %v5127 = vpop.f32.mrb[0].mxu0
      %v5128 = vpop.f32.mrb[0].mxu0
      %v5129 = vadd.f32 0.0, %v5128
      %v5130 = vpop.f32.mrb[0].mxu0
      %5131 = vmatprep.mubr.bf16.mxu0 0
      %5132 = vmatmul.mubr.bf16.gmra.mrb[0].mxu0 %v1165
      %v5133 = vpop.f32.mrb[0].mxu0
      %v5134 = vadd.f32 0.0, %v5133
      %v5135 = vpop.f32.mrb[0].mxu0
      %v5136 = vpop.f32.mrb[0].mxu0
      %v5137 = vadd.f32 0.0, %v5136
      %v5138 = vpop.f32.mrb[0].mxu0
      %5139 = vmatprep.mubr.bf16.mxu0 0
      %5140 = vmatmul.mubr.bf16.gmra.mrb[0].mxu0 %v1168
      %v5141 = vpop.f32.mrb[0].mxu0
      %v5142 = vadd.f32 0.0, %v5141
      %v5143 = vpop.f32.mrb[0].mxu0
      %v5144 = vpop.f32.mrb[0].mxu0
      %v5145 = vadd.f32 0.0, %v5144
      %v5146 = vpop.f32.mrb[0].mxu0
      %5147 = vmatprep.mubr.bf16.mxu0 0
      %5148 = vmatmul.mubr.bf16.gmra.mrb[0].mxu0 %v1171
      %v5149 = vpop.f32.mrb[0].mxu0
      %v5150 = vadd.f32 0.0, %v5149
      %v5151 = vpop.f32.mrb[0].mxu0
      %v5152 = vpop.f32.mrb[0].mxu0
      %v5153 = vadd.f32 0.0, %v5152
      %v5154 = vpop.f32.mrb[0].mxu0
      %5155 = vmatprep.mubr.bf16.mxu0 0
      %5156 = vmatmul.mubr.bf16.gmra.mrb[0].mxu0 %v1814
      %v5157 = vpop.f32.mrb[0].mxu0
      %v5158 = vadd.f32 0.0, %v5157
      %v5159 = vpop.f32.mrb[0].mxu0
      %v5160 = vpop.f32.mrb[0].mxu0
      %v5161 = vadd.f32 0.0, %v5160
      %v5162 = vpop.f32.mrb[0].mxu0
      %5163 = vdwg.mxu0
      %v5164 = vadd.f32 %v5046, %v5102
      %v5165 = vadd.f32 %v5047, %v5105
      %v5166 = vadd.f32 %v5048, %v5110
      %v5167 = vadd.f32 %v5049, %v5113
      %v5168 = vadd.f32 %v5050, %v5118
      %v5169 = vadd.f32 %v5051, %v5121
      %v5170 = vadd.f32 %v5052, %v5126
      %v5171 = vadd.f32 %v5053, %v5129
      %v5172 = vadd.f32 %v5054, %v5134
      %v5173 = vadd.f32 %v5055, %v5137
      %v5174 = vadd.f32 %v5056, %v5142
      %v5175 = vadd.f32 %v5057, %v5145
      %v5176 = vadd.f32 %v5058, %v5150
      %v5177 = vadd.f32 %v5059, %v5153
      %v5178 = vadd.f32 %v5060, %v5158
      %v5179 = vadd.f32 %v5061, %v5161
      %v5180 = vrot.slane %v794, 7
      %v5181 = vrot.slane %v5180, 4
      %v5182 = vrot.slane %v795, 7
      %v5183 = vsel %vm4703, %v5181, %v5182
      %v5184 = vrot.slane %v5182, 4
      %v5185 = vrot.slane %v796, 7
      %v5186 = vsel %vm4703, %v5184, %v5185
      %v5187 = vrot.slane %v797, 7
      %v5188 = vrot.slane %v5187, 4
      %v5189 = vrot.slane %v798, 7
      %v5190 = vsel %vm4703, %v5188, %v5189
      %v5191 = vrot.slane %v5189, 4
      %v5192 = vrot.slane %v799, 7
      %v5193 = vsel %vm4703, %v5191, %v5192
      %v5194 = vrot.slane %v800, 7
      %v5195 = vrot.slane %v5194, 4
      %v5196 = vrot.slane %v801, 7
      %v5197 = vsel %vm4703, %v5195, %v5196
      %v5198 = vrot.slane %v5196, 4
      %v5199 = vrot.slane %v802, 7
      %v5200 = vsel %vm4703, %v5198, %v5199
      %s5201 = scalar_lea.vmem %s1, 92
      %v5202 = vld [vmem:[%s5201] sm:$0xf]
      %v5203 = vunpack.c.l.b16 %v5183
      %v5204 = vunpack.c.l.b16 %v5186
      %v5205 = vunpack.c.l.b16 %v5190
      %v5206 = vunpack.c.l.b16 %v5193
      %v5207 = vunpack.c.l.b16 %v5197
      %v5208 = vunpack.c.l.b16 %v5200
      %v5209 = vpack.c.b16 %v5204, %v5203
      %v5210 = vpack.c.b16 %v5206, %v5205
      %v5211 = vpack.c.b16 %v5208, %v5207
      %v5213 = vsel %vm519, %v5209, 0
      %v5216 = vsel %vm519, %v5210, 0
      %v5219 = vsel %vm519, %v5211, 0
      %v5222 = vsel %vm667, %v5202, 0
      %5224 = vmatprep.subr.bf16.mxu0 0
      %5225 = vmatpush1.bf16.msra.mxu0 %v5222
      %5226 = vmatprep.subr.bf16.mxu0 0
      %5227 = vmatpush1.bf16.msra.mxu0 0
      %5228 = vmatprep.subr.bf16.mxu0 0
      %5229 = vmatpush1.bf16.msra.mxu0 0
      %5230 = vmatprep.subr.bf16.mxu0 0
      %5231 = vmatpush1.bf16.msra.mxu0 0
      %5232 = vmatprep.subr.bf16.mxu0 0
      %5233 = vmatpush1.bf16.msra.mxu0 0
      %5234 = vmatprep.subr.bf16.mxu0 0
      %5235 = vmatpush1.bf16.msra.mxu0 0
      %5236 = vmatprep.subr.bf16.mxu0 0
      %5237 = vmatpush1.bf16.msra.mxu0 0
      %5238 = vmatprep.subr.bf16.mxu0 0
      %5239 = vmatpush1.bf16.msra.mxu0 0
      %5240 = vmatprep.subr.bf16.mxu0 0
      %5241 = vmatpush1.bf16.msra.mxu0 0
      %5242 = vmatprep.subr.bf16.mxu0 0
      %5243 = vmatpush1.bf16.msra.mxu0 0
      %5244 = vmatprep.subr.bf16.mxu0 0
      %5245 = vmatpush1.bf16.msra.mxu0 0
      %5246 = vmatprep.subr.bf16.mxu0 0
      %5247 = vmatpush1.bf16.msra.mxu0 0
      %5248 = vmatprep.subr.bf16.mxu0 0
      %5249 = vmatpush1.bf16.msra.mxu0 0
      %5250 = vmatprep.subr.bf16.mxu0 0
      %5251 = vmatpush1.bf16.msra.mxu0 0
      %5252 = vmatprep.subr.bf16.mxu0 0
      %5253 = vmatpush1.bf16.msra.mxu0 0
      %5254 = vmatprep.subr.bf16.mxu0 0
      %5255 = vmatpush1.bf16.msra.mxu0 0
      %5256 = vmatprep.mubr.bf16.mxu0 0
      %5257 = vmatmul.mubr.bf16.gmra.mrb[0].mxu0 %v4796
      %v5258 = vpop.f32.mrb[0].mxu0
      %v5259 = vadd.f32 0.0, %v5258
      %v5260 = vpop.f32.mrb[0].mxu0
      %v5261 = vpop.f32.mrb[0].mxu0
      %v5262 = vadd.f32 0.0, %v5261
      %v5263 = vpop.f32.mrb[0].mxu0
      %5264 = vmatprep.mubr.bf16.mxu0 0
      %5265 = vmatmul.mubr.bf16.gmra.mrb[0].mxu0 %v4799
      %v5266 = vpop.f32.mrb[0].mxu0
      %v5267 = vadd.f32 0.0, %v5266
      %v5268 = vpop.f32.mrb[0].mxu0
      %v5269 = vpop.f32.mrb[0].mxu0
      %v5270 = vadd.f32 0.0, %v5269
      %v5271 = vpop.f32.mrb[0].mxu0
      %5272 = vmatprep.mubr.bf16.mxu0 0
      %5273 = vmatmul.mubr.bf16.gmra.mrb[0].mxu0 %v4802
      %v5274 = vpop.f32.mrb[0].mxu0
      %v5275 = vadd.f32 0.0, %v5274
      %v5276 = vpop.f32.mrb[0].mxu0
      %v5277 = vpop.f32.mrb[0].mxu0
      %v5278 = vadd.f32 0.0, %v5277
      %v5279 = vpop.f32.mrb[0].mxu0
      %5280 = vmatprep.mubr.bf16.mxu0 0
      %5281 = vmatmul.mubr.bf16.gmra.mrb[0].mxu0 %v4805
      %v5282 = vpop.f32.mrb[0].mxu0
      %v5283 = vadd.f32 0.0, %v5282
      %v5284 = vpop.f32.mrb[0].mxu0
      %v5285 = vpop.f32.mrb[0].mxu0
      %v5286 = vadd.f32 0.0, %v5285
      %v5287 = vpop.f32.mrb[0].mxu0
      %5288 = vmatprep.mubr.bf16.mxu0 0
      %5289 = vmatmul.mubr.bf16.gmra.mrb[0].mxu0 %v4808
      %v5290 = vpop.f32.mrb[0].mxu0
      %v5291 = vadd.f32 0.0, %v5290
      %v5292 = vpop.f32.mrb[0].mxu0
      %v5293 = vpop.f32.mrb[0].mxu0
      %v5294 = vadd.f32 0.0, %v5293
      %v5295 = vpop.f32.mrb[0].mxu0
      %5296 = vmatprep.mubr.bf16.mxu0 0
      %5297 = vmatmul.mubr.bf16.gmra.mrb[0].mxu0 %v5213
      %v5298 = vpop.f32.mrb[0].mxu0
      %v5299 = vadd.f32 0.0, %v5298
      %v5300 = vpop.f32.mrb[0].mxu0
      %v5301 = vpop.f32.mrb[0].mxu0
      %v5302 = vadd.f32 0.0, %v5301
      %v5303 = vpop.f32.mrb[0].mxu0
      %5304 = vmatprep.mubr.bf16.mxu0 0
      %5305 = vmatmul.mubr.bf16.gmra.mrb[0].mxu0 %v5216
      %v5306 = vpop.f32.mrb[0].mxu0
      %v5307 = vadd.f32 0.0, %v5306
      %v5308 = vpop.f32.mrb[0].mxu0
      %v5309 = vpop.f32.mrb[0].mxu0
      %v5310 = vadd.f32 0.0, %v5309
      %v5311 = vpop.f32.mrb[0].mxu0
      %5312 = vmatprep.mubr.bf16.mxu0 0
      %5313 = vmatmul.mubr.bf16.gmra.mrb[0].mxu0 %v5219
      %v5314 = vpop.f32.mrb[0].mxu0
      %v5315 = vadd.f32 0.0, %v5314
      %v5316 = vpop.f32.mrb[0].mxu0
      %v5317 = vpop.f32.mrb[0].mxu0
      %v5318 = vadd.f32 0.0, %v5317
      %v5319 = vpop.f32.mrb[0].mxu0
      %5320 = vdwg.mxu0
      %v5321 = vadd.f32 %v5164, %v5259
      %v5322 = vadd.f32 %v5165, %v5262
      %v5323 = vadd.f32 %v5166, %v5267
      %v5324 = vadd.f32 %v5167, %v5270
      %v5325 = vadd.f32 %v5168, %v5275
      %v5326 = vadd.f32 %v5169, %v5278
      %v5327 = vadd.f32 %v5170, %v5283
      %v5328 = vadd.f32 %v5171, %v5286
      %v5329 = vadd.f32 %v5172, %v5291
      %v5330 = vadd.f32 %v5173, %v5294
      %v5331 = vadd.f32 %v5174, %v5299
      %v5332 = vadd.f32 %v5175, %v5302
      %v5333 = vadd.f32 %v5176, %v5307
      %v5334 = vadd.f32 %v5177, %v5310
      %v5335 = vadd.f32 %v5178, %v5315
      %v5336 = vadd.f32 %v5179, %v5318
      %s5337 = scalar_lea.vmem %s1, 96
      %v5338 = vld [vmem:[%s5337] sm:$0xf]
      %v5343 = vunpack.c.l.b16 %v803
      %v5344 = vunpack.c.l.b16 %v804
      %v5345 = vunpack.c.l.b16 %v806
      %v5346 = vunpack.c.l.b16 %v807
      %v5347 = vunpack.c.l.b16 %v809
      %v5348 = vunpack.c.l.b16 %v810
      %v5349 = vpack.c.b16 %v5344, %v5343
      %v5350 = vpack.c.b16 %v5346, %v5345
      %v5351 = vpack.c.b16 %v5348, %v5347
      %v5353 = vsel %vm519, %v5349, 0
      %v5356 = vsel %vm519, %v5350, 0
      %v5359 = vsel %vm519, %v5351, 0
      %v5362 = vsel %vm667, %v5338, 0
      %5364 = vmatprep.subr.bf16.mxu0 0
      %5365 = vmatpush1.bf16.msra.mxu0 %v5362
      %5366 = vmatprep.subr.bf16.mxu0 0
      %5367 = vmatpush1.bf16.msra.mxu0 0
      %5368 = vmatprep.subr.bf16.mxu0 0
      %5369 = vmatpush1.bf16.msra.mxu0 0
      %5370 = vmatprep.subr.bf16.mxu0 0
      %5371 = vmatpush1.bf16.msra.mxu0 0
      %5372 = vmatprep.subr.bf16.mxu0 0
      %5373 = vmatpush1.bf16.msra.mxu0 0
      %5374 = vmatprep.subr.bf16.mxu0 0
      %5375 = vmatpush1.bf16.msra.mxu0 0
      %5376 = vmatprep.subr.bf16.mxu0 0
      %5377 = vmatpush1.bf16.msra.mxu0 0
      %5378 = vmatprep.subr.bf16.mxu0 0
      %5379 = vmatpush1.bf16.msra.mxu0 0
      %5380 = vmatprep.subr.bf16.mxu0 0
      %5381 = vmatpush1.bf16.msra.mxu0 0
      %5382 = vmatprep.subr.bf16.mxu0 0
      %5383 = vmatpush1.bf16.msra.mxu0 0
      %5384 = vmatprep.subr.bf16.mxu0 0
      %5385 = vmatpush1.bf16.msra.mxu0 0
      %5386 = vmatprep.subr.bf16.mxu0 0
      %5387 = vmatpush1.bf16.msra.mxu0 0
      %5388 = vmatprep.subr.bf16.mxu0 0
      %5389 = vmatpush1.bf16.msra.mxu0 0
      %5390 = vmatprep.subr.bf16.mxu0 0
      %5391 = vmatpush1.bf16.msra.mxu0 0
      %5392 = vmatprep.subr.bf16.mxu0 0
      %5393 = vmatpush1.bf16.msra.mxu0 0
      %5394 = vmatprep.subr.bf16.mxu0 0
      %5395 = vmatpush1.bf16.msra.mxu0 0
      %5396 = vmatprep.mubr.bf16.mxu0 0
      %5397 = vmatmul.mubr.bf16.gmra.mrb[0].mxu0 %v4594
      %v5398 = vpop.f32.mrb[0].mxu0
      %v5399 = vadd.f32 0.0, %v5398
      %v5400 = vpop.f32.mrb[0].mxu0
      %v5401 = vpop.f32.mrb[0].mxu0
      %v5402 = vadd.f32 0.0, %v5401
      %v5403 = vpop.f32.mrb[0].mxu0
      %5404 = vmatprep.mubr.bf16.mxu0 0
      %5405 = vmatmul.mubr.bf16.gmra.mrb[0].mxu0 %v4597
      %v5406 = vpop.f32.mrb[0].mxu0
      %v5407 = vadd.f32 0.0, %v5406
      %v5408 = vpop.f32.mrb[0].mxu0
      %v5409 = vpop.f32.mrb[0].mxu0
      %v5410 = vadd.f32 0.0, %v5409
      %v5411 = vpop.f32.mrb[0].mxu0
      %5412 = vmatprep.mubr.bf16.mxu0 0
      %5413 = vmatmul.mubr.bf16.gmra.mrb[0].mxu0 %v4938
      %v5414 = vpop.f32.mrb[0].mxu0
      %v5415 = vadd.f32 0.0, %v5414
      %v5416 = vpop.f32.mrb[0].mxu0
      %v5417 = vpop.f32.mrb[0].mxu0
      %v5418 = vadd.f32 0.0, %v5417
      %v5419 = vpop.f32.mrb[0].mxu0
      %5420 = vmatprep.mubr.bf16.mxu0 0
      %5421 = vmatmul.mubr.bf16.gmra.mrb[0].mxu0 %v4941
      %v5422 = vpop.f32.mrb[0].mxu0
      %v5423 = vadd.f32 0.0, %v5422
      %v5424 = vpop.f32.mrb[0].mxu0
      %v5425 = vpop.f32.mrb[0].mxu0
      %v5426 = vadd.f32 0.0, %v5425
      %v5427 = vpop.f32.mrb[0].mxu0
      %5428 = vmatprep.mubr.bf16.mxu0 0
      %5429 = vmatmul.mubr.bf16.gmra.mrb[0].mxu0 %v4944
      %v5430 = vpop.f32.mrb[0].mxu0
      %v5431 = vadd.f32 0.0, %v5430
      %v5432 = vpop.f32.mrb[0].mxu0
      %v5433 = vpop.f32.mrb[0].mxu0
      %v5434 = vadd.f32 0.0, %v5433
      %v5435 = vpop.f32.mrb[0].mxu0
      %5436 = vmatprep.mubr.bf16.mxu0 0
      %5437 = vmatmul.mubr.bf16.gmra.mrb[0].mxu0 %v5353
      %v5438 = vpop.f32.mrb[0].mxu0
      %v5439 = vadd.f32 0.0, %v5438
      %v5440 = vpop.f32.mrb[0].mxu0
      %v5441 = vpop.f32.mrb[0].mxu0
      %v5442 = vadd.f32 0.0, %v5441
      %v5443 = vpop.f32.mrb[0].mxu0
      %5444 = vmatprep.mubr.bf16.mxu0 0
      %5445 = vmatmul.mubr.bf16.gmra.mrb[0].mxu0 %v5356
      %v5446 = vpop.f32.mrb[0].mxu0
      %v5447 = vadd.f32 0.0, %v5446
      %v5448 = vpop.f32.mrb[0].mxu0
      %v5449 = vpop.f32.mrb[0].mxu0
      %v5450 = vadd.f32 0.0, %v5449
      %v5451 = vpop.f32.mrb[0].mxu0
      %5452 = vmatprep.mubr.bf16.mxu0 0
      %5453 = vmatmul.mubr.bf16.gmra.mrb[0].mxu0 %v5359
      %v5454 = vpop.f32.mrb[0].mxu0
      %v5455 = vadd.f32 0.0, %v5454
      %v5456 = vpop.f32.mrb[0].mxu0
      %v5457 = vpop.f32.mrb[0].mxu0
      %v5458 = vadd.f32 0.0, %v5457
      %v5459 = vpop.f32.mrb[0].mxu0
      %5460 = vdwg.mxu0
      %v5461 = vadd.f32 %v5321, %v5399
      %v5462 = vadd.f32 %v5322, %v5402
      %v5463 = vadd.f32 %v5323, %v5407
      %v5464 = vadd.f32 %v5324, %v5410
      %v5465 = vadd.f32 %v5325, %v5415
      %v5466 = vadd.f32 %v5326, %v5418
      %v5467 = vadd.f32 %v5327, %v5423
      %v5468 = vadd.f32 %v5328, %v5426
      %v5469 = vadd.f32 %v5329, %v5431
      %v5470 = vadd.f32 %v5330, %v5434
      %v5471 = vadd.f32 %v5331, %v5439
      %v5472 = vadd.f32 %v5332, %v5442
      %v5473 = vadd.f32 %v5333, %v5447
      %v5474 = vadd.f32 %v5334, %v5450
      %v5475 = vadd.f32 %v5335, %v5455
      %v5476 = vadd.f32 %v5336, %v5458
      %v5478 = vshrl.u32 %v809, 16
      %v5480 = vrot.slane %v5478, 5
      %v5481 = vshll.u32 %v809, 16
      %v5483 = vrot.slane %v5481, 6
      %v5484 = vor.u32 %v5480, %v5483
      %v5485 = vrot.slane %v5484, 4
      %v5487 = vshrl.u32 %v810, 16
      %v5489 = vrot.slane %v5487, 5
      %v5490 = vshll.u32 %v810, 16
      %v5492 = vrot.slane %v5490, 6
      %v5493 = vor.u32 %v5489, %v5492
      %v5494 = vsel %vm898, %v5485, %v5493
      %v5495 = vrot.slane %v5493, 4
      %v5497 = vshrl.u32 %v811, 16
      %v5499 = vrot.slane %v5497, 5
      %v5500 = vshll.u32 %v811, 16
      %v5502 = vrot.slane %v5500, 6
      %v5503 = vor.u32 %v5499, %v5502
      %v5504 = vsel %vm898, %v5495, %v5503
      %s5505 = scalar_lea.vmem %s1, 100
      %v5506 = vld [vmem:[%s5505] sm:$0xf]
      %v5507 = vunpack.c.l.b16 %v5494
      %v5508 = vunpack.c.l.b16 %v5504
      %v5509 = vpack.c.b16 %v5508, %v5507
      %v5511 = vsel %vm519, %v5509, 0
      %v5514 = vsel %vm667, %v5506, 0
      %5516 = vmatprep.subr.bf16.mxu0 0
      %5517 = vmatpush1.bf16.msra.mxu0 %v5514
      %5518 = vmatprep.subr.bf16.mxu0 0
      %5519 = vmatpush1.bf16.msra.mxu0 0
      %5520 = vmatprep.subr.bf16.mxu0 0
      %5521 = vmatpush1.bf16.msra.mxu0 0
      %5522 = vmatprep.subr.bf16.mxu0 0
      %5523 = vmatpush1.bf16.msra.mxu0 0
      %5524 = vmatprep.subr.bf16.mxu0 0
      %5525 = vmatpush1.bf16.msra.mxu0 0
      %5526 = vmatprep.subr.bf16.mxu0 0
      %5527 = vmatpush1.bf16.msra.mxu0 0
      %5528 = vmatprep.subr.bf16.mxu0 0
      %5529 = vmatpush1.bf16.msra.mxu0 0
      %5530 = vmatprep.subr.bf16.mxu0 0
      %5531 = vmatpush1.bf16.msra.mxu0 0
      %5532 = vmatprep.subr.bf16.mxu0 0
      %5533 = vmatpush1.bf16.msra.mxu0 0
      %5534 = vmatprep.subr.bf16.mxu0 0
      %5535 = vmatpush1.bf16.msra.mxu0 0
      %5536 = vmatprep.subr.bf16.mxu0 0
      %5537 = vmatpush1.bf16.msra.mxu0 0
      %5538 = vmatprep.subr.bf16.mxu0 0
      %5539 = vmatpush1.bf16.msra.mxu0 0
      %5540 = vmatprep.subr.bf16.mxu0 0
      %5541 = vmatpush1.bf16.msra.mxu0 0
      %5542 = vmatprep.subr.bf16.mxu0 0
      %5543 = vmatpush1.bf16.msra.mxu0 0
      %5544 = vmatprep.subr.bf16.mxu0 0
      %5545 = vmatpush1.bf16.msra.mxu0 0
      %5546 = vmatprep.subr.bf16.mxu0 0
      %5547 = vmatpush1.bf16.msra.mxu0 0
      %5548 = vmatprep.mubr.bf16.mxu0 0
      %5549 = vmatmul.mubr.bf16.gmra.mrb[0].mxu0 %v1162
      %v5550 = vpop.f32.mrb[0].mxu0
      %v5551 = vadd.f32 0.0, %v5550
      %v5552 = vpop.f32.mrb[0].mxu0
      %v5553 = vpop.f32.mrb[0].mxu0
      %v5554 = vadd.f32 0.0, %v5553
      %v5555 = vpop.f32.mrb[0].mxu0
      %5556 = vmatprep.mubr.bf16.mxu0 0
      %5557 = vmatmul.mubr.bf16.gmra.mrb[0].mxu0 %v1165
      %v5558 = vpop.f32.mrb[0].mxu0
      %v5559 = vadd.f32 0.0, %v5558
      %v5560 = vpop.f32.mrb[0].mxu0
      %v5561 = vpop.f32.mrb[0].mxu0
      %v5562 = vadd.f32 0.0, %v5561
      %v5563 = vpop.f32.mrb[0].mxu0
      %5564 = vmatprep.mubr.bf16.mxu0 0
      %5565 = vmatmul.mubr.bf16.gmra.mrb[0].mxu0 %v1168
      %v5566 = vpop.f32.mrb[0].mxu0
      %v5567 = vadd.f32 0.0, %v5566
      %v5568 = vpop.f32.mrb[0].mxu0
      %v5569 = vpop.f32.mrb[0].mxu0
      %v5570 = vadd.f32 0.0, %v5569
      %v5571 = vpop.f32.mrb[0].mxu0
      %5572 = vmatprep.mubr.bf16.mxu0 0
      %5573 = vmatmul.mubr.bf16.gmra.mrb[0].mxu0 %v1171
      %v5574 = vpop.f32.mrb[0].mxu0
      %v5575 = vadd.f32 0.0, %v5574
      %v5576 = vpop.f32.mrb[0].mxu0
      %v5577 = vpop.f32.mrb[0].mxu0
      %v5578 = vadd.f32 0.0, %v5577
      %v5579 = vpop.f32.mrb[0].mxu0
      %5580 = vmatprep.mubr.bf16.mxu0 0
      %5581 = vmatmul.mubr.bf16.gmra.mrb[0].mxu0 %v1814
      %v5582 = vpop.f32.mrb[0].mxu0
      %v5583 = vadd.f32 0.0, %v5582
      %v5584 = vpop.f32.mrb[0].mxu0
      %v5585 = vpop.f32.mrb[0].mxu0
      %v5586 = vadd.f32 0.0, %v5585
      %v5587 = vpop.f32.mrb[0].mxu0
      %5588 = vmatprep.mubr.bf16.mxu0 0
      %5589 = vmatmul.mubr.bf16.gmra.mrb[0].mxu0 %v2231
      %v5590 = vpop.f32.mrb[0].mxu0
      %v5591 = vadd.f32 0.0, %v5590
      %v5592 = vpop.f32.mrb[0].mxu0
      %v5593 = vpop.f32.mrb[0].mxu0
      %v5594 = vadd.f32 0.0, %v5593
      %v5595 = vpop.f32.mrb[0].mxu0
      %5596 = vmatprep.mubr.bf16.mxu0 0
      %5597 = vmatmul.mubr.bf16.gmra.mrb[0].mxu0 %v3813
      %v5598 = vpop.f32.mrb[0].mxu0
      %v5599 = vadd.f32 0.0, %v5598
      %v5600 = vpop.f32.mrb[0].mxu0
      %v5601 = vpop.f32.mrb[0].mxu0
      %v5602 = vadd.f32 0.0, %v5601
      %v5603 = vpop.f32.mrb[0].mxu0
      %5604 = vmatprep.mubr.bf16.mxu0 0
      %5605 = vmatmul.mubr.bf16.gmra.mrb[0].mxu0 %v5511
      %v5606 = vpop.f32.mrb[0].mxu0
      %v5607 = vadd.f32 0.0, %v5606
      %v5608 = vpop.f32.mrb[0].mxu0
      %v5609 = vpop.f32.mrb[0].mxu0
      %v5610 = vadd.f32 0.0, %v5609
      %v5611 = vpop.f32.mrb[0].mxu0
      %5612 = vdwg.mxu0
      %v5613 = vadd.f32 %v5461, %v5551
      %v5614 = vadd.f32 %v5462, %v5554
      %v5615 = vadd.f32 %v5463, %v5559
      %v5616 = vadd.f32 %v5464, %v5562
      %v5617 = vadd.f32 %v5465, %v5567
      %v5618 = vadd.f32 %v5466, %v5570
      %v5619 = vadd.f32 %v5467, %v5575
      %v5620 = vadd.f32 %v5468, %v5578
      %v5621 = vadd.f32 %v5469, %v5583
      %v5622 = vadd.f32 %v5470, %v5586
      %v5623 = vadd.f32 %v5471, %v5591
      %v5624 = vadd.f32 %v5472, %v5594
      %v5625 = vadd.f32 %v5473, %v5599
      %v5626 = vadd.f32 %v5474, %v5602
      %v5627 = vadd.f32 %v5475, %v5607
      %v5628 = vadd.f32 %v5476, %v5610
      %v5631 = vrot.slane %v803, 7
      %v5632 = vrot.slane %v5631, 4
      %v5633 = vrot.slane %v804, 7
      %v5634 = vsel %vm4703, %v5632, %v5633
      %v5635 = vrot.slane %v5633, 4
      %v5636 = vrot.slane %v805, 7
      %v5637 = vsel %vm4703, %v5635, %v5636
      %v5638 = vrot.slane %v806, 7
      %v5639 = vrot.slane %v5638, 4
      %v5640 = vrot.slane %v807, 7
      %v5641 = vsel %vm4703, %v5639, %v5640
      %v5642 = vrot.slane %v5640, 4
      %v5643 = vrot.slane %v808, 7
      %v5644 = vsel %vm4703, %v5642, %v5643
      %v5645 = vrot.slane %v809, 7
      %v5646 = vrot.slane %v5645, 4
      %v5647 = vrot.slane %v810, 7
      %v5648 = vsel %vm4703, %v5646, %v5647
      %v5649 = vrot.slane %v5647, 4
      %v5650 = vrot.slane %v811, 7
      %v5651 = vsel %vm4703, %v5649, %v5650
      %s5652 = scalar_lea.vmem %s1, 104
      %v5653 = vld [vmem:[%s5652] sm:$0xf]
      %v5654 = vunpack.c.l.b16 %v5634
      %v5655 = vunpack.c.l.b16 %v5637
      %v5656 = vunpack.c.l.b16 %v5641
      %v5657 = vunpack.c.l.b16 %v5644
      %v5658 = vunpack.c.l.b16 %v5648
      %v5659 = vunpack.c.l.b16 %v5651
      %v5660 = vpack.c.b16 %v5655, %v5654
      %v5661 = vpack.c.b16 %v5657, %v5656
      %v5662 = vpack.c.b16 %v5659, %v5658
      %v5664 = vsel %vm519, %v5660, 0
      %v5667 = vsel %vm519, %v5661, 0
      %v5670 = vsel %vm519, %v5662, 0
      %v5673 = vsel %vm667, %v5653, 0
      %5675 = vmatprep.subr.bf16.mxu0 0
      %5676 = vmatpush1.bf16.msra.mxu0 %v5673
      %5677 = vmatprep.subr.bf16.mxu0 0
      %5678 = vmatpush1.bf16.msra.mxu0 0
      %5679 = vmatprep.subr.bf16.mxu0 0
      %5680 = vmatpush1.bf16.msra.mxu0 0
      %5681 = vmatprep.subr.bf16.mxu0 0
      %5682 = vmatpush1.bf16.msra.mxu0 0
      %5683 = vmatprep.subr.bf16.mxu0 0
      %5684 = vmatpush1.bf16.msra.mxu0 0
      %5685 = vmatprep.subr.bf16.mxu0 0
      %5686 = vmatpush1.bf16.msra.mxu0 0
      %5687 = vmatprep.subr.bf16.mxu0 0
      %5688 = vmatpush1.bf16.msra.mxu0 0
      %5689 = vmatprep.subr.bf16.mxu0 0
      %5690 = vmatpush1.bf16.msra.mxu0 0
      %5691 = vmatprep.subr.bf16.mxu0 0
      %5692 = vmatpush1.bf16.msra.mxu0 0
      %5693 = vmatprep.subr.bf16.mxu0 0
      %5694 = vmatpush1.bf16.msra.mxu0 0
      %5695 = vmatprep.subr.bf16.mxu0 0
      %5696 = vmatpush1.bf16.msra.mxu0 0
      %5697 = vmatprep.subr.bf16.mxu0 0
      %5698 = vmatpush1.bf16.msra.mxu0 0
      %5699 = vmatprep.subr.bf16.mxu0 0
      %5700 = vmatpush1.bf16.msra.mxu0 0
      %5701 = vmatprep.subr.bf16.mxu0 0
      %5702 = vmatpush1.bf16.msra.mxu0 0
      %5703 = vmatprep.subr.bf16.mxu0 0
      %5704 = vmatpush1.bf16.msra.mxu0 0
      %5705 = vmatprep.subr.bf16.mxu0 0
      %5706 = vmatpush1.bf16.msra.mxu0 0
      %5707 = vmatprep.mubr.bf16.mxu0 0
      %5708 = vmatmul.mubr.bf16.gmra.mrb[0].mxu0 %v4805
      %v5709 = vpop.f32.mrb[0].mxu0
      %v5710 = vadd.f32 0.0, %v5709
      %v5711 = vpop.f32.mrb[0].mxu0
      %v5712 = vpop.f32.mrb[0].mxu0
      %v5713 = vadd.f32 0.0, %v5712
      %v5714 = vpop.f32.mrb[0].mxu0
      %5715 = vmatprep.mubr.bf16.mxu0 0
      %5716 = vmatmul.mubr.bf16.gmra.mrb[0].mxu0 %v4808
      %v5717 = vpop.f32.mrb[0].mxu0
      %v5718 = vadd.f32 0.0, %v5717
      %v5719 = vpop.f32.mrb[0].mxu0
      %v5720 = vpop.f32.mrb[0].mxu0
      %v5721 = vadd.f32 0.0, %v5720
      %v5722 = vpop.f32.mrb[0].mxu0
      %5723 = vmatprep.mubr.bf16.mxu0 0
      %5724 = vmatmul.mubr.bf16.gmra.mrb[0].mxu0 %v5213
      %v5725 = vpop.f32.mrb[0].mxu0
      %v5726 = vadd.f32 0.0, %v5725
      %v5727 = vpop.f32.mrb[0].mxu0
      %v5728 = vpop.f32.mrb[0].mxu0
      %v5729 = vadd.f32 0.0, %v5728
      %v5730 = vpop.f32.mrb[0].mxu0
      %5731 = vmatprep.mubr.bf16.mxu0 0
      %5732 = vmatmul.mubr.bf16.gmra.mrb[0].mxu0 %v5216
      %v5733 = vpop.f32.mrb[0].mxu0
      %v5734 = vadd.f32 0.0, %v5733
      %v5735 = vpop.f32.mrb[0].mxu0
      %v5736 = vpop.f32.mrb[0].mxu0
      %v5737 = vadd.f32 0.0, %v5736
      %v5738 = vpop.f32.mrb[0].mxu0
      %5739 = vmatprep.mubr.bf16.mxu0 0
      %5740 = vmatmul.mubr.bf16.gmra.mrb[0].mxu0 %v5219
      %v5741 = vpop.f32.mrb[0].mxu0
      %v5742 = vadd.f32 0.0, %v5741
      %v5743 = vpop.f32.mrb[0].mxu0
      %v5744 = vpop.f32.mrb[0].mxu0
      %v5745 = vadd.f32 0.0, %v5744
      %v5746 = vpop.f32.mrb[0].mxu0
      %5747 = vmatprep.mubr.bf16.mxu0 0
      %5748 = vmatmul.mubr.bf16.gmra.mrb[0].mxu0 %v5664
      %v5749 = vpop.f32.mrb[0].mxu0
      %v5750 = vadd.f32 0.0, %v5749
      %v5751 = vpop.f32.mrb[0].mxu0
      %v5752 = vpop.f32.mrb[0].mxu0
      %v5753 = vadd.f32 0.0, %v5752
      %v5754 = vpop.f32.mrb[0].mxu0
      %5755 = vmatprep.mubr.bf16.mxu0 0
      %5756 = vmatmul.mubr.bf16.gmra.mrb[0].mxu0 %v5667
      %v5757 = vpop.f32.mrb[0].mxu0
      %v5758 = vadd.f32 0.0, %v5757
      %v5759 = vpop.f32.mrb[0].mxu0
      %v5760 = vpop.f32.mrb[0].mxu0
      %v5761 = vadd.f32 0.0, %v5760
      %v5762 = vpop.f32.mrb[0].mxu0
      %5763 = vmatprep.mubr.bf16.mxu0 0
      %5764 = vmatmul.mubr.bf16.gmra.mrb[0].mxu0 %v5670
      %v5765 = vpop.f32.mrb[0].mxu0
      %v5766 = vadd.f32 0.0, %v5765
      %v5767 = vpop.f32.mrb[0].mxu0
      %v5768 = vpop.f32.mrb[0].mxu0
      %v5769 = vadd.f32 0.0, %v5768
      %v5770 = vpop.f32.mrb[0].mxu0
      %5771 = vdwg.mxu0
      %v5772 = vadd.f32 %v5613, %v5710
      %v5773 = vadd.f32 %v5614, %v5713
      %v5774 = vadd.f32 %v5615, %v5718
      %v5775 = vadd.f32 %v5616, %v5721
      %v5776 = vadd.f32 %v5617, %v5726
      %v5777 = vadd.f32 %v5618, %v5729
      %v5778 = vadd.f32 %v5619, %v5734
      %v5779 = vadd.f32 %v5620, %v5737
      %v5780 = vadd.f32 %v5621, %v5742
      %v5781 = vadd.f32 %v5622, %v5745
      %v5782 = vadd.f32 %v5623, %v5750
      %v5783 = vadd.f32 %v5624, %v5753
      %v5784 = vadd.f32 %v5625, %v5758
      %v5785 = vadd.f32 %v5626, %v5761
      %v5786 = vadd.f32 %v5627, %v5766
      %v5787 = vadd.f32 %v5628, %v5769
      %s5788 = scalar_lea.vmem %s2, 2
      %v5789 = vld [vmem:[%s5788] sm:$0x1]
      %v5791 = vlaneseq
      %v5792 = vshrl.u32 %v5791, 7
      %v5793 = vsub.s32 0, %v5792
      %v5794 = vrot.slane %v5789, %v5793
      %v5796 = vmul.f32 %v5772, %v5794
      %v5797 = vmul.f32 %v5773, %v5794
      %v5798 = vmul.f32 %v5774, %v5794
      %v5799 = vmul.f32 %v5775, %v5794
      %v5800 = vmul.f32 %v5776, %v5794
      %v5801 = vmul.f32 %v5777, %v5794
      %v5802 = vmul.f32 %v5778, %v5794
      %v5803 = vmul.f32 %v5779, %v5794
      %v5804 = vmul.f32 %v5780, %v5794
      %v5805 = vmul.f32 %v5781, %v5794
      %v5806 = vmul.f32 %v5782, %v5794
      %v5807 = vmul.f32 %v5783, %v5794
      %v5808 = vmul.f32 %v5784, %v5794
      %v5809 = vmul.f32 %v5785, %v5794
      %v5810 = vmul.f32 %v5786, %v5794
      %v5811 = vmul.f32 %v5787, %v5794
      %s5812 = scalar_lea.vmem %s3, 2
      %v5813 = vld [vmem:[%s5812] sm:$0x1]
      %v5815 = vlaneseq
      %v5816 = vshrl.u32 %v5815, 7
      %v5817 = vsub.s32 0, %v5816
      %v5818 = vrot.slane %v5813, %v5817
      %v5820 = vadd.f32 %v5796, %v5818
      %v5821 = vadd.f32 %v5797, %v5818
      %v5822 = vadd.f32 %v5798, %v5818
      %v5823 = vadd.f32 %v5799, %v5818
      %v5824 = vadd.f32 %v5800, %v5818
      %v5825 = vadd.f32 %v5801, %v5818
      %v5826 = vadd.f32 %v5802, %v5818
      %v5827 = vadd.f32 %v5803, %v5818
      %v5828 = vadd.f32 %v5804, %v5818
      %v5829 = vadd.f32 %v5805, %v5818
      %v5830 = vadd.f32 %v5806, %v5818
      %v5831 = vadd.f32 %v5807, %v5818
      %v5832 = vadd.f32 %v5808, %v5818
      %v5833 = vadd.f32 %v5809, %v5818
      %v5834 = vadd.f32 %v5810, %v5818
      %v5835 = vadd.f32 %v5811, %v5818
      %v5836 = vmax.f32 %v5820, 0.0
      %v5837 = vmax.f32 %v5821, 0.0
      %v5838 = vmax.f32 %v5822, 0.0
      %v5839 = vmax.f32 %v5823, 0.0
      %v5840 = vmax.f32 %v5824, 0.0
      %v5841 = vmax.f32 %v5825, 0.0
      %v5842 = vmax.f32 %v5826, 0.0
      %v5843 = vmax.f32 %v5827, 0.0
      %v5844 = vmax.f32 %v5828, 0.0
      %v5845 = vmax.f32 %v5829, 0.0
      %v5846 = vmax.f32 %v5830, 0.0
      %v5847 = vmax.f32 %v5831, 0.0
      %v5848 = vmax.f32 %v5832, 0.0
      %v5849 = vmax.f32 %v5833, 0.0
      %v5850 = vmax.f32 %v5834, 0.0
      %v5851 = vmax.f32 %v5835, 0.0
      %v5852 = vpack.c.bf16 %v5837, %v5836
      %v5853 = vpack.c.bf16 %v5839, %v5838
      %v5854 = vpack.c.bf16 %v5841, %v5840
      %v5855 = vpack.c.bf16 %v5843, %v5842
      %v5856 = vpack.c.bf16 %v5845, %v5844
      %v5857 = vpack.c.bf16 %v5847, %v5846
      %v5858 = vpack.c.bf16 %v5849, %v5848
      %v5859 = vpack.c.bf16 %v5851, %v5850
      %s5860 = scalar_lea.vmem %s7, 4
      %v5861 = vld [vmem:[%s5860] sm:$0x3]
      %v5863 = vsel %vm719, %v5852, 0
      %v5866 = vsel %vm719, %v5853, 0
      %v5869 = vsel %vm719, %v5854, 0
      %v5872 = vsel %vm719, %v5855, 0
      %v5875 = vsel %vm719, %v5856, 0
      %v5878 = vsel %vm719, %v5857, 0
      %v5881 = vsel %vm719, %v5858, 0
      %v5884 = vsel %vm719, %v5859, 0
      %v5887 = vsel %vm723, %v5861, 0
      %5889 = vmatprep.subr.bf16.mxu0 0
      %5890 = vmatpush1.bf16.msra.mxu0 %v5887
      %5891 = vmatprep.subr.bf16.mxu0 0
      %5892 = vmatpush1.bf16.msra.mxu0 0
      %5893 = vmatprep.subr.bf16.mxu0 0
      %5894 = vmatpush1.bf16.msra.mxu0 0
      %5895 = vmatprep.subr.bf16.mxu0 0
      %5896 = vmatpush1.bf16.msra.mxu0 0
      %5897 = vmatprep.subr.bf16.mxu0 0
      %5898 = vmatpush1.bf16.msra.mxu0 0
      %5899 = vmatprep.subr.bf16.mxu0 0
      %5900 = vmatpush1.bf16.msra.mxu0 0
      %5901 = vmatprep.subr.bf16.mxu0 0
      %5902 = vmatpush1.bf16.msra.mxu0 0
      %5903 = vmatprep.subr.bf16.mxu0 0
      %5904 = vmatpush1.bf16.msra.mxu0 0
      %5905 = vmatprep.subr.bf16.mxu0 0
      %5906 = vmatpush1.bf16.msra.mxu0 0
      %5907 = vmatprep.subr.bf16.mxu0 0
      %5908 = vmatpush1.bf16.msra.mxu0 0
      %5909 = vmatprep.subr.bf16.mxu0 0
      %5910 = vmatpush1.bf16.msra.mxu0 0
      %5911 = vmatprep.subr.bf16.mxu0 0
      %5912 = vmatpush1.bf16.msra.mxu0 0
      %5913 = vmatprep.subr.bf16.mxu0 0
      %5914 = vmatpush1.bf16.msra.mxu0 0
      %5915 = vmatprep.subr.bf16.mxu0 0
      %5916 = vmatpush1.bf16.msra.mxu0 0
      %5917 = vmatprep.subr.bf16.mxu0 0
      %5918 = vmatpush1.bf16.msra.mxu0 0
      %5919 = vmatprep.subr.bf16.mxu0 0
      %5920 = vmatpush1.bf16.msra.mxu0 0
      %5921 = vmatprep.mubr.bf16.mxu0 0
      %5922 = vmatmul.mubr.bf16.gmra.mrb[0].mxu0 %v5863
      %v5923 = vpop.f32.mrb[0].mxu0
      %v5924 = vadd.f32 0.0, %v5923
      %v5925 = vpop.f32.mrb[0].mxu0
      %v5926 = vpop.f32.mrb[0].mxu0
      %v5927 = vadd.f32 0.0, %v5926
      %v5928 = vpop.f32.mrb[0].mxu0
      %5929 = vmatprep.mubr.bf16.mxu0 0
      %5930 = vmatmul.mubr.bf16.gmra.mrb[0].mxu0 %v5866
      %v5931 = vpop.f32.mrb[0].mxu0
      %v5932 = vadd.f32 0.0, %v5931
      %v5933 = vpop.f32.mrb[0].mxu0
      %v5934 = vpop.f32.mrb[0].mxu0
      %v5935 = vadd.f32 0.0, %v5934
      %v5936 = vpop.f32.mrb[0].mxu0
      %5937 = vmatprep.mubr.bf16.mxu0 0
      %5938 = vmatmul.mubr.bf16.gmra.mrb[0].mxu0 %v5869
      %v5939 = vpop.f32.mrb[0].mxu0
      %v5940 = vadd.f32 0.0, %v5939
      %v5941 = vpop.f32.mrb[0].mxu0
      %v5942 = vpop.f32.mrb[0].mxu0
      %v5943 = vadd.f32 0.0, %v5942
      %v5944 = vpop.f32.mrb[0].mxu0
      %5945 = vmatprep.mubr.bf16.mxu0 0
      %5946 = vmatmul.mubr.bf16.gmra.mrb[0].mxu0 %v5872
      %v5947 = vpop.f32.mrb[0].mxu0
      %v5948 = vadd.f32 0.0, %v5947
      %v5949 = vpop.f32.mrb[0].mxu0
      %v5950 = vpop.f32.mrb[0].mxu0
      %v5951 = vadd.f32 0.0, %v5950
      %v5952 = vpop.f32.mrb[0].mxu0
      %5953 = vmatprep.mubr.bf16.mxu0 0
      %5954 = vmatmul.mubr.bf16.gmra.mrb[0].mxu0 %v5875
      %v5955 = vpop.f32.mrb[0].mxu0
      %v5956 = vadd.f32 0.0, %v5955
      %v5957 = vpop.f32.mrb[0].mxu0
      %v5958 = vpop.f32.mrb[0].mxu0
      %v5959 = vadd.f32 0.0, %v5958
      %v5960 = vpop.f32.mrb[0].mxu0
      %5961 = vmatprep.mubr.bf16.mxu0 0
      %5962 = vmatmul.mubr.bf16.gmra.mrb[0].mxu0 %v5878
      %v5963 = vpop.f32.mrb[0].mxu0
      %v5964 = vadd.f32 0.0, %v5963
      %v5965 = vpop.f32.mrb[0].mxu0
      %v5966 = vpop.f32.mrb[0].mxu0
      %v5967 = vadd.f32 0.0, %v5966
      %v5968 = vpop.f32.mrb[0].mxu0
      %5969 = vmatprep.mubr.bf16.mxu0 0
      %5970 = vmatmul.mubr.bf16.gmra.mrb[0].mxu0 %v5881
      %v5971 = vpop.f32.mrb[0].mxu0
      %v5972 = vadd.f32 0.0, %v5971
      %v5973 = vpop.f32.mrb[0].mxu0
      %v5974 = vpop.f32.mrb[0].mxu0
      %v5975 = vadd.f32 0.0, %v5974
      %v5976 = vpop.f32.mrb[0].mxu0
      %5977 = vmatprep.mubr.bf16.mxu0 0
      %5978 = vmatmul.mubr.bf16.gmra.mrb[0].mxu0 %v5884
      %v5979 = vpop.f32.mrb[0].mxu0
      %v5980 = vadd.f32 0.0, %v5979
      %v5981 = vpop.f32.mrb[0].mxu0
      %v5982 = vpop.f32.mrb[0].mxu0
      %v5983 = vadd.f32 0.0, %v5982
      %v5984 = vpop.f32.mrb[0].mxu0
      %5985 = vdwg.mxu0
      %v5986 = vadd.f32 %v4347, %v5924
      %v5987 = vadd.f32 %v4350, %v5927
      %v5988 = vadd.f32 %v4355, %v5932
      %v5989 = vadd.f32 %v4358, %v5935
      %v5990 = vadd.f32 %v4363, %v5940
      %v5991 = vadd.f32 %v4366, %v5943
      %v5992 = vadd.f32 %v4371, %v5948
      %v5993 = vadd.f32 %v4374, %v5951
      %v5994 = vadd.f32 %v4379, %v5956
      %v5995 = vadd.f32 %v4382, %v5959
      %v5996 = vadd.f32 %v4387, %v5964
      %v5997 = vadd.f32 %v4390, %v5967
      %v5998 = vadd.f32 %v4395, %v5972
      %v5999 = vadd.f32 %v4398, %v5975
      %v6000 = vadd.f32 %v4403, %v5980
      %v6001 = vadd.f32 %v4406, %v5983
      %v6002 = vld [vmem:[%s8] sm:$0x1]
      %v6003 = vmul.f32 %v762, %v6002
      %v6004 = vld [vmem:[%s9] sm:$0x1]
      %v6005 = vadd.f32 %v6003, %v6004
      %v6007 = vlaneseq
      %v6008 = vshrl.u32 %v6007, 7
      %v6009 = vsub.s32 0, %v6008
      %v6010 = vrot.slane %v6002, %v6009
      %v6012 = vmul.f32 %v5986, %v6010
      %v6013 = vmul.f32 %v5987, %v6010
      %v6014 = vmul.f32 %v5988, %v6010
      %v6015 = vmul.f32 %v5989, %v6010
      %v6016 = vmul.f32 %v5990, %v6010
      %v6017 = vmul.f32 %v5991, %v6010
      %v6018 = vmul.f32 %v5992, %v6010
      %v6019 = vmul.f32 %v5993, %v6010
      %v6020 = vmul.f32 %v5994, %v6010
      %v6021 = vmul.f32 %v5995, %v6010
      %v6022 = vmul.f32 %v5996, %v6010
      %v6023 = vmul.f32 %v5997, %v6010
      %v6024 = vmul.f32 %v5998, %v6010
      %v6025 = vmul.f32 %v5999, %v6010
      %v6026 = vmul.f32 %v6000, %v6010
      %v6027 = vmul.f32 %v6001, %v6010
      %v6028 = vlaneseq
      %v6029 = vshrl.u32 %v6028, 7
      %v6030 = vsub.s32 0, %v6029
      %v6031 = vrot.slane %v6005, %v6030
      %v6032 = vadd.f32 %v6012, %v6031
      %v6033 = vadd.f32 %v6013, %v6031
      %v6034 = vadd.f32 %v6014, %v6031
      %v6035 = vadd.f32 %v6015, %v6031
      %v6036 = vadd.f32 %v6016, %v6031
      %v6037 = vadd.f32 %v6017, %v6031
      %v6038 = vadd.f32 %v6018, %v6031
      %v6039 = vadd.f32 %v6019, %v6031
      %v6040 = vadd.f32 %v6020, %v6031
      %v6041 = vadd.f32 %v6021, %v6031
      %v6042 = vadd.f32 %v6022, %v6031
      %v6043 = vadd.f32 %v6023, %v6031
      %v6044 = vadd.f32 %v6024, %v6031
      %v6045 = vadd.f32 %v6025, %v6031
      %v6046 = vadd.f32 %v6026, %v6031
      %v6047 = vadd.f32 %v6027, %v6031
      %v6048 = vmax.f32 %v6032, 0.0
      %v6049 = vmax.f32 %v6033, 0.0
      %v6050 = vmax.f32 %v6034, 0.0
      %v6051 = vmax.f32 %v6035, 0.0
      %v6052 = vmax.f32 %v6036, 0.0
      %v6053 = vmax.f32 %v6037, 0.0
      %v6054 = vmax.f32 %v6038, 0.0
      %v6055 = vmax.f32 %v6039, 0.0
      %v6056 = vmax.f32 %v6040, 0.0
      %v6057 = vmax.f32 %v6041, 0.0
      %v6058 = vmax.f32 %v6042, 0.0
      %v6059 = vmax.f32 %v6043, 0.0
      %v6060 = vmax.f32 %v6044, 0.0
      %v6061 = vmax.f32 %v6045, 0.0
      %v6062 = vmax.f32 %v6046, 0.0
      %v6063 = vmax.f32 %v6047, 0.0
      %6064 = vst.msk [vmem:[%s383] sm:$0xff] %vm519, %v6048
      %6065 = vst.msk [vmem:[%s383 + $0x8] sm:$0xff] %vm519, %v6049
      %6066 = vst.msk [vmem:[%s383 + $0x10] sm:$0xff] %vm519, %v6050
      %6067 = vst.msk [vmem:[%s383 + $0x18] sm:$0xff] %vm519, %v6051
      %6068 = vst.msk [vmem:[%s383 + $0x20] sm:$0xff] %vm519, %v6052
      %6069 = vst.msk [vmem:[%s383 + $0x28] sm:$0xff] %vm519, %v6053
      %6070 = vst.msk [vmem:[%s383 + $0x30] sm:$0xff] %vm519, %v6054
      %6071 = vst.msk [vmem:[%s383 + $0x38] sm:$0xff] %vm519, %v6055
      %6072 = vst.msk [vmem:[%s383 + $0x40] sm:$0xff] %vm519, %v6056
      %6073 = vst.msk [vmem:[%s383 + $0x48] sm:$0xff] %vm519, %v6057
      %6074 = vst.msk [vmem:[%s383 + $0x50] sm:$0xff] %vm519, %v6058
      %6075 = vst.msk [vmem:[%s383 + $0x58] sm:$0xff] %vm519, %v6059
      %6076 = vst.msk [vmem:[%s383 + $0x60] sm:$0xff] %vm519, %v6060
      %6077 = vst.msk [vmem:[%s383 + $0x68] sm:$0xff] %vm519, %v6061
      %6078 = vst.msk [vmem:[%s383 + $0x70] sm:$0xff] %vm519, %v6062
      %6079 = vst.msk [vmem:[%s383 + $0x78] sm:$0xff] %vm519, %v6063
      %s6080 = smul.u32 8, %s26
      %p6081 = scmp.lt.s32.totalorder %s25, 1
      %s6082 = scalar_select %p6081, %s25, 1
      %p6083 = scmp.lt.s32.totalorder %s6080, 15
      %s6084 = scalar_select %p6083, %s6080, 15
      %s6085 = smul.addr %s6084, 2
      %s6086 = smul.addr %s6082, 32
      %s6087 = sadd.s32 %s6085, %s6086
      %s6088 = smul.addr %s6087, 8
      %s6089 = scalar_lea.vmem %s10, %s6088
      // Predicated region
      $region61: #{tpu_custom_call.1} parent=59 // pred_check
        %p6090 = pneg %p268
      $region62: #{tpu_custom_call.1} parent=59 // pred_check_branch
        %6092 = sbr.rel (%p6090) target = $region64
      $region63: #{tpu_custom_call.1} parent=59 // pred_region
        %s6093 = smul.u32 8, %s26
      $region64: #{tpu_custom_call.1} parent=59 // pred_fallthru
        _
    $region60: #{tpu_custom_call.1} parent=5 // pred_fallthru
      _
    %p6094 = scmp.le.s32.totalorder 2, %s16
    // Predicated region
    $region65: #{tpu_custom_call.1} parent=5 // pred_check
      %p6095 = pneg %p6094
    $region66: #{tpu_custom_call.1} parent=5 // pred_check_branch
      %6097 = sbr.rel (%p6095) target = $region68
    $region67: #{tpu_custom_call.1} parent=5 // pred_region
      %s6098 = ssub.s32 %s16, 2
      // Predicated region
      $region69: #{tpu_custom_call.1} parent=67 // pred_check
        %p6099 = pneg %p274
      $region70: #{tpu_custom_call.1} parent=67 // pred_check_branch
        %6101 = sbr.rel (%p6099) target = $region72
      $region71: #{tpu_custom_call.1} parent=67 // pred_region
        %s6102 = smul.u32 8, %s28
        %p6103 = scmp.lt.s32.totalorder %s27, 1
        %s6104 = scalar_select %p6103, %s27, 1
        %p6105 = scmp.lt.s32.totalorder %s6102, 15
        %s6106 = scalar_select %p6105, %s6102, 15
        %s6107 = smul.addr %s6106, 2
        %s6108 = smul.addr %s6104, 32
        %s6109 = sadd.s32 %s6107, %s6108
        %s6110 = smul.addr %s6109, 8
        %s6111 = scalar_lea.vmem %s10, %s6110
      $region72: #{tpu_custom_call.1} parent=67 // pred_fallthru
        _
    $region68: #{tpu_custom_call.1} parent=5 // pred_fallthru
      _
  $region6: #{tpu_custom_call.1} parent=0 // loop_footer
    %s20 = sadd.s32 1, %s16
  $region7: #{tpu_custom_call.1} parent=0 // loop_footer_branch
    %15 = sbr.rel target = $region3
  $region8: #{tpu_custom_call.1} parent=0 // loop_exit
    _

</llo_original>
